<compile_context>
chip_gen: v7x
topology: tpu7x:2x2x1
jax: 0.10.0
libtpu: 0.0.40
codegen_flags: <defaults>
</compile_context>

<pallas_src>
import functools

import jax
import jax.numpy as jnp
from jax.experimental import pallas as pl
from jax.experimental.pallas import tpu as pltpu

LANE = 128
WPAD = 16          # pad the output-width axis to a multiple of 16 (bf16 sublane tile)


def _round_up(x, m):
    return (x + m - 1) // m * m


def _pad_to(a, shape):
    return jnp.pad(a, [(0, t - s) for s, t in zip(a.shape, shape)])


def _pad_last(a, target):
    return _pad_to(a, a.shape[:-1] + (target,))


# ----------------------------- Pallas kernels -------------------------------

def _accum_taps(x_ref, w_ref, b_ref, *, s, Ho, Wo8):
    """3x3-conv tap accumulation for one image / one Cout tile.

    x_ref: (3*s, 1, Hq*Wo8, Cp)  pre-shifted/flattened tap planes (see wrapper)
    w_ref: (3, 3, Cp, tn)        BN-scale-folded weight tile
    b_ref: (1, tn) f32           folded bias
    Every tap is a full (M, Cp) @ (Cp, tn) matmul whose LHS is a static,
    16-row-aligned slice of a contiguous 2-D ref -> no relayouts.
    """
    M = Ho * Wo8
    tn = w_ref.shape[-1]
    # bias pre-loaded into the accumulator; all 9 dots chain into one value
    acc = jnp.broadcast_to(b_ref[...], (M, tn)).astype(jnp.float32)
    for kh in range(3):
        dh, ph = kh // s, kh % s
        row0 = dh * Wo8                     # multiple of 16 -> aligned slice
        for kw in range(3):
            lhs = x_ref[kw * s + ph, 0, row0:row0 + M, :]
            acc = acc + jnp.dot(lhs, w_ref[kh, kw],
                                preferred_element_type=jnp.float32)
    return acc


def _conv_kernel(x_ref, w_ref, b_ref, o_ref, *, s, Ho, Wo8, relu):
    acc = _accum_taps(x_ref, w_ref, b_ref, s=s, Ho=Ho, Wo8=Wo8)
    if relu:
        acc = jnp.maximum(acc, 0.0)
    o_ref[0] = acc.astype(o_ref.dtype)


def _conv_add_relu_kernel(x_ref, w_ref, b_ref, xs_ref, o_ref, *, Ho, Wo8):
    # conv + BN + identity shortcut + final ReLU (all fused)
    acc = _accum_taps(x_ref, w_ref, b_ref, s=1, Ho=Ho, Wo8=Wo8)
    acc = acc + xs_ref[0].astype(jnp.float32)
    o_ref[0] = jnp.maximum(acc, 0.0).astype(o_ref.dtype)


def _conv_proj_add_relu_kernel(x_ref, w_ref, b_ref, xs_ref, ws_ref, bs_ref,
                               o_ref, *, Ho, Wo8):
    # conv + BN + (1x1-conv + BN) projection shortcut + final ReLU (all fused)
    acc = _accum_taps(x_ref, w_ref, b_ref, s=1, Ho=Ho, Wo8=Wo8)
    sc = jnp.dot(xs_ref[0], ws_ref[...],
                 preferred_element_type=jnp.float32) + bs_ref[...]
    o_ref[0] = jnp.maximum(acc + sc, 0.0).astype(o_ref.dtype)


# --------------------------- pallas_call wrapper -----------------------------

def _pick_tn(cop):
    # tn=128 on v5e (4x128^2 MXU, 1 vst slot), 256 on v6e/v7x when it divides.
    prefer256 = True
    try:
        prefer256 = "v5" not in jax.devices()[0].device_kind.lower()
    except Exception:
        pass
    return 256 if (prefer256 and cop % 256 == 0) else LANE


def _compiler_params(in_bytes, out_bytes, acc_bytes):
    # double-buffered input/output blocks + f32 accumulator + headroom,
    # clamped well under v7x's 64 MiB physical VMEM per TensorCore.
    need = 2 * (in_bytes + out_bytes) + acc_bytes + (4 << 20)
    vmem = int(min(max(need, 32 << 20), 48 << 20))
    return pltpu.CompilerParams(
        dimension_semantics=("parallel", "parallel"),
        vmem_limit_bytes=vmem,
    )


def _conv3x3(xk, w, b, *, s, Ho, Wo8, relu, out_dtype,
             shortcut=None, xs=None, ws=None, bs=None):
    """3x3 conv (+folded BN) [+shortcut add] [+ReLU] for all images.

    xk: (3*s, N, Hq*Wo8, Cp)  tap planes;  w: (3,3,Cp,Cop);  b: (1,Cop) f32
    shortcut: None | "identity" (xs: (N, M, Cop)) | "proj" (xs,(N,M,Cs); ws,(Cs,Cop); bs,(1,Cop))
    Grid = (Cout-tile, N): Cout tile is the OUTER axis so weights stay resident
    across images; >=2 total parallel steps keeps both v7x TensorCores busy.
    """
    KWS, NB, Mq, Cp = xk.shape
    Cop = w.shape[-1]
    M = Ho * Wo8
    tn = _pick_tn(Cop)
    grid = (Cop // tn, NB)

    in_specs = [
        pl.BlockSpec((KWS, 1, Mq, Cp), lambda j, n: (0, n, 0, 0)),
        pl.BlockSpec((3, 3, Cp, tn), lambda j, n: (0, 0, 0, j)),
        pl.BlockSpec((1, tn), lambda j, n: (0, j)),
    ]
    args = [xk, w, b]
    in_bytes = (KWS * Mq * Cp * xk.dtype.itemsize
                + 9 * Cp * tn * w.dtype.itemsize + tn * 4)

    if shortcut == "identity":
        in_specs.append(pl.BlockSpec((1, M, tn), lambda j, n: (n, 0, j)))
        args.append(xs)
        in_bytes += M * tn * xs.dtype.itemsize
        kernel = functools.partial(_conv_add_relu_kernel, Ho=Ho, Wo8=Wo8)
    elif shortcut == "proj":
        Cs = xs.shape[-1]
        in_specs += [
            pl.BlockSpec((1, M, Cs), lambda j, n: (n, 0, 0)),
            pl.BlockSpec((Cs, tn), lambda j, n: (0, j)),
            pl.BlockSpec((1, tn), lambda j, n: (0, j)),
        ]
        args += [xs, ws, bs]
        in_bytes += (M * Cs * xs.dtype.itemsize
                     + Cs * tn * ws.dtype.itemsize + tn * 4)
        kernel = functools.partial(_conv_proj_add_relu_kernel, Ho=Ho, Wo8=Wo8)
    else:
        kernel = functools.partial(_conv_kernel, s=s, Ho=Ho, Wo8=Wo8, relu=relu)

    out_bytes = M * tn * jnp.dtype(out_dtype).itemsize
    acc_bytes = M * tn * 4
    return pl.pallas_call(
        kernel,
        out_shape=jax.ShapeDtypeStruct((NB, M, Cop), out_dtype),
        grid=grid,
        in_specs=in_specs,
        out_specs=pl.BlockSpec((1, M, tn), lambda j, n: (n, 0, j)),
        compiler_params=_compiler_params(in_bytes, out_bytes, acc_bytes),
    )(*args)


# ------------------------------- JAX glue ------------------------------------

def _make_tap_planes(x, stride, Ho, Wo, Wo8):
    """Pre-shifted / stride-phase-decomposed conv input planes.

    x: (N, H, W, C) channel-padded, compute dtype.
    Plane idx = kw*stride + ph holds  xpad[n, i*stride + ph, j*stride + kw, c]
    for i in [0, Hq), j in [0, Wo) (zero-padded to Wo8), flattened to 2-D so the
    kernel's tap (kh, kw) is just rows [kh//stride*Wo8, ...+Ho*Wo8) of plane
    kw*stride + kh%stride.  Total size ~ 3x the (output-resolution) activation.
    """
    N, H, W, C = x.shape
    Hq = Ho + (2 // stride)
    xp = jnp.pad(x, ((0, 0), (1, 1), (1, 1), (0, 0)))
    planes = []
    for kw in range(3):
        for ph in range(stride):
            sub = xp[:, ph::stride, kw::stride, :][:, :Hq, :Wo, :]
            sub = jnp.pad(sub, ((0, 0), (0, Hq - sub.shape[1]),
                                (0, Wo8 - sub.shape[2]), (0, 0)))
            planes.append(sub)
    xk = jnp.stack(planes, axis=0)                    # (3*s, N, Hq, Wo8, C)
    return xk.reshape(3 * stride, N, Hq * Wo8, C), Hq


def _fold_bn(w, conv_b, gamma, beta, mean, var, eps=1e-5):
    """Fold inference BN into the conv: scale-folded weights + f32 bias."""
    scale = gamma / jnp.sqrt(var + eps)
    return w * scale, beta - mean * scale + conv_b * scale


def basic_block_forward(x_nchw, params, stride, compute_dtype=jnp.bfloat16):
    """Pallas implementation of BasicBlock.forward (inference-mode BN)."""
    cdt = jnp.dtype(compute_dtype)
    # cast before padding (halves prologue traffic for bf16), then channel-pad
    x = jnp.transpose(x_nchw, (0, 2, 3, 1)).astype(cdt)              # NHWC
    N, H, W, Cin = x.shape
    Cout = params["conv1_w"].shape[-1]
    Cin_p, Cout_p = _round_up(Cin, LANE), _round_up(Cout, LANE)
    Ho = (H + 2 - 3) // stride + 1
    Wo = (W + 2 - 3) // stride + 1
    Wo8 = _round_up(Wo, WPAD)
    x_c = _pad_last(x, Cin_p)

    # residual branch, conv1: 3x3(stride) + BN1 + ReLU
    w1, b1 = _fold_bn(params["conv1_w"], params["conv1_b"], params["bn1_gamma"],
                      params["bn1_beta"], params["bn1_mean"], params["bn1_var"])
    w1 = _pad_to(w1, (3, 3, Cin_p, Cout_p)).astype(cdt)
    b1 = _pad_last(b1, Cout_p).reshape(1, Cout_p).astype(jnp.float32)
    xk1, _ = _make_tap_planes(x_c, stride, Ho, Wo, Wo8)
    y1 = _conv3x3(xk1, w1, b1, s=stride, Ho=Ho, Wo8=Wo8, relu=True,
                  out_dtype=cdt)                                     # (N, Ho*Wo8, Cout_p)

    # conv2 input planes (stride 1), built from the valid region of y1
    w2, b2 = _fold_bn(params["conv2_w"], params["conv2_b"], params["bn2_gamma"],
                      params["bn2_beta"], params["bn2_mean"], params["bn2_var"])
    w2 = _pad_to(w2, (3, 3, Cout_p, Cout_p)).astype(cdt)
    b2 = _pad_last(b2, Cout_p).reshape(1, Cout_p).astype(jnp.float32)
    y1v = y1.reshape(N, Ho, Wo8, Cout_p)[:, :, :Wo, :]
    xk2, _ = _make_tap_planes(y1v, 1, Ho, Wo, Wo8)

    # conv2 + BN2, fused with the shortcut add and the final ReLU
    if stride != 1 or Cin != Cout:
        ws, bs = _fold_bn(params["convs_w"].reshape(Cin, Cout), params["convs_b"],
                          params["bns_gamma"], params["bns_beta"],
                          params["bns_mean"], params["bns_var"])
        ws = _pad_to(ws, (Cin_p, Cout_p)).astype(cdt)
        bs = _pad_last(bs, Cout_p).reshape(1, Cout_p).astype(jnp.float32)
        xs = x_c[:, ::stride, ::stride, :][:, :Ho, :Wo, :]
        xs = jnp.pad(xs, ((0, 0), (0, 0), (0, Wo8 - Wo), (0, 0)))
        xs = xs.reshape(N, Ho * Wo8, Cin_p)
        out = _conv3x3(xk2, w2, b2, s=1, Ho=Ho, Wo8=Wo8, relu=False, out_dtype=cdt,
                       shortcut="proj", xs=xs, ws=ws, bs=bs)
    else:
        xs = jnp.pad(x_c, ((0, 0), (0, 0), (0, Wo8 - W), (0, 0)))
        xs = xs.reshape(N, Ho * Wo8, Cin_p)
        out = _conv3x3(xk2, w2, b2, s=1, Ho=Ho, Wo8=Wo8, relu=False, out_dtype=cdt,
                       shortcut="identity", xs=xs)

    # single fused slice + transpose epilogue; output stays in compute dtype
    out = out.reshape(N, Ho, Wo8, Cout_p)[:, :, :Wo, :Cout]
    return jnp.transpose(out, (0, 3, 1, 2))                          # NCHW


# --------------------------- pure-JAX reference -------------------------------

def _ref_conv_bn(x_nhwc, w_hwio, conv_b, gamma, beta, mean, var, stride, pad, eps=1e-5):
    y = jax.lax.conv_general_dilated(
        x_nhwc, w_hwio, (stride, stride), ((pad, pad), (pad, pad)),
        dimension_numbers=("NHWC", "HWIO", "NHWC")) + conv_b
    return (y - mean) / jnp.sqrt(var + eps) * gamma + beta


def reference_forward(x_nchw, params, stride):
    x = jnp.transpose(x_nchw, (0, 2, 3, 1))
    Cin = x.shape[-1]
    Cout = params["conv1_w"].shape[-1]
    y = _ref_conv_bn(x, params["conv1_w"], params["conv1_b"], params["bn1_gamma"],
                     params["bn1_beta"], params["bn1_mean"], params["bn1_var"], stride, 1)
    y = jnp.maximum(y, 0.0)
    y = _ref_conv_bn(y, params["conv2_w"], params["conv2_b"], params["bn2_gamma"],
                     params["bn2_beta"], params["bn2_mean"], params["bn2_var"], 1, 1)
    if stride != 1 or Cin != Cout:
        sc = _ref_conv_bn(x, params["convs_w"], params["convs_b"], params["bns_gamma"],
                          params["bns_beta"], params["bns_mean"], params["bns_var"], stride, 0)
    else:
        sc = x
    out = jnp.maximum(y + sc, 0.0)
    return jnp.transpose(out, (0, 3, 1, 2))


# ------------------------------ param init ------------------------------------

def init_params(key, cin, cout, stride):
    ks = iter(jax.random.split(key, 24))

    def conv_w(k, kh, kw, ci, co):
        bound = 1.0 / jnp.sqrt(kh * kw * ci)
        return jax.random.uniform(k, (kh, kw, ci, co), jnp.float32, -bound, bound)

    def conv_b(k, kh, kw, ci, co):
        bound = 1.0 / jnp.sqrt(kh * kw * ci)
        return jax.random.uniform(k, (co,), jnp.float32, -bound, bound)

    def bn(kg, kb, km, kv, co):
        return (1.0 + 0.1 * jax.random.normal(kg, (co,), jnp.float32),   # gamma
                0.1 * jax.random.normal(kb, (co,), jnp.float32),          # beta
                0.1 * jax.random.normal(km, (co,), jnp.float32),          # running mean
                jax.random.uniform(kv, (co,), jnp.float32, 0.5, 1.5))     # running var

    p = {}
    p["conv1_w"] = conv_w(next(ks), 3, 3, cin, cout)
    p["conv1_b"] = conv_b(next(ks), 3, 3, cin, cout)
    p["bn1_gamma"], p["bn1_beta"], p["bn1_mean"], p["bn1_var"] = bn(
        next(ks), next(ks), next(ks), next(ks), cout)
    p["conv2_w"] = conv_w(next(ks), 3, 3, cout, cout)
    p["conv2_b"] = conv_b(next(ks), 3, 3, cout, cout)
    p["bn2_gamma"], p["bn2_beta"], p["bn2_mean"], p["bn2_var"] = bn(
        next(ks), next(ks), next(ks), next(ks), cout)
    if stride != 1 or cin != cout:
        p["convs_w"] = conv_w(next(ks), 1, 1, cin, cout)
        p["convs_b"] = conv_b(next(ks), 1, 1, cin, cout)
        p["bns_gamma"], p["bns_beta"], p["bns_mean"], p["bns_var"] = bn(
            next(ks), next(ks), next(ks), next(ks), cout)
    return p


# ---------------------------------- main --------------------------------------

if __name__ == "__main__":
    base_key = jax.random.PRNGKey(0)
    fwd = jax.jit(basic_block_forward, static_argnames=("stride", "compute_dtype"))

    configs = [
        # (N, Cin, Cout, H, W, stride, compute_dtype, atol)
        (2, 4, 8, 16, 16, 2, jnp.float32, 1e-3),    # projection shortcut, exact
        (2, 4, 8, 16, 16, 2, jnp.bfloat16, 1e-1),   # projection shortcut, bf16 fast path
        (2, 8, 8, 16, 16, 1, jnp.float32, 1e-3),    # identity shortcut, exact
    ]
    ok = True
    for idx, (N, Cin, Cout, H, W, stride, cdt, atol) in enumerate(configs):
        kp, kx = jax.random.split(jax.random.fold_in(base_key, idx))
        params = init_params(kp, Cin, Cout, stride)
        x = jax.random.normal(kx, (N, Cin, H, W), jnp.float32)

        out = jax.block_until_ready(fwd(x, params, stride=stride, compute_dtype=cdt))
        ref = jax.block_until_ready(reference_forward(x, params, stride))

        Ho = (H + 2 - 3) // stride + 1
        Wo = (W + 2 - 3) // stride + 1
        assert out.shape == ref.shape == (N, Cout, Ho, Wo), (out.shape, ref.shape)
        err = float(jnp.max(jnp.abs(out.astype(jnp.float32) - ref)))
        if err > atol:
            ok = False
            print(f"MISMATCH cfg={idx} dtype={jnp.dtype(cdt).name} max_abs_err={err}")
    if ok:
        print("KERNEL_OK")
</pallas_src>

<mosaic_0001>
module attributes {stable_mosaic.version = 11 : i64} {
  func.func @_conv_kernel(%arg0: i32, %arg1: i32, %arg2: memref<6x1x144x128xf32, #tpu.memory_space<vmem>>, %arg3: memref<3x3x128x128xf32, #tpu.memory_space<vmem>>, %arg4: memref<1x128xf32, #tpu.memory_space<vmem>>, %arg5: memref<1x128x128xf32, #tpu.memory_space<vmem>>) attributes {dimension_semantics = [#tpu.dimension_semantics<parallel>, #tpu.dimension_semantics<parallel>], iteration_bounds = array<i64: 1, 2>, scalar_prefetch = 0 : i64, scratch_operands = 0 : i64, tpu.core_type = #tpu.core_type<tc>, window_params = [{transform_indices = @transform_0, window_bounds = array<i64: 6, 1, 144, 128>}, {transform_indices = @transform_1, window_bounds = array<i64: 3, 3, 128, 128>}, {transform_indices = @transform_2, window_bounds = array<i64: 1, 128>}, {transform_indices = @transform_3, window_bounds = array<i64: 1, 128, 128>}]} {
    %c0 = arith.constant 0 : index
    %c0_0 = arith.constant 0 : index
    %0 = vector.load %arg4[%c0, %c0_0] : memref<1x128xf32, #tpu.memory_space<vmem>>, vector<1x128xf32>
    %1 = vector.shape_cast %0 : vector<1x128xf32> to vector<1x128xf32>
    %2 = vector.broadcast %1 : vector<1x128xf32> to vector<128x128xf32>
    %c0_1 = arith.constant 0 : index
    %c0_2 = arith.constant 0 : index
    %c0_3 = arith.constant 0 : index
    %c0_4 = arith.constant 0 : index
    %3 = vector.load %arg2[%c0_1, %c0_2, %c0_3, %c0_4] : memref<6x1x144x128xf32, #tpu.memory_space<vmem>>, vector<1x1x128x128xf32>
    %4 = vector.shape_cast %3 : vector<1x1x128x128xf32> to vector<128x128xf32>
    %c0_5 = arith.constant 0 : index
    %c0_6 = arith.constant 0 : index
    %c0_7 = arith.constant 0 : index
    %c0_8 = arith.constant 0 : index
    %5 = vector.load %arg3[%c0_5, %c0_6, %c0_7, %c0_8] : memref<3x3x128x128xf32, #tpu.memory_space<vmem>>, vector<1x1x128x128xf32>
    %6 = vector.shape_cast %5 : vector<1x1x128x128xf32> to vector<128x128xf32>
    %cst = arith.constant dense<0.000000e+00> : vector<128x128xf32>
    %7 = tpu.matmul %4, %6, %cst {dimension_numbers = #tpu.dot_dimension_numbers<[1], [0], [0], [1], [0, 0, 1, 1], [], []>} : vector<128x128xf32>, vector<128x128xf32>, vector<128x128xf32> -> vector<128x128xf32>
    %8 = arith.addf %2, %7 : vector<128x128xf32>
    %c2 = arith.constant 2 : index
    %c0_9 = arith.constant 0 : index
    %c0_10 = arith.constant 0 : index
    %c0_11 = arith.constant 0 : index
    %9 = vector.load %arg2[%c2, %c0_9, %c0_10, %c0_11] : memref<6x1x144x128xf32, #tpu.memory_space<vmem>>, vector<1x1x128x128xf32>
    %10 = vector.shape_cast %9 : vector<1x1x128x128xf32> to vector<128x128xf32>
    %c0_12 = arith.constant 0 : index
    %c1 = arith.constant 1 : index
    %c0_13 = arith.constant 0 : index
    %c0_14 = arith.constant 0 : index
    %11 = vector.load %arg3[%c0_12, %c1, %c0_13, %c0_14] : memref<3x3x128x128xf32, #tpu.memory_space<vmem>>, vector<1x1x128x128xf32>
    %12 = vector.shape_cast %11 : vector<1x1x128x128xf32> to vector<128x128xf32>
    %cst_15 = arith.constant dense<0.000000e+00> : vector<128x128xf32>
    %13 = tpu.matmul %10, %12, %cst_15 {dimension_numbers = #tpu.dot_dimension_numbers<[1], [0], [0], [1], [0, 0, 1, 1], [], []>} : vector<128x128xf32>, vector<128x128xf32>, vector<128x128xf32> -> vector<128x128xf32>
    %14 = arith.addf %8, %13 : vector<128x128xf32>
    %c4 = arith.constant 4 : index
    %c0_16 = arith.constant 0 : index
    %c0_17 = arith.constant 0 : index
    %c0_18 = arith.constant 0 : index
    %15 = vector.load %arg2[%c4, %c0_16, %c0_17, %c0_18] : memref<6x1x144x128xf32, #tpu.memory_space<vmem>>, vector<1x1x128x128xf32>
    %16 = vector.shape_cast %15 : vector<1x1x128x128xf32> to vector<128x128xf32>
    %c0_19 = arith.constant 0 : index
    %c2_20 = arith.constant 2 : index
    %c0_21 = arith.constant 0 : index
    %c0_22 = arith.constant 0 : index
    %17 = vector.load %arg3[%c0_19, %c2_20, %c0_21, %c0_22] : memref<3x3x128x128xf32, #tpu.memory_space<vmem>>, vector<1x1x128x128xf32>
    %18 = vector.shape_cast %17 : vector<1x1x128x128xf32> to vector<128x128xf32>
    %cst_23 = arith.constant dense<0.000000e+00> : vector<128x128xf32>
    %19 = tpu.matmul %16, %18, %cst_23 {dimension_numbers = #tpu.dot_dimension_numbers<[1], [0], [0], [1], [0, 0, 1, 1], [], []>} : vector<128x128xf32>, vector<128x128xf32>, vector<128x128xf32> -> vector<128x128xf32>
    %20 = arith.addf %14, %19 : vector<128x128xf32>
    %c1_24 = arith.constant 1 : index
    %c0_25 = arith.constant 0 : index
    %c0_26 = arith.constant 0 : index
    %c0_27 = arith.constant 0 : index
    %21 = vector.load %arg2[%c1_24, %c0_25, %c0_26, %c0_27] : memref<6x1x144x128xf32, #tpu.memory_space<vmem>>, vector<1x1x128x128xf32>
    %22 = vector.shape_cast %21 : vector<1x1x128x128xf32> to vector<128x128xf32>
    %c1_28 = arith.constant 1 : index
    %c0_29 = arith.constant 0 : index
    %c0_30 = arith.constant 0 : index
    %c0_31 = arith.constant 0 : index
    %23 = vector.load %arg3[%c1_28, %c0_29, %c0_30, %c0_31] : memref<3x3x128x128xf32, #tpu.memory_space<vmem>>, vector<1x1x128x128xf32>
    %24 = vector.shape_cast %23 : vector<1x1x128x128xf32> to vector<128x128xf32>
    %cst_32 = arith.constant dense<0.000000e+00> : vector<128x128xf32>
    %25 = tpu.matmul %22, %24, %cst_32 {dimension_numbers = #tpu.dot_dimension_numbers<[1], [0], [0], [1], [0, 0, 1, 1], [], []>} : vector<128x128xf32>, vector<128x128xf32>, vector<128x128xf32> -> vector<128x128xf32>
    %26 = arith.addf %20, %25 : vector<128x128xf32>
    %c3 = arith.constant 3 : index
    %c0_33 = arith.constant 0 : index
    %c0_34 = arith.constant 0 : index
    %c0_35 = arith.constant 0 : index
    %27 = vector.load %arg2[%c3, %c0_33, %c0_34, %c0_35] : memref<6x1x144x128xf32, #tpu.memory_space<vmem>>, vector<1x1x128x128xf32>
    %28 = vector.shape_cast %27 : vector<1x1x128x128xf32> to vector<128x128xf32>
    %c1_36 = arith.constant 1 : index
    %c1_37 = arith.constant 1 : index
    %c0_38 = arith.constant 0 : index
    %c0_39 = arith.constant 0 : index
    %29 = vector.load %arg3[%c1_36, %c1_37, %c0_38, %c0_39] : memref<3x3x128x128xf32, #tpu.memory_space<vmem>>, vector<1x1x128x128xf32>
    %30 = vector.shape_cast %29 : vector<1x1x128x128xf32> to vector<128x128xf32>
    %cst_40 = arith.constant dense<0.000000e+00> : vector<128x128xf32>
    %31 = tpu.matmul %28, %30, %cst_40 {dimension_numbers = #tpu.dot_dimension_numbers<[1], [0], [0], [1], [0, 0, 1, 1], [], []>} : vector<128x128xf32>, vector<128x128xf32>, vector<128x128xf32> -> vector<128x128xf32>
    %32 = arith.addf %26, %31 : vector<128x128xf32>
    %c5 = arith.constant 5 : index
    %c0_41 = arith.constant 0 : index
    %c0_42 = arith.constant 0 : index
    %c0_43 = arith.constant 0 : index
    %33 = vector.load %arg2[%c5, %c0_41, %c0_42, %c0_43] : memref<6x1x144x128xf32, #tpu.memory_space<vmem>>, vector<1x1x128x128xf32>
    %34 = vector.shape_cast %33 : vector<1x1x128x128xf32> to vector<128x128xf32>
    %c1_44 = arith.constant 1 : index
    %c2_45 = arith.constant 2 : index
    %c0_46 = arith.constant 0 : index
    %c0_47 = arith.constant 0 : index
    %35 = vector.load %arg3[%c1_44, %c2_45, %c0_46, %c0_47] : memref<3x3x128x128xf32, #tpu.memory_space<vmem>>, vector<1x1x128x128xf32>
    %36 = vector.shape_cast %35 : vector<1x1x128x128xf32> to vector<128x128xf32>
    %cst_48 = arith.constant dense<0.000000e+00> : vector<128x128xf32>
    %37 = tpu.matmul %34, %36, %cst_48 {dimension_numbers = #tpu.dot_dimension_numbers<[1], [0], [0], [1], [0, 0, 1, 1], [], []>} : vector<128x128xf32>, vector<128x128xf32>, vector<128x128xf32> -> vector<128x128xf32>
    %38 = arith.addf %32, %37 : vector<128x128xf32>
    %c0_49 = arith.constant 0 : index
    %c0_50 = arith.constant 0 : index
    %c16 = arith.constant 16 : index
    %c0_51 = arith.constant 0 : index
    %39 = vector.load %arg2[%c0_49, %c0_50, %c16, %c0_51] : memref<6x1x144x128xf32, #tpu.memory_space<vmem>>, vector<1x1x128x128xf32>
    %40 = vector.shape_cast %39 : vector<1x1x128x128xf32> to vector<128x128xf32>
    %c2_52 = arith.constant 2 : index
    %c0_53 = arith.constant 0 : index
    %c0_54 = arith.constant 0 : index
    %c0_55 = arith.constant 0 : index
    %41 = vector.load %arg3[%c2_52, %c0_53, %c0_54, %c0_55] : memref<3x3x128x128xf32, #tpu.memory_space<vmem>>, vector<1x1x128x128xf32>
    %42 = vector.shape_cast %41 : vector<1x1x128x128xf32> to vector<128x128xf32>
    %cst_56 = arith.constant dense<0.000000e+00> : vector<128x128xf32>
    %43 = tpu.matmul %40, %42, %cst_56 {dimension_numbers = #tpu.dot_dimension_numbers<[1], [0], [0], [1], [0, 0, 1, 1], [], []>} : vector<128x128xf32>, vector<128x128xf32>, vector<128x128xf32> -> vector<128x128xf32>
    %44 = arith.addf %38, %43 : vector<128x128xf32>
    %c2_57 = arith.constant 2 : index
    %c0_58 = arith.constant 0 : index
    %c16_59 = arith.constant 16 : index
    %c0_60 = arith.constant 0 : index
    %45 = vector.load %arg2[%c2_57, %c0_58, %c16_59, %c0_60] : memref<6x1x144x128xf32, #tpu.memory_space<vmem>>, vector<1x1x128x128xf32>
    %46 = vector.shape_cast %45 : vector<1x1x128x128xf32> to vector<128x128xf32>
    %c2_61 = arith.constant 2 : index
    %c1_62 = arith.constant 1 : index
    %c0_63 = arith.constant 0 : index
    %c0_64 = arith.constant 0 : index
    %47 = vector.load %arg3[%c2_61, %c1_62, %c0_63, %c0_64] : memref<3x3x128x128xf32, #tpu.memory_space<vmem>>, vector<1x1x128x128xf32>
    %48 = vector.shape_cast %47 : vector<1x1x128x128xf32> to vector<128x128xf32>
    %cst_65 = arith.constant dense<0.000000e+00> : vector<128x128xf32>
    %49 = tpu.matmul %46, %48, %cst_65 {dimension_numbers = #tpu.dot_dimension_numbers<[1], [0], [0], [1], [0, 0, 1, 1], [], []>} : vector<128x128xf32>, vector<128x128xf32>, vector<128x128xf32> -> vector<128x128xf32>
    %50 = arith.addf %44, %49 : vector<128x128xf32>
    %c4_66 = arith.constant 4 : index
    %c0_67 = arith.constant 0 : index
    %c16_68 = arith.constant 16 : index
    %c0_69 = arith.constant 0 : index
    %51 = vector.load %arg2[%c4_66, %c0_67, %c16_68, %c0_69] : memref<6x1x144x128xf32, #tpu.memory_space<vmem>>, vector<1x1x128x128xf32>
    %52 = vector.shape_cast %51 : vector<1x1x128x128xf32> to vector<128x128xf32>
    %c2_70 = arith.constant 2 : index
    %c2_71 = arith.constant 2 : index
    %c0_72 = arith.constant 0 : index
    %c0_73 = arith.constant 0 : index
    %53 = vector.load %arg3[%c2_70, %c2_71, %c0_72, %c0_73] : memref<3x3x128x128xf32, #tpu.memory_space<vmem>>, vector<1x1x128x128xf32>
    %54 = vector.shape_cast %53 : vector<1x1x128x128xf32> to vector<128x128xf32>
    %cst_74 = arith.constant dense<0.000000e+00> : vector<128x128xf32>
    %55 = tpu.matmul %52, %54, %cst_74 {dimension_numbers = #tpu.dot_dimension_numbers<[1], [0], [0], [1], [0, 0, 1, 1], [], []>} : vector<128x128xf32>, vector<128x128xf32>, vector<128x128xf32> -> vector<128x128xf32>
    %56 = arith.addf %50, %55 : vector<128x128xf32>
    %cst_75 = arith.constant 0.000000e+00 : f32
    %57 = vector.broadcast %cst_75 : f32 to vector<128x128xf32>
    %58 = arith.maximumf %56, %57 : vector<128x128xf32>
    %c0_76 = arith.constant 0 : index
    %c0_77 = arith.constant 0 : index
    %c0_78 = arith.constant 0 : index
    %59 = vector.load %arg5[%c0_76, %c0_77, %c0_78] : memref<1x128x128xf32, #tpu.memory_space<vmem>>, vector<1x128x128xf32>
    %60 = vector.shape_cast %59 : vector<1x128x128xf32> to vector<128x128xf32>
    %61 = vector.shape_cast %58 : vector<128x128xf32> to vector<1x128x128xf32>
    tpu.vector_store %arg5[%c0_76, %c0_77, %c0_78], %61 {strides = array<i32>} : memref<1x128x128xf32, #tpu.memory_space<vmem>>, vector<1x128x128xf32>,
    return
  }
  func.func @transform_0(%arg0: i32, %arg1: i32) -> (i32, i32, i32, i32) {
    %c0_i32 = arith.constant 0 : i32
    %c0_i32_0 = arith.constant 0 : i32
    %c0_i32_1 = arith.constant 0 : i32
    %c0_i32_2 = arith.constant 0 : i32
    return %c0_i32, %arg1, %c0_i32_0, %c0_i32_1 : i32, i32, i32, i32
  }
  func.func @transform_1(%arg0: i32, %arg1: i32) -> (i32, i32, i32, i32) {
    %c0_i32 = arith.constant 0 : i32
    %c0_i32_0 = arith.constant 0 : i32
    %c0_i32_1 = arith.constant 0 : i32
    %c0_i32_2 = arith.constant 0 : i32
    return %c0_i32, %c0_i32_0, %c0_i32_1, %arg0 : i32, i32, i32, i32
  }
  func.func @transform_2(%arg0: i32, %arg1: i32) -> (i32, i32) {
    %c0_i32 = arith.constant 0 : i32
    %c0_i32_0 = arith.constant 0 : i32
    return %c0_i32, %arg0 : i32, i32
  }
  func.func @transform_3(%arg0: i32, %arg1: i32) -> (i32, i32, i32) {
    %c0_i32 = arith.constant 0 : i32
    %c0_i32_0 = arith.constant 0 : i32
    return %arg1, %c0_i32, %arg0 : i32, i32, i32
  }
}

module attributes {stable_mosaic.version = 11 : i64} {
  func.func @_conv_proj_add_relu_kernel(%arg0: i32, %arg1: i32, %arg2: memref<3x1x160x128xf32, #tpu.memory_space<vmem>>, %arg3: memref<3x3x128x128xf32, #tpu.memory_space<vmem>>, %arg4: memref<1x128xf32, #tpu.memory_space<vmem>>, %arg5: memref<1x128x128xf32, #tpu.memory_space<vmem>>, %arg6: memref<128x128xf32, #tpu.memory_space<vmem>>, %arg7: memref<1x128xf32, #tpu.memory_space<vmem>>, %arg8: memref<1x128x128xf32, #tpu.memory_space<vmem>>) attributes {dimension_semantics = [#tpu.dimension_semantics<parallel>, #tpu.dimension_semantics<parallel>], iteration_bounds = array<i64: 1, 2>, scalar_prefetch = 0 : i64, scratch_operands = 0 : i64, tpu.core_type = #tpu.core_type<tc>, window_params = [{transform_indices = @transform_0, window_bounds = array<i64: 3, 1, 160, 128>}, {transform_indices = @transform_1, window_bounds = array<i64: 3, 3, 128, 128>}, {transform_indices = @transform_2, window_bounds = array<i64: 1, 128>}, {transform_indices = @transform_3, window_bounds = array<i64: 1, 128, 128>}, {transform_indices = @transform_4, window_bounds = array<i64: 128, 128>}, {transform_indices = @transform_5, window_bounds = array<i64: 1, 128>}, {transform_indices = @transform_6, window_bounds = array<i64: 1, 128, 128>}]} {
    %c0 = arith.constant 0 : index
    %c0_0 = arith.constant 0 : index
    %0 = vector.load %arg4[%c0, %c0_0] : memref<1x128xf32, #tpu.memory_space<vmem>>, vector<1x128xf32>
    %1 = vector.shape_cast %0 : vector<1x128xf32> to vector<1x128xf32>
    %2 = vector.broadcast %1 : vector<1x128xf32> to vector<128x128xf32>
    %c0_1 = arith.constant 0 : index
    %c0_2 = arith.constant 0 : index
    %c0_3 = arith.constant 0 : index
    %c0_4 = arith.constant 0 : index
    %3 = vector.load %arg2[%c0_1, %c0_2, %c0_3, %c0_4] : memref<3x1x160x128xf32, #tpu.memory_space<vmem>>, vector<1x1x128x128xf32>
    %4 = vector.shape_cast %3 : vector<1x1x128x128xf32> to vector<128x128xf32>
    %c0_5 = arith.constant 0 : index
    %c0_6 = arith.constant 0 : index
    %c0_7 = arith.constant 0 : index
    %c0_8 = arith.constant 0 : index
    %5 = vector.load %arg3[%c0_5, %c0_6, %c0_7, %c0_8] : memref<3x3x128x128xf32, #tpu.memory_space<vmem>>, vector<1x1x128x128xf32>
    %6 = vector.shape_cast %5 : vector<1x1x128x128xf32> to vector<128x128xf32>
    %cst = arith.constant dense<0.000000e+00> : vector<128x128xf32>
    %7 = tpu.matmul %4, %6, %cst {dimension_numbers = #tpu.dot_dimension_numbers<[1], [0], [0], [1], [0, 0, 1, 1], [], []>} : vector<128x128xf32>, vector<128x128xf32>, vector<128x128xf32> -> vector<128x128xf32>
    %8 = arith.addf %2, %7 : vector<128x128xf32>
    %c1 = arith.constant 1 : index
    %c0_9 = arith.constant 0 : index
    %c0_10 = arith.constant 0 : index
    %c0_11 = arith.constant 0 : index
    %9 = vector.load %arg2[%c1, %c0_9, %c0_10, %c0_11] : memref<3x1x160x128xf32, #tpu.memory_space<vmem>>, vector<1x1x128x128xf32>
    %10 = vector.shape_cast %9 : vector<1x1x128x128xf32> to vector<128x128xf32>
    %c0_12 = arith.constant 0 : index
    %c1_13 = arith.constant 1 : index
    %c0_14 = arith.constant 0 : index
    %c0_15 = arith.constant 0 : index
    %11 = vector.load %arg3[%c0_12, %c1_13, %c0_14, %c0_15] : memref<3x3x128x128xf32, #tpu.memory_space<vmem>>, vector<1x1x128x128xf32>
    %12 = vector.shape_cast %11 : vector<1x1x128x128xf32> to vector<128x128xf32>
    %cst_16 = arith.constant dense<0.000000e+00> : vector<128x128xf32>
    %13 = tpu.matmul %10, %12, %cst_16 {dimension_numbers = #tpu.dot_dimension_numbers<[1], [0], [0], [1], [0, 0, 1, 1], [], []>} : vector<128x128xf32>, vector<128x128xf32>, vector<128x128xf32> -> vector<128x128xf32>
    %14 = arith.addf %8, %13 : vector<128x128xf32>
    %c2 = arith.constant 2 : index
    %c0_17 = arith.constant 0 : index
    %c0_18 = arith.constant 0 : index
    %c0_19 = arith.constant 0 : index
    %15 = vector.load %arg2[%c2, %c0_17, %c0_18, %c0_19] : memref<3x1x160x128xf32, #tpu.memory_space<vmem>>, vector<1x1x128x128xf32>
    %16 = vector.shape_cast %15 : vector<1x1x128x128xf32> to vector<128x128xf32>
    %c0_20 = arith.constant 0 : index
    %c2_21 = arith.constant 2 : index
    %c0_22 = arith.constant 0 : index
    %c0_23 = arith.constant 0 : index
    %17 = vector.load %arg3[%c0_20, %c2_21, %c0_22, %c0_23] : memref<3x3x128x128xf32, #tpu.memory_space<vmem>>, vector<1x1x128x128xf32>
    %18 = vector.shape_cast %17 : vector<1x1x128x128xf32> to vector<128x128xf32>
    %cst_24 = arith.constant dense<0.000000e+00> : vector<128x128xf32>
    %19 = tpu.matmul %16, %18, %cst_24 {dimension_numbers = #tpu.dot_dimension_numbers<[1], [0], [0], [1], [0, 0, 1, 1], [], []>} : vector<128x128xf32>, vector<128x128xf32>, vector<128x128xf32> -> vector<128x128xf32>
    %20 = arith.addf %14, %19 : vector<128x128xf32>
    %c0_25 = arith.constant 0 : index
    %c0_26 = arith.constant 0 : index
    %c16 = arith.constant 16 : index
    %c0_27 = arith.constant 0 : index
    %21 = vector.load %arg2[%c0_25, %c0_26, %c16, %c0_27] : memref<3x1x160x128xf32, #tpu.memory_space<vmem>>, vector<1x1x128x128xf32>
    %22 = vector.shape_cast %21 : vector<1x1x128x128xf32> to vector<128x128xf32>
    %c1_28 = arith.constant 1 : index
    %c0_29 = arith.constant 0 : index
    %c0_30 = arith.constant 0 : index
    %c0_31 = arith.constant 0 : index
    %23 = vector.load %arg3[%c1_28, %c0_29, %c0_30, %c0_31] : memref<3x3x128x128xf32, #tpu.memory_space<vmem>>, vector<1x1x128x128xf32>
    %24 = vector.shape_cast %23 : vector<1x1x128x128xf32> to vector<128x128xf32>
    %cst_32 = arith.constant dense<0.000000e+00> : vector<128x128xf32>
    %25 = tpu.matmul %22, %24, %cst_32 {dimension_numbers = #tpu.dot_dimension_numbers<[1], [0], [0], [1], [0, 0, 1, 1], [], []>} : vector<128x128xf32>, vector<128x128xf32>, vector<128x128xf32> -> vector<128x128xf32>
    %26 = arith.addf %20, %25 : vector<128x128xf32>
    %c1_33 = arith.constant 1 : index
    %c0_34 = arith.constant 0 : index
    %c16_35 = arith.constant 16 : index
    %c0_36 = arith.constant 0 : index
    %27 = vector.load %arg2[%c1_33, %c0_34, %c16_35, %c0_36] : memref<3x1x160x128xf32, #tpu.memory_space<vmem>>, vector<1x1x128x128xf32>
    %28 = vector.shape_cast %27 : vector<1x1x128x128xf32> to vector<128x128xf32>
    %c1_37 = arith.constant 1 : index
    %c1_38 = arith.constant 1 : index
    %c0_39 = arith.constant 0 : index
    %c0_40 = arith.constant 0 : index
    %29 = vector.load %arg3[%c1_37, %c1_38, %c0_39, %c0_40] : memref<3x3x128x128xf32, #tpu.memory_space<vmem>>, vector<1x1x128x128xf32>
    %30 = vector.shape_cast %29 : vector<1x1x128x128xf32> to vector<128x128xf32>
    %cst_41 = arith.constant dense<0.000000e+00> : vector<128x128xf32>
    %31 = tpu.matmul %28, %30, %cst_41 {dimension_numbers = #tpu.dot_dimension_numbers<[1], [0], [0], [1], [0, 0, 1, 1], [], []>} : vector<128x128xf32>, vector<128x128xf32>, vector<128x128xf32> -> vector<128x128xf32>
    %32 = arith.addf %26, %31 : vector<128x128xf32>
    %c2_42 = arith.constant 2 : index
    %c0_43 = arith.constant 0 : index
    %c16_44 = arith.constant 16 : index
    %c0_45 = arith.constant 0 : index
    %33 = vector.load %arg2[%c2_42, %c0_43, %c16_44, %c0_45] : memref<3x1x160x128xf32, #tpu.memory_space<vmem>>, vector<1x1x128x128xf32>
    %34 = vector.shape_cast %33 : vector<1x1x128x128xf32> to vector<128x128xf32>
    %c1_46 = arith.constant 1 : index
    %c2_47 = arith.constant 2 : index
    %c0_48 = arith.constant 0 : index
    %c0_49 = arith.constant 0 : index
    %35 = vector.load %arg3[%c1_46, %c2_47, %c0_48, %c0_49] : memref<3x3x128x128xf32, #tpu.memory_space<vmem>>, vector<1x1x128x128xf32>
    %36 = vector.shape_cast %35 : vector<1x1x128x128xf32> to vector<128x128xf32>
    %cst_50 = arith.constant dense<0.000000e+00> : vector<128x128xf32>
    %37 = tpu.matmul %34, %36, %cst_50 {dimension_numbers = #tpu.dot_dimension_numbers<[1], [0], [0], [1], [0, 0, 1, 1], [], []>} : vector<128x128xf32>, vector<128x128xf32>, vector<128x128xf32> -> vector<128x128xf32>
    %38 = arith.addf %32, %37 : vector<128x128xf32>
    %c0_51 = arith.constant 0 : index
    %c0_52 = arith.constant 0 : index
    %c32 = arith.constant 32 : index
    %c0_53 = arith.constant 0 : index
    %39 = vector.load %arg2[%c0_51, %c0_52, %c32, %c0_53] : memref<3x1x160x128xf32, #tpu.memory_space<vmem>>, vector<1x1x128x128xf32>
    %40 = vector.shape_cast %39 : vector<1x1x128x128xf32> to vector<128x128xf32>
    %c2_54 = arith.constant 2 : index
    %c0_55 = arith.constant 0 : index
    %c0_56 = arith.constant 0 : index
    %c0_57 = arith.constant 0 : index
    %41 = vector.load %arg3[%c2_54, %c0_55, %c0_56, %c0_57] : memref<3x3x128x128xf32, #tpu.memory_space<vmem>>, vector<1x1x128x128xf32>
    %42 = vector.shape_cast %41 : vector<1x1x128x128xf32> to vector<128x128xf32>
    %cst_58 = arith.constant dense<0.000000e+00> : vector<128x128xf32>
    %43 = tpu.matmul %40, %42, %cst_58 {dimension_numbers = #tpu.dot_dimension_numbers<[1], [0], [0], [1], [0, 0, 1, 1], [], []>} : vector<128x128xf32>, vector<128x128xf32>, vector<128x128xf32> -> vector<128x128xf32>
    %44 = arith.addf %38, %43 : vector<128x128xf32>
    %c1_59 = arith.constant 1 : index
    %c0_60 = arith.constant 0 : index
    %c32_61 = arith.constant 32 : index
    %c0_62 = arith.constant 0 : index
    %45 = vector.load %arg2[%c1_59, %c0_60, %c32_61, %c0_62] : memref<3x1x160x128xf32, #tpu.memory_space<vmem>>, vector<1x1x128x128xf32>
    %46 = vector.shape_cast %45 : vector<1x1x128x128xf32> to vector<128x128xf32>
    %c2_63 = arith.constant 2 : index
    %c1_64 = arith.constant 1 : index
    %c0_65 = arith.constant 0 : index
    %c0_66 = arith.constant 0 : index
    %47 = vector.load %arg3[%c2_63, %c1_64, %c0_65, %c0_66] : memref<3x3x128x128xf32, #tpu.memory_space<vmem>>, vector<1x1x128x128xf32>
    %48 = vector.shape_cast %47 : vector<1x1x128x128xf32> to vector<128x128xf32>
    %cst_67 = arith.constant dense<0.000000e+00> : vector<128x128xf32>
    %49 = tpu.matmul %46, %48, %cst_67 {dimension_numbers = #tpu.dot_dimension_numbers<[1], [0], [0], [1], [0, 0, 1, 1], [], []>} : vector<128x128xf32>, vector<128x128xf32>, vector<128x128xf32> -> vector<128x128xf32>
    %50 = arith.addf %44, %49 : vector<128x128xf32>
    %c2_68 = arith.constant 2 : index
    %c0_69 = arith.constant 0 : index
    %c32_70 = arith.constant 32 : index
    %c0_71 = arith.constant 0 : index
    %51 = vector.load %arg2[%c2_68, %c0_69, %c32_70, %c0_71] : memref<3x1x160x128xf32, #tpu.memory_space<vmem>>, vector<1x1x128x128xf32>
    %52 = vector.shape_cast %51 : vector<1x1x128x128xf32> to vector<128x128xf32>
    %c2_72 = arith.constant 2 : index
    %c2_73 = arith.constant 2 : index
    %c0_74 = arith.constant 0 : index
    %c0_75 = arith.constant 0 : index
    %53 = vector.load %arg3[%c2_72, %c2_73, %c0_74, %c0_75] : memref<3x3x128x128xf32, #tpu.memory_space<vmem>>, vector<1x1x128x128xf32>
    %54 = vector.shape_cast %53 : vector<1x1x128x128xf32> to vector<128x128xf32>
    %cst_76 = arith.constant dense<0.000000e+00> : vector<128x128xf32>
    %55 = tpu.matmul %52, %54, %cst_76 {dimension_numbers = #tpu.dot_dimension_numbers<[1], [0], [0], [1], [0, 0, 1, 1], [], []>} : vector<128x128xf32>, vector<128x128xf32>, vector<128x128xf32> -> vector<128x128xf32>
    %56 = arith.addf %50, %55 : vector<128x128xf32>
    %c0_77 = arith.constant 0 : index
    %c0_78 = arith.constant 0 : index
    %c0_79 = arith.constant 0 : index
    %57 = vector.load %arg5[%c0_77, %c0_78, %c0_79] : memref<1x128x128xf32, #tpu.memory_space<vmem>>, vector<1x128x128xf32>
    %58 = vector.shape_cast %57 : vector<1x128x128xf32> to vector<128x128xf32>
    %c0_80 = arith.constant 0 : index
    %c0_81 = arith.constant 0 : index
    %59 = vector.load %arg6[%c0_80, %c0_81] : memref<128x128xf32, #tpu.memory_space<vmem>>, vector<128x128xf32>
    %cst_82 = arith.constant dense<0.000000e+00> : vector<128x128xf32>
    %60 = tpu.matmul %58, %59, %cst_82 {dimension_numbers = #tpu.dot_dimension_numbers<[1], [0], [0], [1], [0, 0, 1, 1], [], []>} : vector<128x128xf32>, vector<128x128xf32>, vector<128x128xf32> -> vector<128x128xf32>
    %c0_83 = arith.constant 0 : index
    %c0_84 = arith.constant 0 : index
    %61 = vector.load %arg7[%c0_83, %c0_84] : memref<1x128xf32, #tpu.memory_space<vmem>>, vector<1x128xf32>
    %62 = vector.broadcast %61 : vector<1x128xf32> to vector<128x128xf32>
    %63 = arith.addf %60, %62 : vector<128x128xf32>
    %64 = arith.addf %56, %63 : vector<128x128xf32>
    %cst_85 = arith.constant 0.000000e+00 : f32
    %65 = vector.broadcast %cst_85 : f32 to vector<128x128xf32>
    %66 = arith.maximumf %64, %65 : vector<128x128xf32>
    %c0_86 = arith.constant 0 : index
    %c0_87 = arith.constant 0 : index
    %c0_88 = arith.constant 0 : index
    %67 = vector.load %arg8[%c0_86, %c0_87, %c0_88] : memref<1x128x128xf32, #tpu.memory_space<vmem>>, vector<1x128x128xf32>
    %68 = vector.shape_cast %67 : vector<1x128x128xf32> to vector<128x128xf32>
    %69 = vector.shape_cast %66 : vector<128x128xf32> to vector<1x128x128xf32>
    tpu.vector_store %arg8[%c0_86, %c0_87, %c0_88], %69 {strides = array<i32>} : memref<1x128x128xf32, #tpu.memory_space<vmem>>, vector<1x128x128xf32>,
    return
  }
  func.func @transform_0(%arg0: i32, %arg1: i32) -> (i32, i32, i32, i32) {
    %c0_i32 = arith.constant 0 : i32
    %c0_i32_0 = arith.constant 0 : i32
    %c0_i32_1 = arith.constant 0 : i32
    %c0_i32_2 = arith.constant 0 : i32
    return %c0_i32, %arg1, %c0_i32_0, %c0_i32_1 : i32, i32, i32, i32
  }
  func.func @transform_1(%arg0: i32, %arg1: i32) -> (i32, i32, i32, i32) {
    %c0_i32 = arith.constant 0 : i32
    %c0_i32_0 = arith.constant 0 : i32
    %c0_i32_1 = arith.constant 0 : i32
    %c0_i32_2 = arith.constant 0 : i32
    return %c0_i32, %c0_i32_0, %c0_i32_1, %arg0 : i32, i32, i32, i32
  }
  func.func @transform_2(%arg0: i32, %arg1: i32) -> (i32, i32) {
    %c0_i32 = arith.constant 0 : i32
    %c0_i32_0 = arith.constant 0 : i32
    return %c0_i32, %arg0 : i32, i32
  }
  func.func @transform_3(%arg0: i32, %arg1: i32) -> (i32, i32, i32) {
    %c0_i32 = arith.constant 0 : i32
    %c0_i32_0 = arith.constant 0 : i32
    %c0_i32_1 = arith.constant 0 : i32
    return %arg1, %c0_i32, %c0_i32_0 : i32, i32, i32
  }
  func.func @transform_4(%arg0: i32, %arg1: i32) -> (i32, i32) {
    %c0_i32 = arith.constant 0 : i32
    %c0_i32_0 = arith.constant 0 : i32
    return %c0_i32, %arg0 : i32, i32
  }
  func.func @transform_5(%arg0: i32, %arg1: i32) -> (i32, i32) {
    %c0_i32 = arith.constant 0 : i32
    %c0_i32_0 = arith.constant 0 : i32
    return %c0_i32, %arg0 : i32, i32
  }
  func.func @transform_6(%arg0: i32, %arg1: i32) -> (i32, i32, i32) {
    %c0_i32 = arith.constant 0 : i32
    %c0_i32_0 = arith.constant 0 : i32
    return %arg1, %c0_i32, %arg0 : i32, i32, i32
  }
}

</mosaic_0001>

<llo_original>
// kernel: basic_block_forward.2
$region0: #{basic_block_forward.2}
  #allocation0 [shape = 'u32[]', space=smem, size = 0x4, offset = 0x4, fixed_abs, tag = 'smem constant byte address 0x4 - core index']
  #allocation1 [shape = 'u32[144,128]{1,0:T(1,128)}', space=vmem, size = 0x12000, scoped, tag = 'internal scratch']
  %s0 = inlined_call_operand.vmem [shape: f32[6,2,144,128], index: 0, kind: input, shape index: {}]
  %s1 = inlined_call_operand.vmem [shape: f32[3,3,128,128], index: 1, kind: input, shape index: {}]
  %s2 = inlined_call_operand.vmem [shape: f32[1,128], index: 2, kind: input, shape index: {}]
  %s3 = inlined_call_operand.vmem [shape: f32[2,128,128], index: 3, kind: output, shape index: {}]
  %s4 = sld [smem:[#allocation0]]
  $region83: #{basic_block_forward.2} parent=0
    _
  %s6 = ssub.s32 1, %s4
  %s7 = scalar_select 0, %s6, %s4
  $region1: #{basic_block_forward.2} parent=0
    #allocation2 [shape = 'u8[884736]{0}', space=vmem, size = 0xd8000, scoped, tag = 'input window, operand 0']
    loop: start=0, step=1, limit=4
    $region2: #{basic_block_forward.2} parent=1 // loop_pre_header
      _
    $region3: #{basic_block_forward.2} parent=1 // loop_header
      %s9 = sphi 0, %s13
      %p10 = scmp.ge.s32.totalorder %s9, 4
      %s16 = sphi 0, %s28
      %s17 = sphi 0, %s24
      %s18 = sphi 0, %s16
      %s19 = sphi 0, %s17
      %s20 = sphi 0, %s18
      %s21 = sphi 0, %s19
      %s31 = sphi 0, %s33
      %s34 = sphi 0, %s31
      %s35 = sphi 0, %s34
      %s51 = sphi 0, %s35
      %s57 = sphi 0, %s59
      %s60 = sphi 0, %s57
      %s61 = sphi 0, %s60
      %s77 = sphi 0, %s61
      %s83 = sphi 0, %s85
      %s86 = sphi 0, %s83
      %s87 = sphi 0, %s86
      %s103 = sphi 0, %s87
      %s111 = sphi 0, %s113
      %s114 = sphi 0, %s111
      %s115 = sphi 0, %s114
      %s131 = sphi 0, %s115
    $region4: #{basic_block_forward.2} parent=1 // loop_header_branch
      %12 = sbr.rel (%p10) target = $region8
    $region5: #{basic_block_forward.2} parent=1 // loop_body
      %s14 = ssub.s32 %s9, 1
      %s15 = ssub.s32 %s9, 2
      %s22 = sadd.s32 1, %s17
      %p23 = scmp.ge.s32.totalorder %s22, 2
      %s24 = scalar_select %p23, 0, %s22
      %s25 = sadd.s32 1, %s16
      %s26 = scalar_select %p23, %s25, %s16
      %p27 = scmp.ge.s32.totalorder %s26, 1
      %s28 = scalar_select %p27, 0, %s26
      %s29 = ssub.s32 %s17, %s24
      %p30 = scmp.eq.s32.totalorder %s29, 0
      %s32 = sadd.s32 %s31, 1
      %s33 = scalar_select %p30, %s31, %s32
      %p36 = pneg %p30
      %p37 = scmp.eq.s32.totalorder %s9, 1
      %p38 = por %p36, %p37
      %p39 = scmp.ne.s32.totalorder %s31, %s34
      %p40 = scmp.eq.s32.totalorder %s9, 0
      %p41 = por %p39, %p40
      %p42 = scmp.ne.s32.totalorder %s31, %s34
      %p43 = scmp.eq.s32.totalorder %s14, 1
      %p44 = por %p42, %p43
      %p45 = scmp.ne.s32.totalorder %s34, %s35
      %p46 = scmp.eq.s32.totalorder %s14, 0
      %p47 = por %p45, %p46
      %p48 = scmp.ne.s32.totalorder %s34, %s35
      %p49 = scmp.eq.s32.totalorder %s15, 1
      %p50 = por %p48, %p49
      %p52 = scmp.ne.s32.totalorder %s35, %s51
      %p53 = scmp.eq.s32.totalorder %s15, 0
      %p54 = por %p52, %p53
      %s55 = ssub.s32 %s16, %s28
      %p56 = scmp.eq.s32.totalorder %s55, 0
      %s58 = sadd.s32 %s57, 1
      %s59 = scalar_select %p56, %s57, %s58
      %p62 = pneg %p56
      %p63 = scmp.eq.s32.totalorder %s9, 1
      %p64 = por %p62, %p63
      %p65 = scmp.ne.s32.totalorder %s57, %s60
      %p66 = scmp.eq.s32.totalorder %s9, 0
      %p67 = por %p65, %p66
      %p68 = scmp.ne.s32.totalorder %s57, %s60
      %p69 = scmp.eq.s32.totalorder %s14, 1
      %p70 = por %p68, %p69
      %p71 = scmp.ne.s32.totalorder %s60, %s61
      %p72 = scmp.eq.s32.totalorder %s14, 0
      %p73 = por %p71, %p72
      %p74 = scmp.ne.s32.totalorder %s60, %s61
      %p75 = scmp.eq.s32.totalorder %s15, 1
      %p76 = por %p74, %p75
      %p78 = scmp.ne.s32.totalorder %s61, %s77
      %p79 = scmp.eq.s32.totalorder %s15, 0
      %p80 = por %p78, %p79
      %s81 = ssub.s32 %s16, %s28
      %p82 = scmp.eq.s32.totalorder %s81, 0
      %s84 = sadd.s32 %s83, 1
      %s85 = scalar_select %p82, %s83, %s84
      %p88 = pneg %p82
      %p89 = scmp.eq.s32.totalorder %s9, 1
      %p90 = por %p88, %p89
      %p91 = scmp.ne.s32.totalorder %s83, %s86
      %p92 = scmp.eq.s32.totalorder %s9, 0
      %p93 = por %p91, %p92
      %p94 = scmp.ne.s32.totalorder %s83, %s86
      %p95 = scmp.eq.s32.totalorder %s14, 1
      %p96 = por %p94, %p95
      %p97 = scmp.ne.s32.totalorder %s86, %s87
      %p98 = scmp.eq.s32.totalorder %s14, 0
      %p99 = por %p97, %p98
      %p100 = scmp.ne.s32.totalorder %s86, %s87
      %p101 = scmp.eq.s32.totalorder %s15, 1
      %p102 = por %p100, %p101
      %p104 = scmp.ne.s32.totalorder %s87, %s103
      %p105 = scmp.eq.s32.totalorder %s15, 0
      %p106 = por %p104, %p105
      %s107 = ssub.s32 %s17, %s24
      %s108 = ssub.s32 %s16, %s28
      %s109 = sor.u32 %s107, %s108
      %p110 = scmp.eq.s32.totalorder %s109, 0
      %s112 = sadd.s32 %s111, 1
      %s113 = scalar_select %p110, %s111, %s112
      %p116 = pneg %p110
      %p117 = scmp.eq.s32.totalorder %s9, 1
      %p118 = por %p116, %p117
      %p119 = scmp.ne.s32.totalorder %s111, %s114
      %p120 = scmp.eq.s32.totalorder %s9, 0
      %p121 = por %p119, %p120
      %p122 = scmp.ne.s32.totalorder %s111, %s114
      %p123 = scmp.eq.s32.totalorder %s14, 1
      %p124 = por %p122, %p123
      %p125 = scmp.ne.s32.totalorder %s114, %s115
      %p126 = scmp.eq.s32.totalorder %s14, 0
      %p127 = por %p125, %p126
      %p128 = scmp.ne.s32.totalorder %s114, %s115
      %p129 = scmp.eq.s32.totalorder %s15, 1
      %p130 = por %p128, %p129
      %p132 = scmp.ne.s32.totalorder %s115, %s131
      %p133 = scmp.eq.s32.totalorder %s15, 0
      %p134 = por %p132, %p133
      %p135 = scmp.le.s32.totalorder 1, %s9
      %p136 = scmp.lt.s32.totalorder %s9, 3
      %p137 = pnand %p135, %p136
      %p138 = pneg %p137
      // Predicated region
      $region9: #{basic_block_forward.2} parent=5 // pred_check
        _
      $region10: #{basic_block_forward.2} parent=5 // pred_check_branch
        %140 = sbr.rel (%p137) target = $region12
      $region11: #{basic_block_forward.2} parent=5 // pred_region
        %s141 = ssub.s32 %s9, 1
        // Predicated region
        $region13: #{basic_block_forward.2} parent=11 // pred_check
          %p142 = pneg %p73
        $region14: #{basic_block_forward.2} parent=11 // pred_check_branch
          %144 = sbr.rel (%p142) target = $region16
        $region15: #{basic_block_forward.2} parent=11 // pred_region
          %p145 = scmp.lt.s32.totalorder %s18, 0
          %s146 = scalar_select %p145, %s18, 0
          %s147 = smul.addr %s146, 8
          %s148 = scalar_lea.vmem %s1, %s147
        $region16: #{basic_block_forward.2} parent=11 // pred_fallthru
          _
        // Predicated region
        $region17: #{basic_block_forward.2} parent=11 // pred_check
          %p149 = pneg %p99
        $region18: #{basic_block_forward.2} parent=11 // pred_check_branch
          %151 = sbr.rel (%p149) target = $region20
        $region19: #{basic_block_forward.2} parent=11 // pred_region
          %p152 = scmp.lt.s32.totalorder %s18, 0
          %s153 = scalar_select %p152, %s18, 0
          %s154 = scalar_lea.vmem %s2, %s153
        $region20: #{basic_block_forward.2} parent=11 // pred_fallthru
          _
      $region12: #{basic_block_forward.2} parent=5 // pred_fallthru
        _
      %p155 = scmp.lt.s32.totalorder %s9, 2
      // Predicated region
      $region21: #{basic_block_forward.2} parent=5 // pred_check
        %p156 = pneg %p155
      $region22: #{basic_block_forward.2} parent=5 // pred_check_branch
        %158 = sbr.rel (%p156) target = $region24
      $region23: #{basic_block_forward.2} parent=5 // pred_region
        // Predicated region
        $region25: #{basic_block_forward.2} parent=23 // pred_check
          %p159 = pneg %p41
        $region26: #{basic_block_forward.2} parent=23 // pred_check_branch
          %161 = sbr.rel (%p159) target = $region28
        $region27: #{basic_block_forward.2} parent=23 // pred_region
          %s162 = sand.u32 %s31, 1
          %s163 = sand.u32 %s31, 1
          %s164 = smul.addr %s163, 864
          %s165 = scalar_lea.vmem [#allocation2], %s164
          %s166 = smul.addr %s17, 18
          %s167 = smul.addr %s166, 8
          %s168 = scalar_lea.vmem %s0, %s167
          // Predicated region
          $region29: #{basic_block_forward.2} parent=27 // pred_check
            _
          $region30: #{basic_block_forward.2} parent=27 // pred_check_branch
            %170 = sbr.rel (0) target = $region32
          $region31: #{basic_block_forward.2} parent=27 // pred_region
            // Predicated region
            $region33: #{basic_block_forward.2} parent=31 // pred_check
              _
            $region34: #{basic_block_forward.2} parent=31 // pred_check_branch
              %172 = sbr.rel (0) target = $region36
            $region35: #{basic_block_forward.2} parent=31 // pred_region
              // Predicated region
              $region48: #{basic_block_forward.2} parent=35 // pred_check
                _
              $region49: #{basic_block_forward.2} parent=35 // pred_check_branch
                %401 = sbr.rel (0) target = $region51
              $region50: #{basic_block_forward.2} parent=35 // pred_region
                loop: start=0, step=1, limit=1
                $region52: #{basic_block_forward.2} parent=50 // loop_pre_header
                  _
                $region53: #{basic_block_forward.2} parent=50 // loop_header
                  %s403 = sphi 0, %s407
                  %p404 = scmp.ge.s32.totalorder %s403, 1
                  %s408 = sphi %s168, %s168
                  %s409 = sphi %s165, %s165
                $region54: #{basic_block_forward.2} parent=50 // loop_header_branch
                  %406 = sbr.rel (%p404) target = $region58
                $region55: #{basic_block_forward.2} parent=50 // loop_body
                  %v410 = vld [vmem:[%s408] sm:$0xff]
                  %411 = vst [vmem:[%s409] sm:$0xff] %v410
                  %v412 = vld [vmem:[%s408 + $0x8] sm:$0xff]
                  %413 = vst [vmem:[%s409 + $0x8] sm:$0xff] %v412
                  %v414 = vld [vmem:[%s408 + $0x10] sm:$0xff]
                  %415 = vst [vmem:[%s409 + $0x10] sm:$0xff] %v414
                  %v416 = vld [vmem:[%s408 + $0x18] sm:$0xff]
                  %417 = vst [vmem:[%s409 + $0x18] sm:$0xff] %v416
                  %v418 = vld [vmem:[%s408 + $0x20] sm:$0xff]
                  %419 = vst [vmem:[%s409 + $0x20] sm:$0xff] %v418
                  %v420 = vld [vmem:[%s408 + $0x28] sm:$0xff]
                  %421 = vst [vmem:[%s409 + $0x28] sm:$0xff] %v420
                  %v422 = vld [vmem:[%s408 + $0x30] sm:$0xff]
                  %423 = vst [vmem:[%s409 + $0x30] sm:$0xff] %v422
                  %v424 = vld [vmem:[%s408 + $0x38] sm:$0xff]
                  %425 = vst [vmem:[%s409 + $0x38] sm:$0xff] %v424
                  %v426 = vld [vmem:[%s408 + $0x40] sm:$0xff]
                  %427 = vst [vmem:[%s409 + $0x40] sm:$0xff] %v426
                  %v428 = vld [vmem:[%s408 + $0x48] sm:$0xff]
                  %429 = vst [vmem:[%s409 + $0x48] sm:$0xff] %v428
                  %v430 = vld [vmem:[%s408 + $0x50] sm:$0xff]
                  %431 = vst [vmem:[%s409 + $0x50] sm:$0xff] %v430
                  %v432 = vld [vmem:[%s408 + $0x58] sm:$0xff]
                  %433 = vst [vmem:[%s409 + $0x58] sm:$0xff] %v432
                  %v434 = vld [vmem:[%s408 + $0x60] sm:$0xff]
                  %435 = vst [vmem:[%s409 + $0x60] sm:$0xff] %v434
                  %v436 = vld [vmem:[%s408 + $0x68] sm:$0xff]
                  %437 = vst [vmem:[%s409 + $0x68] sm:$0xff] %v436
                  %v438 = vld [vmem:[%s408 + $0x70] sm:$0xff]
                  %439 = vst [vmem:[%s409 + $0x70] sm:$0xff] %v438
                  %v440 = vld [vmem:[%s408 + $0x78] sm:$0xff]
                  %441 = vst [vmem:[%s409 + $0x78] sm:$0xff] %v440
                  %v442 = vld [vmem:[%s408 + $0x80] sm:$0xff]
                  %443 = vst [vmem:[%s409 + $0x80] sm:$0xff] %v442
                  %v444 = vld [vmem:[%s408 + $0x88] sm:$0xff]
                  %445 = vst [vmem:[%s409 + $0x88] sm:$0xff] %v444
                  %v446 = vld [vmem:[%s408 + $0x120] sm:$0xff]
                  %447 = vst [vmem:[%s409 + $0x90] sm:$0xff] %v446
                  %v448 = vld [vmem:[%s408 + $0x128] sm:$0xff]
                  %449 = vst [vmem:[%s409 + $0x98] sm:$0xff] %v448
                  %v450 = vld [vmem:[%s408 + $0x130] sm:$0xff]
                  %451 = vst [vmem:[%s409 + $0xa0] sm:$0xff] %v450
                  %v452 = vld [vmem:[%s408 + $0x138] sm:$0xff]
                  %453 = vst [vmem:[%s409 + $0xa8] sm:$0xff] %v452
                  %v454 = vld [vmem:[%s408 + $0x140] sm:$0xff]
                  %455 = vst [vmem:[%s409 + $0xb0] sm:$0xff] %v454
                  %v456 = vld [vmem:[%s408 + $0x148] sm:$0xff]
                  %457 = vst [vmem:[%s409 + $0xb8] sm:$0xff] %v456
                  %v458 = vld [vmem:[%s408 + $0x150] sm:$0xff]
                  %459 = vst [vmem:[%s409 + $0xc0] sm:$0xff] %v458
                  %v460 = vld [vmem:[%s408 + $0x158] sm:$0xff]
                  %461 = vst [vmem:[%s409 + $0xc8] sm:$0xff] %v460
                  %v462 = vld [vmem:[%s408 + $0x160] sm:$0xff]
                  %463 = vst [vmem:[%s409 + $0xd0] sm:$0xff] %v462
                  %v464 = vld [vmem:[%s408 + $0x168] sm:$0xff]
                  %465 = vst [vmem:[%s409 + $0xd8] sm:$0xff] %v464
                  %v466 = vld [vmem:[%s408 + $0x170] sm:$0xff]
                  %467 = vst [vmem:[%s409 + $0xe0] sm:$0xff] %v466
                  %v468 = vld [vmem:[%s408 + $0x178] sm:$0xff]
                  %469 = vst [vmem:[%s409 + $0xe8] sm:$0xff] %v468
                  %v470 = vld [vmem:[%s408 + $0x180] sm:$0xff]
                  %471 = vst [vmem:[%s409 + $0xf0] sm:$0xff] %v470
                  %v472 = vld [vmem:[%s408 + $0x188] sm:$0xff]
                  %473 = vst [vmem:[%s409 + $0xf8] sm:$0xff] %v472
                  %v474 = vld [vmem:[%s408 + $0x190] sm:$0xff]
                  %475 = vst [vmem:[%s409 + $0x100] sm:$0xff] %v474
                  %v476 = vld [vmem:[%s408 + $0x198] sm:$0xff]
                  %477 = vst [vmem:[%s409 + $0x108] sm:$0xff] %v476
                  %v478 = vld [vmem:[%s408 + $0x1a0] sm:$0xff]
                  %479 = vst [vmem:[%s409 + $0x110] sm:$0xff] %v478
                  %v480 = vld [vmem:[%s408 + $0x1a8] sm:$0xff]
                  %481 = vst [vmem:[%s409 + $0x118] sm:$0xff] %v480
                  %v482 = vld [vmem:[%s408 + $0x240] sm:$0xff]
                  %483 = vst [vmem:[%s409 + $0x120] sm:$0xff] %v482
                  %v484 = vld [vmem:[%s408 + $0x248] sm:$0xff]
                  %485 = vst [vmem:[%s409 + $0x128] sm:$0xff] %v484
                  %v486 = vld [vmem:[%s408 + $0x250] sm:$0xff]
                  %487 = vst [vmem:[%s409 + $0x130] sm:$0xff] %v486
                  %v488 = vld [vmem:[%s408 + $0x258] sm:$0xff]
                  %489 = vst [vmem:[%s409 + $0x138] sm:$0xff] %v488
                  %v490 = vld [vmem:[%s408 + $0x260] sm:$0xff]
                  %491 = vst [vmem:[%s409 + $0x140] sm:$0xff] %v490
                  %v492 = vld [vmem:[%s408 + $0x268] sm:$0xff]
                  %493 = vst [vmem:[%s409 + $0x148] sm:$0xff] %v492
                  %v494 = vld [vmem:[%s408 + $0x270] sm:$0xff]
                  %495 = vst [vmem:[%s409 + $0x150] sm:$0xff] %v494
                  %v496 = vld [vmem:[%s408 + $0x278] sm:$0xff]
                  %497 = vst [vmem:[%s409 + $0x158] sm:$0xff] %v496
                  %v498 = vld [vmem:[%s408 + $0x280] sm:$0xff]
                  %499 = vst [vmem:[%s409 + $0x160] sm:$0xff] %v498
                  %v500 = vld [vmem:[%s408 + $0x288] sm:$0xff]
                  %501 = vst [vmem:[%s409 + $0x168] sm:$0xff] %v500
                  %v502 = vld [vmem:[%s408 + $0x290] sm:$0xff]
                  %503 = vst [vmem:[%s409 + $0x170] sm:$0xff] %v502
                  %v504 = vld [vmem:[%s408 + $0x298] sm:$0xff]
                  %505 = vst [vmem:[%s409 + $0x178] sm:$0xff] %v504
                  %v506 = vld [vmem:[%s408 + $0x2a0] sm:$0xff]
                  %507 = vst [vmem:[%s409 + $0x180] sm:$0xff] %v506
                  %v508 = vld [vmem:[%s408 + $0x2a8] sm:$0xff]
                  %509 = vst [vmem:[%s409 + $0x188] sm:$0xff] %v508
                  %v510 = vld [vmem:[%s408 + $0x2b0] sm:$0xff]
                  %511 = vst [vmem:[%s409 + $0x190] sm:$0xff] %v510
                  %v512 = vld [vmem:[%s408 + $0x2b8] sm:$0xff]
                  %513 = vst [vmem:[%s409 + $0x198] sm:$0xff] %v512
                  %v514 = vld [vmem:[%s408 + $0x2c0] sm:$0xff]
                  %515 = vst [vmem:[%s409 + $0x1a0] sm:$0xff] %v514
                  %v516 = vld [vmem:[%s408 + $0x2c8] sm:$0xff]
                  %517 = vst [vmem:[%s409 + $0x1a8] sm:$0xff] %v516
                  %v518 = vld [vmem:[%s408 + $0x360] sm:$0xff]
                  %519 = vst [vmem:[%s409 + $0x1b0] sm:$0xff] %v518
                  %v520 = vld [vmem:[%s408 + $0x368] sm:$0xff]
                  %521 = vst [vmem:[%s409 + $0x1b8] sm:$0xff] %v520
                  %v522 = vld [vmem:[%s408 + $0x370] sm:$0xff]
                  %523 = vst [vmem:[%s409 + $0x1c0] sm:$0xff] %v522
                  %v524 = vld [vmem:[%s408 + $0x378] sm:$0xff]
                  %525 = vst [vmem:[%s409 + $0x1c8] sm:$0xff] %v524
                  %v526 = vld [vmem:[%s408 + $0x380] sm:$0xff]
                  %527 = vst [vmem:[%s409 + $0x1d0] sm:$0xff] %v526
                  %v528 = vld [vmem:[%s408 + $0x388] sm:$0xff]
                  %529 = vst [vmem:[%s409 + $0x1d8] sm:$0xff] %v528
                  %v530 = vld [vmem:[%s408 + $0x390] sm:$0xff]
                  %531 = vst [vmem:[%s409 + $0x1e0] sm:$0xff] %v530
                  %v532 = vld [vmem:[%s408 + $0x398] sm:$0xff]
                  %533 = vst [vmem:[%s409 + $0x1e8] sm:$0xff] %v532
                  %v534 = vld [vmem:[%s408 + $0x3a0] sm:$0xff]
                  %535 = vst [vmem:[%s409 + $0x1f0] sm:$0xff] %v534
                  %v536 = vld [vmem:[%s408 + $0x3a8] sm:$0xff]
                  %537 = vst [vmem:[%s409 + $0x1f8] sm:$0xff] %v536
                  %v538 = vld [vmem:[%s408 + $0x3b0] sm:$0xff]
                  %539 = vst [vmem:[%s409 + $0x200] sm:$0xff] %v538
                  %v540 = vld [vmem:[%s408 + $0x3b8] sm:$0xff]
                  %541 = vst [vmem:[%s409 + $0x208] sm:$0xff] %v540
                  %v542 = vld [vmem:[%s408 + $0x3c0] sm:$0xff]
                  %543 = vst [vmem:[%s409 + $0x210] sm:$0xff] %v542
                  %v544 = vld [vmem:[%s408 + $0x3c8] sm:$0xff]
                  %545 = vst [vmem:[%s409 + $0x218] sm:$0xff] %v544
                  %v546 = vld [vmem:[%s408 + $0x3d0] sm:$0xff]
                  %547 = vst [vmem:[%s409 + $0x220] sm:$0xff] %v546
                  %v548 = vld [vmem:[%s408 + $0x3d8] sm:$0xff]
                  %549 = vst [vmem:[%s409 + $0x228] sm:$0xff] %v548
                  %v550 = vld [vmem:[%s408 + $0x3e0] sm:$0xff]
                  %551 = vst [vmem:[%s409 + $0x230] sm:$0xff] %v550
                  %v552 = vld [vmem:[%s408 + $0x3e8] sm:$0xff]
                  %553 = vst [vmem:[%s409 + $0x238] sm:$0xff] %v552
                  %v554 = vld [vmem:[%s408 + $0x480] sm:$0xff]
                  %555 = vst [vmem:[%s409 + $0x240] sm:$0xff] %v554
                  %v556 = vld [vmem:[%s408 + $0x488] sm:$0xff]
                  %557 = vst [vmem:[%s409 + $0x248] sm:$0xff] %v556
                  %v558 = vld [vmem:[%s408 + $0x490] sm:$0xff]
                  %559 = vst [vmem:[%s409 + $0x250] sm:$0xff] %v558
                  %v560 = vld [vmem:[%s408 + $0x498] sm:$0xff]
                  %561 = vst [vmem:[%s409 + $0x258] sm:$0xff] %v560
                  %v562 = vld [vmem:[%s408 + $0x4a0] sm:$0xff]
                  %563 = vst [vmem:[%s409 + $0x260] sm:$0xff] %v562
                  %v564 = vld [vmem:[%s408 + $0x4a8] sm:$0xff]
                  %565 = vst [vmem:[%s409 + $0x268] sm:$0xff] %v564
                  %v566 = vld [vmem:[%s408 + $0x4b0] sm:$0xff]
                  %567 = vst [vmem:[%s409 + $0x270] sm:$0xff] %v566
                  %v568 = vld [vmem:[%s408 + $0x4b8] sm:$0xff]
                  %569 = vst [vmem:[%s409 + $0x278] sm:$0xff] %v568
                  %v570 = vld [vmem:[%s408 + $0x4c0] sm:$0xff]
                  %571 = vst [vmem:[%s409 + $0x280] sm:$0xff] %v570
                  %v572 = vld [vmem:[%s408 + $0x4c8] sm:$0xff]
                  %573 = vst [vmem:[%s409 + $0x288] sm:$0xff] %v572
                  %v574 = vld [vmem:[%s408 + $0x4d0] sm:$0xff]
                  %575 = vst [vmem:[%s409 + $0x290] sm:$0xff] %v574
                  %v576 = vld [vmem:[%s408 + $0x4d8] sm:$0xff]
                  %577 = vst [vmem:[%s409 + $0x298] sm:$0xff] %v576
                  %v578 = vld [vmem:[%s408 + $0x4e0] sm:$0xff]
                  %579 = vst [vmem:[%s409 + $0x2a0] sm:$0xff] %v578
                  %v580 = vld [vmem:[%s408 + $0x4e8] sm:$0xff]
                  %581 = vst [vmem:[%s409 + $0x2a8] sm:$0xff] %v580
                  %v582 = vld [vmem:[%s408 + $0x4f0] sm:$0xff]
                  %583 = vst [vmem:[%s409 + $0x2b0] sm:$0xff] %v582
                  %v584 = vld [vmem:[%s408 + $0x4f8] sm:$0xff]
                  %585 = vst [vmem:[%s409 + $0x2b8] sm:$0xff] %v584
                  %v586 = vld [vmem:[%s408 + $0x500] sm:$0xff]
                  %587 = vst [vmem:[%s409 + $0x2c0] sm:$0xff] %v586
                  %v588 = vld [vmem:[%s408 + $0x508] sm:$0xff]
                  %589 = vst [vmem:[%s409 + $0x2c8] sm:$0xff] %v588
                  %v590 = vld [vmem:[%s408 + $0x5a0] sm:$0xff]
                  %591 = vst [vmem:[%s409 + $0x2d0] sm:$0xff] %v590
                  %v592 = vld [vmem:[%s408 + $0x5a8] sm:$0xff]
                  %593 = vst [vmem:[%s409 + $0x2d8] sm:$0xff] %v592
                  %v594 = vld [vmem:[%s408 + $0x5b0] sm:$0xff]
                  %595 = vst [vmem:[%s409 + $0x2e0] sm:$0xff] %v594
                  %v596 = vld [vmem:[%s408 + $0x5b8] sm:$0xff]
                  %597 = vst [vmem:[%s409 + $0x2e8] sm:$0xff] %v596
                  %v598 = vld [vmem:[%s408 + $0x5c0] sm:$0xff]
                  %599 = vst [vmem:[%s409 + $0x2f0] sm:$0xff] %v598
                  %v600 = vld [vmem:[%s408 + $0x5c8] sm:$0xff]
                  %601 = vst [vmem:[%s409 + $0x2f8] sm:$0xff] %v600
                  %v602 = vld [vmem:[%s408 + $0x5d0] sm:$0xff]
                  %603 = vst [vmem:[%s409 + $0x300] sm:$0xff] %v602
                  %v604 = vld [vmem:[%s408 + $0x5d8] sm:$0xff]
                  %605 = vst [vmem:[%s409 + $0x308] sm:$0xff] %v604
                  %v606 = vld [vmem:[%s408 + $0x5e0] sm:$0xff]
                  %607 = vst [vmem:[%s409 + $0x310] sm:$0xff] %v606
                  %v608 = vld [vmem:[%s408 + $0x5e8] sm:$0xff]
                  %609 = vst [vmem:[%s409 + $0x318] sm:$0xff] %v608
                  %v610 = vld [vmem:[%s408 + $0x5f0] sm:$0xff]
                  %611 = vst [vmem:[%s409 + $0x320] sm:$0xff] %v610
                  %v612 = vld [vmem:[%s408 + $0x5f8] sm:$0xff]
                  %613 = vst [vmem:[%s409 + $0x328] sm:$0xff] %v612
                  %v614 = vld [vmem:[%s408 + $0x600] sm:$0xff]
                  %615 = vst [vmem:[%s409 + $0x330] sm:$0xff] %v614
                  %v616 = vld [vmem:[%s408 + $0x608] sm:$0xff]
                  %617 = vst [vmem:[%s409 + $0x338] sm:$0xff] %v616
                  %v618 = vld [vmem:[%s408 + $0x610] sm:$0xff]
                  %619 = vst [vmem:[%s409 + $0x340] sm:$0xff] %v618
                  %v620 = vld [vmem:[%s408 + $0x618] sm:$0xff]
                  %621 = vst [vmem:[%s409 + $0x348] sm:$0xff] %v620
                  %v622 = vld [vmem:[%s408 + $0x620] sm:$0xff]
                  %623 = vst [vmem:[%s409 + $0x350] sm:$0xff] %v622
                  %v624 = vld [vmem:[%s408 + $0x628] sm:$0xff]
                  %625 = vst [vmem:[%s409 + $0x358] sm:$0xff] %v624
                $region56: #{basic_block_forward.2} parent=50 // loop_footer
                  %s407 = sadd.s32 1, %s403
                $region57: #{basic_block_forward.2} parent=50 // loop_footer_branch
                  %402 = sbr.rel target = $region53
                $region58: #{basic_block_forward.2} parent=50 // loop_exit
                  _
              $region51: #{basic_block_forward.2} parent=35 // pred_fallthru
                _
              // Predicated region
              $region59: #{basic_block_forward.2} parent=35 // pred_check
                _
              $region60: #{basic_block_forward.2} parent=35 // pred_check_branch
                %627 = sbr.rel target = $region62
              $region61: #{basic_block_forward.2} parent=35 // pred_region
                _
              $region62: #{basic_block_forward.2} parent=35 // pred_fallthru
                _
            $region36: #{basic_block_forward.2} parent=31 // pred_fallthru
              _
            // Predicated region
            $region37: #{basic_block_forward.2} parent=31 // pred_check
              _
            $region38: #{basic_block_forward.2} parent=31 // pred_check_branch
              %174 = sbr.rel target = $region40
            $region39: #{basic_block_forward.2} parent=31 // pred_region
              loop: start=0, step=1, limit=1
              $region41: #{basic_block_forward.2} parent=39 // loop_pre_header
                _
              $region42: #{basic_block_forward.2} parent=39 // loop_header
                %s177 = sphi 0, %s181
                %p178 = scmp.ge.s32.totalorder %s177, 1
                %s182 = sphi %s168, %s168
                %s183 = sphi %s165, %s165
              $region43: #{basic_block_forward.2} parent=39 // loop_header_branch
                %180 = sbr.rel (%p178) target = $region47
              $region44: #{basic_block_forward.2} parent=39 // loop_body
                %v184 = vld [vmem:[%s182] sm:$0xff]
                %185 = vst [vmem:[%s183] sm:$0xff] %v184
                %v186 = vld [vmem:[%s182 + $0x8] sm:$0xff]
                %187 = vst [vmem:[%s183 + $0x8] sm:$0xff] %v186
                %v188 = vld [vmem:[%s182 + $0x10] sm:$0xff]
                %189 = vst [vmem:[%s183 + $0x10] sm:$0xff] %v188
                %v190 = vld [vmem:[%s182 + $0x18] sm:$0xff]
                %191 = vst [vmem:[%s183 + $0x18] sm:$0xff] %v190
                %v192 = vld [vmem:[%s182 + $0x20] sm:$0xff]
                %193 = vst [vmem:[%s183 + $0x20] sm:$0xff] %v192
                %v194 = vld [vmem:[%s182 + $0x28] sm:$0xff]
                %195 = vst [vmem:[%s183 + $0x28] sm:$0xff] %v194
                %v196 = vld [vmem:[%s182 + $0x30] sm:$0xff]
                %197 = vst [vmem:[%s183 + $0x30] sm:$0xff] %v196
                %v198 = vld [vmem:[%s182 + $0x38] sm:$0xff]
                %199 = vst [vmem:[%s183 + $0x38] sm:$0xff] %v198
                %v200 = vld [vmem:[%s182 + $0x40] sm:$0xff]
                %201 = vst [vmem:[%s183 + $0x40] sm:$0xff] %v200
                %v202 = vld [vmem:[%s182 + $0x48] sm:$0xff]
                %203 = vst [vmem:[%s183 + $0x48] sm:$0xff] %v202
                %v204 = vld [vmem:[%s182 + $0x50] sm:$0xff]
                %205 = vst [vmem:[%s183 + $0x50] sm:$0xff] %v204
                %v206 = vld [vmem:[%s182 + $0x58] sm:$0xff]
                %207 = vst [vmem:[%s183 + $0x58] sm:$0xff] %v206
                %v208 = vld [vmem:[%s182 + $0x60] sm:$0xff]
                %209 = vst [vmem:[%s183 + $0x60] sm:$0xff] %v208
                %v210 = vld [vmem:[%s182 + $0x68] sm:$0xff]
                %211 = vst [vmem:[%s183 + $0x68] sm:$0xff] %v210
                %v212 = vld [vmem:[%s182 + $0x70] sm:$0xff]
                %213 = vst [vmem:[%s183 + $0x70] sm:$0xff] %v212
                %v214 = vld [vmem:[%s182 + $0x78] sm:$0xff]
                %215 = vst [vmem:[%s183 + $0x78] sm:$0xff] %v214
                %v216 = vld [vmem:[%s182 + $0x80] sm:$0xff]
                %217 = vst [vmem:[%s183 + $0x80] sm:$0xff] %v216
                %v218 = vld [vmem:[%s182 + $0x88] sm:$0xff]
                %219 = vst [vmem:[%s183 + $0x88] sm:$0xff] %v218
                %v220 = vld [vmem:[%s182 + $0x120] sm:$0xff]
                %221 = vst [vmem:[%s183 + $0x90] sm:$0xff] %v220
                %v222 = vld [vmem:[%s182 + $0x128] sm:$0xff]
                %223 = vst [vmem:[%s183 + $0x98] sm:$0xff] %v222
                %v224 = vld [vmem:[%s182 + $0x130] sm:$0xff]
                %225 = vst [vmem:[%s183 + $0xa0] sm:$0xff] %v224
                %v226 = vld [vmem:[%s182 + $0x138] sm:$0xff]
                %227 = vst [vmem:[%s183 + $0xa8] sm:$0xff] %v226
                %v228 = vld [vmem:[%s182 + $0x140] sm:$0xff]
                %229 = vst [vmem:[%s183 + $0xb0] sm:$0xff] %v228
                %v230 = vld [vmem:[%s182 + $0x148] sm:$0xff]
                %231 = vst [vmem:[%s183 + $0xb8] sm:$0xff] %v230
                %v232 = vld [vmem:[%s182 + $0x150] sm:$0xff]
                %233 = vst [vmem:[%s183 + $0xc0] sm:$0xff] %v232
                %v234 = vld [vmem:[%s182 + $0x158] sm:$0xff]
                %235 = vst [vmem:[%s183 + $0xc8] sm:$0xff] %v234
                %v236 = vld [vmem:[%s182 + $0x160] sm:$0xff]
                %237 = vst [vmem:[%s183 + $0xd0] sm:$0xff] %v236
                %v238 = vld [vmem:[%s182 + $0x168] sm:$0xff]
                %239 = vst [vmem:[%s183 + $0xd8] sm:$0xff] %v238
                %v240 = vld [vmem:[%s182 + $0x170] sm:$0xff]
                %241 = vst [vmem:[%s183 + $0xe0] sm:$0xff] %v240
                %v242 = vld [vmem:[%s182 + $0x178] sm:$0xff]
                %243 = vst [vmem:[%s183 + $0xe8] sm:$0xff] %v242
                %v244 = vld [vmem:[%s182 + $0x180] sm:$0xff]
                %245 = vst [vmem:[%s183 + $0xf0] sm:$0xff] %v244
                %v246 = vld [vmem:[%s182 + $0x188] sm:$0xff]
                %247 = vst [vmem:[%s183 + $0xf8] sm:$0xff] %v246
                %v248 = vld [vmem:[%s182 + $0x190] sm:$0xff]
                %249 = vst [vmem:[%s183 + $0x100] sm:$0xff] %v248
                %v250 = vld [vmem:[%s182 + $0x198] sm:$0xff]
                %251 = vst [vmem:[%s183 + $0x108] sm:$0xff] %v250
                %v252 = vld [vmem:[%s182 + $0x1a0] sm:$0xff]
                %253 = vst [vmem:[%s183 + $0x110] sm:$0xff] %v252
                %v254 = vld [vmem:[%s182 + $0x1a8] sm:$0xff]
                %255 = vst [vmem:[%s183 + $0x118] sm:$0xff] %v254
                %v256 = vld [vmem:[%s182 + $0x240] sm:$0xff]
                %257 = vst [vmem:[%s183 + $0x120] sm:$0xff] %v256
                %v258 = vld [vmem:[%s182 + $0x248] sm:$0xff]
                %259 = vst [vmem:[%s183 + $0x128] sm:$0xff] %v258
                %v260 = vld [vmem:[%s182 + $0x250] sm:$0xff]
                %261 = vst [vmem:[%s183 + $0x130] sm:$0xff] %v260
                %v262 = vld [vmem:[%s182 + $0x258] sm:$0xff]
                %263 = vst [vmem:[%s183 + $0x138] sm:$0xff] %v262
                %v264 = vld [vmem:[%s182 + $0x260] sm:$0xff]
                %265 = vst [vmem:[%s183 + $0x140] sm:$0xff] %v264
                %v266 = vld [vmem:[%s182 + $0x268] sm:$0xff]
                %267 = vst [vmem:[%s183 + $0x148] sm:$0xff] %v266
                %v268 = vld [vmem:[%s182 + $0x270] sm:$0xff]
                %269 = vst [vmem:[%s183 + $0x150] sm:$0xff] %v268
                %v270 = vld [vmem:[%s182 + $0x278] sm:$0xff]
                %271 = vst [vmem:[%s183 + $0x158] sm:$0xff] %v270
                %v272 = vld [vmem:[%s182 + $0x280] sm:$0xff]
                %273 = vst [vmem:[%s183 + $0x160] sm:$0xff] %v272
                %v274 = vld [vmem:[%s182 + $0x288] sm:$0xff]
                %275 = vst [vmem:[%s183 + $0x168] sm:$0xff] %v274
                %v276 = vld [vmem:[%s182 + $0x290] sm:$0xff]
                %277 = vst [vmem:[%s183 + $0x170] sm:$0xff] %v276
                %v278 = vld [vmem:[%s182 + $0x298] sm:$0xff]
                %279 = vst [vmem:[%s183 + $0x178] sm:$0xff] %v278
                %v280 = vld [vmem:[%s182 + $0x2a0] sm:$0xff]
                %281 = vst [vmem:[%s183 + $0x180] sm:$0xff] %v280
                %v282 = vld [vmem:[%s182 + $0x2a8] sm:$0xff]
                %283 = vst [vmem:[%s183 + $0x188] sm:$0xff] %v282
                %v284 = vld [vmem:[%s182 + $0x2b0] sm:$0xff]
                %285 = vst [vmem:[%s183 + $0x190] sm:$0xff] %v284
                %v286 = vld [vmem:[%s182 + $0x2b8] sm:$0xff]
                %287 = vst [vmem:[%s183 + $0x198] sm:$0xff] %v286
                %v288 = vld [vmem:[%s182 + $0x2c0] sm:$0xff]
                %289 = vst [vmem:[%s183 + $0x1a0] sm:$0xff] %v288
                %v290 = vld [vmem:[%s182 + $0x2c8] sm:$0xff]
                %291 = vst [vmem:[%s183 + $0x1a8] sm:$0xff] %v290
                %v292 = vld [vmem:[%s182 + $0x360] sm:$0xff]
                %293 = vst [vmem:[%s183 + $0x1b0] sm:$0xff] %v292
                %v294 = vld [vmem:[%s182 + $0x368] sm:$0xff]
                %295 = vst [vmem:[%s183 + $0x1b8] sm:$0xff] %v294
                %v296 = vld [vmem:[%s182 + $0x370] sm:$0xff]
                %297 = vst [vmem:[%s183 + $0x1c0] sm:$0xff] %v296
                %v298 = vld [vmem:[%s182 + $0x378] sm:$0xff]
                %299 = vst [vmem:[%s183 + $0x1c8] sm:$0xff] %v298
                %v300 = vld [vmem:[%s182 + $0x380] sm:$0xff]
                %301 = vst [vmem:[%s183 + $0x1d0] sm:$0xff] %v300
                %v302 = vld [vmem:[%s182 + $0x388] sm:$0xff]
                %303 = vst [vmem:[%s183 + $0x1d8] sm:$0xff] %v302
                %v304 = vld [vmem:[%s182 + $0x390] sm:$0xff]
                %305 = vst [vmem:[%s183 + $0x1e0] sm:$0xff] %v304
                %v306 = vld [vmem:[%s182 + $0x398] sm:$0xff]
                %307 = vst [vmem:[%s183 + $0x1e8] sm:$0xff] %v306
                %v308 = vld [vmem:[%s182 + $0x3a0] sm:$0xff]
                %309 = vst [vmem:[%s183 + $0x1f0] sm:$0xff] %v308
                %v310 = vld [vmem:[%s182 + $0x3a8] sm:$0xff]
                %311 = vst [vmem:[%s183 + $0x1f8] sm:$0xff] %v310
                %v312 = vld [vmem:[%s182 + $0x3b0] sm:$0xff]
                %313 = vst [vmem:[%s183 + $0x200] sm:$0xff] %v312
                %v314 = vld [vmem:[%s182 + $0x3b8] sm:$0xff]
                %315 = vst [vmem:[%s183 + $0x208] sm:$0xff] %v314
                %v316 = vld [vmem:[%s182 + $0x3c0] sm:$0xff]
                %317 = vst [vmem:[%s183 + $0x210] sm:$0xff] %v316
                %v318 = vld [vmem:[%s182 + $0x3c8] sm:$0xff]
                %319 = vst [vmem:[%s183 + $0x218] sm:$0xff] %v318
                %v320 = vld [vmem:[%s182 + $0x3d0] sm:$0xff]
                %321 = vst [vmem:[%s183 + $0x220] sm:$0xff] %v320
                %v322 = vld [vmem:[%s182 + $0x3d8] sm:$0xff]
                %323 = vst [vmem:[%s183 + $0x228] sm:$0xff] %v322
                %v324 = vld [vmem:[%s182 + $0x3e0] sm:$0xff]
                %325 = vst [vmem:[%s183 + $0x230] sm:$0xff] %v324
                %v326 = vld [vmem:[%s182 + $0x3e8] sm:$0xff]
                %327 = vst [vmem:[%s183 + $0x238] sm:$0xff] %v326
                %v328 = vld [vmem:[%s182 + $0x480] sm:$0xff]
                %329 = vst [vmem:[%s183 + $0x240] sm:$0xff] %v328
                %v330 = vld [vmem:[%s182 + $0x488] sm:$0xff]
                %331 = vst [vmem:[%s183 + $0x248] sm:$0xff] %v330
                %v332 = vld [vmem:[%s182 + $0x490] sm:$0xff]
                %333 = vst [vmem:[%s183 + $0x250] sm:$0xff] %v332
                %v334 = vld [vmem:[%s182 + $0x498] sm:$0xff]
                %335 = vst [vmem:[%s183 + $0x258] sm:$0xff] %v334
                %v336 = vld [vmem:[%s182 + $0x4a0] sm:$0xff]
                %337 = vst [vmem:[%s183 + $0x260] sm:$0xff] %v336
                %v338 = vld [vmem:[%s182 + $0x4a8] sm:$0xff]
                %339 = vst [vmem:[%s183 + $0x268] sm:$0xff] %v338
                %v340 = vld [vmem:[%s182 + $0x4b0] sm:$0xff]
                %341 = vst [vmem:[%s183 + $0x270] sm:$0xff] %v340
                %v342 = vld [vmem:[%s182 + $0x4b8] sm:$0xff]
                %343 = vst [vmem:[%s183 + $0x278] sm:$0xff] %v342
                %v344 = vld [vmem:[%s182 + $0x4c0] sm:$0xff]
                %345 = vst [vmem:[%s183 + $0x280] sm:$0xff] %v344
                %v346 = vld [vmem:[%s182 + $0x4c8] sm:$0xff]
                %347 = vst [vmem:[%s183 + $0x288] sm:$0xff] %v346
                %v348 = vld [vmem:[%s182 + $0x4d0] sm:$0xff]
                %349 = vst [vmem:[%s183 + $0x290] sm:$0xff] %v348
                %v350 = vld [vmem:[%s182 + $0x4d8] sm:$0xff]
                %351 = vst [vmem:[%s183 + $0x298] sm:$0xff] %v350
                %v352 = vld [vmem:[%s182 + $0x4e0] sm:$0xff]
                %353 = vst [vmem:[%s183 + $0x2a0] sm:$0xff] %v352
                %v354 = vld [vmem:[%s182 + $0x4e8] sm:$0xff]
                %355 = vst [vmem:[%s183 + $0x2a8] sm:$0xff] %v354
                %v356 = vld [vmem:[%s182 + $0x4f0] sm:$0xff]
                %357 = vst [vmem:[%s183 + $0x2b0] sm:$0xff] %v356
                %v358 = vld [vmem:[%s182 + $0x4f8] sm:$0xff]
                %359 = vst [vmem:[%s183 + $0x2b8] sm:$0xff] %v358
                %v360 = vld [vmem:[%s182 + $0x500] sm:$0xff]
                %361 = vst [vmem:[%s183 + $0x2c0] sm:$0xff] %v360
                %v362 = vld [vmem:[%s182 + $0x508] sm:$0xff]
                %363 = vst [vmem:[%s183 + $0x2c8] sm:$0xff] %v362
                %v364 = vld [vmem:[%s182 + $0x5a0] sm:$0xff]
                %365 = vst [vmem:[%s183 + $0x2d0] sm:$0xff] %v364
                %v366 = vld [vmem:[%s182 + $0x5a8] sm:$0xff]
                %367 = vst [vmem:[%s183 + $0x2d8] sm:$0xff] %v366
                %v368 = vld [vmem:[%s182 + $0x5b0] sm:$0xff]
                %369 = vst [vmem:[%s183 + $0x2e0] sm:$0xff] %v368
                %v370 = vld [vmem:[%s182 + $0x5b8] sm:$0xff]
                %371 = vst [vmem:[%s183 + $0x2e8] sm:$0xff] %v370
                %v372 = vld [vmem:[%s182 + $0x5c0] sm:$0xff]
                %373 = vst [vmem:[%s183 + $0x2f0] sm:$0xff] %v372
                %v374 = vld [vmem:[%s182 + $0x5c8] sm:$0xff]
                %375 = vst [vmem:[%s183 + $0x2f8] sm:$0xff] %v374
                %v376 = vld [vmem:[%s182 + $0x5d0] sm:$0xff]
                %377 = vst [vmem:[%s183 + $0x300] sm:$0xff] %v376
                %v378 = vld [vmem:[%s182 + $0x5d8] sm:$0xff]
                %379 = vst [vmem:[%s183 + $0x308] sm:$0xff] %v378
                %v380 = vld [vmem:[%s182 + $0x5e0] sm:$0xff]
                %381 = vst [vmem:[%s183 + $0x310] sm:$0xff] %v380
                %v382 = vld [vmem:[%s182 + $0x5e8] sm:$0xff]
                %383 = vst [vmem:[%s183 + $0x318] sm:$0xff] %v382
                %v384 = vld [vmem:[%s182 + $0x5f0] sm:$0xff]
                %385 = vst [vmem:[%s183 + $0x320] sm:$0xff] %v384
                %v386 = vld [vmem:[%s182 + $0x5f8] sm:$0xff]
                %387 = vst [vmem:[%s183 + $0x328] sm:$0xff] %v386
                %v388 = vld [vmem:[%s182 + $0x600] sm:$0xff]
                %389 = vst [vmem:[%s183 + $0x330] sm:$0xff] %v388
                %v390 = vld [vmem:[%s182 + $0x608] sm:$0xff]
                %391 = vst [vmem:[%s183 + $0x338] sm:$0xff] %v390
                %v392 = vld [vmem:[%s182 + $0x610] sm:$0xff]
                %393 = vst [vmem:[%s183 + $0x340] sm:$0xff] %v392
                %v394 = vld [vmem:[%s182 + $0x618] sm:$0xff]
                %395 = vst [vmem:[%s183 + $0x348] sm:$0xff] %v394
                %v396 = vld [vmem:[%s182 + $0x620] sm:$0xff]
                %397 = vst [vmem:[%s183 + $0x350] sm:$0xff] %v396
                %v398 = vld [vmem:[%s182 + $0x628] sm:$0xff]
                %399 = vst [vmem:[%s183 + $0x358] sm:$0xff] %v398
              $region45: #{basic_block_forward.2} parent=39 // loop_footer
                %s181 = sadd.s32 1, %s177
              $region46: #{basic_block_forward.2} parent=39 // loop_footer_branch
                %176 = sbr.rel target = $region42
              $region47: #{basic_block_forward.2} parent=39 // loop_exit
                _
            $region40: #{basic_block_forward.2} parent=31 // pred_fallthru
              _
          $region32: #{basic_block_forward.2} parent=27 // pred_fallthru
            _
          %628 = vnop
        $region28: #{basic_block_forward.2} parent=23 // pred_fallthru
          _
      $region24: #{basic_block_forward.2} parent=5 // pred_fallthru
        _
      %p629 = scmp.le.s32.totalorder 1, %s9
      %p630 = scmp.lt.s32.totalorder %s9, 3
      %p631 = pnand %p629, %p630
      %p632 = pneg %p631
      // Predicated region
      $region63: #{basic_block_forward.2} parent=5 // pred_check
        _
      $region64: #{basic_block_forward.2} parent=5 // pred_check_branch
        %634 = sbr.rel (%p631) target = $region66
      $region65: #{basic_block_forward.2} parent=5 // pred_region
        %s635 = ssub.s32 %s9, 1
        %s636 = sand.u32 %s34, 1
        %s637 = sand.u32 %s34, 1
        %s638 = smul.addr %s637, 864
        %s639 = scalar_lea.vmem [#allocation2], %s638
        // Predicated region
        $region67: #{basic_block_forward.2} parent=65 // pred_check
          %p640 = pneg %p47
        $region68: #{basic_block_forward.2} parent=65 // pred_check_branch
          %642 = sbr.rel (%p640) target = $region70
        $region69: #{basic_block_forward.2} parent=65 // pred_region
          _
        $region70: #{basic_block_forward.2} parent=65 // pred_fallthru
          _
        %s643 = sand.u32 %s34, 1
        %s644 = sand.u32 %s34, 1
        %s645 = smul.addr %s644, 864
        %s646 = scalar_lea.vmem [#allocation2], %s645
        %p647 = pneg %p47
        %p648 = pneg %p44
        %p649 = scmp.lt.s32.totalorder %s18, 0
        %s650 = scalar_select %p649, %s18, 0
        %s651 = smul.addr %s650, 8
        %s652 = scalar_lea.vmem %s1, %s651
        %p653 = pneg %p73
        %p654 = pneg %p70
        %p655 = scmp.lt.s32.totalorder %s18, 0
        %s656 = scalar_select %p655, %s18, 0
        %s657 = scalar_lea.vmem %s2, %s656
        %p658 = pneg %p99
        %p659 = pneg %p96
        %p660 = pneg %p127
        %p661 = pneg %p124
        %p662 = scmp.lt.s32.totalorder %s19, 1
        %s663 = scalar_select %p662, %s19, 1
        %p664 = scmp.lt.s32.totalorder %s18, 0
        %s665 = scalar_select %p664, %s18, 0
        %s666 = smul.addr %s663, 16
        %s667 = sadd.s32 %s665, %s666
        %s668 = smul.addr %s667, 8
        %s669 = scalar_lea.vmem %s3, %s668
        %p670 = scmp.lt.s32.totalorder %s18, 0
        %s671 = scalar_select %p670, %s18, 0
        %s672 = smul.addr %s671, 8
        %s673 = scalar_lea.vmem %s1, %s672
        %p674 = scmp.lt.s32.totalorder %s18, 0
        %s675 = scalar_select %p674, %s18, 0
        %s676 = scalar_lea.vmem %s2, %s675
        %p677 = scmp.lt.s32.totalorder %s19, 1
        %s678 = scalar_select %p677, %s19, 1
        %p679 = scmp.lt.s32.totalorder %s18, 0
        %s680 = scalar_select %p679, %s18, 0
        %s681 = smul.addr %s678, 16
        %s682 = sadd.s32 %s680, %s681
        %s683 = smul.addr %s682, 8
        %s684 = scalar_lea.vmem %s3, %s683
        %v685 = vld [vmem:[%s676] sm:$0x1]
        %v687 = vlaneseq
        %v688 = vshrl.u32 %v687, 7
        %v689 = vsub.s32 0, %v688
        %v690 = vrot.slane %v685, %v689
        %v692 = vld [vmem:[%s639] sm:$0xff]
        %v693 = vld [vmem:[%s639 + $0x8] sm:$0xff]
        %v694 = vld [vmem:[%s639 + $0x10] sm:$0xff]
        %v695 = vld [vmem:[%s639 + $0x18] sm:$0xff]
        %v696 = vld [vmem:[%s639 + $0x20] sm:$0xff]
        %v697 = vld [vmem:[%s639 + $0x28] sm:$0xff]
        %v698 = vld [vmem:[%s639 + $0x30] sm:$0xff]
        %v699 = vld [vmem:[%s639 + $0x38] sm:$0xff]
        %v700 = vld [vmem:[%s639 + $0x40] sm:$0xff]
        %v701 = vld [vmem:[%s639 + $0x48] sm:$0xff]
        %v702 = vld [vmem:[%s639 + $0x50] sm:$0xff]
        %v703 = vld [vmem:[%s639 + $0x58] sm:$0xff]
        %v704 = vld [vmem:[%s639 + $0x60] sm:$0xff]
        %v705 = vld [vmem:[%s639 + $0x68] sm:$0xff]
        %v706 = vld [vmem:[%s639 + $0x70] sm:$0xff]
        %v707 = vld [vmem:[%s639 + $0x78] sm:$0xff]
        %v708 = vld [vmem:[%s673] sm:$0xff]
        %v709 = vld [vmem:[%s673 + $0x8] sm:$0xff]
        %v710 = vld [vmem:[%s673 + $0x10] sm:$0xff]
        %v711 = vld [vmem:[%s673 + $0x18] sm:$0xff]
        %v712 = vld [vmem:[%s673 + $0x20] sm:$0xff]
        %v713 = vld [vmem:[%s673 + $0x28] sm:$0xff]
        %v714 = vld [vmem:[%s673 + $0x30] sm:$0xff]
        %v715 = vld [vmem:[%s673 + $0x38] sm:$0xff]
        %v716 = vld [vmem:[%s673 + $0x40] sm:$0xff]
        %v717 = vld [vmem:[%s673 + $0x48] sm:$0xff]
        %v718 = vld [vmem:[%s673 + $0x50] sm:$0xff]
        %v719 = vld [vmem:[%s673 + $0x58] sm:$0xff]
        %v720 = vld [vmem:[%s673 + $0x60] sm:$0xff]
        %v721 = vld [vmem:[%s673 + $0x68] sm:$0xff]
        %v722 = vld [vmem:[%s673 + $0x70] sm:$0xff]
        %v723 = vld [vmem:[%s673 + $0x78] sm:$0xff]
        %724 = vmatprep.subr.mxu0 0.0
        %725 = vmatpush1.msra.mxu0 %v708
        %726 = vmatprep.subr.mxu0 0.0
        %727 = vmatpush1.msra.mxu0 %v709
        %728 = vmatprep.subr.mxu0 0.0
        %729 = vmatpush1.msra.mxu0 %v710
        %730 = vmatprep.subr.mxu0 0.0
        %731 = vmatpush1.msra.mxu0 %v711
        %732 = vmatprep.subr.mxu0 0.0
        %733 = vmatpush1.msra.mxu0 %v712
        %734 = vmatprep.subr.mxu0 0.0
        %735 = vmatpush1.msra.mxu0 %v713
        %736 = vmatprep.subr.mxu0 0.0
        %737 = vmatpush1.msra.mxu0 %v714
        %738 = vmatprep.subr.mxu0 0.0
        %739 = vmatpush1.msra.mxu0 %v715
        %740 = vmatprep.subr.mxu0 0.0
        %741 = vmatpush1.msra.mxu0 %v716
        %742 = vmatprep.subr.mxu0 0.0
        %743 = vmatpush1.msra.mxu0 %v717
        %744 = vmatprep.subr.mxu0 0.0
        %745 = vmatpush1.msra.mxu0 %v718
        %746 = vmatprep.subr.mxu0 0.0
        %747 = vmatpush1.msra.mxu0 %v719
        %748 = vmatprep.subr.mxu0 0.0
        %749 = vmatpush1.msra.mxu0 %v720
        %750 = vmatprep.subr.mxu0 0.0
        %751 = vmatpush1.msra.mxu0 %v721
        %752 = vmatprep.subr.mxu0 0.0
        %753 = vmatpush1.msra.mxu0 %v722
        %754 = vmatprep.subr.mxu0 0.0
        %755 = vmatpush1.msra.mxu0 %v723
        %756 = vmatprep.subr.mxu0 0.0
        %757 = vmatpush1.msra.mxu0 0.0
        %758 = vmatprep.subr.mxu0 0.0
        %759 = vmatpush1.msra.mxu0 0.0
        %760 = vmatprep.subr.mxu0 0.0
        %761 = vmatpush1.msra.mxu0 0.0
        %762 = vmatprep.subr.mxu0 0.0
        %763 = vmatpush1.msra.mxu0 0.0
        %764 = vmatprep.subr.mxu0 0.0
        %765 = vmatpush1.msra.mxu0 0.0
        %766 = vmatprep.subr.mxu0 0.0
        %767 = vmatpush1.msra.mxu0 0.0
        %768 = vmatprep.subr.mxu0 0.0
        %769 = vmatpush1.msra.mxu0 0.0
        %770 = vmatprep.subr.mxu0 0.0
        %771 = vmatpush1.msra.mxu0 0.0
        %772 = vmatprep.subr.mxu0 0.0
        %773 = vmatpush1.msra.mxu0 0.0
        %774 = vmatprep.subr.mxu0 0.0
        %775 = vmatpush1.msra.mxu0 0.0
        %776 = vmatprep.subr.mxu0 0.0
        %777 = vmatpush1.msra.mxu0 0.0
        %778 = vmatprep.subr.mxu0 0.0
        %779 = vmatpush1.msra.mxu0 0.0
        %780 = vmatprep.subr.mxu0 0.0
        %781 = vmatpush1.msra.mxu0 0.0
        %782 = vmatprep.subr.mxu0 0.0
        %783 = vmatpush1.msra.mxu0 0.0
        %784 = vmatprep.subr.mxu0 0.0
        %785 = vmatpush1.msra.mxu0 0.0
        %786 = vmatprep.subr.mxu0 0.0
        %787 = vmatpush1.msra.mxu0 0.0
        %788 = vmatprep.mubr.f32.mxu0 0.0
        %789 = vmatmul.mubr.f32.gmra.mrb[0].mxu0 %v692
        %v790 = vpop.f32.mrb[0].mxu0
        %v791 = vadd.f32 0.0, %v790
        %v792 = vpop.f32.mrb[0].mxu0
        %793 = vmatprep.mubr.f32.mxu0 0.0
        %794 = vmatmul.mubr.f32.gmra.mrb[0].mxu0 %v693
        %v795 = vpop.f32.mrb[0].mxu0
        %v796 = vadd.f32 0.0, %v795
        %v797 = vpop.f32.mrb[0].mxu0
        %798 = vmatprep.mubr.f32.mxu0 0.0
        %799 = vmatmul.mubr.f32.gmra.mrb[0].mxu0 %v694
        %v800 = vpop.f32.mrb[0].mxu0
        %v801 = vadd.f32 0.0, %v800
        %v802 = vpop.f32.mrb[0].mxu0
        %803 = vmatprep.mubr.f32.mxu0 0.0
        %804 = vmatmul.mubr.f32.gmra.mrb[0].mxu0 %v695
        %v805 = vpop.f32.mrb[0].mxu0
        %v806 = vadd.f32 0.0, %v805
        %v807 = vpop.f32.mrb[0].mxu0
        %808 = vmatprep.mubr.f32.mxu0 0.0
        %809 = vmatmul.mubr.f32.gmra.mrb[0].mxu0 %v696
        %v810 = vpop.f32.mrb[0].mxu0
        %v811 = vadd.f32 0.0, %v810
        %v812 = vpop.f32.mrb[0].mxu0
        %813 = vmatprep.mubr.f32.mxu0 0.0
        %814 = vmatmul.mubr.f32.gmra.mrb[0].mxu0 %v697
        %v815 = vpop.f32.mrb[0].mxu0
        %v816 = vadd.f32 0.0, %v815
        %v817 = vpop.f32.mrb[0].mxu0
        %818 = vmatprep.mubr.f32.mxu0 0.0
        %819 = vmatmul.mubr.f32.gmra.mrb[0].mxu0 %v698
        %v820 = vpop.f32.mrb[0].mxu0
        %v821 = vadd.f32 0.0, %v820
        %v822 = vpop.f32.mrb[0].mxu0
        %823 = vmatprep.mubr.f32.mxu0 0.0
        %824 = vmatmul.mubr.f32.gmra.mrb[0].mxu0 %v699
        %v825 = vpop.f32.mrb[0].mxu0
        %v826 = vadd.f32 0.0, %v825
        %v827 = vpop.f32.mrb[0].mxu0
        %828 = vmatprep.mubr.f32.mxu0 0.0
        %829 = vmatmul.mubr.f32.gmra.mrb[0].mxu0 %v700
        %v830 = vpop.f32.mrb[0].mxu0
        %v831 = vadd.f32 0.0, %v830
        %v832 = vpop.f32.mrb[0].mxu0
        %833 = vmatprep.mubr.f32.mxu0 0.0
        %834 = vmatmul.mubr.f32.gmra.mrb[0].mxu0 %v701
        %v835 = vpop.f32.mrb[0].mxu0
        %v836 = vadd.f32 0.0, %v835
        %v837 = vpop.f32.mrb[0].mxu0
        %838 = vmatprep.mubr.f32.mxu0 0.0
        %839 = vmatmul.mubr.f32.gmra.mrb[0].mxu0 %v702
        %v840 = vpop.f32.mrb[0].mxu0
        %v841 = vadd.f32 0.0, %v840
        %v842 = vpop.f32.mrb[0].mxu0
        %843 = vmatprep.mubr.f32.mxu0 0.0
        %844 = vmatmul.mubr.f32.gmra.mrb[0].mxu0 %v703
        %v845 = vpop.f32.mrb[0].mxu0
        %v846 = vadd.f32 0.0, %v845
        %v847 = vpop.f32.mrb[0].mxu0
        %848 = vmatprep.mubr.f32.mxu0 0.0
        %849 = vmatmul.mubr.f32.gmra.mrb[0].mxu0 %v704
        %v850 = vpop.f32.mrb[0].mxu0
        %v851 = vadd.f32 0.0, %v850
        %v852 = vpop.f32.mrb[0].mxu0
        %853 = vmatprep.mubr.f32.mxu0 0.0
        %854 = vmatmul.mubr.f32.gmra.mrb[0].mxu0 %v705
        %v855 = vpop.f32.mrb[0].mxu0
        %v856 = vadd.f32 0.0, %v855
        %v857 = vpop.f32.mrb[0].mxu0
        %858 = vmatprep.mubr.f32.mxu0 0.0
        %859 = vmatmul.mubr.f32.gmra.mrb[0].mxu0 %v706
        %v860 = vpop.f32.mrb[0].mxu0
        %v861 = vadd.f32 0.0, %v860
        %v862 = vpop.f32.mrb[0].mxu0
        %863 = vmatprep.mubr.f32.mxu0 0.0
        %864 = vmatmul.mubr.f32.gmra.mrb[0].mxu0 %v707
        %v865 = vpop.f32.mrb[0].mxu0
        %v866 = vadd.f32 0.0, %v865
        %v867 = vpop.f32.mrb[0].mxu0
        %868 = vdwg.mxu0
        %v869 = vadd.f32 %v690, %v791
        %v870 = vadd.f32 %v690, %v796
        %v871 = vadd.f32 %v690, %v801
        %v872 = vadd.f32 %v690, %v806
        %v873 = vadd.f32 %v690, %v811
        %v874 = vadd.f32 %v690, %v816
        %v875 = vadd.f32 %v690, %v821
        %v876 = vadd.f32 %v690, %v826
        %v877 = vadd.f32 %v690, %v831
        %v878 = vadd.f32 %v690, %v836
        %v879 = vadd.f32 %v690, %v841
        %v880 = vadd.f32 %v690, %v846
        %v881 = vadd.f32 %v690, %v851
        %v882 = vadd.f32 %v690, %v856
        %v883 = vadd.f32 %v690, %v861
        %v884 = vadd.f32 %v690, %v866
        %s885 = scalar_lea.vmem %s639, 288 [#allocation2]
        %v886 = vld [vmem:[%s885] sm:$0xff]
        %v887 = vld [vmem:[%s885 + $0x8] sm:$0xff]
        %v888 = vld [vmem:[%s885 + $0x10] sm:$0xff]
        %v889 = vld [vmem:[%s885 + $0x18] sm:$0xff]
        %v890 = vld [vmem:[%s885 + $0x20] sm:$0xff]
        %v891 = vld [vmem:[%s885 + $0x28] sm:$0xff]
        %v892 = vld [vmem:[%s885 + $0x30] sm:$0xff]
        %v893 = vld [vmem:[%s885 + $0x38] sm:$0xff]
        %v894 = vld [vmem:[%s885 + $0x40] sm:$0xff]
        %v895 = vld [vmem:[%s885 + $0x48] sm:$0xff]
        %v896 = vld [vmem:[%s885 + $0x50] sm:$0xff]
        %v897 = vld [vmem:[%s885 + $0x58] sm:$0xff]
        %v898 = vld [vmem:[%s885 + $0x60] sm:$0xff]
        %v899 = vld [vmem:[%s885 + $0x68] sm:$0xff]
        %v900 = vld [vmem:[%s885 + $0x70] sm:$0xff]
        %v901 = vld [vmem:[%s885 + $0x78] sm:$0xff]
        %s902 = scalar_lea.vmem %s673, 128
        %v903 = vld [vmem:[%s902] sm:$0xff]
        %v904 = vld [vmem:[%s902 + $0x8] sm:$0xff]
        %v905 = vld [vmem:[%s902 + $0x10] sm:$0xff]
        %v906 = vld [vmem:[%s902 + $0x18] sm:$0xff]
        %v907 = vld [vmem:[%s902 + $0x20] sm:$0xff]
        %v908 = vld [vmem:[%s902 + $0x28] sm:$0xff]
        %v909 = vld [vmem:[%s902 + $0x30] sm:$0xff]
        %v910 = vld [vmem:[%s902 + $0x38] sm:$0xff]
        %v911 = vld [vmem:[%s902 + $0x40] sm:$0xff]
        %v912 = vld [vmem:[%s902 + $0x48] sm:$0xff]
        %v913 = vld [vmem:[%s902 + $0x50] sm:$0xff]
        %v914 = vld [vmem:[%s902 + $0x58] sm:$0xff]
        %v915 = vld [vmem:[%s902 + $0x60] sm:$0xff]
        %v916 = vld [vmem:[%s902 + $0x68] sm:$0xff]
        %v917 = vld [vmem:[%s902 + $0x70] sm:$0xff]
        %v918 = vld [vmem:[%s902 + $0x78] sm:$0xff]
        %919 = vmatprep.subr.mxu0 0.0
        %920 = vmatpush1.msra.mxu0 %v903
        %921 = vmatprep.subr.mxu0 0.0
        %922 = vmatpush1.msra.mxu0 %v904
        %923 = vmatprep.subr.mxu0 0.0
        %924 = vmatpush1.msra.mxu0 %v905
        %925 = vmatprep.subr.mxu0 0.0
        %926 = vmatpush1.msra.mxu0 %v906
        %927 = vmatprep.subr.mxu0 0.0
        %928 = vmatpush1.msra.mxu0 %v907
        %929 = vmatprep.subr.mxu0 0.0
        %930 = vmatpush1.msra.mxu0 %v908
        %931 = vmatprep.subr.mxu0 0.0
        %932 = vmatpush1.msra.mxu0 %v909
        %933 = vmatprep.subr.mxu0 0.0
        %934 = vmatpush1.msra.mxu0 %v910
        %935 = vmatprep.subr.mxu0 0.0
        %936 = vmatpush1.msra.mxu0 %v911
        %937 = vmatprep.subr.mxu0 0.0
        %938 = vmatpush1.msra.mxu0 %v912
        %939 = vmatprep.subr.mxu0 0.0
        %940 = vmatpush1.msra.mxu0 %v913
        %941 = vmatprep.subr.mxu0 0.0
        %942 = vmatpush1.msra.mxu0 %v914
        %943 = vmatprep.subr.mxu0 0.0
        %944 = vmatpush1.msra.mxu0 %v915
        %945 = vmatprep.subr.mxu0 0.0
        %946 = vmatpush1.msra.mxu0 %v916
        %947 = vmatprep.subr.mxu0 0.0
        %948 = vmatpush1.msra.mxu0 %v917
        %949 = vmatprep.subr.mxu0 0.0
        %950 = vmatpush1.msra.mxu0 %v918
        %951 = vmatprep.subr.mxu0 0.0
        %952 = vmatpush1.msra.mxu0 0.0
        %953 = vmatprep.subr.mxu0 0.0
        %954 = vmatpush1.msra.mxu0 0.0
        %955 = vmatprep.subr.mxu0 0.0
        %956 = vmatpush1.msra.mxu0 0.0
        %957 = vmatprep.subr.mxu0 0.0
        %958 = vmatpush1.msra.mxu0 0.0
        %959 = vmatprep.subr.mxu0 0.0
        %960 = vmatpush1.msra.mxu0 0.0
        %961 = vmatprep.subr.mxu0 0.0
        %962 = vmatpush1.msra.mxu0 0.0
        %963 = vmatprep.subr.mxu0 0.0
        %964 = vmatpush1.msra.mxu0 0.0
        %965 = vmatprep.subr.mxu0 0.0
        %966 = vmatpush1.msra.mxu0 0.0
        %967 = vmatprep.subr.mxu0 0.0
        %968 = vmatpush1.msra.mxu0 0.0
        %969 = vmatprep.subr.mxu0 0.0
        %970 = vmatpush1.msra.mxu0 0.0
        %971 = vmatprep.subr.mxu0 0.0
        %972 = vmatpush1.msra.mxu0 0.0
        %973 = vmatprep.subr.mxu0 0.0
        %974 = vmatpush1.msra.mxu0 0.0
        %975 = vmatprep.subr.mxu0 0.0
        %976 = vmatpush1.msra.mxu0 0.0
        %977 = vmatprep.subr.mxu0 0.0
        %978 = vmatpush1.msra.mxu0 0.0
        %979 = vmatprep.subr.mxu0 0.0
        %980 = vmatpush1.msra.mxu0 0.0
        %981 = vmatprep.subr.mxu0 0.0
        %982 = vmatpush1.msra.mxu0 0.0
        %983 = vmatprep.mubr.f32.mxu0 0.0
        %984 = vmatmul.mubr.f32.gmra.mrb[0].mxu0 %v886
        %v985 = vpop.f32.mrb[0].mxu0
        %v986 = vadd.f32 0.0, %v985
        %v987 = vpop.f32.mrb[0].mxu0
        %988 = vmatprep.mubr.f32.mxu0 0.0
        %989 = vmatmul.mubr.f32.gmra.mrb[0].mxu0 %v887
        %v990 = vpop.f32.mrb[0].mxu0
        %v991 = vadd.f32 0.0, %v990
        %v992 = vpop.f32.mrb[0].mxu0
        %993 = vmatprep.mubr.f32.mxu0 0.0
        %994 = vmatmul.mubr.f32.gmra.mrb[0].mxu0 %v888
        %v995 = vpop.f32.mrb[0].mxu0
        %v996 = vadd.f32 0.0, %v995
        %v997 = vpop.f32.mrb[0].mxu0
        %998 = vmatprep.mubr.f32.mxu0 0.0
        %999 = vmatmul.mubr.f32.gmra.mrb[0].mxu0 %v889
        %v1000 = vpop.f32.mrb[0].mxu0
        %v1001 = vadd.f32 0.0, %v1000
        %v1002 = vpop.f32.mrb[0].mxu0
        %1003 = vmatprep.mubr.f32.mxu0 0.0
        %1004 = vmatmul.mubr.f32.gmra.mrb[0].mxu0 %v890
        %v1005 = vpop.f32.mrb[0].mxu0
        %v1006 = vadd.f32 0.0, %v1005
        %v1007 = vpop.f32.mrb[0].mxu0
        %1008 = vmatprep.mubr.f32.mxu0 0.0
        %1009 = vmatmul.mubr.f32.gmra.mrb[0].mxu0 %v891
        %v1010 = vpop.f32.mrb[0].mxu0
        %v1011 = vadd.f32 0.0, %v1010
        %v1012 = vpop.f32.mrb[0].mxu0
        %1013 = vmatprep.mubr.f32.mxu0 0.0
        %1014 = vmatmul.mubr.f32.gmra.mrb[0].mxu0 %v892
        %v1015 = vpop.f32.mrb[0].mxu0
        %v1016 = vadd.f32 0.0, %v1015
        %v1017 = vpop.f32.mrb[0].mxu0
        %1018 = vmatprep.mubr.f32.mxu0 0.0
        %1019 = vmatmul.mubr.f32.gmra.mrb[0].mxu0 %v893
        %v1020 = vpop.f32.mrb[0].mxu0
        %v1021 = vadd.f32 0.0, %v1020
        %v1022 = vpop.f32.mrb[0].mxu0
        %1023 = vmatprep.mubr.f32.mxu0 0.0
        %1024 = vmatmul.mubr.f32.gmra.mrb[0].mxu0 %v894
        %v1025 = vpop.f32.mrb[0].mxu0
        %v1026 = vadd.f32 0.0, %v1025
        %v1027 = vpop.f32.mrb[0].mxu0
        %1028 = vmatprep.mubr.f32.mxu0 0.0
        %1029 = vmatmul.mubr.f32.gmra.mrb[0].mxu0 %v895
        %v1030 = vpop.f32.mrb[0].mxu0
        %v1031 = vadd.f32 0.0, %v1030
        %v1032 = vpop.f32.mrb[0].mxu0
        %1033 = vmatprep.mubr.f32.mxu0 0.0
        %1034 = vmatmul.mubr.f32.gmra.mrb[0].mxu0 %v896
        %v1035 = vpop.f32.mrb[0].mxu0
        %v1036 = vadd.f32 0.0, %v1035
        %v1037 = vpop.f32.mrb[0].mxu0
        %1038 = vmatprep.mubr.f32.mxu0 0.0
        %1039 = vmatmul.mubr.f32.gmra.mrb[0].mxu0 %v897
        %v1040 = vpop.f32.mrb[0].mxu0
        %v1041 = vadd.f32 0.0, %v1040
        %v1042 = vpop.f32.mrb[0].mxu0
        %1043 = vmatprep.mubr.f32.mxu0 0.0
        %1044 = vmatmul.mubr.f32.gmra.mrb[0].mxu0 %v898
        %v1045 = vpop.f32.mrb[0].mxu0
        %v1046 = vadd.f32 0.0, %v1045
        %v1047 = vpop.f32.mrb[0].mxu0
        %1048 = vmatprep.mubr.f32.mxu0 0.0
        %1049 = vmatmul.mubr.f32.gmra.mrb[0].mxu0 %v899
        %v1050 = vpop.f32.mrb[0].mxu0
        %v1051 = vadd.f32 0.0, %v1050
        %v1052 = vpop.f32.mrb[0].mxu0
        %1053 = vmatprep.mubr.f32.mxu0 0.0
        %1054 = vmatmul.mubr.f32.gmra.mrb[0].mxu0 %v900
        %v1055 = vpop.f32.mrb[0].mxu0
        %v1056 = vadd.f32 0.0, %v1055
        %v1057 = vpop.f32.mrb[0].mxu0
        %1058 = vmatprep.mubr.f32.mxu0 0.0
        %1059 = vmatmul.mubr.f32.gmra.mrb[0].mxu0 %v901
        %v1060 = vpop.f32.mrb[0].mxu0
        %v1061 = vadd.f32 0.0, %v1060
        %v1062 = vpop.f32.mrb[0].mxu0
        %1063 = vdwg.mxu0
        %v1064 = vadd.f32 %v869, %v986
        %v1065 = vadd.f32 %v870, %v991
        %v1066 = vadd.f32 %v871, %v996
        %v1067 = vadd.f32 %v872, %v1001
        %v1068 = vadd.f32 %v873, %v1006
        %v1069 = vadd.f32 %v874, %v1011
        %v1070 = vadd.f32 %v875, %v1016
        %v1071 = vadd.f32 %v876, %v1021
        %v1072 = vadd.f32 %v877, %v1026
        %v1073 = vadd.f32 %v878, %v1031
        %v1074 = vadd.f32 %v879, %v1036
        %v1075 = vadd.f32 %v880, %v1041
        %v1076 = vadd.f32 %v881, %v1046
        %v1077 = vadd.f32 %v882, %v1051
        %v1078 = vadd.f32 %v883, %v1056
        %v1079 = vadd.f32 %v884, %v1061
        %s1080 = scalar_lea.vmem %s639, 576 [#allocation2]
        %v1081 = vld [vmem:[%s1080] sm:$0xff]
        %v1082 = vld [vmem:[%s1080 + $0x8] sm:$0xff]
        %v1083 = vld [vmem:[%s1080 + $0x10] sm:$0xff]
        %v1084 = vld [vmem:[%s1080 + $0x18] sm:$0xff]
        %v1085 = vld [vmem:[%s1080 + $0x20] sm:$0xff]
        %v1086 = vld [vmem:[%s1080 + $0x28] sm:$0xff]
        %v1087 = vld [vmem:[%s1080 + $0x30] sm:$0xff]
        %v1088 = vld [vmem:[%s1080 + $0x38] sm:$0xff]
        %v1089 = vld [vmem:[%s1080 + $0x40] sm:$0xff]
        %v1090 = vld [vmem:[%s1080 + $0x48] sm:$0xff]
        %v1091 = vld [vmem:[%s1080 + $0x50] sm:$0xff]
        %v1092 = vld [vmem:[%s1080 + $0x58] sm:$0xff]
        %v1093 = vld [vmem:[%s1080 + $0x60] sm:$0xff]
        %v1094 = vld [vmem:[%s1080 + $0x68] sm:$0xff]
        %v1095 = vld [vmem:[%s1080 + $0x70] sm:$0xff]
        %v1096 = vld [vmem:[%s1080 + $0x78] sm:$0xff]
        %s1097 = scalar_lea.vmem %s673, 256
        %v1098 = vld [vmem:[%s1097] sm:$0xff]
        %v1099 = vld [vmem:[%s1097 + $0x8] sm:$0xff]
        %v1100 = vld [vmem:[%s1097 + $0x10] sm:$0xff]
        %v1101 = vld [vmem:[%s1097 + $0x18] sm:$0xff]
        %v1102 = vld [vmem:[%s1097 + $0x20] sm:$0xff]
        %v1103 = vld [vmem:[%s1097 + $0x28] sm:$0xff]
        %v1104 = vld [vmem:[%s1097 + $0x30] sm:$0xff]
        %v1105 = vld [vmem:[%s1097 + $0x38] sm:$0xff]
        %v1106 = vld [vmem:[%s1097 + $0x40] sm:$0xff]
        %v1107 = vld [vmem:[%s1097 + $0x48] sm:$0xff]
        %v1108 = vld [vmem:[%s1097 + $0x50] sm:$0xff]
        %v1109 = vld [vmem:[%s1097 + $0x58] sm:$0xff]
        %v1110 = vld [vmem:[%s1097 + $0x60] sm:$0xff]
        %v1111 = vld [vmem:[%s1097 + $0x68] sm:$0xff]
        %v1112 = vld [vmem:[%s1097 + $0x70] sm:$0xff]
        %v1113 = vld [vmem:[%s1097 + $0x78] sm:$0xff]
        %1114 = vmatprep.subr.mxu0 0.0
        %1115 = vmatpush1.msra.mxu0 %v1098
        %1116 = vmatprep.subr.mxu0 0.0
        %1117 = vmatpush1.msra.mxu0 %v1099
        %1118 = vmatprep.subr.mxu0 0.0
        %1119 = vmatpush1.msra.mxu0 %v1100
        %1120 = vmatprep.subr.mxu0 0.0
        %1121 = vmatpush1.msra.mxu0 %v1101
        %1122 = vmatprep.subr.mxu0 0.0
        %1123 = vmatpush1.msra.mxu0 %v1102
        %1124 = vmatprep.subr.mxu0 0.0
        %1125 = vmatpush1.msra.mxu0 %v1103
        %1126 = vmatprep.subr.mxu0 0.0
        %1127 = vmatpush1.msra.mxu0 %v1104
        %1128 = vmatprep.subr.mxu0 0.0
        %1129 = vmatpush1.msra.mxu0 %v1105
        %1130 = vmatprep.subr.mxu0 0.0
        %1131 = vmatpush1.msra.mxu0 %v1106
        %1132 = vmatprep.subr.mxu0 0.0
        %1133 = vmatpush1.msra.mxu0 %v1107
        %1134 = vmatprep.subr.mxu0 0.0
        %1135 = vmatpush1.msra.mxu0 %v1108
        %1136 = vmatprep.subr.mxu0 0.0
        %1137 = vmatpush1.msra.mxu0 %v1109
        %1138 = vmatprep.subr.mxu0 0.0
        %1139 = vmatpush1.msra.mxu0 %v1110
        %1140 = vmatprep.subr.mxu0 0.0
        %1141 = vmatpush1.msra.mxu0 %v1111
        %1142 = vmatprep.subr.mxu0 0.0
        %1143 = vmatpush1.msra.mxu0 %v1112
        %1144 = vmatprep.subr.mxu0 0.0
        %1145 = vmatpush1.msra.mxu0 %v1113
        %1146 = vmatprep.subr.mxu0 0.0
        %1147 = vmatpush1.msra.mxu0 0.0
        %1148 = vmatprep.subr.mxu0 0.0
        %1149 = vmatpush1.msra.mxu0 0.0
        %1150 = vmatprep.subr.mxu0 0.0
        %1151 = vmatpush1.msra.mxu0 0.0
        %1152 = vmatprep.subr.mxu0 0.0
        %1153 = vmatpush1.msra.mxu0 0.0
        %1154 = vmatprep.subr.mxu0 0.0
        %1155 = vmatpush1.msra.mxu0 0.0
        %1156 = vmatprep.subr.mxu0 0.0
        %1157 = vmatpush1.msra.mxu0 0.0
        %1158 = vmatprep.subr.mxu0 0.0
        %1159 = vmatpush1.msra.mxu0 0.0
        %1160 = vmatprep.subr.mxu0 0.0
        %1161 = vmatpush1.msra.mxu0 0.0
        %1162 = vmatprep.subr.mxu0 0.0
        %1163 = vmatpush1.msra.mxu0 0.0
        %1164 = vmatprep.subr.mxu0 0.0
        %1165 = vmatpush1.msra.mxu0 0.0
        %1166 = vmatprep.subr.mxu0 0.0
        %1167 = vmatpush1.msra.mxu0 0.0
        %1168 = vmatprep.subr.mxu0 0.0
        %1169 = vmatpush1.msra.mxu0 0.0
        %1170 = vmatprep.subr.mxu0 0.0
        %1171 = vmatpush1.msra.mxu0 0.0
        %1172 = vmatprep.subr.mxu0 0.0
        %1173 = vmatpush1.msra.mxu0 0.0
        %1174 = vmatprep.subr.mxu0 0.0
        %1175 = vmatpush1.msra.mxu0 0.0
        %1176 = vmatprep.subr.mxu0 0.0
        %1177 = vmatpush1.msra.mxu0 0.0
        %1178 = vmatprep.mubr.f32.mxu0 0.0
        %1179 = vmatmul.mubr.f32.gmra.mrb[0].mxu0 %v1081
        %v1180 = vpop.f32.mrb[0].mxu0
        %v1181 = vadd.f32 0.0, %v1180
        %v1182 = vpop.f32.mrb[0].mxu0
        %1183 = vmatprep.mubr.f32.mxu0 0.0
        %1184 = vmatmul.mubr.f32.gmra.mrb[0].mxu0 %v1082
        %v1185 = vpop.f32.mrb[0].mxu0
        %v1186 = vadd.f32 0.0, %v1185
        %v1187 = vpop.f32.mrb[0].mxu0
        %1188 = vmatprep.mubr.f32.mxu0 0.0
        %1189 = vmatmul.mubr.f32.gmra.mrb[0].mxu0 %v1083
        %v1190 = vpop.f32.mrb[0].mxu0
        %v1191 = vadd.f32 0.0, %v1190
        %v1192 = vpop.f32.mrb[0].mxu0
        %1193 = vmatprep.mubr.f32.mxu0 0.0
        %1194 = vmatmul.mubr.f32.gmra.mrb[0].mxu0 %v1084
        %v1195 = vpop.f32.mrb[0].mxu0
        %v1196 = vadd.f32 0.0, %v1195
        %v1197 = vpop.f32.mrb[0].mxu0
        %1198 = vmatprep.mubr.f32.mxu0 0.0
        %1199 = vmatmul.mubr.f32.gmra.mrb[0].mxu0 %v1085
        %v1200 = vpop.f32.mrb[0].mxu0
        %v1201 = vadd.f32 0.0, %v1200
        %v1202 = vpop.f32.mrb[0].mxu0
        %1203 = vmatprep.mubr.f32.mxu0 0.0
        %1204 = vmatmul.mubr.f32.gmra.mrb[0].mxu0 %v1086
        %v1205 = vpop.f32.mrb[0].mxu0
        %v1206 = vadd.f32 0.0, %v1205
        %v1207 = vpop.f32.mrb[0].mxu0
        %1208 = vmatprep.mubr.f32.mxu0 0.0
        %1209 = vmatmul.mubr.f32.gmra.mrb[0].mxu0 %v1087
        %v1210 = vpop.f32.mrb[0].mxu0
        %v1211 = vadd.f32 0.0, %v1210
        %v1212 = vpop.f32.mrb[0].mxu0
        %1213 = vmatprep.mubr.f32.mxu0 0.0
        %1214 = vmatmul.mubr.f32.gmra.mrb[0].mxu0 %v1088
        %v1215 = vpop.f32.mrb[0].mxu0
        %v1216 = vadd.f32 0.0, %v1215
        %v1217 = vpop.f32.mrb[0].mxu0
        %1218 = vmatprep.mubr.f32.mxu0 0.0
        %1219 = vmatmul.mubr.f32.gmra.mrb[0].mxu0 %v1089
        %v1220 = vpop.f32.mrb[0].mxu0
        %v1221 = vadd.f32 0.0, %v1220
        %v1222 = vpop.f32.mrb[0].mxu0
        %1223 = vmatprep.mubr.f32.mxu0 0.0
        %1224 = vmatmul.mubr.f32.gmra.mrb[0].mxu0 %v1090
        %v1225 = vpop.f32.mrb[0].mxu0
        %v1226 = vadd.f32 0.0, %v1225
        %v1227 = vpop.f32.mrb[0].mxu0
        %1228 = vmatprep.mubr.f32.mxu0 0.0
        %1229 = vmatmul.mubr.f32.gmra.mrb[0].mxu0 %v1091
        %v1230 = vpop.f32.mrb[0].mxu0
        %v1231 = vadd.f32 0.0, %v1230
        %v1232 = vpop.f32.mrb[0].mxu0
        %1233 = vmatprep.mubr.f32.mxu0 0.0
        %1234 = vmatmul.mubr.f32.gmra.mrb[0].mxu0 %v1092
        %v1235 = vpop.f32.mrb[0].mxu0
        %v1236 = vadd.f32 0.0, %v1235
        %v1237 = vpop.f32.mrb[0].mxu0
        %1238 = vmatprep.mubr.f32.mxu0 0.0
        %1239 = vmatmul.mubr.f32.gmra.mrb[0].mxu0 %v1093
        %v1240 = vpop.f32.mrb[0].mxu0
        %v1241 = vadd.f32 0.0, %v1240
        %v1242 = vpop.f32.mrb[0].mxu0
        %1243 = vmatprep.mubr.f32.mxu0 0.0
        %1244 = vmatmul.mubr.f32.gmra.mrb[0].mxu0 %v1094
        %v1245 = vpop.f32.mrb[0].mxu0
        %v1246 = vadd.f32 0.0, %v1245
        %v1247 = vpop.f32.mrb[0].mxu0
        %1248 = vmatprep.mubr.f32.mxu0 0.0
        %1249 = vmatmul.mubr.f32.gmra.mrb[0].mxu0 %v1095
        %v1250 = vpop.f32.mrb[0].mxu0
        %v1251 = vadd.f32 0.0, %v1250
        %v1252 = vpop.f32.mrb[0].mxu0
        %1253 = vmatprep.mubr.f32.mxu0 0.0
        %1254 = vmatmul.mubr.f32.gmra.mrb[0].mxu0 %v1096
        %v1255 = vpop.f32.mrb[0].mxu0
        %v1256 = vadd.f32 0.0, %v1255
        %v1257 = vpop.f32.mrb[0].mxu0
        %1258 = vdwg.mxu0
        %v1259 = vadd.f32 %v1064, %v1181
        %v1260 = vadd.f32 %v1065, %v1186
        %v1261 = vadd.f32 %v1066, %v1191
        %v1262 = vadd.f32 %v1067, %v1196
        %v1263 = vadd.f32 %v1068, %v1201
        %v1264 = vadd.f32 %v1069, %v1206
        %v1265 = vadd.f32 %v1070, %v1211
        %v1266 = vadd.f32 %v1071, %v1216
        %v1267 = vadd.f32 %v1072, %v1221
        %v1268 = vadd.f32 %v1073, %v1226
        %v1269 = vadd.f32 %v1074, %v1231
        %v1270 = vadd.f32 %v1075, %v1236
        %v1271 = vadd.f32 %v1076, %v1241
        %v1272 = vadd.f32 %v1077, %v1246
        %v1273 = vadd.f32 %v1078, %v1251
        %v1274 = vadd.f32 %v1079, %v1256
        %s1275 = scalar_lea.vmem %s639, 144 [#allocation2]
        %v1276 = vld [vmem:[%s1275] sm:$0xff]
        %v1277 = vld [vmem:[%s1275 + $0x8] sm:$0xff]
        %v1278 = vld [vmem:[%s1275 + $0x10] sm:$0xff]
        %v1279 = vld [vmem:[%s1275 + $0x18] sm:$0xff]
        %v1280 = vld [vmem:[%s1275 + $0x20] sm:$0xff]
        %v1281 = vld [vmem:[%s1275 + $0x28] sm:$0xff]
        %v1282 = vld [vmem:[%s1275 + $0x30] sm:$0xff]
        %v1283 = vld [vmem:[%s1275 + $0x38] sm:$0xff]
        %v1284 = vld [vmem:[%s1275 + $0x40] sm:$0xff]
        %v1285 = vld [vmem:[%s1275 + $0x48] sm:$0xff]
        %v1286 = vld [vmem:[%s1275 + $0x50] sm:$0xff]
        %v1287 = vld [vmem:[%s1275 + $0x58] sm:$0xff]
        %v1288 = vld [vmem:[%s1275 + $0x60] sm:$0xff]
        %v1289 = vld [vmem:[%s1275 + $0x68] sm:$0xff]
        %v1290 = vld [vmem:[%s1275 + $0x70] sm:$0xff]
        %v1291 = vld [vmem:[%s1275 + $0x78] sm:$0xff]
        %s1292 = scalar_lea.vmem %s673, 384
        %v1293 = vld [vmem:[%s1292] sm:$0xff]
        %v1294 = vld [vmem:[%s1292 + $0x8] sm:$0xff]
        %v1295 = vld [vmem:[%s1292 + $0x10] sm:$0xff]
        %v1296 = vld [vmem:[%s1292 + $0x18] sm:$0xff]
        %v1297 = vld [vmem:[%s1292 + $0x20] sm:$0xff]
        %v1298 = vld [vmem:[%s1292 + $0x28] sm:$0xff]
        %v1299 = vld [vmem:[%s1292 + $0x30] sm:$0xff]
        %v1300 = vld [vmem:[%s1292 + $0x38] sm:$0xff]
        %v1301 = vld [vmem:[%s1292 + $0x40] sm:$0xff]
        %v1302 = vld [vmem:[%s1292 + $0x48] sm:$0xff]
        %v1303 = vld [vmem:[%s1292 + $0x50] sm:$0xff]
        %v1304 = vld [vmem:[%s1292 + $0x58] sm:$0xff]
        %v1305 = vld [vmem:[%s1292 + $0x60] sm:$0xff]
        %v1306 = vld [vmem:[%s1292 + $0x68] sm:$0xff]
        %v1307 = vld [vmem:[%s1292 + $0x70] sm:$0xff]
        %v1308 = vld [vmem:[%s1292 + $0x78] sm:$0xff]
        %1309 = vmatprep.subr.mxu0 0.0
        %1310 = vmatpush1.msra.mxu0 %v1293
        %1311 = vmatprep.subr.mxu0 0.0
        %1312 = vmatpush1.msra.mxu0 %v1294
        %1313 = vmatprep.subr.mxu0 0.0
        %1314 = vmatpush1.msra.mxu0 %v1295
        %1315 = vmatprep.subr.mxu0 0.0
        %1316 = vmatpush1.msra.mxu0 %v1296
        %1317 = vmatprep.subr.mxu0 0.0
        %1318 = vmatpush1.msra.mxu0 %v1297
        %1319 = vmatprep.subr.mxu0 0.0
        %1320 = vmatpush1.msra.mxu0 %v1298
        %1321 = vmatprep.subr.mxu0 0.0
        %1322 = vmatpush1.msra.mxu0 %v1299
        %1323 = vmatprep.subr.mxu0 0.0
        %1324 = vmatpush1.msra.mxu0 %v1300
        %1325 = vmatprep.subr.mxu0 0.0
        %1326 = vmatpush1.msra.mxu0 %v1301
        %1327 = vmatprep.subr.mxu0 0.0
        %1328 = vmatpush1.msra.mxu0 %v1302
        %1329 = vmatprep.subr.mxu0 0.0
        %1330 = vmatpush1.msra.mxu0 %v1303
        %1331 = vmatprep.subr.mxu0 0.0
        %1332 = vmatpush1.msra.mxu0 %v1304
        %1333 = vmatprep.subr.mxu0 0.0
        %1334 = vmatpush1.msra.mxu0 %v1305
        %1335 = vmatprep.subr.mxu0 0.0
        %1336 = vmatpush1.msra.mxu0 %v1306
        %1337 = vmatprep.subr.mxu0 0.0
        %1338 = vmatpush1.msra.mxu0 %v1307
        %1339 = vmatprep.subr.mxu0 0.0
        %1340 = vmatpush1.msra.mxu0 %v1308
        %1341 = vmatprep.subr.mxu0 0.0
        %1342 = vmatpush1.msra.mxu0 0.0
        %1343 = vmatprep.subr.mxu0 0.0
        %1344 = vmatpush1.msra.mxu0 0.0
        %1345 = vmatprep.subr.mxu0 0.0
        %1346 = vmatpush1.msra.mxu0 0.0
        %1347 = vmatprep.subr.mxu0 0.0
        %1348 = vmatpush1.msra.mxu0 0.0
        %1349 = vmatprep.subr.mxu0 0.0
        %1350 = vmatpush1.msra.mxu0 0.0
        %1351 = vmatprep.subr.mxu0 0.0
        %1352 = vmatpush1.msra.mxu0 0.0
        %1353 = vmatprep.subr.mxu0 0.0
        %1354 = vmatpush1.msra.mxu0 0.0
        %1355 = vmatprep.subr.mxu0 0.0
        %1356 = vmatpush1.msra.mxu0 0.0
        %1357 = vmatprep.subr.mxu0 0.0
        %1358 = vmatpush1.msra.mxu0 0.0
        %1359 = vmatprep.subr.mxu0 0.0
        %1360 = vmatpush1.msra.mxu0 0.0
        %1361 = vmatprep.subr.mxu0 0.0
        %1362 = vmatpush1.msra.mxu0 0.0
        %1363 = vmatprep.subr.mxu0 0.0
        %1364 = vmatpush1.msra.mxu0 0.0
        %1365 = vmatprep.subr.mxu0 0.0
        %1366 = vmatpush1.msra.mxu0 0.0
        %1367 = vmatprep.subr.mxu0 0.0
        %1368 = vmatpush1.msra.mxu0 0.0
        %1369 = vmatprep.subr.mxu0 0.0
        %1370 = vmatpush1.msra.mxu0 0.0
        %1371 = vmatprep.subr.mxu0 0.0
        %1372 = vmatpush1.msra.mxu0 0.0
        %1373 = vmatprep.mubr.f32.mxu0 0.0
        %1374 = vmatmul.mubr.f32.gmra.mrb[0].mxu0 %v1276
        %v1375 = vpop.f32.mrb[0].mxu0
        %v1376 = vadd.f32 0.0, %v1375
        %v1377 = vpop.f32.mrb[0].mxu0
        %1378 = vmatprep.mubr.f32.mxu0 0.0
        %1379 = vmatmul.mubr.f32.gmra.mrb[0].mxu0 %v1277
        %v1380 = vpop.f32.mrb[0].mxu0
        %v1381 = vadd.f32 0.0, %v1380
        %v1382 = vpop.f32.mrb[0].mxu0
        %1383 = vmatprep.mubr.f32.mxu0 0.0
        %1384 = vmatmul.mubr.f32.gmra.mrb[0].mxu0 %v1278
        %v1385 = vpop.f32.mrb[0].mxu0
        %v1386 = vadd.f32 0.0, %v1385
        %v1387 = vpop.f32.mrb[0].mxu0
        %1388 = vmatprep.mubr.f32.mxu0 0.0
        %1389 = vmatmul.mubr.f32.gmra.mrb[0].mxu0 %v1279
        %v1390 = vpop.f32.mrb[0].mxu0
        %v1391 = vadd.f32 0.0, %v1390
        %v1392 = vpop.f32.mrb[0].mxu0
        %1393 = vmatprep.mubr.f32.mxu0 0.0
        %1394 = vmatmul.mubr.f32.gmra.mrb[0].mxu0 %v1280
        %v1395 = vpop.f32.mrb[0].mxu0
        %v1396 = vadd.f32 0.0, %v1395
        %v1397 = vpop.f32.mrb[0].mxu0
        %1398 = vmatprep.mubr.f32.mxu0 0.0
        %1399 = vmatmul.mubr.f32.gmra.mrb[0].mxu0 %v1281
        %v1400 = vpop.f32.mrb[0].mxu0
        %v1401 = vadd.f32 0.0, %v1400
        %v1402 = vpop.f32.mrb[0].mxu0
        %1403 = vmatprep.mubr.f32.mxu0 0.0
        %1404 = vmatmul.mubr.f32.gmra.mrb[0].mxu0 %v1282
        %v1405 = vpop.f32.mrb[0].mxu0
        %v1406 = vadd.f32 0.0, %v1405
        %v1407 = vpop.f32.mrb[0].mxu0
        %1408 = vmatprep.mubr.f32.mxu0 0.0
        %1409 = vmatmul.mubr.f32.gmra.mrb[0].mxu0 %v1283
        %v1410 = vpop.f32.mrb[0].mxu0
        %v1411 = vadd.f32 0.0, %v1410
        %v1412 = vpop.f32.mrb[0].mxu0
        %1413 = vmatprep.mubr.f32.mxu0 0.0
        %1414 = vmatmul.mubr.f32.gmra.mrb[0].mxu0 %v1284
        %v1415 = vpop.f32.mrb[0].mxu0
        %v1416 = vadd.f32 0.0, %v1415
        %v1417 = vpop.f32.mrb[0].mxu0
        %1418 = vmatprep.mubr.f32.mxu0 0.0
        %1419 = vmatmul.mubr.f32.gmra.mrb[0].mxu0 %v1285
        %v1420 = vpop.f32.mrb[0].mxu0
        %v1421 = vadd.f32 0.0, %v1420
        %v1422 = vpop.f32.mrb[0].mxu0
        %1423 = vmatprep.mubr.f32.mxu0 0.0
        %1424 = vmatmul.mubr.f32.gmra.mrb[0].mxu0 %v1286
        %v1425 = vpop.f32.mrb[0].mxu0
        %v1426 = vadd.f32 0.0, %v1425
        %v1427 = vpop.f32.mrb[0].mxu0
        %1428 = vmatprep.mubr.f32.mxu0 0.0
        %1429 = vmatmul.mubr.f32.gmra.mrb[0].mxu0 %v1287
        %v1430 = vpop.f32.mrb[0].mxu0
        %v1431 = vadd.f32 0.0, %v1430
        %v1432 = vpop.f32.mrb[0].mxu0
        %1433 = vmatprep.mubr.f32.mxu0 0.0
        %1434 = vmatmul.mubr.f32.gmra.mrb[0].mxu0 %v1288
        %v1435 = vpop.f32.mrb[0].mxu0
        %v1436 = vadd.f32 0.0, %v1435
        %v1437 = vpop.f32.mrb[0].mxu0
        %1438 = vmatprep.mubr.f32.mxu0 0.0
        %1439 = vmatmul.mubr.f32.gmra.mrb[0].mxu0 %v1289
        %v1440 = vpop.f32.mrb[0].mxu0
        %v1441 = vadd.f32 0.0, %v1440
        %v1442 = vpop.f32.mrb[0].mxu0
        %1443 = vmatprep.mubr.f32.mxu0 0.0
        %1444 = vmatmul.mubr.f32.gmra.mrb[0].mxu0 %v1290
        %v1445 = vpop.f32.mrb[0].mxu0
        %v1446 = vadd.f32 0.0, %v1445
        %v1447 = vpop.f32.mrb[0].mxu0
        %1448 = vmatprep.mubr.f32.mxu0 0.0
        %1449 = vmatmul.mubr.f32.gmra.mrb[0].mxu0 %v1291
        %v1450 = vpop.f32.mrb[0].mxu0
        %v1451 = vadd.f32 0.0, %v1450
        %v1452 = vpop.f32.mrb[0].mxu0
        %1453 = vdwg.mxu0
        %v1454 = vadd.f32 %v1259, %v1376
        %v1455 = vadd.f32 %v1260, %v1381
        %v1456 = vadd.f32 %v1261, %v1386
        %v1457 = vadd.f32 %v1262, %v1391
        %v1458 = vadd.f32 %v1263, %v1396
        %v1459 = vadd.f32 %v1264, %v1401
        %v1460 = vadd.f32 %v1265, %v1406
        %v1461 = vadd.f32 %v1266, %v1411
        %v1462 = vadd.f32 %v1267, %v1416
        %v1463 = vadd.f32 %v1268, %v1421
        %v1464 = vadd.f32 %v1269, %v1426
        %v1465 = vadd.f32 %v1270, %v1431
        %v1466 = vadd.f32 %v1271, %v1436
        %v1467 = vadd.f32 %v1272, %v1441
        %v1468 = vadd.f32 %v1273, %v1446
        %v1469 = vadd.f32 %v1274, %v1451
        %s1470 = scalar_lea.vmem %s639, 432 [#allocation2]
        %v1471 = vld [vmem:[%s1470] sm:$0xff]
        %v1472 = vld [vmem:[%s1470 + $0x8] sm:$0xff]
        %v1473 = vld [vmem:[%s1470 + $0x10] sm:$0xff]
        %v1474 = vld [vmem:[%s1470 + $0x18] sm:$0xff]
        %v1475 = vld [vmem:[%s1470 + $0x20] sm:$0xff]
        %v1476 = vld [vmem:[%s1470 + $0x28] sm:$0xff]
        %v1477 = vld [vmem:[%s1470 + $0x30] sm:$0xff]
        %v1478 = vld [vmem:[%s1470 + $0x38] sm:$0xff]
        %v1479 = vld [vmem:[%s1470 + $0x40] sm:$0xff]
        %v1480 = vld [vmem:[%s1470 + $0x48] sm:$0xff]
        %v1481 = vld [vmem:[%s1470 + $0x50] sm:$0xff]
        %v1482 = vld [vmem:[%s1470 + $0x58] sm:$0xff]
        %v1483 = vld [vmem:[%s1470 + $0x60] sm:$0xff]
        %v1484 = vld [vmem:[%s1470 + $0x68] sm:$0xff]
        %v1485 = vld [vmem:[%s1470 + $0x70] sm:$0xff]
        %v1486 = vld [vmem:[%s1470 + $0x78] sm:$0xff]
        %s1487 = scalar_lea.vmem %s673, 512
        %v1488 = vld [vmem:[%s1487] sm:$0xff]
        %v1489 = vld [vmem:[%s1487 + $0x8] sm:$0xff]
        %v1490 = vld [vmem:[%s1487 + $0x10] sm:$0xff]
        %v1491 = vld [vmem:[%s1487 + $0x18] sm:$0xff]
        %v1492 = vld [vmem:[%s1487 + $0x20] sm:$0xff]
        %v1493 = vld [vmem:[%s1487 + $0x28] sm:$0xff]
        %v1494 = vld [vmem:[%s1487 + $0x30] sm:$0xff]
        %v1495 = vld [vmem:[%s1487 + $0x38] sm:$0xff]
        %v1496 = vld [vmem:[%s1487 + $0x40] sm:$0xff]
        %v1497 = vld [vmem:[%s1487 + $0x48] sm:$0xff]
        %v1498 = vld [vmem:[%s1487 + $0x50] sm:$0xff]
        %v1499 = vld [vmem:[%s1487 + $0x58] sm:$0xff]
        %v1500 = vld [vmem:[%s1487 + $0x60] sm:$0xff]
        %v1501 = vld [vmem:[%s1487 + $0x68] sm:$0xff]
        %v1502 = vld [vmem:[%s1487 + $0x70] sm:$0xff]
        %v1503 = vld [vmem:[%s1487 + $0x78] sm:$0xff]
        %1504 = vmatprep.subr.mxu0 0.0
        %1505 = vmatpush1.msra.mxu0 %v1488
        %1506 = vmatprep.subr.mxu0 0.0
        %1507 = vmatpush1.msra.mxu0 %v1489
        %1508 = vmatprep.subr.mxu0 0.0
        %1509 = vmatpush1.msra.mxu0 %v1490
        %1510 = vmatprep.subr.mxu0 0.0
        %1511 = vmatpush1.msra.mxu0 %v1491
        %1512 = vmatprep.subr.mxu0 0.0
        %1513 = vmatpush1.msra.mxu0 %v1492
        %1514 = vmatprep.subr.mxu0 0.0
        %1515 = vmatpush1.msra.mxu0 %v1493
        %1516 = vmatprep.subr.mxu0 0.0
        %1517 = vmatpush1.msra.mxu0 %v1494
        %1518 = vmatprep.subr.mxu0 0.0
        %1519 = vmatpush1.msra.mxu0 %v1495
        %1520 = vmatprep.subr.mxu0 0.0
        %1521 = vmatpush1.msra.mxu0 %v1496
        %1522 = vmatprep.subr.mxu0 0.0
        %1523 = vmatpush1.msra.mxu0 %v1497
        %1524 = vmatprep.subr.mxu0 0.0
        %1525 = vmatpush1.msra.mxu0 %v1498
        %1526 = vmatprep.subr.mxu0 0.0
        %1527 = vmatpush1.msra.mxu0 %v1499
        %1528 = vmatprep.subr.mxu0 0.0
        %1529 = vmatpush1.msra.mxu0 %v1500
        %1530 = vmatprep.subr.mxu0 0.0
        %1531 = vmatpush1.msra.mxu0 %v1501
        %1532 = vmatprep.subr.mxu0 0.0
        %1533 = vmatpush1.msra.mxu0 %v1502
        %1534 = vmatprep.subr.mxu0 0.0
        %1535 = vmatpush1.msra.mxu0 %v1503
        %1536 = vmatprep.subr.mxu0 0.0
        %1537 = vmatpush1.msra.mxu0 0.0
        %1538 = vmatprep.subr.mxu0 0.0
        %1539 = vmatpush1.msra.mxu0 0.0
        %1540 = vmatprep.subr.mxu0 0.0
        %1541 = vmatpush1.msra.mxu0 0.0
        %1542 = vmatprep.subr.mxu0 0.0
        %1543 = vmatpush1.msra.mxu0 0.0
        %1544 = vmatprep.subr.mxu0 0.0
        %1545 = vmatpush1.msra.mxu0 0.0
        %1546 = vmatprep.subr.mxu0 0.0
        %1547 = vmatpush1.msra.mxu0 0.0
        %1548 = vmatprep.subr.mxu0 0.0
        %1549 = vmatpush1.msra.mxu0 0.0
        %1550 = vmatprep.subr.mxu0 0.0
        %1551 = vmatpush1.msra.mxu0 0.0
        %1552 = vmatprep.subr.mxu0 0.0
        %1553 = vmatpush1.msra.mxu0 0.0
        %1554 = vmatprep.subr.mxu0 0.0
        %1555 = vmatpush1.msra.mxu0 0.0
        %1556 = vmatprep.subr.mxu0 0.0
        %1557 = vmatpush1.msra.mxu0 0.0
        %1558 = vmatprep.subr.mxu0 0.0
        %1559 = vmatpush1.msra.mxu0 0.0
        %1560 = vmatprep.subr.mxu0 0.0
        %1561 = vmatpush1.msra.mxu0 0.0
        %1562 = vmatprep.subr.mxu0 0.0
        %1563 = vmatpush1.msra.mxu0 0.0
        %1564 = vmatprep.subr.mxu0 0.0
        %1565 = vmatpush1.msra.mxu0 0.0
        %1566 = vmatprep.subr.mxu0 0.0
        %1567 = vmatpush1.msra.mxu0 0.0
        %1568 = vmatprep.mubr.f32.mxu0 0.0
        %1569 = vmatmul.mubr.f32.gmra.mrb[0].mxu0 %v1471
        %v1570 = vpop.f32.mrb[0].mxu0
        %v1571 = vadd.f32 0.0, %v1570
        %v1572 = vpop.f32.mrb[0].mxu0
        %1573 = vmatprep.mubr.f32.mxu0 0.0
        %1574 = vmatmul.mubr.f32.gmra.mrb[0].mxu0 %v1472
        %v1575 = vpop.f32.mrb[0].mxu0
        %v1576 = vadd.f32 0.0, %v1575
        %v1577 = vpop.f32.mrb[0].mxu0
        %1578 = vmatprep.mubr.f32.mxu0 0.0
        %1579 = vmatmul.mubr.f32.gmra.mrb[0].mxu0 %v1473
        %v1580 = vpop.f32.mrb[0].mxu0
        %v1581 = vadd.f32 0.0, %v1580
        %v1582 = vpop.f32.mrb[0].mxu0
        %1583 = vmatprep.mubr.f32.mxu0 0.0
        %1584 = vmatmul.mubr.f32.gmra.mrb[0].mxu0 %v1474
        %v1585 = vpop.f32.mrb[0].mxu0
        %v1586 = vadd.f32 0.0, %v1585
        %v1587 = vpop.f32.mrb[0].mxu0
        %1588 = vmatprep.mubr.f32.mxu0 0.0
        %1589 = vmatmul.mubr.f32.gmra.mrb[0].mxu0 %v1475
        %v1590 = vpop.f32.mrb[0].mxu0
        %v1591 = vadd.f32 0.0, %v1590
        %v1592 = vpop.f32.mrb[0].mxu0
        %1593 = vmatprep.mubr.f32.mxu0 0.0
        %1594 = vmatmul.mubr.f32.gmra.mrb[0].mxu0 %v1476
        %v1595 = vpop.f32.mrb[0].mxu0
        %v1596 = vadd.f32 0.0, %v1595
        %v1597 = vpop.f32.mrb[0].mxu0
        %1598 = vmatprep.mubr.f32.mxu0 0.0
        %1599 = vmatmul.mubr.f32.gmra.mrb[0].mxu0 %v1477
        %v1600 = vpop.f32.mrb[0].mxu0
        %v1601 = vadd.f32 0.0, %v1600
        %v1602 = vpop.f32.mrb[0].mxu0
        %1603 = vmatprep.mubr.f32.mxu0 0.0
        %1604 = vmatmul.mubr.f32.gmra.mrb[0].mxu0 %v1478
        %v1605 = vpop.f32.mrb[0].mxu0
        %v1606 = vadd.f32 0.0, %v1605
        %v1607 = vpop.f32.mrb[0].mxu0
        %1608 = vmatprep.mubr.f32.mxu0 0.0
        %1609 = vmatmul.mubr.f32.gmra.mrb[0].mxu0 %v1479
        %v1610 = vpop.f32.mrb[0].mxu0
        %v1611 = vadd.f32 0.0, %v1610
        %v1612 = vpop.f32.mrb[0].mxu0
        %1613 = vmatprep.mubr.f32.mxu0 0.0
        %1614 = vmatmul.mubr.f32.gmra.mrb[0].mxu0 %v1480
        %v1615 = vpop.f32.mrb[0].mxu0
        %v1616 = vadd.f32 0.0, %v1615
        %v1617 = vpop.f32.mrb[0].mxu0
        %1618 = vmatprep.mubr.f32.mxu0 0.0
        %1619 = vmatmul.mubr.f32.gmra.mrb[0].mxu0 %v1481
        %v1620 = vpop.f32.mrb[0].mxu0
        %v1621 = vadd.f32 0.0, %v1620
        %v1622 = vpop.f32.mrb[0].mxu0
        %1623 = vmatprep.mubr.f32.mxu0 0.0
        %1624 = vmatmul.mubr.f32.gmra.mrb[0].mxu0 %v1482
        %v1625 = vpop.f32.mrb[0].mxu0
        %v1626 = vadd.f32 0.0, %v1625
        %v1627 = vpop.f32.mrb[0].mxu0
        %1628 = vmatprep.mubr.f32.mxu0 0.0
        %1629 = vmatmul.mubr.f32.gmra.mrb[0].mxu0 %v1483
        %v1630 = vpop.f32.mrb[0].mxu0
        %v1631 = vadd.f32 0.0, %v1630
        %v1632 = vpop.f32.mrb[0].mxu0
        %1633 = vmatprep.mubr.f32.mxu0 0.0
        %1634 = vmatmul.mubr.f32.gmra.mrb[0].mxu0 %v1484
        %v1635 = vpop.f32.mrb[0].mxu0
        %v1636 = vadd.f32 0.0, %v1635
        %v1637 = vpop.f32.mrb[0].mxu0
        %1638 = vmatprep.mubr.f32.mxu0 0.0
        %1639 = vmatmul.mubr.f32.gmra.mrb[0].mxu0 %v1485
        %v1640 = vpop.f32.mrb[0].mxu0
        %v1641 = vadd.f32 0.0, %v1640
        %v1642 = vpop.f32.mrb[0].mxu0
        %1643 = vmatprep.mubr.f32.mxu0 0.0
        %1644 = vmatmul.mubr.f32.gmra.mrb[0].mxu0 %v1486
        %v1645 = vpop.f32.mrb[0].mxu0
        %v1646 = vadd.f32 0.0, %v1645
        %v1647 = vpop.f32.mrb[0].mxu0
        %1648 = vdwg.mxu0
        %v1649 = vadd.f32 %v1454, %v1571
        %v1650 = vadd.f32 %v1455, %v1576
        %v1651 = vadd.f32 %v1456, %v1581
        %v1652 = vadd.f32 %v1457, %v1586
        %v1653 = vadd.f32 %v1458, %v1591
        %v1654 = vadd.f32 %v1459, %v1596
        %v1655 = vadd.f32 %v1460, %v1601
        %v1656 = vadd.f32 %v1461, %v1606
        %v1657 = vadd.f32 %v1462, %v1611
        %v1658 = vadd.f32 %v1463, %v1616
        %v1659 = vadd.f32 %v1464, %v1621
        %v1660 = vadd.f32 %v1465, %v1626
        %v1661 = vadd.f32 %v1466, %v1631
        %v1662 = vadd.f32 %v1467, %v1636
        %v1663 = vadd.f32 %v1468, %v1641
        %v1664 = vadd.f32 %v1469, %v1646
        %s1665 = scalar_lea.vmem %s639, 720 [#allocation2]
        %v1666 = vld [vmem:[%s1665] sm:$0xff]
        %v1667 = vld [vmem:[%s1665 + $0x8] sm:$0xff]
        %v1668 = vld [vmem:[%s1665 + $0x10] sm:$0xff]
        %v1669 = vld [vmem:[%s1665 + $0x18] sm:$0xff]
        %v1670 = vld [vmem:[%s1665 + $0x20] sm:$0xff]
        %v1671 = vld [vmem:[%s1665 + $0x28] sm:$0xff]
        %v1672 = vld [vmem:[%s1665 + $0x30] sm:$0xff]
        %v1673 = vld [vmem:[%s1665 + $0x38] sm:$0xff]
        %v1674 = vld [vmem:[%s1665 + $0x40] sm:$0xff]
        %v1675 = vld [vmem:[%s1665 + $0x48] sm:$0xff]
        %v1676 = vld [vmem:[%s1665 + $0x50] sm:$0xff]
        %v1677 = vld [vmem:[%s1665 + $0x58] sm:$0xff]
        %v1678 = vld [vmem:[%s1665 + $0x60] sm:$0xff]
        %v1679 = vld [vmem:[%s1665 + $0x68] sm:$0xff]
        %v1680 = vld [vmem:[%s1665 + $0x70] sm:$0xff]
        %v1681 = vld [vmem:[%s1665 + $0x78] sm:$0xff]
        %s1682 = scalar_lea.vmem %s673, 640
        %v1683 = vld [vmem:[%s1682] sm:$0xff]
        %v1684 = vld [vmem:[%s1682 + $0x8] sm:$0xff]
        %v1685 = vld [vmem:[%s1682 + $0x10] sm:$0xff]
        %v1686 = vld [vmem:[%s1682 + $0x18] sm:$0xff]
        %v1687 = vld [vmem:[%s1682 + $0x20] sm:$0xff]
        %v1688 = vld [vmem:[%s1682 + $0x28] sm:$0xff]
        %v1689 = vld [vmem:[%s1682 + $0x30] sm:$0xff]
        %v1690 = vld [vmem:[%s1682 + $0x38] sm:$0xff]
        %v1691 = vld [vmem:[%s1682 + $0x40] sm:$0xff]
        %v1692 = vld [vmem:[%s1682 + $0x48] sm:$0xff]
        %v1693 = vld [vmem:[%s1682 + $0x50] sm:$0xff]
        %v1694 = vld [vmem:[%s1682 + $0x58] sm:$0xff]
        %v1695 = vld [vmem:[%s1682 + $0x60] sm:$0xff]
        %v1696 = vld [vmem:[%s1682 + $0x68] sm:$0xff]
        %v1697 = vld [vmem:[%s1682 + $0x70] sm:$0xff]
        %v1698 = vld [vmem:[%s1682 + $0x78] sm:$0xff]
        %1699 = vmatprep.subr.mxu0 0.0
        %1700 = vmatpush1.msra.mxu0 %v1683
        %1701 = vmatprep.subr.mxu0 0.0
        %1702 = vmatpush1.msra.mxu0 %v1684
        %1703 = vmatprep.subr.mxu0 0.0
        %1704 = vmatpush1.msra.mxu0 %v1685
        %1705 = vmatprep.subr.mxu0 0.0
        %1706 = vmatpush1.msra.mxu0 %v1686
        %1707 = vmatprep.subr.mxu0 0.0
        %1708 = vmatpush1.msra.mxu0 %v1687
        %1709 = vmatprep.subr.mxu0 0.0
        %1710 = vmatpush1.msra.mxu0 %v1688
        %1711 = vmatprep.subr.mxu0 0.0
        %1712 = vmatpush1.msra.mxu0 %v1689
        %1713 = vmatprep.subr.mxu0 0.0
        %1714 = vmatpush1.msra.mxu0 %v1690
        %1715 = vmatprep.subr.mxu0 0.0
        %1716 = vmatpush1.msra.mxu0 %v1691
        %1717 = vmatprep.subr.mxu0 0.0
        %1718 = vmatpush1.msra.mxu0 %v1692
        %1719 = vmatprep.subr.mxu0 0.0
        %1720 = vmatpush1.msra.mxu0 %v1693
        %1721 = vmatprep.subr.mxu0 0.0
        %1722 = vmatpush1.msra.mxu0 %v1694
        %1723 = vmatprep.subr.mxu0 0.0
        %1724 = vmatpush1.msra.mxu0 %v1695
        %1725 = vmatprep.subr.mxu0 0.0
        %1726 = vmatpush1.msra.mxu0 %v1696
        %1727 = vmatprep.subr.mxu0 0.0
        %1728 = vmatpush1.msra.mxu0 %v1697
        %1729 = vmatprep.subr.mxu0 0.0
        %1730 = vmatpush1.msra.mxu0 %v1698
        %1731 = vmatprep.subr.mxu0 0.0
        %1732 = vmatpush1.msra.mxu0 0.0
        %1733 = vmatprep.subr.mxu0 0.0
        %1734 = vmatpush1.msra.mxu0 0.0
        %1735 = vmatprep.subr.mxu0 0.0
        %1736 = vmatpush1.msra.mxu0 0.0
        %1737 = vmatprep.subr.mxu0 0.0
        %1738 = vmatpush1.msra.mxu0 0.0
        %1739 = vmatprep.subr.mxu0 0.0
        %1740 = vmatpush1.msra.mxu0 0.0
        %1741 = vmatprep.subr.mxu0 0.0
        %1742 = vmatpush1.msra.mxu0 0.0
        %1743 = vmatprep.subr.mxu0 0.0
        %1744 = vmatpush1.msra.mxu0 0.0
        %1745 = vmatprep.subr.mxu0 0.0
        %1746 = vmatpush1.msra.mxu0 0.0
        %1747 = vmatprep.subr.mxu0 0.0
        %1748 = vmatpush1.msra.mxu0 0.0
        %1749 = vmatprep.subr.mxu0 0.0
        %1750 = vmatpush1.msra.mxu0 0.0
        %1751 = vmatprep.subr.mxu0 0.0
        %1752 = vmatpush1.msra.mxu0 0.0
        %1753 = vmatprep.subr.mxu0 0.0
        %1754 = vmatpush1.msra.mxu0 0.0
        %1755 = vmatprep.subr.mxu0 0.0
        %1756 = vmatpush1.msra.mxu0 0.0
        %1757 = vmatprep.subr.mxu0 0.0
        %1758 = vmatpush1.msra.mxu0 0.0
        %1759 = vmatprep.subr.mxu0 0.0
        %1760 = vmatpush1.msra.mxu0 0.0
        %1761 = vmatprep.subr.mxu0 0.0
        %1762 = vmatpush1.msra.mxu0 0.0
        %1763 = vmatprep.mubr.f32.mxu0 0.0
        %1764 = vmatmul.mubr.f32.gmra.mrb[0].mxu0 %v1666
        %v1765 = vpop.f32.mrb[0].mxu0
        %v1766 = vadd.f32 0.0, %v1765
        %v1767 = vpop.f32.mrb[0].mxu0
        %1768 = vmatprep.mubr.f32.mxu0 0.0
        %1769 = vmatmul.mubr.f32.gmra.mrb[0].mxu0 %v1667
        %v1770 = vpop.f32.mrb[0].mxu0
        %v1771 = vadd.f32 0.0, %v1770
        %v1772 = vpop.f32.mrb[0].mxu0
        %1773 = vmatprep.mubr.f32.mxu0 0.0
        %1774 = vmatmul.mubr.f32.gmra.mrb[0].mxu0 %v1668
        %v1775 = vpop.f32.mrb[0].mxu0
        %v1776 = vadd.f32 0.0, %v1775
        %v1777 = vpop.f32.mrb[0].mxu0
        %1778 = vmatprep.mubr.f32.mxu0 0.0
        %1779 = vmatmul.mubr.f32.gmra.mrb[0].mxu0 %v1669
        %v1780 = vpop.f32.mrb[0].mxu0
        %v1781 = vadd.f32 0.0, %v1780
        %v1782 = vpop.f32.mrb[0].mxu0
        %1783 = vmatprep.mubr.f32.mxu0 0.0
        %1784 = vmatmul.mubr.f32.gmra.mrb[0].mxu0 %v1670
        %v1785 = vpop.f32.mrb[0].mxu0
        %v1786 = vadd.f32 0.0, %v1785
        %v1787 = vpop.f32.mrb[0].mxu0
        %1788 = vmatprep.mubr.f32.mxu0 0.0
        %1789 = vmatmul.mubr.f32.gmra.mrb[0].mxu0 %v1671
        %v1790 = vpop.f32.mrb[0].mxu0
        %v1791 = vadd.f32 0.0, %v1790
        %v1792 = vpop.f32.mrb[0].mxu0
        %1793 = vmatprep.mubr.f32.mxu0 0.0
        %1794 = vmatmul.mubr.f32.gmra.mrb[0].mxu0 %v1672
        %v1795 = vpop.f32.mrb[0].mxu0
        %v1796 = vadd.f32 0.0, %v1795
        %v1797 = vpop.f32.mrb[0].mxu0
        %1798 = vmatprep.mubr.f32.mxu0 0.0
        %1799 = vmatmul.mubr.f32.gmra.mrb[0].mxu0 %v1673
        %v1800 = vpop.f32.mrb[0].mxu0
        %v1801 = vadd.f32 0.0, %v1800
        %v1802 = vpop.f32.mrb[0].mxu0
        %1803 = vmatprep.mubr.f32.mxu0 0.0
        %1804 = vmatmul.mubr.f32.gmra.mrb[0].mxu0 %v1674
        %v1805 = vpop.f32.mrb[0].mxu0
        %v1806 = vadd.f32 0.0, %v1805
        %v1807 = vpop.f32.mrb[0].mxu0
        %1808 = vmatprep.mubr.f32.mxu0 0.0
        %1809 = vmatmul.mubr.f32.gmra.mrb[0].mxu0 %v1675
        %v1810 = vpop.f32.mrb[0].mxu0
        %v1811 = vadd.f32 0.0, %v1810
        %v1812 = vpop.f32.mrb[0].mxu0
        %1813 = vmatprep.mubr.f32.mxu0 0.0
        %1814 = vmatmul.mubr.f32.gmra.mrb[0].mxu0 %v1676
        %v1815 = vpop.f32.mrb[0].mxu0
        %v1816 = vadd.f32 0.0, %v1815
        %v1817 = vpop.f32.mrb[0].mxu0
        %1818 = vmatprep.mubr.f32.mxu0 0.0
        %1819 = vmatmul.mubr.f32.gmra.mrb[0].mxu0 %v1677
        %v1820 = vpop.f32.mrb[0].mxu0
        %v1821 = vadd.f32 0.0, %v1820
        %v1822 = vpop.f32.mrb[0].mxu0
        %1823 = vmatprep.mubr.f32.mxu0 0.0
        %1824 = vmatmul.mubr.f32.gmra.mrb[0].mxu0 %v1678
        %v1825 = vpop.f32.mrb[0].mxu0
        %v1826 = vadd.f32 0.0, %v1825
        %v1827 = vpop.f32.mrb[0].mxu0
        %1828 = vmatprep.mubr.f32.mxu0 0.0
        %1829 = vmatmul.mubr.f32.gmra.mrb[0].mxu0 %v1679
        %v1830 = vpop.f32.mrb[0].mxu0
        %v1831 = vadd.f32 0.0, %v1830
        %v1832 = vpop.f32.mrb[0].mxu0
        %1833 = vmatprep.mubr.f32.mxu0 0.0
        %1834 = vmatmul.mubr.f32.gmra.mrb[0].mxu0 %v1680
        %v1835 = vpop.f32.mrb[0].mxu0
        %v1836 = vadd.f32 0.0, %v1835
        %v1837 = vpop.f32.mrb[0].mxu0
        %1838 = vmatprep.mubr.f32.mxu0 0.0
        %1839 = vmatmul.mubr.f32.gmra.mrb[0].mxu0 %v1681
        %v1840 = vpop.f32.mrb[0].mxu0
        %v1841 = vadd.f32 0.0, %v1840
        %v1842 = vpop.f32.mrb[0].mxu0
        %1843 = vdwg.mxu0
        %v1844 = vadd.f32 %v1649, %v1766
        %v1845 = vadd.f32 %v1650, %v1771
        %v1846 = vadd.f32 %v1651, %v1776
        %v1847 = vadd.f32 %v1652, %v1781
        %v1848 = vadd.f32 %v1653, %v1786
        %v1849 = vadd.f32 %v1654, %v1791
        %v1850 = vadd.f32 %v1655, %v1796
        %v1851 = vadd.f32 %v1656, %v1801
        %v1852 = vadd.f32 %v1657, %v1806
        %v1853 = vadd.f32 %v1658, %v1811
        %v1854 = vadd.f32 %v1659, %v1816
        %v1855 = vadd.f32 %v1660, %v1821
        %v1856 = vadd.f32 %v1661, %v1826
        %v1857 = vadd.f32 %v1662, %v1831
        %v1858 = vadd.f32 %v1663, %v1836
        %v1859 = vadd.f32 %v1664, %v1841
        %v1860 = vld [vmem:[%s639 + $0x10] sm:$0xff]
        %v1861 = vld [vmem:[%s639 + $0x18] sm:$0xff]
        %v1862 = vld [vmem:[%s639 + $0x20] sm:$0xff]
        %v1863 = vld [vmem:[%s639 + $0x28] sm:$0xff]
        %v1864 = vld [vmem:[%s639 + $0x30] sm:$0xff]
        %v1865 = vld [vmem:[%s639 + $0x38] sm:$0xff]
        %v1866 = vld [vmem:[%s639 + $0x40] sm:$0xff]
        %v1867 = vld [vmem:[%s639 + $0x48] sm:$0xff]
        %v1868 = vld [vmem:[%s639 + $0x50] sm:$0xff]
        %v1869 = vld [vmem:[%s639 + $0x58] sm:$0xff]
        %v1870 = vld [vmem:[%s639 + $0x60] sm:$0xff]
        %v1871 = vld [vmem:[%s639 + $0x68] sm:$0xff]
        %v1872 = vld [vmem:[%s639 + $0x70] sm:$0xff]
        %v1873 = vld [vmem:[%s639 + $0x78] sm:$0xff]
        %v1874 = vld [vmem:[%s639 + $0x80] sm:$0xff]
        %v1875 = vld [vmem:[%s639 + $0x88] sm:$0xff]
        %s1876 = scalar_lea.vmem %s673, 768
        %v1877 = vld [vmem:[%s1876] sm:$0xff]
        %v1878 = vld [vmem:[%s1876 + $0x8] sm:$0xff]
        %v1879 = vld [vmem:[%s1876 + $0x10] sm:$0xff]
        %v1880 = vld [vmem:[%s1876 + $0x18] sm:$0xff]
        %v1881 = vld [vmem:[%s1876 + $0x20] sm:$0xff]
        %v1882 = vld [vmem:[%s1876 + $0x28] sm:$0xff]
        %v1883 = vld [vmem:[%s1876 + $0x30] sm:$0xff]
        %v1884 = vld [vmem:[%s1876 + $0x38] sm:$0xff]
        %v1885 = vld [vmem:[%s1876 + $0x40] sm:$0xff]
        %v1886 = vld [vmem:[%s1876 + $0x48] sm:$0xff]
        %v1887 = vld [vmem:[%s1876 + $0x50] sm:$0xff]
        %v1888 = vld [vmem:[%s1876 + $0x58] sm:$0xff]
        %v1889 = vld [vmem:[%s1876 + $0x60] sm:$0xff]
        %v1890 = vld [vmem:[%s1876 + $0x68] sm:$0xff]
        %v1891 = vld [vmem:[%s1876 + $0x70] sm:$0xff]
        %v1892 = vld [vmem:[%s1876 + $0x78] sm:$0xff]
        %1893 = vmatprep.subr.mxu0 0.0
        %1894 = vmatpush1.msra.mxu0 %v1877
        %1895 = vmatprep.subr.mxu0 0.0
        %1896 = vmatpush1.msra.mxu0 %v1878
        %1897 = vmatprep.subr.mxu0 0.0
        %1898 = vmatpush1.msra.mxu0 %v1879
        %1899 = vmatprep.subr.mxu0 0.0
        %1900 = vmatpush1.msra.mxu0 %v1880
        %1901 = vmatprep.subr.mxu0 0.0
        %1902 = vmatpush1.msra.mxu0 %v1881
        %1903 = vmatprep.subr.mxu0 0.0
        %1904 = vmatpush1.msra.mxu0 %v1882
        %1905 = vmatprep.subr.mxu0 0.0
        %1906 = vmatpush1.msra.mxu0 %v1883
        %1907 = vmatprep.subr.mxu0 0.0
        %1908 = vmatpush1.msra.mxu0 %v1884
        %1909 = vmatprep.subr.mxu0 0.0
        %1910 = vmatpush1.msra.mxu0 %v1885
        %1911 = vmatprep.subr.mxu0 0.0
        %1912 = vmatpush1.msra.mxu0 %v1886
        %1913 = vmatprep.subr.mxu0 0.0
        %1914 = vmatpush1.msra.mxu0 %v1887
        %1915 = vmatprep.subr.mxu0 0.0
        %1916 = vmatpush1.msra.mxu0 %v1888
        %1917 = vmatprep.subr.mxu0 0.0
        %1918 = vmatpush1.msra.mxu0 %v1889
        %1919 = vmatprep.subr.mxu0 0.0
        %1920 = vmatpush1.msra.mxu0 %v1890
        %1921 = vmatprep.subr.mxu0 0.0
        %1922 = vmatpush1.msra.mxu0 %v1891
        %1923 = vmatprep.subr.mxu0 0.0
        %1924 = vmatpush1.msra.mxu0 %v1892
        %1925 = vmatprep.subr.mxu0 0.0
        %1926 = vmatpush1.msra.mxu0 0.0
        %1927 = vmatprep.subr.mxu0 0.0
        %1928 = vmatpush1.msra.mxu0 0.0
        %1929 = vmatprep.subr.mxu0 0.0
        %1930 = vmatpush1.msra.mxu0 0.0
        %1931 = vmatprep.subr.mxu0 0.0
        %1932 = vmatpush1.msra.mxu0 0.0
        %1933 = vmatprep.subr.mxu0 0.0
        %1934 = vmatpush1.msra.mxu0 0.0
        %1935 = vmatprep.subr.mxu0 0.0
        %1936 = vmatpush1.msra.mxu0 0.0
        %1937 = vmatprep.subr.mxu0 0.0
        %1938 = vmatpush1.msra.mxu0 0.0
        %1939 = vmatprep.subr.mxu0 0.0
        %1940 = vmatpush1.msra.mxu0 0.0
        %1941 = vmatprep.subr.mxu0 0.0
        %1942 = vmatpush1.msra.mxu0 0.0
        %1943 = vmatprep.subr.mxu0 0.0
        %1944 = vmatpush1.msra.mxu0 0.0
        %1945 = vmatprep.subr.mxu0 0.0
        %1946 = vmatpush1.msra.mxu0 0.0
        %1947 = vmatprep.subr.mxu0 0.0
        %1948 = vmatpush1.msra.mxu0 0.0
        %1949 = vmatprep.subr.mxu0 0.0
        %1950 = vmatpush1.msra.mxu0 0.0
        %1951 = vmatprep.subr.mxu0 0.0
        %1952 = vmatpush1.msra.mxu0 0.0
        %1953 = vmatprep.subr.mxu0 0.0
        %1954 = vmatpush1.msra.mxu0 0.0
        %1955 = vmatprep.subr.mxu0 0.0
        %1956 = vmatpush1.msra.mxu0 0.0
        %1957 = vmatprep.mubr.f32.mxu0 0.0
        %1958 = vmatmul.mubr.f32.gmra.mrb[0].mxu0 %v1860
        %v1959 = vpop.f32.mrb[0].mxu0
        %v1960 = vadd.f32 0.0, %v1959
        %v1961 = vpop.f32.mrb[0].mxu0
        %1962 = vmatprep.mubr.f32.mxu0 0.0
        %1963 = vmatmul.mubr.f32.gmra.mrb[0].mxu0 %v1861
        %v1964 = vpop.f32.mrb[0].mxu0
        %v1965 = vadd.f32 0.0, %v1964
        %v1966 = vpop.f32.mrb[0].mxu0
        %1967 = vmatprep.mubr.f32.mxu0 0.0
        %1968 = vmatmul.mubr.f32.gmra.mrb[0].mxu0 %v1862
        %v1969 = vpop.f32.mrb[0].mxu0
        %v1970 = vadd.f32 0.0, %v1969
        %v1971 = vpop.f32.mrb[0].mxu0
        %1972 = vmatprep.mubr.f32.mxu0 0.0
        %1973 = vmatmul.mubr.f32.gmra.mrb[0].mxu0 %v1863
        %v1974 = vpop.f32.mrb[0].mxu0
        %v1975 = vadd.f32 0.0, %v1974
        %v1976 = vpop.f32.mrb[0].mxu0
        %1977 = vmatprep.mubr.f32.mxu0 0.0
        %1978 = vmatmul.mubr.f32.gmra.mrb[0].mxu0 %v1864
        %v1979 = vpop.f32.mrb[0].mxu0
        %v1980 = vadd.f32 0.0, %v1979
        %v1981 = vpop.f32.mrb[0].mxu0
        %1982 = vmatprep.mubr.f32.mxu0 0.0
        %1983 = vmatmul.mubr.f32.gmra.mrb[0].mxu0 %v1865
        %v1984 = vpop.f32.mrb[0].mxu0
        %v1985 = vadd.f32 0.0, %v1984
        %v1986 = vpop.f32.mrb[0].mxu0
        %1987 = vmatprep.mubr.f32.mxu0 0.0
        %1988 = vmatmul.mubr.f32.gmra.mrb[0].mxu0 %v1866
        %v1989 = vpop.f32.mrb[0].mxu0
        %v1990 = vadd.f32 0.0, %v1989
        %v1991 = vpop.f32.mrb[0].mxu0
        %1992 = vmatprep.mubr.f32.mxu0 0.0
        %1993 = vmatmul.mubr.f32.gmra.mrb[0].mxu0 %v1867
        %v1994 = vpop.f32.mrb[0].mxu0
        %v1995 = vadd.f32 0.0, %v1994
        %v1996 = vpop.f32.mrb[0].mxu0
        %1997 = vmatprep.mubr.f32.mxu0 0.0
        %1998 = vmatmul.mubr.f32.gmra.mrb[0].mxu0 %v1868
        %v1999 = vpop.f32.mrb[0].mxu0
        %v2000 = vadd.f32 0.0, %v1999
        %v2001 = vpop.f32.mrb[0].mxu0
        %2002 = vmatprep.mubr.f32.mxu0 0.0
        %2003 = vmatmul.mubr.f32.gmra.mrb[0].mxu0 %v1869
        %v2004 = vpop.f32.mrb[0].mxu0
        %v2005 = vadd.f32 0.0, %v2004
        %v2006 = vpop.f32.mrb[0].mxu0
        %2007 = vmatprep.mubr.f32.mxu0 0.0
        %2008 = vmatmul.mubr.f32.gmra.mrb[0].mxu0 %v1870
        %v2009 = vpop.f32.mrb[0].mxu0
        %v2010 = vadd.f32 0.0, %v2009
        %v2011 = vpop.f32.mrb[0].mxu0
        %2012 = vmatprep.mubr.f32.mxu0 0.0
        %2013 = vmatmul.mubr.f32.gmra.mrb[0].mxu0 %v1871
        %v2014 = vpop.f32.mrb[0].mxu0
        %v2015 = vadd.f32 0.0, %v2014
        %v2016 = vpop.f32.mrb[0].mxu0
        %2017 = vmatprep.mubr.f32.mxu0 0.0
        %2018 = vmatmul.mubr.f32.gmra.mrb[0].mxu0 %v1872
        %v2019 = vpop.f32.mrb[0].mxu0
        %v2020 = vadd.f32 0.0, %v2019
        %v2021 = vpop.f32.mrb[0].mxu0
        %2022 = vmatprep.mubr.f32.mxu0 0.0
        %2023 = vmatmul.mubr.f32.gmra.mrb[0].mxu0 %v1873
        %v2024 = vpop.f32.mrb[0].mxu0
        %v2025 = vadd.f32 0.0, %v2024
        %v2026 = vpop.f32.mrb[0].mxu0
        %2027 = vmatprep.mubr.f32.mxu0 0.0
        %2028 = vmatmul.mubr.f32.gmra.mrb[0].mxu0 %v1874
        %v2029 = vpop.f32.mrb[0].mxu0
        %v2030 = vadd.f32 0.0, %v2029
        %v2031 = vpop.f32.mrb[0].mxu0
        %2032 = vmatprep.mubr.f32.mxu0 0.0
        %2033 = vmatmul.mubr.f32.gmra.mrb[0].mxu0 %v1875
        %v2034 = vpop.f32.mrb[0].mxu0
        %v2035 = vadd.f32 0.0, %v2034
        %v2036 = vpop.f32.mrb[0].mxu0
        %2037 = vdwg.mxu0
        %v2038 = vadd.f32 %v1844, %v1960
        %v2039 = vadd.f32 %v1845, %v1965
        %v2040 = vadd.f32 %v1846, %v1970
        %v2041 = vadd.f32 %v1847, %v1975
        %v2042 = vadd.f32 %v1848, %v1980
        %v2043 = vadd.f32 %v1849, %v1985
        %v2044 = vadd.f32 %v1850, %v1990
        %v2045 = vadd.f32 %v1851, %v1995
        %v2046 = vadd.f32 %v1852, %v2000
        %v2047 = vadd.f32 %v1853, %v2005
        %v2048 = vadd.f32 %v1854, %v2010
        %v2049 = vadd.f32 %v1855, %v2015
        %v2050 = vadd.f32 %v1856, %v2020
        %v2051 = vadd.f32 %v1857, %v2025
        %v2052 = vadd.f32 %v1858, %v2030
        %v2053 = vadd.f32 %v1859, %v2035
        %v2054 = vld [vmem:[%s885 + $0x10] sm:$0xff]
        %v2055 = vld [vmem:[%s885 + $0x18] sm:$0xff]
        %v2056 = vld [vmem:[%s885 + $0x20] sm:$0xff]
        %v2057 = vld [vmem:[%s885 + $0x28] sm:$0xff]
        %v2058 = vld [vmem:[%s885 + $0x30] sm:$0xff]
        %v2059 = vld [vmem:[%s885 + $0x38] sm:$0xff]
        %v2060 = vld [vmem:[%s885 + $0x40] sm:$0xff]
        %v2061 = vld [vmem:[%s885 + $0x48] sm:$0xff]
        %v2062 = vld [vmem:[%s885 + $0x50] sm:$0xff]
        %v2063 = vld [vmem:[%s885 + $0x58] sm:$0xff]
        %v2064 = vld [vmem:[%s885 + $0x60] sm:$0xff]
        %v2065 = vld [vmem:[%s885 + $0x68] sm:$0xff]
        %v2066 = vld [vmem:[%s885 + $0x70] sm:$0xff]
        %v2067 = vld [vmem:[%s885 + $0x78] sm:$0xff]
        %v2068 = vld [vmem:[%s885 + $0x80] sm:$0xff]
        %v2069 = vld [vmem:[%s885 + $0x88] sm:$0xff]
        %s2070 = scalar_lea.vmem %s673, 896
        %v2071 = vld [vmem:[%s2070] sm:$0xff]
        %v2072 = vld [vmem:[%s2070 + $0x8] sm:$0xff]
        %v2073 = vld [vmem:[%s2070 + $0x10] sm:$0xff]
        %v2074 = vld [vmem:[%s2070 + $0x18] sm:$0xff]
        %v2075 = vld [vmem:[%s2070 + $0x20] sm:$0xff]
        %v2076 = vld [vmem:[%s2070 + $0x28] sm:$0xff]
        %v2077 = vld [vmem:[%s2070 + $0x30] sm:$0xff]
        %v2078 = vld [vmem:[%s2070 + $0x38] sm:$0xff]
        %v2079 = vld [vmem:[%s2070 + $0x40] sm:$0xff]
        %v2080 = vld [vmem:[%s2070 + $0x48] sm:$0xff]
        %v2081 = vld [vmem:[%s2070 + $0x50] sm:$0xff]
        %v2082 = vld [vmem:[%s2070 + $0x58] sm:$0xff]
        %v2083 = vld [vmem:[%s2070 + $0x60] sm:$0xff]
        %v2084 = vld [vmem:[%s2070 + $0x68] sm:$0xff]
        %v2085 = vld [vmem:[%s2070 + $0x70] sm:$0xff]
        %v2086 = vld [vmem:[%s2070 + $0x78] sm:$0xff]
        %2087 = vmatprep.subr.mxu0 0.0
        %2088 = vmatpush1.msra.mxu0 %v2071
        %2089 = vmatprep.subr.mxu0 0.0
        %2090 = vmatpush1.msra.mxu0 %v2072
        %2091 = vmatprep.subr.mxu0 0.0
        %2092 = vmatpush1.msra.mxu0 %v2073
        %2093 = vmatprep.subr.mxu0 0.0
        %2094 = vmatpush1.msra.mxu0 %v2074
        %2095 = vmatprep.subr.mxu0 0.0
        %2096 = vmatpush1.msra.mxu0 %v2075
        %2097 = vmatprep.subr.mxu0 0.0
        %2098 = vmatpush1.msra.mxu0 %v2076
        %2099 = vmatprep.subr.mxu0 0.0
        %2100 = vmatpush1.msra.mxu0 %v2077
        %2101 = vmatprep.subr.mxu0 0.0
        %2102 = vmatpush1.msra.mxu0 %v2078
        %2103 = vmatprep.subr.mxu0 0.0
        %2104 = vmatpush1.msra.mxu0 %v2079
        %2105 = vmatprep.subr.mxu0 0.0
        %2106 = vmatpush1.msra.mxu0 %v2080
        %2107 = vmatprep.subr.mxu0 0.0
        %2108 = vmatpush1.msra.mxu0 %v2081
        %2109 = vmatprep.subr.mxu0 0.0
        %2110 = vmatpush1.msra.mxu0 %v2082
        %2111 = vmatprep.subr.mxu0 0.0
        %2112 = vmatpush1.msra.mxu0 %v2083
        %2113 = vmatprep.subr.mxu0 0.0
        %2114 = vmatpush1.msra.mxu0 %v2084
        %2115 = vmatprep.subr.mxu0 0.0
        %2116 = vmatpush1.msra.mxu0 %v2085
        %2117 = vmatprep.subr.mxu0 0.0
        %2118 = vmatpush1.msra.mxu0 %v2086
        %2119 = vmatprep.subr.mxu0 0.0
        %2120 = vmatpush1.msra.mxu0 0.0
        %2121 = vmatprep.subr.mxu0 0.0
        %2122 = vmatpush1.msra.mxu0 0.0
        %2123 = vmatprep.subr.mxu0 0.0
        %2124 = vmatpush1.msra.mxu0 0.0
        %2125 = vmatprep.subr.mxu0 0.0
        %2126 = vmatpush1.msra.mxu0 0.0
        %2127 = vmatprep.subr.mxu0 0.0
        %2128 = vmatpush1.msra.mxu0 0.0
        %2129 = vmatprep.subr.mxu0 0.0
        %2130 = vmatpush1.msra.mxu0 0.0
        %2131 = vmatprep.subr.mxu0 0.0
        %2132 = vmatpush1.msra.mxu0 0.0
        %2133 = vmatprep.subr.mxu0 0.0
        %2134 = vmatpush1.msra.mxu0 0.0
        %2135 = vmatprep.subr.mxu0 0.0
        %2136 = vmatpush1.msra.mxu0 0.0
        %2137 = vmatprep.subr.mxu0 0.0
        %2138 = vmatpush1.msra.mxu0 0.0
        %2139 = vmatprep.subr.mxu0 0.0
        %2140 = vmatpush1.msra.mxu0 0.0
        %2141 = vmatprep.subr.mxu0 0.0
        %2142 = vmatpush1.msra.mxu0 0.0
        %2143 = vmatprep.subr.mxu0 0.0
        %2144 = vmatpush1.msra.mxu0 0.0
        %2145 = vmatprep.subr.mxu0 0.0
        %2146 = vmatpush1.msra.mxu0 0.0
        %2147 = vmatprep.subr.mxu0 0.0
        %2148 = vmatpush1.msra.mxu0 0.0
        %2149 = vmatprep.subr.mxu0 0.0
        %2150 = vmatpush1.msra.mxu0 0.0
        %2151 = vmatprep.mubr.f32.mxu0 0.0
        %2152 = vmatmul.mubr.f32.gmra.mrb[0].mxu0 %v2054
        %v2153 = vpop.f32.mrb[0].mxu0
        %v2154 = vadd.f32 0.0, %v2153
        %v2155 = vpop.f32.mrb[0].mxu0
        %2156 = vmatprep.mubr.f32.mxu0 0.0
        %2157 = vmatmul.mubr.f32.gmra.mrb[0].mxu0 %v2055
        %v2158 = vpop.f32.mrb[0].mxu0
        %v2159 = vadd.f32 0.0, %v2158
        %v2160 = vpop.f32.mrb[0].mxu0
        %2161 = vmatprep.mubr.f32.mxu0 0.0
        %2162 = vmatmul.mubr.f32.gmra.mrb[0].mxu0 %v2056
        %v2163 = vpop.f32.mrb[0].mxu0
        %v2164 = vadd.f32 0.0, %v2163
        %v2165 = vpop.f32.mrb[0].mxu0
        %2166 = vmatprep.mubr.f32.mxu0 0.0
        %2167 = vmatmul.mubr.f32.gmra.mrb[0].mxu0 %v2057
        %v2168 = vpop.f32.mrb[0].mxu0
        %v2169 = vadd.f32 0.0, %v2168
        %v2170 = vpop.f32.mrb[0].mxu0
        %2171 = vmatprep.mubr.f32.mxu0 0.0
        %2172 = vmatmul.mubr.f32.gmra.mrb[0].mxu0 %v2058
        %v2173 = vpop.f32.mrb[0].mxu0
        %v2174 = vadd.f32 0.0, %v2173
        %v2175 = vpop.f32.mrb[0].mxu0
        %2176 = vmatprep.mubr.f32.mxu0 0.0
        %2177 = vmatmul.mubr.f32.gmra.mrb[0].mxu0 %v2059
        %v2178 = vpop.f32.mrb[0].mxu0
        %v2179 = vadd.f32 0.0, %v2178
        %v2180 = vpop.f32.mrb[0].mxu0
        %2181 = vmatprep.mubr.f32.mxu0 0.0
        %2182 = vmatmul.mubr.f32.gmra.mrb[0].mxu0 %v2060
        %v2183 = vpop.f32.mrb[0].mxu0
        %v2184 = vadd.f32 0.0, %v2183
        %v2185 = vpop.f32.mrb[0].mxu0
        %2186 = vmatprep.mubr.f32.mxu0 0.0
        %2187 = vmatmul.mubr.f32.gmra.mrb[0].mxu0 %v2061
        %v2188 = vpop.f32.mrb[0].mxu0
        %v2189 = vadd.f32 0.0, %v2188
        %v2190 = vpop.f32.mrb[0].mxu0
        %2191 = vmatprep.mubr.f32.mxu0 0.0
        %2192 = vmatmul.mubr.f32.gmra.mrb[0].mxu0 %v2062
        %v2193 = vpop.f32.mrb[0].mxu0
        %v2194 = vadd.f32 0.0, %v2193
        %v2195 = vpop.f32.mrb[0].mxu0
        %2196 = vmatprep.mubr.f32.mxu0 0.0
        %2197 = vmatmul.mubr.f32.gmra.mrb[0].mxu0 %v2063
        %v2198 = vpop.f32.mrb[0].mxu0
        %v2199 = vadd.f32 0.0, %v2198
        %v2200 = vpop.f32.mrb[0].mxu0
        %2201 = vmatprep.mubr.f32.mxu0 0.0
        %2202 = vmatmul.mubr.f32.gmra.mrb[0].mxu0 %v2064
        %v2203 = vpop.f32.mrb[0].mxu0
        %v2204 = vadd.f32 0.0, %v2203
        %v2205 = vpop.f32.mrb[0].mxu0
        %2206 = vmatprep.mubr.f32.mxu0 0.0
        %2207 = vmatmul.mubr.f32.gmra.mrb[0].mxu0 %v2065
        %v2208 = vpop.f32.mrb[0].mxu0
        %v2209 = vadd.f32 0.0, %v2208
        %v2210 = vpop.f32.mrb[0].mxu0
        %2211 = vmatprep.mubr.f32.mxu0 0.0
        %2212 = vmatmul.mubr.f32.gmra.mrb[0].mxu0 %v2066
        %v2213 = vpop.f32.mrb[0].mxu0
        %v2214 = vadd.f32 0.0, %v2213
        %v2215 = vpop.f32.mrb[0].mxu0
        %2216 = vmatprep.mubr.f32.mxu0 0.0
        %2217 = vmatmul.mubr.f32.gmra.mrb[0].mxu0 %v2067
        %v2218 = vpop.f32.mrb[0].mxu0
        %v2219 = vadd.f32 0.0, %v2218
        %v2220 = vpop.f32.mrb[0].mxu0
        %2221 = vmatprep.mubr.f32.mxu0 0.0
        %2222 = vmatmul.mubr.f32.gmra.mrb[0].mxu0 %v2068
        %v2223 = vpop.f32.mrb[0].mxu0
        %v2224 = vadd.f32 0.0, %v2223
        %v2225 = vpop.f32.mrb[0].mxu0
        %2226 = vmatprep.mubr.f32.mxu0 0.0
        %2227 = vmatmul.mubr.f32.gmra.mrb[0].mxu0 %v2069
        %v2228 = vpop.f32.mrb[0].mxu0
        %v2229 = vadd.f32 0.0, %v2228
        %v2230 = vpop.f32.mrb[0].mxu0
        %2231 = vdwg.mxu0
        %v2232 = vadd.f32 %v2038, %v2154
        %v2233 = vadd.f32 %v2039, %v2159
        %v2234 = vadd.f32 %v2040, %v2164
        %v2235 = vadd.f32 %v2041, %v2169
        %v2236 = vadd.f32 %v2042, %v2174
        %v2237 = vadd.f32 %v2043, %v2179
        %v2238 = vadd.f32 %v2044, %v2184
        %v2239 = vadd.f32 %v2045, %v2189
        %v2240 = vadd.f32 %v2046, %v2194
        %v2241 = vadd.f32 %v2047, %v2199
        %v2242 = vadd.f32 %v2048, %v2204
        %v2243 = vadd.f32 %v2049, %v2209
        %v2244 = vadd.f32 %v2050, %v2214
        %v2245 = vadd.f32 %v2051, %v2219
        %v2246 = vadd.f32 %v2052, %v2224
        %v2247 = vadd.f32 %v2053, %v2229
        %v2248 = vld [vmem:[%s1080 + $0x10] sm:$0xff]
        %v2249 = vld [vmem:[%s1080 + $0x18] sm:$0xff]
        %v2250 = vld [vmem:[%s1080 + $0x20] sm:$0xff]
        %v2251 = vld [vmem:[%s1080 + $0x28] sm:$0xff]
        %v2252 = vld [vmem:[%s1080 + $0x30] sm:$0xff]
        %v2253 = vld [vmem:[%s1080 + $0x38] sm:$0xff]
        %v2254 = vld [vmem:[%s1080 + $0x40] sm:$0xff]
        %v2255 = vld [vmem:[%s1080 + $0x48] sm:$0xff]
        %v2256 = vld [vmem:[%s1080 + $0x50] sm:$0xff]
        %v2257 = vld [vmem:[%s1080 + $0x58] sm:$0xff]
        %v2258 = vld [vmem:[%s1080 + $0x60] sm:$0xff]
        %v2259 = vld [vmem:[%s1080 + $0x68] sm:$0xff]
        %v2260 = vld [vmem:[%s1080 + $0x70] sm:$0xff]
        %v2261 = vld [vmem:[%s1080 + $0x78] sm:$0xff]
        %v2262 = vld [vmem:[%s1080 + $0x80] sm:$0xff]
        %v2263 = vld [vmem:[%s1080 + $0x88] sm:$0xff]
        %s2264 = scalar_lea.vmem %s673, 1024
        %v2265 = vld [vmem:[%s2264] sm:$0xff]
        %v2266 = vld [vmem:[%s2264 + $0x8] sm:$0xff]
        %v2267 = vld [vmem:[%s2264 + $0x10] sm:$0xff]
        %v2268 = vld [vmem:[%s2264 + $0x18] sm:$0xff]
        %v2269 = vld [vmem:[%s2264 + $0x20] sm:$0xff]
        %v2270 = vld [vmem:[%s2264 + $0x28] sm:$0xff]
        %v2271 = vld [vmem:[%s2264 + $0x30] sm:$0xff]
        %v2272 = vld [vmem:[%s2264 + $0x38] sm:$0xff]
        %v2273 = vld [vmem:[%s2264 + $0x40] sm:$0xff]
        %v2274 = vld [vmem:[%s2264 + $0x48] sm:$0xff]
        %v2275 = vld [vmem:[%s2264 + $0x50] sm:$0xff]
        %v2276 = vld [vmem:[%s2264 + $0x58] sm:$0xff]
        %v2277 = vld [vmem:[%s2264 + $0x60] sm:$0xff]
        %v2278 = vld [vmem:[%s2264 + $0x68] sm:$0xff]
        %v2279 = vld [vmem:[%s2264 + $0x70] sm:$0xff]
        %v2280 = vld [vmem:[%s2264 + $0x78] sm:$0xff]
        %2281 = vmatprep.subr.mxu0 0.0
        %2282 = vmatpush1.msra.mxu0 %v2265
        %2283 = vmatprep.subr.mxu0 0.0
        %2284 = vmatpush1.msra.mxu0 %v2266
        %2285 = vmatprep.subr.mxu0 0.0
        %2286 = vmatpush1.msra.mxu0 %v2267
        %2287 = vmatprep.subr.mxu0 0.0
        %2288 = vmatpush1.msra.mxu0 %v2268
        %2289 = vmatprep.subr.mxu0 0.0
        %2290 = vmatpush1.msra.mxu0 %v2269
        %2291 = vmatprep.subr.mxu0 0.0
        %2292 = vmatpush1.msra.mxu0 %v2270
        %2293 = vmatprep.subr.mxu0 0.0
        %2294 = vmatpush1.msra.mxu0 %v2271
        %2295 = vmatprep.subr.mxu0 0.0
        %2296 = vmatpush1.msra.mxu0 %v2272
        %2297 = vmatprep.subr.mxu0 0.0
        %2298 = vmatpush1.msra.mxu0 %v2273
        %2299 = vmatprep.subr.mxu0 0.0
        %2300 = vmatpush1.msra.mxu0 %v2274
        %2301 = vmatprep.subr.mxu0 0.0
        %2302 = vmatpush1.msra.mxu0 %v2275
        %2303 = vmatprep.subr.mxu0 0.0
        %2304 = vmatpush1.msra.mxu0 %v2276
        %2305 = vmatprep.subr.mxu0 0.0
        %2306 = vmatpush1.msra.mxu0 %v2277
        %2307 = vmatprep.subr.mxu0 0.0
        %2308 = vmatpush1.msra.mxu0 %v2278
        %2309 = vmatprep.subr.mxu0 0.0
        %2310 = vmatpush1.msra.mxu0 %v2279
        %2311 = vmatprep.subr.mxu0 0.0
        %2312 = vmatpush1.msra.mxu0 %v2280
        %2313 = vmatprep.subr.mxu0 0.0
        %2314 = vmatpush1.msra.mxu0 0.0
        %2315 = vmatprep.subr.mxu0 0.0
        %2316 = vmatpush1.msra.mxu0 0.0
        %2317 = vmatprep.subr.mxu0 0.0
        %2318 = vmatpush1.msra.mxu0 0.0
        %2319 = vmatprep.subr.mxu0 0.0
        %2320 = vmatpush1.msra.mxu0 0.0
        %2321 = vmatprep.subr.mxu0 0.0
        %2322 = vmatpush1.msra.mxu0 0.0
        %2323 = vmatprep.subr.mxu0 0.0
        %2324 = vmatpush1.msra.mxu0 0.0
        %2325 = vmatprep.subr.mxu0 0.0
        %2326 = vmatpush1.msra.mxu0 0.0
        %2327 = vmatprep.subr.mxu0 0.0
        %2328 = vmatpush1.msra.mxu0 0.0
        %2329 = vmatprep.subr.mxu0 0.0
        %2330 = vmatpush1.msra.mxu0 0.0
        %2331 = vmatprep.subr.mxu0 0.0
        %2332 = vmatpush1.msra.mxu0 0.0
        %2333 = vmatprep.subr.mxu0 0.0
        %2334 = vmatpush1.msra.mxu0 0.0
        %2335 = vmatprep.subr.mxu0 0.0
        %2336 = vmatpush1.msra.mxu0 0.0
        %2337 = vmatprep.subr.mxu0 0.0
        %2338 = vmatpush1.msra.mxu0 0.0
        %2339 = vmatprep.subr.mxu0 0.0
        %2340 = vmatpush1.msra.mxu0 0.0
        %2341 = vmatprep.subr.mxu0 0.0
        %2342 = vmatpush1.msra.mxu0 0.0
        %2343 = vmatprep.subr.mxu0 0.0
        %2344 = vmatpush1.msra.mxu0 0.0
        %2345 = vmatprep.mubr.f32.mxu0 0.0
        %2346 = vmatmul.mubr.f32.gmra.mrb[0].mxu0 %v2248
        %v2347 = vpop.f32.mrb[0].mxu0
        %v2348 = vadd.f32 0.0, %v2347
        %v2349 = vpop.f32.mrb[0].mxu0
        %2350 = vmatprep.mubr.f32.mxu0 0.0
        %2351 = vmatmul.mubr.f32.gmra.mrb[0].mxu0 %v2249
        %v2352 = vpop.f32.mrb[0].mxu0
        %v2353 = vadd.f32 0.0, %v2352
        %v2354 = vpop.f32.mrb[0].mxu0
        %2355 = vmatprep.mubr.f32.mxu0 0.0
        %2356 = vmatmul.mubr.f32.gmra.mrb[0].mxu0 %v2250
        %v2357 = vpop.f32.mrb[0].mxu0
        %v2358 = vadd.f32 0.0, %v2357
        %v2359 = vpop.f32.mrb[0].mxu0
        %2360 = vmatprep.mubr.f32.mxu0 0.0
        %2361 = vmatmul.mubr.f32.gmra.mrb[0].mxu0 %v2251
        %v2362 = vpop.f32.mrb[0].mxu0
        %v2363 = vadd.f32 0.0, %v2362
        %v2364 = vpop.f32.mrb[0].mxu0
        %2365 = vmatprep.mubr.f32.mxu0 0.0
        %2366 = vmatmul.mubr.f32.gmra.mrb[0].mxu0 %v2252
        %v2367 = vpop.f32.mrb[0].mxu0
        %v2368 = vadd.f32 0.0, %v2367
        %v2369 = vpop.f32.mrb[0].mxu0
        %2370 = vmatprep.mubr.f32.mxu0 0.0
        %2371 = vmatmul.mubr.f32.gmra.mrb[0].mxu0 %v2253
        %v2372 = vpop.f32.mrb[0].mxu0
        %v2373 = vadd.f32 0.0, %v2372
        %v2374 = vpop.f32.mrb[0].mxu0
        %2375 = vmatprep.mubr.f32.mxu0 0.0
        %2376 = vmatmul.mubr.f32.gmra.mrb[0].mxu0 %v2254
        %v2377 = vpop.f32.mrb[0].mxu0
        %v2378 = vadd.f32 0.0, %v2377
        %v2379 = vpop.f32.mrb[0].mxu0
        %2380 = vmatprep.mubr.f32.mxu0 0.0
        %2381 = vmatmul.mubr.f32.gmra.mrb[0].mxu0 %v2255
        %v2382 = vpop.f32.mrb[0].mxu0
        %v2383 = vadd.f32 0.0, %v2382
        %v2384 = vpop.f32.mrb[0].mxu0
        %2385 = vmatprep.mubr.f32.mxu0 0.0
        %2386 = vmatmul.mubr.f32.gmra.mrb[0].mxu0 %v2256
        %v2387 = vpop.f32.mrb[0].mxu0
        %v2388 = vadd.f32 0.0, %v2387
        %v2389 = vpop.f32.mrb[0].mxu0
        %2390 = vmatprep.mubr.f32.mxu0 0.0
        %2391 = vmatmul.mubr.f32.gmra.mrb[0].mxu0 %v2257
        %v2392 = vpop.f32.mrb[0].mxu0
        %v2393 = vadd.f32 0.0, %v2392
        %v2394 = vpop.f32.mrb[0].mxu0
        %2395 = vmatprep.mubr.f32.mxu0 0.0
        %2396 = vmatmul.mubr.f32.gmra.mrb[0].mxu0 %v2258
        %v2397 = vpop.f32.mrb[0].mxu0
        %v2398 = vadd.f32 0.0, %v2397
        %v2399 = vpop.f32.mrb[0].mxu0
        %2400 = vmatprep.mubr.f32.mxu0 0.0
        %2401 = vmatmul.mubr.f32.gmra.mrb[0].mxu0 %v2259
        %v2402 = vpop.f32.mrb[0].mxu0
        %v2403 = vadd.f32 0.0, %v2402
        %v2404 = vpop.f32.mrb[0].mxu0
        %2405 = vmatprep.mubr.f32.mxu0 0.0
        %2406 = vmatmul.mubr.f32.gmra.mrb[0].mxu0 %v2260
        %v2407 = vpop.f32.mrb[0].mxu0
        %v2408 = vadd.f32 0.0, %v2407
        %v2409 = vpop.f32.mrb[0].mxu0
        %2410 = vmatprep.mubr.f32.mxu0 0.0
        %2411 = vmatmul.mubr.f32.gmra.mrb[0].mxu0 %v2261
        %v2412 = vpop.f32.mrb[0].mxu0
        %v2413 = vadd.f32 0.0, %v2412
        %v2414 = vpop.f32.mrb[0].mxu0
        %2415 = vmatprep.mubr.f32.mxu0 0.0
        %2416 = vmatmul.mubr.f32.gmra.mrb[0].mxu0 %v2262
        %v2417 = vpop.f32.mrb[0].mxu0
        %v2418 = vadd.f32 0.0, %v2417
        %v2419 = vpop.f32.mrb[0].mxu0
        %2420 = vmatprep.mubr.f32.mxu0 0.0
        %2421 = vmatmul.mubr.f32.gmra.mrb[0].mxu0 %v2263
        %v2422 = vpop.f32.mrb[0].mxu0
        %v2423 = vadd.f32 0.0, %v2422
        %v2424 = vpop.f32.mrb[0].mxu0
        %2425 = vdwg.mxu0
        %v2426 = vadd.f32 %v2232, %v2348
        %v2427 = vadd.f32 %v2233, %v2353
        %v2428 = vadd.f32 %v2234, %v2358
        %v2429 = vadd.f32 %v2235, %v2363
        %v2430 = vadd.f32 %v2236, %v2368
        %v2431 = vadd.f32 %v2237, %v2373
        %v2432 = vadd.f32 %v2238, %v2378
        %v2433 = vadd.f32 %v2239, %v2383
        %v2434 = vadd.f32 %v2240, %v2388
        %v2435 = vadd.f32 %v2241, %v2393
        %v2436 = vadd.f32 %v2242, %v2398
        %v2437 = vadd.f32 %v2243, %v2403
        %v2438 = vadd.f32 %v2244, %v2408
        %v2439 = vadd.f32 %v2245, %v2413
        %v2440 = vadd.f32 %v2246, %v2418
        %v2441 = vadd.f32 %v2247, %v2423
        %v2442 = vmax.f32 %v2426, 0.0
        %v2443 = vmax.f32 %v2427, 0.0
        %v2444 = vmax.f32 %v2428, 0.0
        %v2445 = vmax.f32 %v2429, 0.0
        %v2446 = vmax.f32 %v2430, 0.0
        %v2447 = vmax.f32 %v2431, 0.0
        %v2448 = vmax.f32 %v2432, 0.0
        %v2449 = vmax.f32 %v2433, 0.0
        %v2450 = vmax.f32 %v2434, 0.0
        %v2451 = vmax.f32 %v2435, 0.0
        %v2452 = vmax.f32 %v2436, 0.0
        %v2453 = vmax.f32 %v2437, 0.0
        %v2454 = vmax.f32 %v2438, 0.0
        %v2455 = vmax.f32 %v2439, 0.0
        %v2456 = vmax.f32 %v2440, 0.0
        %v2457 = vmax.f32 %v2441, 0.0
        %2458 = vst [vmem:[%s684] sm:$0xff] %v2442
        %2459 = vst [vmem:[%s684 + $0x8] sm:$0xff] %v2443
        %2460 = vst [vmem:[%s684 + $0x10] sm:$0xff] %v2444
        %2461 = vst [vmem:[%s684 + $0x18] sm:$0xff] %v2445
        %2462 = vst [vmem:[%s684 + $0x20] sm:$0xff] %v2446
        %2463 = vst [vmem:[%s684 + $0x28] sm:$0xff] %v2447
        %2464 = vst [vmem:[%s684 + $0x30] sm:$0xff] %v2448
        %2465 = vst [vmem:[%s684 + $0x38] sm:$0xff] %v2449
        %2466 = vst [vmem:[%s684 + $0x40] sm:$0xff] %v2450
        %2467 = vst [vmem:[%s684 + $0x48] sm:$0xff] %v2451
        %2468 = vst [vmem:[%s684 + $0x50] sm:$0xff] %v2452
        %2469 = vst [vmem:[%s684 + $0x58] sm:$0xff] %v2453
        %2470 = vst [vmem:[%s684 + $0x60] sm:$0xff] %v2454
        %2471 = vst [vmem:[%s684 + $0x68] sm:$0xff] %v2455
        %2472 = vst [vmem:[%s684 + $0x70] sm:$0xff] %v2456
        %2473 = vst [vmem:[%s684 + $0x78] sm:$0xff] %v2457
        %p2474 = scmp.lt.s32.totalorder %s19, 1
        %s2475 = scalar_select %p2474, %s19, 1
        %p2476 = scmp.lt.s32.totalorder %s18, 0
        %s2477 = scalar_select %p2476, %s18, 0
        %s2478 = smul.addr %s2475, 16
        %s2479 = sadd.s32 %s2477, %s2478
        %s2480 = smul.addr %s2479, 8
        %s2481 = scalar_lea.vmem %s3, %s2480
        // Predicated region
        $region71: #{basic_block_forward.2} parent=65 // pred_check
          %p2482 = pneg %p124
        $region72: #{basic_block_forward.2} parent=65 // pred_check_branch
          %2484 = sbr.rel (%p2482) target = $region74
        $region73: #{basic_block_forward.2} parent=65 // pred_region
          _
        $region74: #{basic_block_forward.2} parent=65 // pred_fallthru
          _
      $region66: #{basic_block_forward.2} parent=5 // pred_fallthru
        _
      %p2485 = scmp.le.s32.totalorder 2, %s9
      // Predicated region
      $region75: #{basic_block_forward.2} parent=5 // pred_check
        %p2486 = pneg %p2485
      $region76: #{basic_block_forward.2} parent=5 // pred_check_branch
        %2488 = sbr.rel (%p2486) target = $region78
      $region77: #{basic_block_forward.2} parent=5 // pred_region
        %s2489 = ssub.s32 %s9, 2
        // Predicated region
        $region79: #{basic_block_forward.2} parent=77 // pred_check
          %p2490 = pneg %p130
        $region80: #{basic_block_forward.2} parent=77 // pred_check_branch
          %2492 = sbr.rel (%p2490) target = $region82
        $region81: #{basic_block_forward.2} parent=77 // pred_region
          %p2493 = scmp.lt.s32.totalorder %s21, 1
          %s2494 = scalar_select %p2493, %s21, 1
          %p2495 = scmp.lt.s32.totalorder %s20, 0
          %s2496 = scalar_select %p2495, %s20, 0
          %s2497 = smul.addr %s2494, 16
          %s2498 = sadd.s32 %s2496, %s2497
          %s2499 = smul.addr %s2498, 8
          %s2500 = scalar_lea.vmem %s3, %s2499
        $region82: #{basic_block_forward.2} parent=77 // pred_fallthru
          _
      $region78: #{basic_block_forward.2} parent=5 // pred_fallthru
        _
    $region6: #{basic_block_forward.2} parent=1 // loop_footer
      %s13 = sadd.s32 1, %s9
    $region7: #{basic_block_forward.2} parent=1 // loop_footer_branch
      %8 = sbr.rel target = $region3
    $region8: #{basic_block_forward.2} parent=1 // loop_exit
      _

// kernel: basic_block_forward.3
$region0: #{basic_block_forward.3}
  #allocation0 [shape = 'u32[]', space=smem, size = 0x4, offset = 0x4, fixed_abs, tag = 'smem constant byte address 0x4 - core index']
  #allocation1 [shape = 'u32[144,128]{1,0:T(1,128)}', space=vmem, size = 0x12000, scoped, tag = 'internal scratch']
  %s0 = inlined_call_operand.vmem [shape: f32[3,2,160,128], index: 0, kind: input, shape index: {}]
  %s1 = inlined_call_operand.vmem [shape: f32[3,3,128,128], index: 1, kind: input, shape index: {}]
  %s2 = inlined_call_operand.vmem [shape: f32[1,128], index: 2, kind: input, shape index: {}]
  %s3 = inlined_call_operand.vmem [shape: f32[2,128,128], index: 3, kind: input, shape index: {}]
  %s4 = inlined_call_operand.vmem [shape: f32[128,128], index: 4, kind: input, shape index: {}]
  %s5 = inlined_call_operand.vmem [shape: f32[1,128], index: 5, kind: input, shape index: {}]
  %s6 = inlined_call_operand.vmem [shape: f32[2,128,128], index: 6, kind: output, shape index: {}]
  %s7 = sld [smem:[#allocation0]]
  $region95: #{basic_block_forward.3} parent=0
    _
  %s9 = ssub.s32 1, %s7
  %s10 = scalar_select 0, %s9, %s7
  $region1: #{basic_block_forward.3} parent=0
    #allocation2 [shape = 'u8[491520]{0}', space=vmem, size = 0x78000, scoped, tag = 'input window, operand 0']
    loop: start=0, step=1, limit=4
    $region2: #{basic_block_forward.3} parent=1 // loop_pre_header
      _
    $region3: #{basic_block_forward.3} parent=1 // loop_header
      %s12 = sphi 0, %s16
      %p13 = scmp.ge.s32.totalorder %s12, 4
      %s19 = sphi 0, %s31
      %s20 = sphi 0, %s27
      %s21 = sphi 0, %s19
      %s22 = sphi 0, %s20
      %s23 = sphi 0, %s21
      %s24 = sphi 0, %s22
      %s34 = sphi 0, %s36
      %s37 = sphi 0, %s34
      %s38 = sphi 0, %s37
      %s54 = sphi 0, %s38
      %s60 = sphi 0, %s62
      %s63 = sphi 0, %s60
      %s64 = sphi 0, %s63
      %s80 = sphi 0, %s64
      %s86 = sphi 0, %s88
      %s89 = sphi 0, %s86
      %s90 = sphi 0, %s89
      %s106 = sphi 0, %s90
      %s112 = sphi 0, %s114
      %s115 = sphi 0, %s112
      %s116 = sphi 0, %s115
      %s132 = sphi 0, %s116
      %s138 = sphi 0, %s140
      %s141 = sphi 0, %s138
      %s142 = sphi 0, %s141
      %s158 = sphi 0, %s142
      %s164 = sphi 0, %s166
      %s167 = sphi 0, %s164
      %s168 = sphi 0, %s167
      %s184 = sphi 0, %s168
      %s192 = sphi 0, %s194
      %s195 = sphi 0, %s192
      %s196 = sphi 0, %s195
      %s212 = sphi 0, %s196
    $region4: #{basic_block_forward.3} parent=1 // loop_header_branch
      %15 = sbr.rel (%p13) target = $region8
    $region5: #{basic_block_forward.3} parent=1 // loop_body
      %s17 = ssub.s32 %s12, 1
      %s18 = ssub.s32 %s12, 2
      %s25 = sadd.s32 1, %s20
      %p26 = scmp.ge.s32.totalorder %s25, 2
      %s27 = scalar_select %p26, 0, %s25
      %s28 = sadd.s32 1, %s19
      %s29 = scalar_select %p26, %s28, %s19
      %p30 = scmp.ge.s32.totalorder %s29, 1
      %s31 = scalar_select %p30, 0, %s29
      %s32 = ssub.s32 %s20, %s27
      %p33 = scmp.eq.s32.totalorder %s32, 0
      %s35 = sadd.s32 %s34, 1
      %s36 = scalar_select %p33, %s34, %s35
      %p39 = pneg %p33
      %p40 = scmp.eq.s32.totalorder %s12, 1
      %p41 = por %p39, %p40
      %p42 = scmp.ne.s32.totalorder %s34, %s37
      %p43 = scmp.eq.s32.totalorder %s12, 0
      %p44 = por %p42, %p43
      %p45 = scmp.ne.s32.totalorder %s34, %s37
      %p46 = scmp.eq.s32.totalorder %s17, 1
      %p47 = por %p45, %p46
      %p48 = scmp.ne.s32.totalorder %s37, %s38
      %p49 = scmp.eq.s32.totalorder %s17, 0
      %p50 = por %p48, %p49
      %p51 = scmp.ne.s32.totalorder %s37, %s38
      %p52 = scmp.eq.s32.totalorder %s18, 1
      %p53 = por %p51, %p52
      %p55 = scmp.ne.s32.totalorder %s38, %s54
      %p56 = scmp.eq.s32.totalorder %s18, 0
      %p57 = por %p55, %p56
      %s58 = ssub.s32 %s19, %s31
      %p59 = scmp.eq.s32.totalorder %s58, 0
      %s61 = sadd.s32 %s60, 1
      %s62 = scalar_select %p59, %s60, %s61
      %p65 = pneg %p59
      %p66 = scmp.eq.s32.totalorder %s12, 1
      %p67 = por %p65, %p66
      %p68 = scmp.ne.s32.totalorder %s60, %s63
      %p69 = scmp.eq.s32.totalorder %s12, 0
      %p70 = por %p68, %p69
      %p71 = scmp.ne.s32.totalorder %s60, %s63
      %p72 = scmp.eq.s32.totalorder %s17, 1
      %p73 = por %p71, %p72
      %p74 = scmp.ne.s32.totalorder %s63, %s64
      %p75 = scmp.eq.s32.totalorder %s17, 0
      %p76 = por %p74, %p75
      %p77 = scmp.ne.s32.totalorder %s63, %s64
      %p78 = scmp.eq.s32.totalorder %s18, 1
      %p79 = por %p77, %p78
      %p81 = scmp.ne.s32.totalorder %s64, %s80
      %p82 = scmp.eq.s32.totalorder %s18, 0
      %p83 = por %p81, %p82
      %s84 = ssub.s32 %s19, %s31
      %p85 = scmp.eq.s32.totalorder %s84, 0
      %s87 = sadd.s32 %s86, 1
      %s88 = scalar_select %p85, %s86, %s87
      %p91 = pneg %p85
      %p92 = scmp.eq.s32.totalorder %s12, 1
      %p93 = por %p91, %p92
      %p94 = scmp.ne.s32.totalorder %s86, %s89
      %p95 = scmp.eq.s32.totalorder %s12, 0
      %p96 = por %p94, %p95
      %p97 = scmp.ne.s32.totalorder %s86, %s89
      %p98 = scmp.eq.s32.totalorder %s17, 1
      %p99 = por %p97, %p98
      %p100 = scmp.ne.s32.totalorder %s89, %s90
      %p101 = scmp.eq.s32.totalorder %s17, 0
      %p102 = por %p100, %p101
      %p103 = scmp.ne.s32.totalorder %s89, %s90
      %p104 = scmp.eq.s32.totalorder %s18, 1
      %p105 = por %p103, %p104
      %p107 = scmp.ne.s32.totalorder %s90, %s106
      %p108 = scmp.eq.s32.totalorder %s18, 0
      %p109 = por %p107, %p108
      %s110 = ssub.s32 %s20, %s27
      %p111 = scmp.eq.s32.totalorder %s110, 0
      %s113 = sadd.s32 %s112, 1
      %s114 = scalar_select %p111, %s112, %s113
      %p117 = pneg %p111
      %p118 = scmp.eq.s32.totalorder %s12, 1
      %p119 = por %p117, %p118
      %p120 = scmp.ne.s32.totalorder %s112, %s115
      %p121 = scmp.eq.s32.totalorder %s12, 0
      %p122 = por %p120, %p121
      %p123 = scmp.ne.s32.totalorder %s112, %s115
      %p124 = scmp.eq.s32.totalorder %s17, 1
      %p125 = por %p123, %p124
      %p126 = scmp.ne.s32.totalorder %s115, %s116
      %p127 = scmp.eq.s32.totalorder %s17, 0
      %p128 = por %p126, %p127
      %p129 = scmp.ne.s32.totalorder %s115, %s116
      %p130 = scmp.eq.s32.totalorder %s18, 1
      %p131 = por %p129, %p130
      %p133 = scmp.ne.s32.totalorder %s116, %s132
      %p134 = scmp.eq.s32.totalorder %s18, 0
      %p135 = por %p133, %p134
      %s136 = ssub.s32 %s19, %s31
      %p137 = scmp.eq.s32.totalorder %s136, 0
      %s139 = sadd.s32 %s138, 1
      %s140 = scalar_select %p137, %s138, %s139
      %p143 = pneg %p137
      %p144 = scmp.eq.s32.totalorder %s12, 1
      %p145 = por %p143, %p144
      %p146 = scmp.ne.s32.totalorder %s138, %s141
      %p147 = scmp.eq.s32.totalorder %s12, 0
      %p148 = por %p146, %p147
      %p149 = scmp.ne.s32.totalorder %s138, %s141
      %p150 = scmp.eq.s32.totalorder %s17, 1
      %p151 = por %p149, %p150
      %p152 = scmp.ne.s32.totalorder %s141, %s142
      %p153 = scmp.eq.s32.totalorder %s17, 0
      %p154 = por %p152, %p153
      %p155 = scmp.ne.s32.totalorder %s141, %s142
      %p156 = scmp.eq.s32.totalorder %s18, 1
      %p157 = por %p155, %p156
      %p159 = scmp.ne.s32.totalorder %s142, %s158
      %p160 = scmp.eq.s32.totalorder %s18, 0
      %p161 = por %p159, %p160
      %s162 = ssub.s32 %s19, %s31
      %p163 = scmp.eq.s32.totalorder %s162, 0
      %s165 = sadd.s32 %s164, 1
      %s166 = scalar_select %p163, %s164, %s165
      %p169 = pneg %p163
      %p170 = scmp.eq.s32.totalorder %s12, 1
      %p171 = por %p169, %p170
      %p172 = scmp.ne.s32.totalorder %s164, %s167
      %p173 = scmp.eq.s32.totalorder %s12, 0
      %p174 = por %p172, %p173
      %p175 = scmp.ne.s32.totalorder %s164, %s167
      %p176 = scmp.eq.s32.totalorder %s17, 1
      %p177 = por %p175, %p176
      %p178 = scmp.ne.s32.totalorder %s167, %s168
      %p179 = scmp.eq.s32.totalorder %s17, 0
      %p180 = por %p178, %p179
      %p181 = scmp.ne.s32.totalorder %s167, %s168
      %p182 = scmp.eq.s32.totalorder %s18, 1
      %p183 = por %p181, %p182
      %p185 = scmp.ne.s32.totalorder %s168, %s184
      %p186 = scmp.eq.s32.totalorder %s18, 0
      %p187 = por %p185, %p186
      %s188 = ssub.s32 %s20, %s27
      %s189 = ssub.s32 %s19, %s31
      %s190 = sor.u32 %s188, %s189
      %p191 = scmp.eq.s32.totalorder %s190, 0
      %s193 = sadd.s32 %s192, 1
      %s194 = scalar_select %p191, %s192, %s193
      %p197 = pneg %p191
      %p198 = scmp.eq.s32.totalorder %s12, 1
      %p199 = por %p197, %p198
      %p200 = scmp.ne.s32.totalorder %s192, %s195
      %p201 = scmp.eq.s32.totalorder %s12, 0
      %p202 = por %p200, %p201
      %p203 = scmp.ne.s32.totalorder %s192, %s195
      %p204 = scmp.eq.s32.totalorder %s17, 1
      %p205 = por %p203, %p204
      %p206 = scmp.ne.s32.totalorder %s195, %s196
      %p207 = scmp.eq.s32.totalorder %s17, 0
      %p208 = por %p206, %p207
      %p209 = scmp.ne.s32.totalorder %s195, %s196
      %p210 = scmp.eq.s32.totalorder %s18, 1
      %p211 = por %p209, %p210
      %p213 = scmp.ne.s32.totalorder %s196, %s212
      %p214 = scmp.eq.s32.totalorder %s18, 0
      %p215 = por %p213, %p214
      %p216 = scmp.le.s32.totalorder 1, %s12
      %p217 = scmp.lt.s32.totalorder %s12, 3
      %p218 = pnand %p216, %p217
      %p219 = pneg %p218
      // Predicated region
      $region9: #{basic_block_forward.3} parent=5 // pred_check
        _
      $region10: #{basic_block_forward.3} parent=5 // pred_check_branch
        %221 = sbr.rel (%p218) target = $region12
      $region11: #{basic_block_forward.3} parent=5 // pred_region
        %s222 = ssub.s32 %s12, 1
        // Predicated region
        $region13: #{basic_block_forward.3} parent=11 // pred_check
          %p223 = pneg %p76
        $region14: #{basic_block_forward.3} parent=11 // pred_check_branch
          %225 = sbr.rel (%p223) target = $region16
        $region15: #{basic_block_forward.3} parent=11 // pred_region
          %p226 = scmp.lt.s32.totalorder %s21, 0
          %s227 = scalar_select %p226, %s21, 0
          %s228 = smul.addr %s227, 8
          %s229 = scalar_lea.vmem %s1, %s228
        $region16: #{basic_block_forward.3} parent=11 // pred_fallthru
          _
        // Predicated region
        $region17: #{basic_block_forward.3} parent=11 // pred_check
          %p230 = pneg %p102
        $region18: #{basic_block_forward.3} parent=11 // pred_check_branch
          %232 = sbr.rel (%p230) target = $region20
        $region19: #{basic_block_forward.3} parent=11 // pred_region
          %p233 = scmp.lt.s32.totalorder %s21, 0
          %s234 = scalar_select %p233, %s21, 0
          %s235 = scalar_lea.vmem %s2, %s234
        $region20: #{basic_block_forward.3} parent=11 // pred_fallthru
          _
        // Predicated region
        $region21: #{basic_block_forward.3} parent=11 // pred_check
          %p236 = pneg %p154
        $region22: #{basic_block_forward.3} parent=11 // pred_check_branch
          %238 = sbr.rel (%p236) target = $region24
        $region23: #{basic_block_forward.3} parent=11 // pred_region
          %p239 = scmp.lt.s32.totalorder %s21, 0
          %s240 = scalar_select %p239, %s21, 0
          %s241 = smul.addr %s240, 8
          %s242 = scalar_lea.vmem %s4, %s241
        $region24: #{basic_block_forward.3} parent=11 // pred_fallthru
          _
        // Predicated region
        $region25: #{basic_block_forward.3} parent=11 // pred_check
          %p243 = pneg %p180
        $region26: #{basic_block_forward.3} parent=11 // pred_check_branch
          %245 = sbr.rel (%p243) target = $region28
        $region27: #{basic_block_forward.3} parent=11 // pred_region
          %p246 = scmp.lt.s32.totalorder %s21, 0
          %s247 = scalar_select %p246, %s21, 0
          %s248 = scalar_lea.vmem %s5, %s247
        $region28: #{basic_block_forward.3} parent=11 // pred_fallthru
          _
      $region12: #{basic_block_forward.3} parent=5 // pred_fallthru
        _
      %p249 = scmp.lt.s32.totalorder %s12, 2
      // Predicated region
      $region29: #{basic_block_forward.3} parent=5 // pred_check
        %p250 = pneg %p249
      $region30: #{basic_block_forward.3} parent=5 // pred_check_branch
        %252 = sbr.rel (%p250) target = $region32
      $region31: #{basic_block_forward.3} parent=5 // pred_region
        // Predicated region
        $region33: #{basic_block_forward.3} parent=31 // pred_check
          %p253 = pneg %p44
        $region34: #{basic_block_forward.3} parent=31 // pred_check_branch
          %255 = sbr.rel (%p253) target = $region36
        $region35: #{basic_block_forward.3} parent=31 // pred_region
          %s256 = sand.u32 %s34, 1
          %s257 = sand.u32 %s34, 1
          %s258 = smul.addr %s257, 480
          %s259 = scalar_lea.vmem [#allocation2], %s258
          %s260 = smul.addr %s20, 20
          %s261 = smul.addr %s260, 8
          %s262 = scalar_lea.vmem %s0, %s261
          // Predicated region
          $region37: #{basic_block_forward.3} parent=35 // pred_check
            _
          $region38: #{basic_block_forward.3} parent=35 // pred_check_branch
            %264 = sbr.rel (0) target = $region40
          $region39: #{basic_block_forward.3} parent=35 // pred_region
            // Predicated region
            $region41: #{basic_block_forward.3} parent=39 // pred_check
              _
            $region42: #{basic_block_forward.3} parent=39 // pred_check_branch
              %266 = sbr.rel (0) target = $region44
            $region43: #{basic_block_forward.3} parent=39 // pred_region
              // Predicated region
              $region56: #{basic_block_forward.3} parent=43 // pred_check
                _
              $region57: #{basic_block_forward.3} parent=43 // pred_check_branch
                %399 = sbr.rel (0) target = $region59
              $region58: #{basic_block_forward.3} parent=43 // pred_region
                loop: start=0, step=1, limit=1
                $region60: #{basic_block_forward.3} parent=58 // loop_pre_header
                  _
                $region61: #{basic_block_forward.3} parent=58 // loop_header
                  %s401 = sphi 0, %s405
                  %p402 = scmp.ge.s32.totalorder %s401, 1
                  %s406 = sphi %s262, %s262
                  %s407 = sphi %s259, %s259
                $region62: #{basic_block_forward.3} parent=58 // loop_header_branch
                  %404 = sbr.rel (%p402) target = $region66
                $region63: #{basic_block_forward.3} parent=58 // loop_body
                  %v408 = vld [vmem:[%s406] sm:$0xff]
                  %409 = vst [vmem:[%s407] sm:$0xff] %v408
                  %v410 = vld [vmem:[%s406 + $0x8] sm:$0xff]
                  %411 = vst [vmem:[%s407 + $0x8] sm:$0xff] %v410
                  %v412 = vld [vmem:[%s406 + $0x10] sm:$0xff]
                  %413 = vst [vmem:[%s407 + $0x10] sm:$0xff] %v412
                  %v414 = vld [vmem:[%s406 + $0x18] sm:$0xff]
                  %415 = vst [vmem:[%s407 + $0x18] sm:$0xff] %v414
                  %v416 = vld [vmem:[%s406 + $0x20] sm:$0xff]
                  %417 = vst [vmem:[%s407 + $0x20] sm:$0xff] %v416
                  %v418 = vld [vmem:[%s406 + $0x28] sm:$0xff]
                  %419 = vst [vmem:[%s407 + $0x28] sm:$0xff] %v418
                  %v420 = vld [vmem:[%s406 + $0x30] sm:$0xff]
                  %421 = vst [vmem:[%s407 + $0x30] sm:$0xff] %v420
                  %v422 = vld [vmem:[%s406 + $0x38] sm:$0xff]
                  %423 = vst [vmem:[%s407 + $0x38] sm:$0xff] %v422
                  %v424 = vld [vmem:[%s406 + $0x40] sm:$0xff]
                  %425 = vst [vmem:[%s407 + $0x40] sm:$0xff] %v424
                  %v426 = vld [vmem:[%s406 + $0x48] sm:$0xff]
                  %427 = vst [vmem:[%s407 + $0x48] sm:$0xff] %v426
                  %v428 = vld [vmem:[%s406 + $0x50] sm:$0xff]
                  %429 = vst [vmem:[%s407 + $0x50] sm:$0xff] %v428
                  %v430 = vld [vmem:[%s406 + $0x58] sm:$0xff]
                  %431 = vst [vmem:[%s407 + $0x58] sm:$0xff] %v430
                  %v432 = vld [vmem:[%s406 + $0x60] sm:$0xff]
                  %433 = vst [vmem:[%s407 + $0x60] sm:$0xff] %v432
                  %v434 = vld [vmem:[%s406 + $0x68] sm:$0xff]
                  %435 = vst [vmem:[%s407 + $0x68] sm:$0xff] %v434
                  %v436 = vld [vmem:[%s406 + $0x70] sm:$0xff]
                  %437 = vst [vmem:[%s407 + $0x70] sm:$0xff] %v436
                  %v438 = vld [vmem:[%s406 + $0x78] sm:$0xff]
                  %439 = vst [vmem:[%s407 + $0x78] sm:$0xff] %v438
                  %v440 = vld [vmem:[%s406 + $0x80] sm:$0xff]
                  %441 = vst [vmem:[%s407 + $0x80] sm:$0xff] %v440
                  %v442 = vld [vmem:[%s406 + $0x88] sm:$0xff]
                  %443 = vst [vmem:[%s407 + $0x88] sm:$0xff] %v442
                  %v444 = vld [vmem:[%s406 + $0x90] sm:$0xff]
                  %445 = vst [vmem:[%s407 + $0x90] sm:$0xff] %v444
                  %v446 = vld [vmem:[%s406 + $0x98] sm:$0xff]
                  %447 = vst [vmem:[%s407 + $0x98] sm:$0xff] %v446
                  %v448 = vld [vmem:[%s406 + $0x140] sm:$0xff]
                  %449 = vst [vmem:[%s407 + $0xa0] sm:$0xff] %v448
                  %v450 = vld [vmem:[%s406 + $0x148] sm:$0xff]
                  %451 = vst [vmem:[%s407 + $0xa8] sm:$0xff] %v450
                  %v452 = vld [vmem:[%s406 + $0x150] sm:$0xff]
                  %453 = vst [vmem:[%s407 + $0xb0] sm:$0xff] %v452
                  %v454 = vld [vmem:[%s406 + $0x158] sm:$0xff]
                  %455 = vst [vmem:[%s407 + $0xb8] sm:$0xff] %v454
                  %v456 = vld [vmem:[%s406 + $0x160] sm:$0xff]
                  %457 = vst [vmem:[%s407 + $0xc0] sm:$0xff] %v456
                  %v458 = vld [vmem:[%s406 + $0x168] sm:$0xff]
                  %459 = vst [vmem:[%s407 + $0xc8] sm:$0xff] %v458
                  %v460 = vld [vmem:[%s406 + $0x170] sm:$0xff]
                  %461 = vst [vmem:[%s407 + $0xd0] sm:$0xff] %v460
                  %v462 = vld [vmem:[%s406 + $0x178] sm:$0xff]
                  %463 = vst [vmem:[%s407 + $0xd8] sm:$0xff] %v462
                  %v464 = vld [vmem:[%s406 + $0x180] sm:$0xff]
                  %465 = vst [vmem:[%s407 + $0xe0] sm:$0xff] %v464
                  %v466 = vld [vmem:[%s406 + $0x188] sm:$0xff]
                  %467 = vst [vmem:[%s407 + $0xe8] sm:$0xff] %v466
                  %v468 = vld [vmem:[%s406 + $0x190] sm:$0xff]
                  %469 = vst [vmem:[%s407 + $0xf0] sm:$0xff] %v468
                  %v470 = vld [vmem:[%s406 + $0x198] sm:$0xff]
                  %471 = vst [vmem:[%s407 + $0xf8] sm:$0xff] %v470
                  %v472 = vld [vmem:[%s406 + $0x1a0] sm:$0xff]
                  %473 = vst [vmem:[%s407 + $0x100] sm:$0xff] %v472
                  %v474 = vld [vmem:[%s406 + $0x1a8] sm:$0xff]
                  %475 = vst [vmem:[%s407 + $0x108] sm:$0xff] %v474
                  %v476 = vld [vmem:[%s406 + $0x1b0] sm:$0xff]
                  %477 = vst [vmem:[%s407 + $0x110] sm:$0xff] %v476
                  %v478 = vld [vmem:[%s406 + $0x1b8] sm:$0xff]
                  %479 = vst [vmem:[%s407 + $0x118] sm:$0xff] %v478
                  %v480 = vld [vmem:[%s406 + $0x1c0] sm:$0xff]
                  %481 = vst [vmem:[%s407 + $0x120] sm:$0xff] %v480
                  %v482 = vld [vmem:[%s406 + $0x1c8] sm:$0xff]
                  %483 = vst [vmem:[%s407 + $0x128] sm:$0xff] %v482
                  %v484 = vld [vmem:[%s406 + $0x1d0] sm:$0xff]
                  %485 = vst [vmem:[%s407 + $0x130] sm:$0xff] %v484
                  %v486 = vld [vmem:[%s406 + $0x1d8] sm:$0xff]
                  %487 = vst [vmem:[%s407 + $0x138] sm:$0xff] %v486
                  %v488 = vld [vmem:[%s406 + $0x280] sm:$0xff]
                  %489 = vst [vmem:[%s407 + $0x140] sm:$0xff] %v488
                  %v490 = vld [vmem:[%s406 + $0x288] sm:$0xff]
                  %491 = vst [vmem:[%s407 + $0x148] sm:$0xff] %v490
                  %v492 = vld [vmem:[%s406 + $0x290] sm:$0xff]
                  %493 = vst [vmem:[%s407 + $0x150] sm:$0xff] %v492
                  %v494 = vld [vmem:[%s406 + $0x298] sm:$0xff]
                  %495 = vst [vmem:[%s407 + $0x158] sm:$0xff] %v494
                  %v496 = vld [vmem:[%s406 + $0x2a0] sm:$0xff]
                  %497 = vst [vmem:[%s407 + $0x160] sm:$0xff] %v496
                  %v498 = vld [vmem:[%s406 + $0x2a8] sm:$0xff]
                  %499 = vst [vmem:[%s407 + $0x168] sm:$0xff] %v498
                  %v500 = vld [vmem:[%s406 + $0x2b0] sm:$0xff]
                  %501 = vst [vmem:[%s407 + $0x170] sm:$0xff] %v500
                  %v502 = vld [vmem:[%s406 + $0x2b8] sm:$0xff]
                  %503 = vst [vmem:[%s407 + $0x178] sm:$0xff] %v502
                  %v504 = vld [vmem:[%s406 + $0x2c0] sm:$0xff]
                  %505 = vst [vmem:[%s407 + $0x180] sm:$0xff] %v504
                  %v506 = vld [vmem:[%s406 + $0x2c8] sm:$0xff]
                  %507 = vst [vmem:[%s407 + $0x188] sm:$0xff] %v506
                  %v508 = vld [vmem:[%s406 + $0x2d0] sm:$0xff]
                  %509 = vst [vmem:[%s407 + $0x190] sm:$0xff] %v508
                  %v510 = vld [vmem:[%s406 + $0x2d8] sm:$0xff]
                  %511 = vst [vmem:[%s407 + $0x198] sm:$0xff] %v510
                  %v512 = vld [vmem:[%s406 + $0x2e0] sm:$0xff]
                  %513 = vst [vmem:[%s407 + $0x1a0] sm:$0xff] %v512
                  %v514 = vld [vmem:[%s406 + $0x2e8] sm:$0xff]
                  %515 = vst [vmem:[%s407 + $0x1a8] sm:$0xff] %v514
                  %v516 = vld [vmem:[%s406 + $0x2f0] sm:$0xff]
                  %517 = vst [vmem:[%s407 + $0x1b0] sm:$0xff] %v516
                  %v518 = vld [vmem:[%s406 + $0x2f8] sm:$0xff]
                  %519 = vst [vmem:[%s407 + $0x1b8] sm:$0xff] %v518
                  %v520 = vld [vmem:[%s406 + $0x300] sm:$0xff]
                  %521 = vst [vmem:[%s407 + $0x1c0] sm:$0xff] %v520
                  %v522 = vld [vmem:[%s406 + $0x308] sm:$0xff]
                  %523 = vst [vmem:[%s407 + $0x1c8] sm:$0xff] %v522
                  %v524 = vld [vmem:[%s406 + $0x310] sm:$0xff]
                  %525 = vst [vmem:[%s407 + $0x1d0] sm:$0xff] %v524
                  %v526 = vld [vmem:[%s406 + $0x318] sm:$0xff]
                  %527 = vst [vmem:[%s407 + $0x1d8] sm:$0xff] %v526
                $region64: #{basic_block_forward.3} parent=58 // loop_footer
                  %s405 = sadd.s32 1, %s401
                $region65: #{basic_block_forward.3} parent=58 // loop_footer_branch
                  %400 = sbr.rel target = $region61
                $region66: #{basic_block_forward.3} parent=58 // loop_exit
                  _
              $region59: #{basic_block_forward.3} parent=43 // pred_fallthru
                _
              // Predicated region
              $region67: #{basic_block_forward.3} parent=43 // pred_check
                _
              $region68: #{basic_block_forward.3} parent=43 // pred_check_branch
                %529 = sbr.rel target = $region70
              $region69: #{basic_block_forward.3} parent=43 // pred_region
                _
              $region70: #{basic_block_forward.3} parent=43 // pred_fallthru
                _
            $region44: #{basic_block_forward.3} parent=39 // pred_fallthru
              _
            // Predicated region
            $region45: #{basic_block_forward.3} parent=39 // pred_check
              _
            $region46: #{basic_block_forward.3} parent=39 // pred_check_branch
              %268 = sbr.rel target = $region48
            $region47: #{basic_block_forward.3} parent=39 // pred_region
              loop: start=0, step=1, limit=1
              $region49: #{basic_block_forward.3} parent=47 // loop_pre_header
                _
              $region50: #{basic_block_forward.3} parent=47 // loop_header
                %s271 = sphi 0, %s275
                %p272 = scmp.ge.s32.totalorder %s271, 1
                %s276 = sphi %s262, %s262
                %s277 = sphi %s259, %s259
              $region51: #{basic_block_forward.3} parent=47 // loop_header_branch
                %274 = sbr.rel (%p272) target = $region55
              $region52: #{basic_block_forward.3} parent=47 // loop_body
                %v278 = vld [vmem:[%s276] sm:$0xff]
                %279 = vst [vmem:[%s277] sm:$0xff] %v278
                %v280 = vld [vmem:[%s276 + $0x8] sm:$0xff]
                %281 = vst [vmem:[%s277 + $0x8] sm:$0xff] %v280
                %v282 = vld [vmem:[%s276 + $0x10] sm:$0xff]
                %283 = vst [vmem:[%s277 + $0x10] sm:$0xff] %v282
                %v284 = vld [vmem:[%s276 + $0x18] sm:$0xff]
                %285 = vst [vmem:[%s277 + $0x18] sm:$0xff] %v284
                %v286 = vld [vmem:[%s276 + $0x20] sm:$0xff]
                %287 = vst [vmem:[%s277 + $0x20] sm:$0xff] %v286
                %v288 = vld [vmem:[%s276 + $0x28] sm:$0xff]
                %289 = vst [vmem:[%s277 + $0x28] sm:$0xff] %v288
                %v290 = vld [vmem:[%s276 + $0x30] sm:$0xff]
                %291 = vst [vmem:[%s277 + $0x30] sm:$0xff] %v290
                %v292 = vld [vmem:[%s276 + $0x38] sm:$0xff]
                %293 = vst [vmem:[%s277 + $0x38] sm:$0xff] %v292
                %v294 = vld [vmem:[%s276 + $0x40] sm:$0xff]
                %295 = vst [vmem:[%s277 + $0x40] sm:$0xff] %v294
                %v296 = vld [vmem:[%s276 + $0x48] sm:$0xff]
                %297 = vst [vmem:[%s277 + $0x48] sm:$0xff] %v296
                %v298 = vld [vmem:[%s276 + $0x50] sm:$0xff]
                %299 = vst [vmem:[%s277 + $0x50] sm:$0xff] %v298
                %v300 = vld [vmem:[%s276 + $0x58] sm:$0xff]
                %301 = vst [vmem:[%s277 + $0x58] sm:$0xff] %v300
                %v302 = vld [vmem:[%s276 + $0x60] sm:$0xff]
                %303 = vst [vmem:[%s277 + $0x60] sm:$0xff] %v302
                %v304 = vld [vmem:[%s276 + $0x68] sm:$0xff]
                %305 = vst [vmem:[%s277 + $0x68] sm:$0xff] %v304
                %v306 = vld [vmem:[%s276 + $0x70] sm:$0xff]
                %307 = vst [vmem:[%s277 + $0x70] sm:$0xff] %v306
                %v308 = vld [vmem:[%s276 + $0x78] sm:$0xff]
                %309 = vst [vmem:[%s277 + $0x78] sm:$0xff] %v308
                %v310 = vld [vmem:[%s276 + $0x80] sm:$0xff]
                %311 = vst [vmem:[%s277 + $0x80] sm:$0xff] %v310
                %v312 = vld [vmem:[%s276 + $0x88] sm:$0xff]
                %313 = vst [vmem:[%s277 + $0x88] sm:$0xff] %v312
                %v314 = vld [vmem:[%s276 + $0x90] sm:$0xff]
                %315 = vst [vmem:[%s277 + $0x90] sm:$0xff] %v314
                %v316 = vld [vmem:[%s276 + $0x98] sm:$0xff]
                %317 = vst [vmem:[%s277 + $0x98] sm:$0xff] %v316
                %v318 = vld [vmem:[%s276 + $0x140] sm:$0xff]
                %319 = vst [vmem:[%s277 + $0xa0] sm:$0xff] %v318
                %v320 = vld [vmem:[%s276 + $0x148] sm:$0xff]
                %321 = vst [vmem:[%s277 + $0xa8] sm:$0xff] %v320
                %v322 = vld [vmem:[%s276 + $0x150] sm:$0xff]
                %323 = vst [vmem:[%s277 + $0xb0] sm:$0xff] %v322
                %v324 = vld [vmem:[%s276 + $0x158] sm:$0xff]
                %325 = vst [vmem:[%s277 + $0xb8] sm:$0xff] %v324
                %v326 = vld [vmem:[%s276 + $0x160] sm:$0xff]
                %327 = vst [vmem:[%s277 + $0xc0] sm:$0xff] %v326
                %v328 = vld [vmem:[%s276 + $0x168] sm:$0xff]
                %329 = vst [vmem:[%s277 + $0xc8] sm:$0xff] %v328
                %v330 = vld [vmem:[%s276 + $0x170] sm:$0xff]
                %331 = vst [vmem:[%s277 + $0xd0] sm:$0xff] %v330
                %v332 = vld [vmem:[%s276 + $0x178] sm:$0xff]
                %333 = vst [vmem:[%s277 + $0xd8] sm:$0xff] %v332
                %v334 = vld [vmem:[%s276 + $0x180] sm:$0xff]
                %335 = vst [vmem:[%s277 + $0xe0] sm:$0xff] %v334
                %v336 = vld [vmem:[%s276 + $0x188] sm:$0xff]
                %337 = vst [vmem:[%s277 + $0xe8] sm:$0xff] %v336
                %v338 = vld [vmem:[%s276 + $0x190] sm:$0xff]
                %339 = vst [vmem:[%s277 + $0xf0] sm:$0xff] %v338
                %v340 = vld [vmem:[%s276 + $0x198] sm:$0xff]
                %341 = vst [vmem:[%s277 + $0xf8] sm:$0xff] %v340
                %v342 = vld [vmem:[%s276 + $0x1a0] sm:$0xff]
                %343 = vst [vmem:[%s277 + $0x100] sm:$0xff] %v342
                %v344 = vld [vmem:[%s276 + $0x1a8] sm:$0xff]
                %345 = vst [vmem:[%s277 + $0x108] sm:$0xff] %v344
                %v346 = vld [vmem:[%s276 + $0x1b0] sm:$0xff]
                %347 = vst [vmem:[%s277 + $0x110] sm:$0xff] %v346
                %v348 = vld [vmem:[%s276 + $0x1b8] sm:$0xff]
                %349 = vst [vmem:[%s277 + $0x118] sm:$0xff] %v348
                %v350 = vld [vmem:[%s276 + $0x1c0] sm:$0xff]
                %351 = vst [vmem:[%s277 + $0x120] sm:$0xff] %v350
                %v352 = vld [vmem:[%s276 + $0x1c8] sm:$0xff]
                %353 = vst [vmem:[%s277 + $0x128] sm:$0xff] %v352
                %v354 = vld [vmem:[%s276 + $0x1d0] sm:$0xff]
                %355 = vst [vmem:[%s277 + $0x130] sm:$0xff] %v354
                %v356 = vld [vmem:[%s276 + $0x1d8] sm:$0xff]
                %357 = vst [vmem:[%s277 + $0x138] sm:$0xff] %v356
                %v358 = vld [vmem:[%s276 + $0x280] sm:$0xff]
                %359 = vst [vmem:[%s277 + $0x140] sm:$0xff] %v358
                %v360 = vld [vmem:[%s276 + $0x288] sm:$0xff]
                %361 = vst [vmem:[%s277 + $0x148] sm:$0xff] %v360
                %v362 = vld [vmem:[%s276 + $0x290] sm:$0xff]
                %363 = vst [vmem:[%s277 + $0x150] sm:$0xff] %v362
                %v364 = vld [vmem:[%s276 + $0x298] sm:$0xff]
                %365 = vst [vmem:[%s277 + $0x158] sm:$0xff] %v364
                %v366 = vld [vmem:[%s276 + $0x2a0] sm:$0xff]
                %367 = vst [vmem:[%s277 + $0x160] sm:$0xff] %v366
                %v368 = vld [vmem:[%s276 + $0x2a8] sm:$0xff]
                %369 = vst [vmem:[%s277 + $0x168] sm:$0xff] %v368
                %v370 = vld [vmem:[%s276 + $0x2b0] sm:$0xff]
                %371 = vst [vmem:[%s277 + $0x170] sm:$0xff] %v370
                %v372 = vld [vmem:[%s276 + $0x2b8] sm:$0xff]
                %373 = vst [vmem:[%s277 + $0x178] sm:$0xff] %v372
                %v374 = vld [vmem:[%s276 + $0x2c0] sm:$0xff]
                %375 = vst [vmem:[%s277 + $0x180] sm:$0xff] %v374
                %v376 = vld [vmem:[%s276 + $0x2c8] sm:$0xff]
                %377 = vst [vmem:[%s277 + $0x188] sm:$0xff] %v376
                %v378 = vld [vmem:[%s276 + $0x2d0] sm:$0xff]
                %379 = vst [vmem:[%s277 + $0x190] sm:$0xff] %v378
                %v380 = vld [vmem:[%s276 + $0x2d8] sm:$0xff]
                %381 = vst [vmem:[%s277 + $0x198] sm:$0xff] %v380
                %v382 = vld [vmem:[%s276 + $0x2e0] sm:$0xff]
                %383 = vst [vmem:[%s277 + $0x1a0] sm:$0xff] %v382
                %v384 = vld [vmem:[%s276 + $0x2e8] sm:$0xff]
                %385 = vst [vmem:[%s277 + $0x1a8] sm:$0xff] %v384
                %v386 = vld [vmem:[%s276 + $0x2f0] sm:$0xff]
                %387 = vst [vmem:[%s277 + $0x1b0] sm:$0xff] %v386
                %v388 = vld [vmem:[%s276 + $0x2f8] sm:$0xff]
                %389 = vst [vmem:[%s277 + $0x1b8] sm:$0xff] %v388
                %v390 = vld [vmem:[%s276 + $0x300] sm:$0xff]
                %391 = vst [vmem:[%s277 + $0x1c0] sm:$0xff] %v390
                %v392 = vld [vmem:[%s276 + $0x308] sm:$0xff]
                %393 = vst [vmem:[%s277 + $0x1c8] sm:$0xff] %v392
                %v394 = vld [vmem:[%s276 + $0x310] sm:$0xff]
                %395 = vst [vmem:[%s277 + $0x1d0] sm:$0xff] %v394
                %v396 = vld [vmem:[%s276 + $0x318] sm:$0xff]
                %397 = vst [vmem:[%s277 + $0x1d8] sm:$0xff] %v396
              $region53: #{basic_block_forward.3} parent=47 // loop_footer
                %s275 = sadd.s32 1, %s271
              $region54: #{basic_block_forward.3} parent=47 // loop_footer_branch
                %270 = sbr.rel target = $region50
              $region55: #{basic_block_forward.3} parent=47 // loop_exit
                _
            $region48: #{basic_block_forward.3} parent=39 // pred_fallthru
              _
          $region40: #{basic_block_forward.3} parent=35 // pred_fallthru
            _
          %530 = vnop
        $region36: #{basic_block_forward.3} parent=31 // pred_fallthru
          _
        // Predicated region
        $region71: #{basic_block_forward.3} parent=31 // pred_check
          %p531 = pneg %p122
        $region72: #{basic_block_forward.3} parent=31 // pred_check_branch
          %533 = sbr.rel (%p531) target = $region74
        $region73: #{basic_block_forward.3} parent=31 // pred_region
          %p534 = scmp.lt.s32.totalorder %s20, 1
          %s535 = scalar_select %p534, %s20, 1
          %s536 = smul.addr %s535, 16
          %s537 = smul.addr %s536, 8
          %s538 = scalar_lea.vmem %s3, %s537
        $region74: #{basic_block_forward.3} parent=31 // pred_fallthru
          _
      $region32: #{basic_block_forward.3} parent=5 // pred_fallthru
        _
      %p539 = scmp.le.s32.totalorder 1, %s12
      %p540 = scmp.lt.s32.totalorder %s12, 3
      %p541 = pnand %p539, %p540
      %p542 = pneg %p541
      // Predicated region
      $region75: #{basic_block_forward.3} parent=5 // pred_check
        _
      $region76: #{basic_block_forward.3} parent=5 // pred_check_branch
        %544 = sbr.rel (%p541) target = $region78
      $region77: #{basic_block_forward.3} parent=5 // pred_region
        %s545 = ssub.s32 %s12, 1
        %s546 = sand.u32 %s37, 1
        %s547 = sand.u32 %s37, 1
        %s548 = smul.addr %s547, 480
        %s549 = scalar_lea.vmem [#allocation2], %s548
        // Predicated region
        $region79: #{basic_block_forward.3} parent=77 // pred_check
          %p550 = pneg %p50
        $region80: #{basic_block_forward.3} parent=77 // pred_check_branch
          %552 = sbr.rel (%p550) target = $region82
        $region81: #{basic_block_forward.3} parent=77 // pred_region
          _
        $region82: #{basic_block_forward.3} parent=77 // pred_fallthru
          _
        %s553 = sand.u32 %s37, 1
        %s554 = sand.u32 %s37, 1
        %s555 = smul.addr %s554, 480
        %s556 = scalar_lea.vmem [#allocation2], %s555
        %p557 = pneg %p50
        %p558 = pneg %p47
        %p559 = scmp.lt.s32.totalorder %s21, 0
        %s560 = scalar_select %p559, %s21, 0
        %s561 = smul.addr %s560, 8
        %s562 = scalar_lea.vmem %s1, %s561
        %p563 = pneg %p76
        %p564 = pneg %p73
        %p565 = scmp.lt.s32.totalorder %s21, 0
        %s566 = scalar_select %p565, %s21, 0
        %s567 = scalar_lea.vmem %s2, %s566
        %p568 = pneg %p102
        %p569 = pneg %p99
        %p570 = scmp.lt.s32.totalorder %s22, 1
        %s571 = scalar_select %p570, %s22, 1
        %s572 = smul.addr %s571, 16
        %s573 = smul.addr %s572, 8
        %s574 = scalar_lea.vmem %s3, %s573
        %p575 = pneg %p128
        %p576 = pneg %p125
        %p577 = scmp.lt.s32.totalorder %s21, 0
        %s578 = scalar_select %p577, %s21, 0
        %s579 = smul.addr %s578, 8
        %s580 = scalar_lea.vmem %s4, %s579
        %p581 = pneg %p154
        %p582 = pneg %p151
        %p583 = scmp.lt.s32.totalorder %s21, 0
        %s584 = scalar_select %p583, %s21, 0
        %s585 = scalar_lea.vmem %s5, %s584
        %p586 = pneg %p180
        %p587 = pneg %p177
        %p588 = pneg %p208
        %p589 = pneg %p205
        %p590 = scmp.lt.s32.totalorder %s22, 1
        %s591 = scalar_select %p590, %s22, 1
        %p592 = scmp.lt.s32.totalorder %s21, 0
        %s593 = scalar_select %p592, %s21, 0
        %s594 = smul.addr %s591, 16
        %s595 = sadd.s32 %s593, %s594
        %s596 = smul.addr %s595, 8
        %s597 = scalar_lea.vmem %s6, %s596
        %p598 = scmp.lt.s32.totalorder %s21, 0
        %s599 = scalar_select %p598, %s21, 0
        %s600 = smul.addr %s599, 8
        %s601 = scalar_lea.vmem %s1, %s600
        %p602 = scmp.lt.s32.totalorder %s21, 0
        %s603 = scalar_select %p602, %s21, 0
        %s604 = scalar_lea.vmem %s2, %s603
        %p605 = scmp.lt.s32.totalorder %s22, 1
        %s606 = scalar_select %p605, %s22, 1
        %s607 = smul.addr %s606, 16
        %s608 = smul.addr %s607, 8
        %s609 = scalar_lea.vmem %s3, %s608
        %p610 = scmp.lt.s32.totalorder %s21, 0
        %s611 = scalar_select %p610, %s21, 0
        %s612 = smul.addr %s611, 8
        %s613 = scalar_lea.vmem %s4, %s612
        %p614 = scmp.lt.s32.totalorder %s21, 0
        %s615 = scalar_select %p614, %s21, 0
        %s616 = scalar_lea.vmem %s5, %s615
        %p617 = scmp.lt.s32.totalorder %s22, 1
        %s618 = scalar_select %p617, %s22, 1
        %p619 = scmp.lt.s32.totalorder %s21, 0
        %s620 = scalar_select %p619, %s21, 0
        %s621 = smul.addr %s618, 16
        %s622 = sadd.s32 %s620, %s621
        %s623 = smul.addr %s622, 8
        %s624 = scalar_lea.vmem %s6, %s623
        %v625 = vld [vmem:[%s604] sm:$0x1]
        %v627 = vlaneseq
        %v628 = vshrl.u32 %v627, 7
        %v629 = vsub.s32 0, %v628
        %v630 = vrot.slane %v625, %v629
        %v632 = vld [vmem:[%s549] sm:$0xff]
        %v633 = vld [vmem:[%s549 + $0x8] sm:$0xff]
        %v634 = vld [vmem:[%s549 + $0x10] sm:$0xff]
        %v635 = vld [vmem:[%s549 + $0x18] sm:$0xff]
        %v636 = vld [vmem:[%s549 + $0x20] sm:$0xff]
        %v637 = vld [vmem:[%s549 + $0x28] sm:$0xff]
        %v638 = vld [vmem:[%s549 + $0x30] sm:$0xff]
        %v639 = vld [vmem:[%s549 + $0x38] sm:$0xff]
        %v640 = vld [vmem:[%s549 + $0x40] sm:$0xff]
        %v641 = vld [vmem:[%s549 + $0x48] sm:$0xff]
        %v642 = vld [vmem:[%s549 + $0x50] sm:$0xff]
        %v643 = vld [vmem:[%s549 + $0x58] sm:$0xff]
        %v644 = vld [vmem:[%s549 + $0x60] sm:$0xff]
        %v645 = vld [vmem:[%s549 + $0x68] sm:$0xff]
        %v646 = vld [vmem:[%s549 + $0x70] sm:$0xff]
        %v647 = vld [vmem:[%s549 + $0x78] sm:$0xff]
        %v648 = vld [vmem:[%s601] sm:$0xff]
        %v649 = vld [vmem:[%s601 + $0x8] sm:$0xff]
        %v650 = vld [vmem:[%s601 + $0x10] sm:$0xff]
        %v651 = vld [vmem:[%s601 + $0x18] sm:$0xff]
        %v652 = vld [vmem:[%s601 + $0x20] sm:$0xff]
        %v653 = vld [vmem:[%s601 + $0x28] sm:$0xff]
        %v654 = vld [vmem:[%s601 + $0x30] sm:$0xff]
        %v655 = vld [vmem:[%s601 + $0x38] sm:$0xff]
        %v656 = vld [vmem:[%s601 + $0x40] sm:$0xff]
        %v657 = vld [vmem:[%s601 + $0x48] sm:$0xff]
        %v658 = vld [vmem:[%s601 + $0x50] sm:$0xff]
        %v659 = vld [vmem:[%s601 + $0x58] sm:$0xff]
        %v660 = vld [vmem:[%s601 + $0x60] sm:$0xff]
        %v661 = vld [vmem:[%s601 + $0x68] sm:$0xff]
        %v662 = vld [vmem:[%s601 + $0x70] sm:$0xff]
        %v663 = vld [vmem:[%s601 + $0x78] sm:$0xff]
        %664 = vmatprep.subr.mxu0 0.0
        %665 = vmatpush1.msra.mxu0 %v648
        %666 = vmatprep.subr.mxu0 0.0
        %667 = vmatpush1.msra.mxu0 %v649
        %668 = vmatprep.subr.mxu0 0.0
        %669 = vmatpush1.msra.mxu0 %v650
        %670 = vmatprep.subr.mxu0 0.0
        %671 = vmatpush1.msra.mxu0 %v651
        %672 = vmatprep.subr.mxu0 0.0
        %673 = vmatpush1.msra.mxu0 %v652
        %674 = vmatprep.subr.mxu0 0.0
        %675 = vmatpush1.msra.mxu0 %v653
        %676 = vmatprep.subr.mxu0 0.0
        %677 = vmatpush1.msra.mxu0 %v654
        %678 = vmatprep.subr.mxu0 0.0
        %679 = vmatpush1.msra.mxu0 %v655
        %680 = vmatprep.subr.mxu0 0.0
        %681 = vmatpush1.msra.mxu0 %v656
        %682 = vmatprep.subr.mxu0 0.0
        %683 = vmatpush1.msra.mxu0 %v657
        %684 = vmatprep.subr.mxu0 0.0
        %685 = vmatpush1.msra.mxu0 %v658
        %686 = vmatprep.subr.mxu0 0.0
        %687 = vmatpush1.msra.mxu0 %v659
        %688 = vmatprep.subr.mxu0 0.0
        %689 = vmatpush1.msra.mxu0 %v660
        %690 = vmatprep.subr.mxu0 0.0
        %691 = vmatpush1.msra.mxu0 %v661
        %692 = vmatprep.subr.mxu0 0.0
        %693 = vmatpush1.msra.mxu0 %v662
        %694 = vmatprep.subr.mxu0 0.0
        %695 = vmatpush1.msra.mxu0 %v663
        %696 = vmatprep.subr.mxu0 0.0
        %697 = vmatpush1.msra.mxu0 0.0
        %698 = vmatprep.subr.mxu0 0.0
        %699 = vmatpush1.msra.mxu0 0.0
        %700 = vmatprep.subr.mxu0 0.0
        %701 = vmatpush1.msra.mxu0 0.0
        %702 = vmatprep.subr.mxu0 0.0
        %703 = vmatpush1.msra.mxu0 0.0
        %704 = vmatprep.subr.mxu0 0.0
        %705 = vmatpush1.msra.mxu0 0.0
        %706 = vmatprep.subr.mxu0 0.0
        %707 = vmatpush1.msra.mxu0 0.0
        %708 = vmatprep.subr.mxu0 0.0
        %709 = vmatpush1.msra.mxu0 0.0
        %710 = vmatprep.subr.mxu0 0.0
        %711 = vmatpush1.msra.mxu0 0.0
        %712 = vmatprep.subr.mxu0 0.0
        %713 = vmatpush1.msra.mxu0 0.0
        %714 = vmatprep.subr.mxu0 0.0
        %715 = vmatpush1.msra.mxu0 0.0
        %716 = vmatprep.subr.mxu0 0.0
        %717 = vmatpush1.msra.mxu0 0.0
        %718 = vmatprep.subr.mxu0 0.0
        %719 = vmatpush1.msra.mxu0 0.0
        %720 = vmatprep.subr.mxu0 0.0
        %721 = vmatpush1.msra.mxu0 0.0
        %722 = vmatprep.subr.mxu0 0.0
        %723 = vmatpush1.msra.mxu0 0.0
        %724 = vmatprep.subr.mxu0 0.0
        %725 = vmatpush1.msra.mxu0 0.0
        %726 = vmatprep.subr.mxu0 0.0
        %727 = vmatpush1.msra.mxu0 0.0
        %728 = vmatprep.mubr.f32.mxu0 0.0
        %729 = vmatmul.mubr.f32.gmra.mrb[0].mxu0 %v632
        %v730 = vpop.f32.mrb[0].mxu0
        %v731 = vadd.f32 0.0, %v730
        %v732 = vpop.f32.mrb[0].mxu0
        %733 = vmatprep.mubr.f32.mxu0 0.0
        %734 = vmatmul.mubr.f32.gmra.mrb[0].mxu0 %v633
        %v735 = vpop.f32.mrb[0].mxu0
        %v736 = vadd.f32 0.0, %v735
        %v737 = vpop.f32.mrb[0].mxu0
        %738 = vmatprep.mubr.f32.mxu0 0.0
        %739 = vmatmul.mubr.f32.gmra.mrb[0].mxu0 %v634
        %v740 = vpop.f32.mrb[0].mxu0
        %v741 = vadd.f32 0.0, %v740
        %v742 = vpop.f32.mrb[0].mxu0
        %743 = vmatprep.mubr.f32.mxu0 0.0
        %744 = vmatmul.mubr.f32.gmra.mrb[0].mxu0 %v635
        %v745 = vpop.f32.mrb[0].mxu0
        %v746 = vadd.f32 0.0, %v745
        %v747 = vpop.f32.mrb[0].mxu0
        %748 = vmatprep.mubr.f32.mxu0 0.0
        %749 = vmatmul.mubr.f32.gmra.mrb[0].mxu0 %v636
        %v750 = vpop.f32.mrb[0].mxu0
        %v751 = vadd.f32 0.0, %v750
        %v752 = vpop.f32.mrb[0].mxu0
        %753 = vmatprep.mubr.f32.mxu0 0.0
        %754 = vmatmul.mubr.f32.gmra.mrb[0].mxu0 %v637
        %v755 = vpop.f32.mrb[0].mxu0
        %v756 = vadd.f32 0.0, %v755
        %v757 = vpop.f32.mrb[0].mxu0
        %758 = vmatprep.mubr.f32.mxu0 0.0
        %759 = vmatmul.mubr.f32.gmra.mrb[0].mxu0 %v638
        %v760 = vpop.f32.mrb[0].mxu0
        %v761 = vadd.f32 0.0, %v760
        %v762 = vpop.f32.mrb[0].mxu0
        %763 = vmatprep.mubr.f32.mxu0 0.0
        %764 = vmatmul.mubr.f32.gmra.mrb[0].mxu0 %v639
        %v765 = vpop.f32.mrb[0].mxu0
        %v766 = vadd.f32 0.0, %v765
        %v767 = vpop.f32.mrb[0].mxu0
        %768 = vmatprep.mubr.f32.mxu0 0.0
        %769 = vmatmul.mubr.f32.gmra.mrb[0].mxu0 %v640
        %v770 = vpop.f32.mrb[0].mxu0
        %v771 = vadd.f32 0.0, %v770
        %v772 = vpop.f32.mrb[0].mxu0
        %773 = vmatprep.mubr.f32.mxu0 0.0
        %774 = vmatmul.mubr.f32.gmra.mrb[0].mxu0 %v641
        %v775 = vpop.f32.mrb[0].mxu0
        %v776 = vadd.f32 0.0, %v775
        %v777 = vpop.f32.mrb[0].mxu0
        %778 = vmatprep.mubr.f32.mxu0 0.0
        %779 = vmatmul.mubr.f32.gmra.mrb[0].mxu0 %v642
        %v780 = vpop.f32.mrb[0].mxu0
        %v781 = vadd.f32 0.0, %v780
        %v782 = vpop.f32.mrb[0].mxu0
        %783 = vmatprep.mubr.f32.mxu0 0.0
        %784 = vmatmul.mubr.f32.gmra.mrb[0].mxu0 %v643
        %v785 = vpop.f32.mrb[0].mxu0
        %v786 = vadd.f32 0.0, %v785
        %v787 = vpop.f32.mrb[0].mxu0
        %788 = vmatprep.mubr.f32.mxu0 0.0
        %789 = vmatmul.mubr.f32.gmra.mrb[0].mxu0 %v644
        %v790 = vpop.f32.mrb[0].mxu0
        %v791 = vadd.f32 0.0, %v790
        %v792 = vpop.f32.mrb[0].mxu0
        %793 = vmatprep.mubr.f32.mxu0 0.0
        %794 = vmatmul.mubr.f32.gmra.mrb[0].mxu0 %v645
        %v795 = vpop.f32.mrb[0].mxu0
        %v796 = vadd.f32 0.0, %v795
        %v797 = vpop.f32.mrb[0].mxu0
        %798 = vmatprep.mubr.f32.mxu0 0.0
        %799 = vmatmul.mubr.f32.gmra.mrb[0].mxu0 %v646
        %v800 = vpop.f32.mrb[0].mxu0
        %v801 = vadd.f32 0.0, %v800
        %v802 = vpop.f32.mrb[0].mxu0
        %803 = vmatprep.mubr.f32.mxu0 0.0
        %804 = vmatmul.mubr.f32.gmra.mrb[0].mxu0 %v647
        %v805 = vpop.f32.mrb[0].mxu0
        %v806 = vadd.f32 0.0, %v805
        %v807 = vpop.f32.mrb[0].mxu0
        %808 = vdwg.mxu0
        %v809 = vadd.f32 %v630, %v731
        %v810 = vadd.f32 %v630, %v736
        %v811 = vadd.f32 %v630, %v741
        %v812 = vadd.f32 %v630, %v746
        %v813 = vadd.f32 %v630, %v751
        %v814 = vadd.f32 %v630, %v756
        %v815 = vadd.f32 %v630, %v761
        %v816 = vadd.f32 %v630, %v766
        %v817 = vadd.f32 %v630, %v771
        %v818 = vadd.f32 %v630, %v776
        %v819 = vadd.f32 %v630, %v781
        %v820 = vadd.f32 %v630, %v786
        %v821 = vadd.f32 %v630, %v791
        %v822 = vadd.f32 %v630, %v796
        %v823 = vadd.f32 %v630, %v801
        %v824 = vadd.f32 %v630, %v806
        %s825 = scalar_lea.vmem %s549, 160 [#allocation2]
        %v826 = vld [vmem:[%s825] sm:$0xff]
        %v827 = vld [vmem:[%s825 + $0x8] sm:$0xff]
        %v828 = vld [vmem:[%s825 + $0x10] sm:$0xff]
        %v829 = vld [vmem:[%s825 + $0x18] sm:$0xff]
        %v830 = vld [vmem:[%s825 + $0x20] sm:$0xff]
        %v831 = vld [vmem:[%s825 + $0x28] sm:$0xff]
        %v832 = vld [vmem:[%s825 + $0x30] sm:$0xff]
        %v833 = vld [vmem:[%s825 + $0x38] sm:$0xff]
        %v834 = vld [vmem:[%s825 + $0x40] sm:$0xff]
        %v835 = vld [vmem:[%s825 + $0x48] sm:$0xff]
        %v836 = vld [vmem:[%s825 + $0x50] sm:$0xff]
        %v837 = vld [vmem:[%s825 + $0x58] sm:$0xff]
        %v838 = vld [vmem:[%s825 + $0x60] sm:$0xff]
        %v839 = vld [vmem:[%s825 + $0x68] sm:$0xff]
        %v840 = vld [vmem:[%s825 + $0x70] sm:$0xff]
        %v841 = vld [vmem:[%s825 + $0x78] sm:$0xff]
        %s842 = scalar_lea.vmem %s601, 128
        %v843 = vld [vmem:[%s842] sm:$0xff]
        %v844 = vld [vmem:[%s842 + $0x8] sm:$0xff]
        %v845 = vld [vmem:[%s842 + $0x10] sm:$0xff]
        %v846 = vld [vmem:[%s842 + $0x18] sm:$0xff]
        %v847 = vld [vmem:[%s842 + $0x20] sm:$0xff]
        %v848 = vld [vmem:[%s842 + $0x28] sm:$0xff]
        %v849 = vld [vmem:[%s842 + $0x30] sm:$0xff]
        %v850 = vld [vmem:[%s842 + $0x38] sm:$0xff]
        %v851 = vld [vmem:[%s842 + $0x40] sm:$0xff]
        %v852 = vld [vmem:[%s842 + $0x48] sm:$0xff]
        %v853 = vld [vmem:[%s842 + $0x50] sm:$0xff]
        %v854 = vld [vmem:[%s842 + $0x58] sm:$0xff]
        %v855 = vld [vmem:[%s842 + $0x60] sm:$0xff]
        %v856 = vld [vmem:[%s842 + $0x68] sm:$0xff]
        %v857 = vld [vmem:[%s842 + $0x70] sm:$0xff]
        %v858 = vld [vmem:[%s842 + $0x78] sm:$0xff]
        %859 = vmatprep.subr.mxu0 0.0
        %860 = vmatpush1.msra.mxu0 %v843
        %861 = vmatprep.subr.mxu0 0.0
        %862 = vmatpush1.msra.mxu0 %v844
        %863 = vmatprep.subr.mxu0 0.0
        %864 = vmatpush1.msra.mxu0 %v845
        %865 = vmatprep.subr.mxu0 0.0
        %866 = vmatpush1.msra.mxu0 %v846
        %867 = vmatprep.subr.mxu0 0.0
        %868 = vmatpush1.msra.mxu0 %v847
        %869 = vmatprep.subr.mxu0 0.0
        %870 = vmatpush1.msra.mxu0 %v848
        %871 = vmatprep.subr.mxu0 0.0
        %872 = vmatpush1.msra.mxu0 %v849
        %873 = vmatprep.subr.mxu0 0.0
        %874 = vmatpush1.msra.mxu0 %v850
        %875 = vmatprep.subr.mxu0 0.0
        %876 = vmatpush1.msra.mxu0 %v851
        %877 = vmatprep.subr.mxu0 0.0
        %878 = vmatpush1.msra.mxu0 %v852
        %879 = vmatprep.subr.mxu0 0.0
        %880 = vmatpush1.msra.mxu0 %v853
        %881 = vmatprep.subr.mxu0 0.0
        %882 = vmatpush1.msra.mxu0 %v854
        %883 = vmatprep.subr.mxu0 0.0
        %884 = vmatpush1.msra.mxu0 %v855
        %885 = vmatprep.subr.mxu0 0.0
        %886 = vmatpush1.msra.mxu0 %v856
        %887 = vmatprep.subr.mxu0 0.0
        %888 = vmatpush1.msra.mxu0 %v857
        %889 = vmatprep.subr.mxu0 0.0
        %890 = vmatpush1.msra.mxu0 %v858
        %891 = vmatprep.subr.mxu0 0.0
        %892 = vmatpush1.msra.mxu0 0.0
        %893 = vmatprep.subr.mxu0 0.0
        %894 = vmatpush1.msra.mxu0 0.0
        %895 = vmatprep.subr.mxu0 0.0
        %896 = vmatpush1.msra.mxu0 0.0
        %897 = vmatprep.subr.mxu0 0.0
        %898 = vmatpush1.msra.mxu0 0.0
        %899 = vmatprep.subr.mxu0 0.0
        %900 = vmatpush1.msra.mxu0 0.0
        %901 = vmatprep.subr.mxu0 0.0
        %902 = vmatpush1.msra.mxu0 0.0
        %903 = vmatprep.subr.mxu0 0.0
        %904 = vmatpush1.msra.mxu0 0.0
        %905 = vmatprep.subr.mxu0 0.0
        %906 = vmatpush1.msra.mxu0 0.0
        %907 = vmatprep.subr.mxu0 0.0
        %908 = vmatpush1.msra.mxu0 0.0
        %909 = vmatprep.subr.mxu0 0.0
        %910 = vmatpush1.msra.mxu0 0.0
        %911 = vmatprep.subr.mxu0 0.0
        %912 = vmatpush1.msra.mxu0 0.0
        %913 = vmatprep.subr.mxu0 0.0
        %914 = vmatpush1.msra.mxu0 0.0
        %915 = vmatprep.subr.mxu0 0.0
        %916 = vmatpush1.msra.mxu0 0.0
        %917 = vmatprep.subr.mxu0 0.0
        %918 = vmatpush1.msra.mxu0 0.0
        %919 = vmatprep.subr.mxu0 0.0
        %920 = vmatpush1.msra.mxu0 0.0
        %921 = vmatprep.subr.mxu0 0.0
        %922 = vmatpush1.msra.mxu0 0.0
        %923 = vmatprep.mubr.f32.mxu0 0.0
        %924 = vmatmul.mubr.f32.gmra.mrb[0].mxu0 %v826
        %v925 = vpop.f32.mrb[0].mxu0
        %v926 = vadd.f32 0.0, %v925
        %v927 = vpop.f32.mrb[0].mxu0
        %928 = vmatprep.mubr.f32.mxu0 0.0
        %929 = vmatmul.mubr.f32.gmra.mrb[0].mxu0 %v827
        %v930 = vpop.f32.mrb[0].mxu0
        %v931 = vadd.f32 0.0, %v930
        %v932 = vpop.f32.mrb[0].mxu0
        %933 = vmatprep.mubr.f32.mxu0 0.0
        %934 = vmatmul.mubr.f32.gmra.mrb[0].mxu0 %v828
        %v935 = vpop.f32.mrb[0].mxu0
        %v936 = vadd.f32 0.0, %v935
        %v937 = vpop.f32.mrb[0].mxu0
        %938 = vmatprep.mubr.f32.mxu0 0.0
        %939 = vmatmul.mubr.f32.gmra.mrb[0].mxu0 %v829
        %v940 = vpop.f32.mrb[0].mxu0
        %v941 = vadd.f32 0.0, %v940
        %v942 = vpop.f32.mrb[0].mxu0
        %943 = vmatprep.mubr.f32.mxu0 0.0
        %944 = vmatmul.mubr.f32.gmra.mrb[0].mxu0 %v830
        %v945 = vpop.f32.mrb[0].mxu0
        %v946 = vadd.f32 0.0, %v945
        %v947 = vpop.f32.mrb[0].mxu0
        %948 = vmatprep.mubr.f32.mxu0 0.0
        %949 = vmatmul.mubr.f32.gmra.mrb[0].mxu0 %v831
        %v950 = vpop.f32.mrb[0].mxu0
        %v951 = vadd.f32 0.0, %v950
        %v952 = vpop.f32.mrb[0].mxu0
        %953 = vmatprep.mubr.f32.mxu0 0.0
        %954 = vmatmul.mubr.f32.gmra.mrb[0].mxu0 %v832
        %v955 = vpop.f32.mrb[0].mxu0
        %v956 = vadd.f32 0.0, %v955
        %v957 = vpop.f32.mrb[0].mxu0
        %958 = vmatprep.mubr.f32.mxu0 0.0
        %959 = vmatmul.mubr.f32.gmra.mrb[0].mxu0 %v833
        %v960 = vpop.f32.mrb[0].mxu0
        %v961 = vadd.f32 0.0, %v960
        %v962 = vpop.f32.mrb[0].mxu0
        %963 = vmatprep.mubr.f32.mxu0 0.0
        %964 = vmatmul.mubr.f32.gmra.mrb[0].mxu0 %v834
        %v965 = vpop.f32.mrb[0].mxu0
        %v966 = vadd.f32 0.0, %v965
        %v967 = vpop.f32.mrb[0].mxu0
        %968 = vmatprep.mubr.f32.mxu0 0.0
        %969 = vmatmul.mubr.f32.gmra.mrb[0].mxu0 %v835
        %v970 = vpop.f32.mrb[0].mxu0
        %v971 = vadd.f32 0.0, %v970
        %v972 = vpop.f32.mrb[0].mxu0
        %973 = vmatprep.mubr.f32.mxu0 0.0
        %974 = vmatmul.mubr.f32.gmra.mrb[0].mxu0 %v836
        %v975 = vpop.f32.mrb[0].mxu0
        %v976 = vadd.f32 0.0, %v975
        %v977 = vpop.f32.mrb[0].mxu0
        %978 = vmatprep.mubr.f32.mxu0 0.0
        %979 = vmatmul.mubr.f32.gmra.mrb[0].mxu0 %v837
        %v980 = vpop.f32.mrb[0].mxu0
        %v981 = vadd.f32 0.0, %v980
        %v982 = vpop.f32.mrb[0].mxu0
        %983 = vmatprep.mubr.f32.mxu0 0.0
        %984 = vmatmul.mubr.f32.gmra.mrb[0].mxu0 %v838
        %v985 = vpop.f32.mrb[0].mxu0
        %v986 = vadd.f32 0.0, %v985
        %v987 = vpop.f32.mrb[0].mxu0
        %988 = vmatprep.mubr.f32.mxu0 0.0
        %989 = vmatmul.mubr.f32.gmra.mrb[0].mxu0 %v839
        %v990 = vpop.f32.mrb[0].mxu0
        %v991 = vadd.f32 0.0, %v990
        %v992 = vpop.f32.mrb[0].mxu0
        %993 = vmatprep.mubr.f32.mxu0 0.0
        %994 = vmatmul.mubr.f32.gmra.mrb[0].mxu0 %v840
        %v995 = vpop.f32.mrb[0].mxu0
        %v996 = vadd.f32 0.0, %v995
        %v997 = vpop.f32.mrb[0].mxu0
        %998 = vmatprep.mubr.f32.mxu0 0.0
        %999 = vmatmul.mubr.f32.gmra.mrb[0].mxu0 %v841
        %v1000 = vpop.f32.mrb[0].mxu0
        %v1001 = vadd.f32 0.0, %v1000
        %v1002 = vpop.f32.mrb[0].mxu0
        %1003 = vdwg.mxu0
        %v1004 = vadd.f32 %v809, %v926
        %v1005 = vadd.f32 %v810, %v931
        %v1006 = vadd.f32 %v811, %v936
        %v1007 = vadd.f32 %v812, %v941
        %v1008 = vadd.f32 %v813, %v946
        %v1009 = vadd.f32 %v814, %v951
        %v1010 = vadd.f32 %v815, %v956
        %v1011 = vadd.f32 %v816, %v961
        %v1012 = vadd.f32 %v817, %v966
        %v1013 = vadd.f32 %v818, %v971
        %v1014 = vadd.f32 %v819, %v976
        %v1015 = vadd.f32 %v820, %v981
        %v1016 = vadd.f32 %v821, %v986
        %v1017 = vadd.f32 %v822, %v991
        %v1018 = vadd.f32 %v823, %v996
        %v1019 = vadd.f32 %v824, %v1001
        %s1020 = scalar_lea.vmem %s549, 320 [#allocation2]
        %v1021 = vld [vmem:[%s1020] sm:$0xff]
        %v1022 = vld [vmem:[%s1020 + $0x8] sm:$0xff]
        %v1023 = vld [vmem:[%s1020 + $0x10] sm:$0xff]
        %v1024 = vld [vmem:[%s1020 + $0x18] sm:$0xff]
        %v1025 = vld [vmem:[%s1020 + $0x20] sm:$0xff]
        %v1026 = vld [vmem:[%s1020 + $0x28] sm:$0xff]
        %v1027 = vld [vmem:[%s1020 + $0x30] sm:$0xff]
        %v1028 = vld [vmem:[%s1020 + $0x38] sm:$0xff]
        %v1029 = vld [vmem:[%s1020 + $0x40] sm:$0xff]
        %v1030 = vld [vmem:[%s1020 + $0x48] sm:$0xff]
        %v1031 = vld [vmem:[%s1020 + $0x50] sm:$0xff]
        %v1032 = vld [vmem:[%s1020 + $0x58] sm:$0xff]
        %v1033 = vld [vmem:[%s1020 + $0x60] sm:$0xff]
        %v1034 = vld [vmem:[%s1020 + $0x68] sm:$0xff]
        %v1035 = vld [vmem:[%s1020 + $0x70] sm:$0xff]
        %v1036 = vld [vmem:[%s1020 + $0x78] sm:$0xff]
        %s1037 = scalar_lea.vmem %s601, 256
        %v1038 = vld [vmem:[%s1037] sm:$0xff]
        %v1039 = vld [vmem:[%s1037 + $0x8] sm:$0xff]
        %v1040 = vld [vmem:[%s1037 + $0x10] sm:$0xff]
        %v1041 = vld [vmem:[%s1037 + $0x18] sm:$0xff]
        %v1042 = vld [vmem:[%s1037 + $0x20] sm:$0xff]
        %v1043 = vld [vmem:[%s1037 + $0x28] sm:$0xff]
        %v1044 = vld [vmem:[%s1037 + $0x30] sm:$0xff]
        %v1045 = vld [vmem:[%s1037 + $0x38] sm:$0xff]
        %v1046 = vld [vmem:[%s1037 + $0x40] sm:$0xff]
        %v1047 = vld [vmem:[%s1037 + $0x48] sm:$0xff]
        %v1048 = vld [vmem:[%s1037 + $0x50] sm:$0xff]
        %v1049 = vld [vmem:[%s1037 + $0x58] sm:$0xff]
        %v1050 = vld [vmem:[%s1037 + $0x60] sm:$0xff]
        %v1051 = vld [vmem:[%s1037 + $0x68] sm:$0xff]
        %v1052 = vld [vmem:[%s1037 + $0x70] sm:$0xff]
        %v1053 = vld [vmem:[%s1037 + $0x78] sm:$0xff]
        %1054 = vmatprep.subr.mxu0 0.0
        %1055 = vmatpush1.msra.mxu0 %v1038
        %1056 = vmatprep.subr.mxu0 0.0
        %1057 = vmatpush1.msra.mxu0 %v1039
        %1058 = vmatprep.subr.mxu0 0.0
        %1059 = vmatpush1.msra.mxu0 %v1040
        %1060 = vmatprep.subr.mxu0 0.0
        %1061 = vmatpush1.msra.mxu0 %v1041
        %1062 = vmatprep.subr.mxu0 0.0
        %1063 = vmatpush1.msra.mxu0 %v1042
        %1064 = vmatprep.subr.mxu0 0.0
        %1065 = vmatpush1.msra.mxu0 %v1043
        %1066 = vmatprep.subr.mxu0 0.0
        %1067 = vmatpush1.msra.mxu0 %v1044
        %1068 = vmatprep.subr.mxu0 0.0
        %1069 = vmatpush1.msra.mxu0 %v1045
        %1070 = vmatprep.subr.mxu0 0.0
        %1071 = vmatpush1.msra.mxu0 %v1046
        %1072 = vmatprep.subr.mxu0 0.0
        %1073 = vmatpush1.msra.mxu0 %v1047
        %1074 = vmatprep.subr.mxu0 0.0
        %1075 = vmatpush1.msra.mxu0 %v1048
        %1076 = vmatprep.subr.mxu0 0.0
        %1077 = vmatpush1.msra.mxu0 %v1049
        %1078 = vmatprep.subr.mxu0 0.0
        %1079 = vmatpush1.msra.mxu0 %v1050
        %1080 = vmatprep.subr.mxu0 0.0
        %1081 = vmatpush1.msra.mxu0 %v1051
        %1082 = vmatprep.subr.mxu0 0.0
        %1083 = vmatpush1.msra.mxu0 %v1052
        %1084 = vmatprep.subr.mxu0 0.0
        %1085 = vmatpush1.msra.mxu0 %v1053
        %1086 = vmatprep.subr.mxu0 0.0
        %1087 = vmatpush1.msra.mxu0 0.0
        %1088 = vmatprep.subr.mxu0 0.0
        %1089 = vmatpush1.msra.mxu0 0.0
        %1090 = vmatprep.subr.mxu0 0.0
        %1091 = vmatpush1.msra.mxu0 0.0
        %1092 = vmatprep.subr.mxu0 0.0
        %1093 = vmatpush1.msra.mxu0 0.0
        %1094 = vmatprep.subr.mxu0 0.0
        %1095 = vmatpush1.msra.mxu0 0.0
        %1096 = vmatprep.subr.mxu0 0.0
        %1097 = vmatpush1.msra.mxu0 0.0
        %1098 = vmatprep.subr.mxu0 0.0
        %1099 = vmatpush1.msra.mxu0 0.0
        %1100 = vmatprep.subr.mxu0 0.0
        %1101 = vmatpush1.msra.mxu0 0.0
        %1102 = vmatprep.subr.mxu0 0.0
        %1103 = vmatpush1.msra.mxu0 0.0
        %1104 = vmatprep.subr.mxu0 0.0
        %1105 = vmatpush1.msra.mxu0 0.0
        %1106 = vmatprep.subr.mxu0 0.0
        %1107 = vmatpush1.msra.mxu0 0.0
        %1108 = vmatprep.subr.mxu0 0.0
        %1109 = vmatpush1.msra.mxu0 0.0
        %1110 = vmatprep.subr.mxu0 0.0
        %1111 = vmatpush1.msra.mxu0 0.0
        %1112 = vmatprep.subr.mxu0 0.0
        %1113 = vmatpush1.msra.mxu0 0.0
        %1114 = vmatprep.subr.mxu0 0.0
        %1115 = vmatpush1.msra.mxu0 0.0
        %1116 = vmatprep.subr.mxu0 0.0
        %1117 = vmatpush1.msra.mxu0 0.0
        %1118 = vmatprep.mubr.f32.mxu0 0.0
        %1119 = vmatmul.mubr.f32.gmra.mrb[0].mxu0 %v1021
        %v1120 = vpop.f32.mrb[0].mxu0
        %v1121 = vadd.f32 0.0, %v1120
        %v1122 = vpop.f32.mrb[0].mxu0
        %1123 = vmatprep.mubr.f32.mxu0 0.0
        %1124 = vmatmul.mubr.f32.gmra.mrb[0].mxu0 %v1022
        %v1125 = vpop.f32.mrb[0].mxu0
        %v1126 = vadd.f32 0.0, %v1125
        %v1127 = vpop.f32.mrb[0].mxu0
        %1128 = vmatprep.mubr.f32.mxu0 0.0
        %1129 = vmatmul.mubr.f32.gmra.mrb[0].mxu0 %v1023
        %v1130 = vpop.f32.mrb[0].mxu0
        %v1131 = vadd.f32 0.0, %v1130
        %v1132 = vpop.f32.mrb[0].mxu0
        %1133 = vmatprep.mubr.f32.mxu0 0.0
        %1134 = vmatmul.mubr.f32.gmra.mrb[0].mxu0 %v1024
        %v1135 = vpop.f32.mrb[0].mxu0
        %v1136 = vadd.f32 0.0, %v1135
        %v1137 = vpop.f32.mrb[0].mxu0
        %1138 = vmatprep.mubr.f32.mxu0 0.0
        %1139 = vmatmul.mubr.f32.gmra.mrb[0].mxu0 %v1025
        %v1140 = vpop.f32.mrb[0].mxu0
        %v1141 = vadd.f32 0.0, %v1140
        %v1142 = vpop.f32.mrb[0].mxu0
        %1143 = vmatprep.mubr.f32.mxu0 0.0
        %1144 = vmatmul.mubr.f32.gmra.mrb[0].mxu0 %v1026
        %v1145 = vpop.f32.mrb[0].mxu0
        %v1146 = vadd.f32 0.0, %v1145
        %v1147 = vpop.f32.mrb[0].mxu0
        %1148 = vmatprep.mubr.f32.mxu0 0.0
        %1149 = vmatmul.mubr.f32.gmra.mrb[0].mxu0 %v1027
        %v1150 = vpop.f32.mrb[0].mxu0
        %v1151 = vadd.f32 0.0, %v1150
        %v1152 = vpop.f32.mrb[0].mxu0
        %1153 = vmatprep.mubr.f32.mxu0 0.0
        %1154 = vmatmul.mubr.f32.gmra.mrb[0].mxu0 %v1028
        %v1155 = vpop.f32.mrb[0].mxu0
        %v1156 = vadd.f32 0.0, %v1155
        %v1157 = vpop.f32.mrb[0].mxu0
        %1158 = vmatprep.mubr.f32.mxu0 0.0
        %1159 = vmatmul.mubr.f32.gmra.mrb[0].mxu0 %v1029
        %v1160 = vpop.f32.mrb[0].mxu0
        %v1161 = vadd.f32 0.0, %v1160
        %v1162 = vpop.f32.mrb[0].mxu0
        %1163 = vmatprep.mubr.f32.mxu0 0.0
        %1164 = vmatmul.mubr.f32.gmra.mrb[0].mxu0 %v1030
        %v1165 = vpop.f32.mrb[0].mxu0
        %v1166 = vadd.f32 0.0, %v1165
        %v1167 = vpop.f32.mrb[0].mxu0
        %1168 = vmatprep.mubr.f32.mxu0 0.0
        %1169 = vmatmul.mubr.f32.gmra.mrb[0].mxu0 %v1031
        %v1170 = vpop.f32.mrb[0].mxu0
        %v1171 = vadd.f32 0.0, %v1170
        %v1172 = vpop.f32.mrb[0].mxu0
        %1173 = vmatprep.mubr.f32.mxu0 0.0
        %1174 = vmatmul.mubr.f32.gmra.mrb[0].mxu0 %v1032
        %v1175 = vpop.f32.mrb[0].mxu0
        %v1176 = vadd.f32 0.0, %v1175
        %v1177 = vpop.f32.mrb[0].mxu0
        %1178 = vmatprep.mubr.f32.mxu0 0.0
        %1179 = vmatmul.mubr.f32.gmra.mrb[0].mxu0 %v1033
        %v1180 = vpop.f32.mrb[0].mxu0
        %v1181 = vadd.f32 0.0, %v1180
        %v1182 = vpop.f32.mrb[0].mxu0
        %1183 = vmatprep.mubr.f32.mxu0 0.0
        %1184 = vmatmul.mubr.f32.gmra.mrb[0].mxu0 %v1034
        %v1185 = vpop.f32.mrb[0].mxu0
        %v1186 = vadd.f32 0.0, %v1185
        %v1187 = vpop.f32.mrb[0].mxu0
        %1188 = vmatprep.mubr.f32.mxu0 0.0
        %1189 = vmatmul.mubr.f32.gmra.mrb[0].mxu0 %v1035
        %v1190 = vpop.f32.mrb[0].mxu0
        %v1191 = vadd.f32 0.0, %v1190
        %v1192 = vpop.f32.mrb[0].mxu0
        %1193 = vmatprep.mubr.f32.mxu0 0.0
        %1194 = vmatmul.mubr.f32.gmra.mrb[0].mxu0 %v1036
        %v1195 = vpop.f32.mrb[0].mxu0
        %v1196 = vadd.f32 0.0, %v1195
        %v1197 = vpop.f32.mrb[0].mxu0
        %1198 = vdwg.mxu0
        %v1199 = vadd.f32 %v1004, %v1121
        %v1200 = vadd.f32 %v1005, %v1126
        %v1201 = vadd.f32 %v1006, %v1131
        %v1202 = vadd.f32 %v1007, %v1136
        %v1203 = vadd.f32 %v1008, %v1141
        %v1204 = vadd.f32 %v1009, %v1146
        %v1205 = vadd.f32 %v1010, %v1151
        %v1206 = vadd.f32 %v1011, %v1156
        %v1207 = vadd.f32 %v1012, %v1161
        %v1208 = vadd.f32 %v1013, %v1166
        %v1209 = vadd.f32 %v1014, %v1171
        %v1210 = vadd.f32 %v1015, %v1176
        %v1211 = vadd.f32 %v1016, %v1181
        %v1212 = vadd.f32 %v1017, %v1186
        %v1213 = vadd.f32 %v1018, %v1191
        %v1214 = vadd.f32 %v1019, %v1196
        %v1215 = vld [vmem:[%s549 + $0x10] sm:$0xff]
        %v1216 = vld [vmem:[%s549 + $0x18] sm:$0xff]
        %v1217 = vld [vmem:[%s549 + $0x20] sm:$0xff]
        %v1218 = vld [vmem:[%s549 + $0x28] sm:$0xff]
        %v1219 = vld [vmem:[%s549 + $0x30] sm:$0xff]
        %v1220 = vld [vmem:[%s549 + $0x38] sm:$0xff]
        %v1221 = vld [vmem:[%s549 + $0x40] sm:$0xff]
        %v1222 = vld [vmem:[%s549 + $0x48] sm:$0xff]
        %v1223 = vld [vmem:[%s549 + $0x50] sm:$0xff]
        %v1224 = vld [vmem:[%s549 + $0x58] sm:$0xff]
        %v1225 = vld [vmem:[%s549 + $0x60] sm:$0xff]
        %v1226 = vld [vmem:[%s549 + $0x68] sm:$0xff]
        %v1227 = vld [vmem:[%s549 + $0x70] sm:$0xff]
        %v1228 = vld [vmem:[%s549 + $0x78] sm:$0xff]
        %v1229 = vld [vmem:[%s549 + $0x80] sm:$0xff]
        %v1230 = vld [vmem:[%s549 + $0x88] sm:$0xff]
        %s1231 = scalar_lea.vmem %s601, 384
        %v1232 = vld [vmem:[%s1231] sm:$0xff]
        %v1233 = vld [vmem:[%s1231 + $0x8] sm:$0xff]
        %v1234 = vld [vmem:[%s1231 + $0x10] sm:$0xff]
        %v1235 = vld [vmem:[%s1231 + $0x18] sm:$0xff]
        %v1236 = vld [vmem:[%s1231 + $0x20] sm:$0xff]
        %v1237 = vld [vmem:[%s1231 + $0x28] sm:$0xff]
        %v1238 = vld [vmem:[%s1231 + $0x30] sm:$0xff]
        %v1239 = vld [vmem:[%s1231 + $0x38] sm:$0xff]
        %v1240 = vld [vmem:[%s1231 + $0x40] sm:$0xff]
        %v1241 = vld [vmem:[%s1231 + $0x48] sm:$0xff]
        %v1242 = vld [vmem:[%s1231 + $0x50] sm:$0xff]
        %v1243 = vld [vmem:[%s1231 + $0x58] sm:$0xff]
        %v1244 = vld [vmem:[%s1231 + $0x60] sm:$0xff]
        %v1245 = vld [vmem:[%s1231 + $0x68] sm:$0xff]
        %v1246 = vld [vmem:[%s1231 + $0x70] sm:$0xff]
        %v1247 = vld [vmem:[%s1231 + $0x78] sm:$0xff]
        %1248 = vmatprep.subr.mxu0 0.0
        %1249 = vmatpush1.msra.mxu0 %v1232
        %1250 = vmatprep.subr.mxu0 0.0
        %1251 = vmatpush1.msra.mxu0 %v1233
        %1252 = vmatprep.subr.mxu0 0.0
        %1253 = vmatpush1.msra.mxu0 %v1234
        %1254 = vmatprep.subr.mxu0 0.0
        %1255 = vmatpush1.msra.mxu0 %v1235
        %1256 = vmatprep.subr.mxu0 0.0
        %1257 = vmatpush1.msra.mxu0 %v1236
        %1258 = vmatprep.subr.mxu0 0.0
        %1259 = vmatpush1.msra.mxu0 %v1237
        %1260 = vmatprep.subr.mxu0 0.0
        %1261 = vmatpush1.msra.mxu0 %v1238
        %1262 = vmatprep.subr.mxu0 0.0
        %1263 = vmatpush1.msra.mxu0 %v1239
        %1264 = vmatprep.subr.mxu0 0.0
        %1265 = vmatpush1.msra.mxu0 %v1240
        %1266 = vmatprep.subr.mxu0 0.0
        %1267 = vmatpush1.msra.mxu0 %v1241
        %1268 = vmatprep.subr.mxu0 0.0
        %1269 = vmatpush1.msra.mxu0 %v1242
        %1270 = vmatprep.subr.mxu0 0.0
        %1271 = vmatpush1.msra.mxu0 %v1243
        %1272 = vmatprep.subr.mxu0 0.0
        %1273 = vmatpush1.msra.mxu0 %v1244
        %1274 = vmatprep.subr.mxu0 0.0
        %1275 = vmatpush1.msra.mxu0 %v1245
        %1276 = vmatprep.subr.mxu0 0.0
        %1277 = vmatpush1.msra.mxu0 %v1246
        %1278 = vmatprep.subr.mxu0 0.0
        %1279 = vmatpush1.msra.mxu0 %v1247
        %1280 = vmatprep.subr.mxu0 0.0
        %1281 = vmatpush1.msra.mxu0 0.0
        %1282 = vmatprep.subr.mxu0 0.0
        %1283 = vmatpush1.msra.mxu0 0.0
        %1284 = vmatprep.subr.mxu0 0.0
        %1285 = vmatpush1.msra.mxu0 0.0
        %1286 = vmatprep.subr.mxu0 0.0
        %1287 = vmatpush1.msra.mxu0 0.0
        %1288 = vmatprep.subr.mxu0 0.0
        %1289 = vmatpush1.msra.mxu0 0.0
        %1290 = vmatprep.subr.mxu0 0.0
        %1291 = vmatpush1.msra.mxu0 0.0
        %1292 = vmatprep.subr.mxu0 0.0
        %1293 = vmatpush1.msra.mxu0 0.0
        %1294 = vmatprep.subr.mxu0 0.0
        %1295 = vmatpush1.msra.mxu0 0.0
        %1296 = vmatprep.subr.mxu0 0.0
        %1297 = vmatpush1.msra.mxu0 0.0
        %1298 = vmatprep.subr.mxu0 0.0
        %1299 = vmatpush1.msra.mxu0 0.0
        %1300 = vmatprep.subr.mxu0 0.0
        %1301 = vmatpush1.msra.mxu0 0.0
        %1302 = vmatprep.subr.mxu0 0.0
        %1303 = vmatpush1.msra.mxu0 0.0
        %1304 = vmatprep.subr.mxu0 0.0
        %1305 = vmatpush1.msra.mxu0 0.0
        %1306 = vmatprep.subr.mxu0 0.0
        %1307 = vmatpush1.msra.mxu0 0.0
        %1308 = vmatprep.subr.mxu0 0.0
        %1309 = vmatpush1.msra.mxu0 0.0
        %1310 = vmatprep.subr.mxu0 0.0
        %1311 = vmatpush1.msra.mxu0 0.0
        %1312 = vmatprep.mubr.f32.mxu0 0.0
        %1313 = vmatmul.mubr.f32.gmra.mrb[0].mxu0 %v1215
        %v1314 = vpop.f32.mrb[0].mxu0
        %v1315 = vadd.f32 0.0, %v1314
        %v1316 = vpop.f32.mrb[0].mxu0
        %1317 = vmatprep.mubr.f32.mxu0 0.0
        %1318 = vmatmul.mubr.f32.gmra.mrb[0].mxu0 %v1216
        %v1319 = vpop.f32.mrb[0].mxu0
        %v1320 = vadd.f32 0.0, %v1319
        %v1321 = vpop.f32.mrb[0].mxu0
        %1322 = vmatprep.mubr.f32.mxu0 0.0
        %1323 = vmatmul.mubr.f32.gmra.mrb[0].mxu0 %v1217
        %v1324 = vpop.f32.mrb[0].mxu0
        %v1325 = vadd.f32 0.0, %v1324
        %v1326 = vpop.f32.mrb[0].mxu0
        %1327 = vmatprep.mubr.f32.mxu0 0.0
        %1328 = vmatmul.mubr.f32.gmra.mrb[0].mxu0 %v1218
        %v1329 = vpop.f32.mrb[0].mxu0
        %v1330 = vadd.f32 0.0, %v1329
        %v1331 = vpop.f32.mrb[0].mxu0
        %1332 = vmatprep.mubr.f32.mxu0 0.0
        %1333 = vmatmul.mubr.f32.gmra.mrb[0].mxu0 %v1219
        %v1334 = vpop.f32.mrb[0].mxu0
        %v1335 = vadd.f32 0.0, %v1334
        %v1336 = vpop.f32.mrb[0].mxu0
        %1337 = vmatprep.mubr.f32.mxu0 0.0
        %1338 = vmatmul.mubr.f32.gmra.mrb[0].mxu0 %v1220
        %v1339 = vpop.f32.mrb[0].mxu0
        %v1340 = vadd.f32 0.0, %v1339
        %v1341 = vpop.f32.mrb[0].mxu0
        %1342 = vmatprep.mubr.f32.mxu0 0.0
        %1343 = vmatmul.mubr.f32.gmra.mrb[0].mxu0 %v1221
        %v1344 = vpop.f32.mrb[0].mxu0
        %v1345 = vadd.f32 0.0, %v1344
        %v1346 = vpop.f32.mrb[0].mxu0
        %1347 = vmatprep.mubr.f32.mxu0 0.0
        %1348 = vmatmul.mubr.f32.gmra.mrb[0].mxu0 %v1222
        %v1349 = vpop.f32.mrb[0].mxu0
        %v1350 = vadd.f32 0.0, %v1349
        %v1351 = vpop.f32.mrb[0].mxu0
        %1352 = vmatprep.mubr.f32.mxu0 0.0
        %1353 = vmatmul.mubr.f32.gmra.mrb[0].mxu0 %v1223
        %v1354 = vpop.f32.mrb[0].mxu0
        %v1355 = vadd.f32 0.0, %v1354
        %v1356 = vpop.f32.mrb[0].mxu0
        %1357 = vmatprep.mubr.f32.mxu0 0.0
        %1358 = vmatmul.mubr.f32.gmra.mrb[0].mxu0 %v1224
        %v1359 = vpop.f32.mrb[0].mxu0
        %v1360 = vadd.f32 0.0, %v1359
        %v1361 = vpop.f32.mrb[0].mxu0
        %1362 = vmatprep.mubr.f32.mxu0 0.0
        %1363 = vmatmul.mubr.f32.gmra.mrb[0].mxu0 %v1225
        %v1364 = vpop.f32.mrb[0].mxu0
        %v1365 = vadd.f32 0.0, %v1364
        %v1366 = vpop.f32.mrb[0].mxu0
        %1367 = vmatprep.mubr.f32.mxu0 0.0
        %1368 = vmatmul.mubr.f32.gmra.mrb[0].mxu0 %v1226
        %v1369 = vpop.f32.mrb[0].mxu0
        %v1370 = vadd.f32 0.0, %v1369
        %v1371 = vpop.f32.mrb[0].mxu0
        %1372 = vmatprep.mubr.f32.mxu0 0.0
        %1373 = vmatmul.mubr.f32.gmra.mrb[0].mxu0 %v1227
        %v1374 = vpop.f32.mrb[0].mxu0
        %v1375 = vadd.f32 0.0, %v1374
        %v1376 = vpop.f32.mrb[0].mxu0
        %1377 = vmatprep.mubr.f32.mxu0 0.0
        %1378 = vmatmul.mubr.f32.gmra.mrb[0].mxu0 %v1228
        %v1379 = vpop.f32.mrb[0].mxu0
        %v1380 = vadd.f32 0.0, %v1379
        %v1381 = vpop.f32.mrb[0].mxu0
        %1382 = vmatprep.mubr.f32.mxu0 0.0
        %1383 = vmatmul.mubr.f32.gmra.mrb[0].mxu0 %v1229
        %v1384 = vpop.f32.mrb[0].mxu0
        %v1385 = vadd.f32 0.0, %v1384
        %v1386 = vpop.f32.mrb[0].mxu0
        %1387 = vmatprep.mubr.f32.mxu0 0.0
        %1388 = vmatmul.mubr.f32.gmra.mrb[0].mxu0 %v1230
        %v1389 = vpop.f32.mrb[0].mxu0
        %v1390 = vadd.f32 0.0, %v1389
        %v1391 = vpop.f32.mrb[0].mxu0
        %1392 = vdwg.mxu0
        %v1393 = vadd.f32 %v1199, %v1315
        %v1394 = vadd.f32 %v1200, %v1320
        %v1395 = vadd.f32 %v1201, %v1325
        %v1396 = vadd.f32 %v1202, %v1330
        %v1397 = vadd.f32 %v1203, %v1335
        %v1398 = vadd.f32 %v1204, %v1340
        %v1399 = vadd.f32 %v1205, %v1345
        %v1400 = vadd.f32 %v1206, %v1350
        %v1401 = vadd.f32 %v1207, %v1355
        %v1402 = vadd.f32 %v1208, %v1360
        %v1403 = vadd.f32 %v1209, %v1365
        %v1404 = vadd.f32 %v1210, %v1370
        %v1405 = vadd.f32 %v1211, %v1375
        %v1406 = vadd.f32 %v1212, %v1380
        %v1407 = vadd.f32 %v1213, %v1385
        %v1408 = vadd.f32 %v1214, %v1390
        %v1409 = vld [vmem:[%s825 + $0x10] sm:$0xff]
        %v1410 = vld [vmem:[%s825 + $0x18] sm:$0xff]
        %v1411 = vld [vmem:[%s825 + $0x20] sm:$0xff]
        %v1412 = vld [vmem:[%s825 + $0x28] sm:$0xff]
        %v1413 = vld [vmem:[%s825 + $0x30] sm:$0xff]
        %v1414 = vld [vmem:[%s825 + $0x38] sm:$0xff]
        %v1415 = vld [vmem:[%s825 + $0x40] sm:$0xff]
        %v1416 = vld [vmem:[%s825 + $0x48] sm:$0xff]
        %v1417 = vld [vmem:[%s825 + $0x50] sm:$0xff]
        %v1418 = vld [vmem:[%s825 + $0x58] sm:$0xff]
        %v1419 = vld [vmem:[%s825 + $0x60] sm:$0xff]
        %v1420 = vld [vmem:[%s825 + $0x68] sm:$0xff]
        %v1421 = vld [vmem:[%s825 + $0x70] sm:$0xff]
        %v1422 = vld [vmem:[%s825 + $0x78] sm:$0xff]
        %v1423 = vld [vmem:[%s825 + $0x80] sm:$0xff]
        %v1424 = vld [vmem:[%s825 + $0x88] sm:$0xff]
        %s1425 = scalar_lea.vmem %s601, 512
        %v1426 = vld [vmem:[%s1425] sm:$0xff]
        %v1427 = vld [vmem:[%s1425 + $0x8] sm:$0xff]
        %v1428 = vld [vmem:[%s1425 + $0x10] sm:$0xff]
        %v1429 = vld [vmem:[%s1425 + $0x18] sm:$0xff]
        %v1430 = vld [vmem:[%s1425 + $0x20] sm:$0xff]
        %v1431 = vld [vmem:[%s1425 + $0x28] sm:$0xff]
        %v1432 = vld [vmem:[%s1425 + $0x30] sm:$0xff]
        %v1433 = vld [vmem:[%s1425 + $0x38] sm:$0xff]
        %v1434 = vld [vmem:[%s1425 + $0x40] sm:$0xff]
        %v1435 = vld [vmem:[%s1425 + $0x48] sm:$0xff]
        %v1436 = vld [vmem:[%s1425 + $0x50] sm:$0xff]
        %v1437 = vld [vmem:[%s1425 + $0x58] sm:$0xff]
        %v1438 = vld [vmem:[%s1425 + $0x60] sm:$0xff]
        %v1439 = vld [vmem:[%s1425 + $0x68] sm:$0xff]
        %v1440 = vld [vmem:[%s1425 + $0x70] sm:$0xff]
        %v1441 = vld [vmem:[%s1425 + $0x78] sm:$0xff]
        %1442 = vmatprep.subr.mxu0 0.0
        %1443 = vmatpush1.msra.mxu0 %v1426
        %1444 = vmatprep.subr.mxu0 0.0
        %1445 = vmatpush1.msra.mxu0 %v1427
        %1446 = vmatprep.subr.mxu0 0.0
        %1447 = vmatpush1.msra.mxu0 %v1428
        %1448 = vmatprep.subr.mxu0 0.0
        %1449 = vmatpush1.msra.mxu0 %v1429
        %1450 = vmatprep.subr.mxu0 0.0
        %1451 = vmatpush1.msra.mxu0 %v1430
        %1452 = vmatprep.subr.mxu0 0.0
        %1453 = vmatpush1.msra.mxu0 %v1431
        %1454 = vmatprep.subr.mxu0 0.0
        %1455 = vmatpush1.msra.mxu0 %v1432
        %1456 = vmatprep.subr.mxu0 0.0
        %1457 = vmatpush1.msra.mxu0 %v1433
        %1458 = vmatprep.subr.mxu0 0.0
        %1459 = vmatpush1.msra.mxu0 %v1434
        %1460 = vmatprep.subr.mxu0 0.0
        %1461 = vmatpush1.msra.mxu0 %v1435
        %1462 = vmatprep.subr.mxu0 0.0
        %1463 = vmatpush1.msra.mxu0 %v1436
        %1464 = vmatprep.subr.mxu0 0.0
        %1465 = vmatpush1.msra.mxu0 %v1437
        %1466 = vmatprep.subr.mxu0 0.0
        %1467 = vmatpush1.msra.mxu0 %v1438
        %1468 = vmatprep.subr.mxu0 0.0
        %1469 = vmatpush1.msra.mxu0 %v1439
        %1470 = vmatprep.subr.mxu0 0.0
        %1471 = vmatpush1.msra.mxu0 %v1440
        %1472 = vmatprep.subr.mxu0 0.0
        %1473 = vmatpush1.msra.mxu0 %v1441
        %1474 = vmatprep.subr.mxu0 0.0
        %1475 = vmatpush1.msra.mxu0 0.0
        %1476 = vmatprep.subr.mxu0 0.0
        %1477 = vmatpush1.msra.mxu0 0.0
        %1478 = vmatprep.subr.mxu0 0.0
        %1479 = vmatpush1.msra.mxu0 0.0
        %1480 = vmatprep.subr.mxu0 0.0
        %1481 = vmatpush1.msra.mxu0 0.0
        %1482 = vmatprep.subr.mxu0 0.0
        %1483 = vmatpush1.msra.mxu0 0.0
        %1484 = vmatprep.subr.mxu0 0.0
        %1485 = vmatpush1.msra.mxu0 0.0
        %1486 = vmatprep.subr.mxu0 0.0
        %1487 = vmatpush1.msra.mxu0 0.0
        %1488 = vmatprep.subr.mxu0 0.0
        %1489 = vmatpush1.msra.mxu0 0.0
        %1490 = vmatprep.subr.mxu0 0.0
        %1491 = vmatpush1.msra.mxu0 0.0
        %1492 = vmatprep.subr.mxu0 0.0
        %1493 = vmatpush1.msra.mxu0 0.0
        %1494 = vmatprep.subr.mxu0 0.0
        %1495 = vmatpush1.msra.mxu0 0.0
        %1496 = vmatprep.subr.mxu0 0.0
        %1497 = vmatpush1.msra.mxu0 0.0
        %1498 = vmatprep.subr.mxu0 0.0
        %1499 = vmatpush1.msra.mxu0 0.0
        %1500 = vmatprep.subr.mxu0 0.0
        %1501 = vmatpush1.msra.mxu0 0.0
        %1502 = vmatprep.subr.mxu0 0.0
        %1503 = vmatpush1.msra.mxu0 0.0
        %1504 = vmatprep.subr.mxu0 0.0
        %1505 = vmatpush1.msra.mxu0 0.0
        %1506 = vmatprep.mubr.f32.mxu0 0.0
        %1507 = vmatmul.mubr.f32.gmra.mrb[0].mxu0 %v1409
        %v1508 = vpop.f32.mrb[0].mxu0
        %v1509 = vadd.f32 0.0, %v1508
        %v1510 = vpop.f32.mrb[0].mxu0
        %1511 = vmatprep.mubr.f32.mxu0 0.0
        %1512 = vmatmul.mubr.f32.gmra.mrb[0].mxu0 %v1410
        %v1513 = vpop.f32.mrb[0].mxu0
        %v1514 = vadd.f32 0.0, %v1513
        %v1515 = vpop.f32.mrb[0].mxu0
        %1516 = vmatprep.mubr.f32.mxu0 0.0
        %1517 = vmatmul.mubr.f32.gmra.mrb[0].mxu0 %v1411
        %v1518 = vpop.f32.mrb[0].mxu0
        %v1519 = vadd.f32 0.0, %v1518
        %v1520 = vpop.f32.mrb[0].mxu0
        %1521 = vmatprep.mubr.f32.mxu0 0.0
        %1522 = vmatmul.mubr.f32.gmra.mrb[0].mxu0 %v1412
        %v1523 = vpop.f32.mrb[0].mxu0
        %v1524 = vadd.f32 0.0, %v1523
        %v1525 = vpop.f32.mrb[0].mxu0
        %1526 = vmatprep.mubr.f32.mxu0 0.0
        %1527 = vmatmul.mubr.f32.gmra.mrb[0].mxu0 %v1413
        %v1528 = vpop.f32.mrb[0].mxu0
        %v1529 = vadd.f32 0.0, %v1528
        %v1530 = vpop.f32.mrb[0].mxu0
        %1531 = vmatprep.mubr.f32.mxu0 0.0
        %1532 = vmatmul.mubr.f32.gmra.mrb[0].mxu0 %v1414
        %v1533 = vpop.f32.mrb[0].mxu0
        %v1534 = vadd.f32 0.0, %v1533
        %v1535 = vpop.f32.mrb[0].mxu0
        %1536 = vmatprep.mubr.f32.mxu0 0.0
        %1537 = vmatmul.mubr.f32.gmra.mrb[0].mxu0 %v1415
        %v1538 = vpop.f32.mrb[0].mxu0
        %v1539 = vadd.f32 0.0, %v1538
        %v1540 = vpop.f32.mrb[0].mxu0
        %1541 = vmatprep.mubr.f32.mxu0 0.0
        %1542 = vmatmul.mubr.f32.gmra.mrb[0].mxu0 %v1416
        %v1543 = vpop.f32.mrb[0].mxu0
        %v1544 = vadd.f32 0.0, %v1543
        %v1545 = vpop.f32.mrb[0].mxu0
        %1546 = vmatprep.mubr.f32.mxu0 0.0
        %1547 = vmatmul.mubr.f32.gmra.mrb[0].mxu0 %v1417
        %v1548 = vpop.f32.mrb[0].mxu0
        %v1549 = vadd.f32 0.0, %v1548
        %v1550 = vpop.f32.mrb[0].mxu0
        %1551 = vmatprep.mubr.f32.mxu0 0.0
        %1552 = vmatmul.mubr.f32.gmra.mrb[0].mxu0 %v1418
        %v1553 = vpop.f32.mrb[0].mxu0
        %v1554 = vadd.f32 0.0, %v1553
        %v1555 = vpop.f32.mrb[0].mxu0
        %1556 = vmatprep.mubr.f32.mxu0 0.0
        %1557 = vmatmul.mubr.f32.gmra.mrb[0].mxu0 %v1419
        %v1558 = vpop.f32.mrb[0].mxu0
        %v1559 = vadd.f32 0.0, %v1558
        %v1560 = vpop.f32.mrb[0].mxu0
        %1561 = vmatprep.mubr.f32.mxu0 0.0
        %1562 = vmatmul.mubr.f32.gmra.mrb[0].mxu0 %v1420
        %v1563 = vpop.f32.mrb[0].mxu0
        %v1564 = vadd.f32 0.0, %v1563
        %v1565 = vpop.f32.mrb[0].mxu0
        %1566 = vmatprep.mubr.f32.mxu0 0.0
        %1567 = vmatmul.mubr.f32.gmra.mrb[0].mxu0 %v1421
        %v1568 = vpop.f32.mrb[0].mxu0
        %v1569 = vadd.f32 0.0, %v1568
        %v1570 = vpop.f32.mrb[0].mxu0
        %1571 = vmatprep.mubr.f32.mxu0 0.0
        %1572 = vmatmul.mubr.f32.gmra.mrb[0].mxu0 %v1422
        %v1573 = vpop.f32.mrb[0].mxu0
        %v1574 = vadd.f32 0.0, %v1573
        %v1575 = vpop.f32.mrb[0].mxu0
        %1576 = vmatprep.mubr.f32.mxu0 0.0
        %1577 = vmatmul.mubr.f32.gmra.mrb[0].mxu0 %v1423
        %v1578 = vpop.f32.mrb[0].mxu0
        %v1579 = vadd.f32 0.0, %v1578
        %v1580 = vpop.f32.mrb[0].mxu0
        %1581 = vmatprep.mubr.f32.mxu0 0.0
        %1582 = vmatmul.mubr.f32.gmra.mrb[0].mxu0 %v1424
        %v1583 = vpop.f32.mrb[0].mxu0
        %v1584 = vadd.f32 0.0, %v1583
        %v1585 = vpop.f32.mrb[0].mxu0
        %1586 = vdwg.mxu0
        %v1587 = vadd.f32 %v1393, %v1509
        %v1588 = vadd.f32 %v1394, %v1514
        %v1589 = vadd.f32 %v1395, %v1519
        %v1590 = vadd.f32 %v1396, %v1524
        %v1591 = vadd.f32 %v1397, %v1529
        %v1592 = vadd.f32 %v1398, %v1534
        %v1593 = vadd.f32 %v1399, %v1539
        %v1594 = vadd.f32 %v1400, %v1544
        %v1595 = vadd.f32 %v1401, %v1549
        %v1596 = vadd.f32 %v1402, %v1554
        %v1597 = vadd.f32 %v1403, %v1559
        %v1598 = vadd.f32 %v1404, %v1564
        %v1599 = vadd.f32 %v1405, %v1569
        %v1600 = vadd.f32 %v1406, %v1574
        %v1601 = vadd.f32 %v1407, %v1579
        %v1602 = vadd.f32 %v1408, %v1584
        %v1603 = vld [vmem:[%s1020 + $0x10] sm:$0xff]
        %v1604 = vld [vmem:[%s1020 + $0x18] sm:$0xff]
        %v1605 = vld [vmem:[%s1020 + $0x20] sm:$0xff]
        %v1606 = vld [vmem:[%s1020 + $0x28] sm:$0xff]
        %v1607 = vld [vmem:[%s1020 + $0x30] sm:$0xff]
        %v1608 = vld [vmem:[%s1020 + $0x38] sm:$0xff]
        %v1609 = vld [vmem:[%s1020 + $0x40] sm:$0xff]
        %v1610 = vld [vmem:[%s1020 + $0x48] sm:$0xff]
        %v1611 = vld [vmem:[%s1020 + $0x50] sm:$0xff]
        %v1612 = vld [vmem:[%s1020 + $0x58] sm:$0xff]
        %v1613 = vld [vmem:[%s1020 + $0x60] sm:$0xff]
        %v1614 = vld [vmem:[%s1020 + $0x68] sm:$0xff]
        %v1615 = vld [vmem:[%s1020 + $0x70] sm:$0xff]
        %v1616 = vld [vmem:[%s1020 + $0x78] sm:$0xff]
        %v1617 = vld [vmem:[%s1020 + $0x80] sm:$0xff]
        %v1618 = vld [vmem:[%s1020 + $0x88] sm:$0xff]
        %s1619 = scalar_lea.vmem %s601, 640
        %v1620 = vld [vmem:[%s1619] sm:$0xff]
        %v1621 = vld [vmem:[%s1619 + $0x8] sm:$0xff]
        %v1622 = vld [vmem:[%s1619 + $0x10] sm:$0xff]
        %v1623 = vld [vmem:[%s1619 + $0x18] sm:$0xff]
        %v1624 = vld [vmem:[%s1619 + $0x20] sm:$0xff]
        %v1625 = vld [vmem:[%s1619 + $0x28] sm:$0xff]
        %v1626 = vld [vmem:[%s1619 + $0x30] sm:$0xff]
        %v1627 = vld [vmem:[%s1619 + $0x38] sm:$0xff]
        %v1628 = vld [vmem:[%s1619 + $0x40] sm:$0xff]
        %v1629 = vld [vmem:[%s1619 + $0x48] sm:$0xff]
        %v1630 = vld [vmem:[%s1619 + $0x50] sm:$0xff]
        %v1631 = vld [vmem:[%s1619 + $0x58] sm:$0xff]
        %v1632 = vld [vmem:[%s1619 + $0x60] sm:$0xff]
        %v1633 = vld [vmem:[%s1619 + $0x68] sm:$0xff]
        %v1634 = vld [vmem:[%s1619 + $0x70] sm:$0xff]
        %v1635 = vld [vmem:[%s1619 + $0x78] sm:$0xff]
        %1636 = vmatprep.subr.mxu0 0.0
        %1637 = vmatpush1.msra.mxu0 %v1620
        %1638 = vmatprep.subr.mxu0 0.0
        %1639 = vmatpush1.msra.mxu0 %v1621
        %1640 = vmatprep.subr.mxu0 0.0
        %1641 = vmatpush1.msra.mxu0 %v1622
        %1642 = vmatprep.subr.mxu0 0.0
        %1643 = vmatpush1.msra.mxu0 %v1623
        %1644 = vmatprep.subr.mxu0 0.0
        %1645 = vmatpush1.msra.mxu0 %v1624
        %1646 = vmatprep.subr.mxu0 0.0
        %1647 = vmatpush1.msra.mxu0 %v1625
        %1648 = vmatprep.subr.mxu0 0.0
        %1649 = vmatpush1.msra.mxu0 %v1626
        %1650 = vmatprep.subr.mxu0 0.0
        %1651 = vmatpush1.msra.mxu0 %v1627
        %1652 = vmatprep.subr.mxu0 0.0
        %1653 = vmatpush1.msra.mxu0 %v1628
        %1654 = vmatprep.subr.mxu0 0.0
        %1655 = vmatpush1.msra.mxu0 %v1629
        %1656 = vmatprep.subr.mxu0 0.0
        %1657 = vmatpush1.msra.mxu0 %v1630
        %1658 = vmatprep.subr.mxu0 0.0
        %1659 = vmatpush1.msra.mxu0 %v1631
        %1660 = vmatprep.subr.mxu0 0.0
        %1661 = vmatpush1.msra.mxu0 %v1632
        %1662 = vmatprep.subr.mxu0 0.0
        %1663 = vmatpush1.msra.mxu0 %v1633
        %1664 = vmatprep.subr.mxu0 0.0
        %1665 = vmatpush1.msra.mxu0 %v1634
        %1666 = vmatprep.subr.mxu0 0.0
        %1667 = vmatpush1.msra.mxu0 %v1635
        %1668 = vmatprep.subr.mxu0 0.0
        %1669 = vmatpush1.msra.mxu0 0.0
        %1670 = vmatprep.subr.mxu0 0.0
        %1671 = vmatpush1.msra.mxu0 0.0
        %1672 = vmatprep.subr.mxu0 0.0
        %1673 = vmatpush1.msra.mxu0 0.0
        %1674 = vmatprep.subr.mxu0 0.0
        %1675 = vmatpush1.msra.mxu0 0.0
        %1676 = vmatprep.subr.mxu0 0.0
        %1677 = vmatpush1.msra.mxu0 0.0
        %1678 = vmatprep.subr.mxu0 0.0
        %1679 = vmatpush1.msra.mxu0 0.0
        %1680 = vmatprep.subr.mxu0 0.0
        %1681 = vmatpush1.msra.mxu0 0.0
        %1682 = vmatprep.subr.mxu0 0.0
        %1683 = vmatpush1.msra.mxu0 0.0
        %1684 = vmatprep.subr.mxu0 0.0
        %1685 = vmatpush1.msra.mxu0 0.0
        %1686 = vmatprep.subr.mxu0 0.0
        %1687 = vmatpush1.msra.mxu0 0.0
        %1688 = vmatprep.subr.mxu0 0.0
        %1689 = vmatpush1.msra.mxu0 0.0
        %1690 = vmatprep.subr.mxu0 0.0
        %1691 = vmatpush1.msra.mxu0 0.0
        %1692 = vmatprep.subr.mxu0 0.0
        %1693 = vmatpush1.msra.mxu0 0.0
        %1694 = vmatprep.subr.mxu0 0.0
        %1695 = vmatpush1.msra.mxu0 0.0
        %1696 = vmatprep.subr.mxu0 0.0
        %1697 = vmatpush1.msra.mxu0 0.0
        %1698 = vmatprep.subr.mxu0 0.0
        %1699 = vmatpush1.msra.mxu0 0.0
        %1700 = vmatprep.mubr.f32.mxu0 0.0
        %1701 = vmatmul.mubr.f32.gmra.mrb[0].mxu0 %v1603
        %v1702 = vpop.f32.mrb[0].mxu0
        %v1703 = vadd.f32 0.0, %v1702
        %v1704 = vpop.f32.mrb[0].mxu0
        %1705 = vmatprep.mubr.f32.mxu0 0.0
        %1706 = vmatmul.mubr.f32.gmra.mrb[0].mxu0 %v1604
        %v1707 = vpop.f32.mrb[0].mxu0
        %v1708 = vadd.f32 0.0, %v1707
        %v1709 = vpop.f32.mrb[0].mxu0
        %1710 = vmatprep.mubr.f32.mxu0 0.0
        %1711 = vmatmul.mubr.f32.gmra.mrb[0].mxu0 %v1605
        %v1712 = vpop.f32.mrb[0].mxu0
        %v1713 = vadd.f32 0.0, %v1712
        %v1714 = vpop.f32.mrb[0].mxu0
        %1715 = vmatprep.mubr.f32.mxu0 0.0
        %1716 = vmatmul.mubr.f32.gmra.mrb[0].mxu0 %v1606
        %v1717 = vpop.f32.mrb[0].mxu0
        %v1718 = vadd.f32 0.0, %v1717
        %v1719 = vpop.f32.mrb[0].mxu0
        %1720 = vmatprep.mubr.f32.mxu0 0.0
        %1721 = vmatmul.mubr.f32.gmra.mrb[0].mxu0 %v1607
        %v1722 = vpop.f32.mrb[0].mxu0
        %v1723 = vadd.f32 0.0, %v1722
        %v1724 = vpop.f32.mrb[0].mxu0
        %1725 = vmatprep.mubr.f32.mxu0 0.0
        %1726 = vmatmul.mubr.f32.gmra.mrb[0].mxu0 %v1608
        %v1727 = vpop.f32.mrb[0].mxu0
        %v1728 = vadd.f32 0.0, %v1727
        %v1729 = vpop.f32.mrb[0].mxu0
        %1730 = vmatprep.mubr.f32.mxu0 0.0
        %1731 = vmatmul.mubr.f32.gmra.mrb[0].mxu0 %v1609
        %v1732 = vpop.f32.mrb[0].mxu0
        %v1733 = vadd.f32 0.0, %v1732
        %v1734 = vpop.f32.mrb[0].mxu0
        %1735 = vmatprep.mubr.f32.mxu0 0.0
        %1736 = vmatmul.mubr.f32.gmra.mrb[0].mxu0 %v1610
        %v1737 = vpop.f32.mrb[0].mxu0
        %v1738 = vadd.f32 0.0, %v1737
        %v1739 = vpop.f32.mrb[0].mxu0
        %1740 = vmatprep.mubr.f32.mxu0 0.0
        %1741 = vmatmul.mubr.f32.gmra.mrb[0].mxu0 %v1611
        %v1742 = vpop.f32.mrb[0].mxu0
        %v1743 = vadd.f32 0.0, %v1742
        %v1744 = vpop.f32.mrb[0].mxu0
        %1745 = vmatprep.mubr.f32.mxu0 0.0
        %1746 = vmatmul.mubr.f32.gmra.mrb[0].mxu0 %v1612
        %v1747 = vpop.f32.mrb[0].mxu0
        %v1748 = vadd.f32 0.0, %v1747
        %v1749 = vpop.f32.mrb[0].mxu0
        %1750 = vmatprep.mubr.f32.mxu0 0.0
        %1751 = vmatmul.mubr.f32.gmra.mrb[0].mxu0 %v1613
        %v1752 = vpop.f32.mrb[0].mxu0
        %v1753 = vadd.f32 0.0, %v1752
        %v1754 = vpop.f32.mrb[0].mxu0
        %1755 = vmatprep.mubr.f32.mxu0 0.0
        %1756 = vmatmul.mubr.f32.gmra.mrb[0].mxu0 %v1614
        %v1757 = vpop.f32.mrb[0].mxu0
        %v1758 = vadd.f32 0.0, %v1757
        %v1759 = vpop.f32.mrb[0].mxu0
        %1760 = vmatprep.mubr.f32.mxu0 0.0
        %1761 = vmatmul.mubr.f32.gmra.mrb[0].mxu0 %v1615
        %v1762 = vpop.f32.mrb[0].mxu0
        %v1763 = vadd.f32 0.0, %v1762
        %v1764 = vpop.f32.mrb[0].mxu0
        %1765 = vmatprep.mubr.f32.mxu0 0.0
        %1766 = vmatmul.mubr.f32.gmra.mrb[0].mxu0 %v1616
        %v1767 = vpop.f32.mrb[0].mxu0
        %v1768 = vadd.f32 0.0, %v1767
        %v1769 = vpop.f32.mrb[0].mxu0
        %1770 = vmatprep.mubr.f32.mxu0 0.0
        %1771 = vmatmul.mubr.f32.gmra.mrb[0].mxu0 %v1617
        %v1772 = vpop.f32.mrb[0].mxu0
        %v1773 = vadd.f32 0.0, %v1772
        %v1774 = vpop.f32.mrb[0].mxu0
        %1775 = vmatprep.mubr.f32.mxu0 0.0
        %1776 = vmatmul.mubr.f32.gmra.mrb[0].mxu0 %v1618
        %v1777 = vpop.f32.mrb[0].mxu0
        %v1778 = vadd.f32 0.0, %v1777
        %v1779 = vpop.f32.mrb[0].mxu0
        %1780 = vdwg.mxu0
        %v1781 = vadd.f32 %v1587, %v1703
        %v1782 = vadd.f32 %v1588, %v1708
        %v1783 = vadd.f32 %v1589, %v1713
        %v1784 = vadd.f32 %v1590, %v1718
        %v1785 = vadd.f32 %v1591, %v1723
        %v1786 = vadd.f32 %v1592, %v1728
        %v1787 = vadd.f32 %v1593, %v1733
        %v1788 = vadd.f32 %v1594, %v1738
        %v1789 = vadd.f32 %v1595, %v1743
        %v1790 = vadd.f32 %v1596, %v1748
        %v1791 = vadd.f32 %v1597, %v1753
        %v1792 = vadd.f32 %v1598, %v1758
        %v1793 = vadd.f32 %v1599, %v1763
        %v1794 = vadd.f32 %v1600, %v1768
        %v1795 = vadd.f32 %v1601, %v1773
        %v1796 = vadd.f32 %v1602, %v1778
        %v1797 = vld [vmem:[%s549 + $0x20] sm:$0xff]
        %v1798 = vld [vmem:[%s549 + $0x28] sm:$0xff]
        %v1799 = vld [vmem:[%s549 + $0x30] sm:$0xff]
        %v1800 = vld [vmem:[%s549 + $0x38] sm:$0xff]
        %v1801 = vld [vmem:[%s549 + $0x40] sm:$0xff]
        %v1802 = vld [vmem:[%s549 + $0x48] sm:$0xff]
        %v1803 = vld [vmem:[%s549 + $0x50] sm:$0xff]
        %v1804 = vld [vmem:[%s549 + $0x58] sm:$0xff]
        %v1805 = vld [vmem:[%s549 + $0x60] sm:$0xff]
        %v1806 = vld [vmem:[%s549 + $0x68] sm:$0xff]
        %v1807 = vld [vmem:[%s549 + $0x70] sm:$0xff]
        %v1808 = vld [vmem:[%s549 + $0x78] sm:$0xff]
        %v1809 = vld [vmem:[%s549 + $0x80] sm:$0xff]
        %v1810 = vld [vmem:[%s549 + $0x88] sm:$0xff]
        %v1811 = vld [vmem:[%s549 + $0x90] sm:$0xff]
        %v1812 = vld [vmem:[%s549 + $0x98] sm:$0xff]
        %s1813 = scalar_lea.vmem %s601, 768
        %v1814 = vld [vmem:[%s1813] sm:$0xff]
        %v1815 = vld [vmem:[%s1813 + $0x8] sm:$0xff]
        %v1816 = vld [vmem:[%s1813 + $0x10] sm:$0xff]
        %v1817 = vld [vmem:[%s1813 + $0x18] sm:$0xff]
        %v1818 = vld [vmem:[%s1813 + $0x20] sm:$0xff]
        %v1819 = vld [vmem:[%s1813 + $0x28] sm:$0xff]
        %v1820 = vld [vmem:[%s1813 + $0x30] sm:$0xff]
        %v1821 = vld [vmem:[%s1813 + $0x38] sm:$0xff]
        %v1822 = vld [vmem:[%s1813 + $0x40] sm:$0xff]
        %v1823 = vld [vmem:[%s1813 + $0x48] sm:$0xff]
        %v1824 = vld [vmem:[%s1813 + $0x50] sm:$0xff]
        %v1825 = vld [vmem:[%s1813 + $0x58] sm:$0xff]
        %v1826 = vld [vmem:[%s1813 + $0x60] sm:$0xff]
        %v1827 = vld [vmem:[%s1813 + $0x68] sm:$0xff]
        %v1828 = vld [vmem:[%s1813 + $0x70] sm:$0xff]
        %v1829 = vld [vmem:[%s1813 + $0x78] sm:$0xff]
        %1830 = vmatprep.subr.mxu0 0.0
        %1831 = vmatpush1.msra.mxu0 %v1814
        %1832 = vmatprep.subr.mxu0 0.0
        %1833 = vmatpush1.msra.mxu0 %v1815
        %1834 = vmatprep.subr.mxu0 0.0
        %1835 = vmatpush1.msra.mxu0 %v1816
        %1836 = vmatprep.subr.mxu0 0.0
        %1837 = vmatpush1.msra.mxu0 %v1817
        %1838 = vmatprep.subr.mxu0 0.0
        %1839 = vmatpush1.msra.mxu0 %v1818
        %1840 = vmatprep.subr.mxu0 0.0
        %1841 = vmatpush1.msra.mxu0 %v1819
        %1842 = vmatprep.subr.mxu0 0.0
        %1843 = vmatpush1.msra.mxu0 %v1820
        %1844 = vmatprep.subr.mxu0 0.0
        %1845 = vmatpush1.msra.mxu0 %v1821
        %1846 = vmatprep.subr.mxu0 0.0
        %1847 = vmatpush1.msra.mxu0 %v1822
        %1848 = vmatprep.subr.mxu0 0.0
        %1849 = vmatpush1.msra.mxu0 %v1823
        %1850 = vmatprep.subr.mxu0 0.0
        %1851 = vmatpush1.msra.mxu0 %v1824
        %1852 = vmatprep.subr.mxu0 0.0
        %1853 = vmatpush1.msra.mxu0 %v1825
        %1854 = vmatprep.subr.mxu0 0.0
        %1855 = vmatpush1.msra.mxu0 %v1826
        %1856 = vmatprep.subr.mxu0 0.0
        %1857 = vmatpush1.msra.mxu0 %v1827
        %1858 = vmatprep.subr.mxu0 0.0
        %1859 = vmatpush1.msra.mxu0 %v1828
        %1860 = vmatprep.subr.mxu0 0.0
        %1861 = vmatpush1.msra.mxu0 %v1829
        %1862 = vmatprep.subr.mxu0 0.0
        %1863 = vmatpush1.msra.mxu0 0.0
        %1864 = vmatprep.subr.mxu0 0.0
        %1865 = vmatpush1.msra.mxu0 0.0
        %1866 = vmatprep.subr.mxu0 0.0
        %1867 = vmatpush1.msra.mxu0 0.0
        %1868 = vmatprep.subr.mxu0 0.0
        %1869 = vmatpush1.msra.mxu0 0.0
        %1870 = vmatprep.subr.mxu0 0.0
        %1871 = vmatpush1.msra.mxu0 0.0
        %1872 = vmatprep.subr.mxu0 0.0
        %1873 = vmatpush1.msra.mxu0 0.0
        %1874 = vmatprep.subr.mxu0 0.0
        %1875 = vmatpush1.msra.mxu0 0.0
        %1876 = vmatprep.subr.mxu0 0.0
        %1877 = vmatpush1.msra.mxu0 0.0
        %1878 = vmatprep.subr.mxu0 0.0
        %1879 = vmatpush1.msra.mxu0 0.0
        %1880 = vmatprep.subr.mxu0 0.0
        %1881 = vmatpush1.msra.mxu0 0.0
        %1882 = vmatprep.subr.mxu0 0.0
        %1883 = vmatpush1.msra.mxu0 0.0
        %1884 = vmatprep.subr.mxu0 0.0
        %1885 = vmatpush1.msra.mxu0 0.0
        %1886 = vmatprep.subr.mxu0 0.0
        %1887 = vmatpush1.msra.mxu0 0.0
        %1888 = vmatprep.subr.mxu0 0.0
        %1889 = vmatpush1.msra.mxu0 0.0
        %1890 = vmatprep.subr.mxu0 0.0
        %1891 = vmatpush1.msra.mxu0 0.0
        %1892 = vmatprep.subr.mxu0 0.0
        %1893 = vmatpush1.msra.mxu0 0.0
        %1894 = vmatprep.mubr.f32.mxu0 0.0
        %1895 = vmatmul.mubr.f32.gmra.mrb[0].mxu0 %v1797
        %v1896 = vpop.f32.mrb[0].mxu0
        %v1897 = vadd.f32 0.0, %v1896
        %v1898 = vpop.f32.mrb[0].mxu0
        %1899 = vmatprep.mubr.f32.mxu0 0.0
        %1900 = vmatmul.mubr.f32.gmra.mrb[0].mxu0 %v1798
        %v1901 = vpop.f32.mrb[0].mxu0
        %v1902 = vadd.f32 0.0, %v1901
        %v1903 = vpop.f32.mrb[0].mxu0
        %1904 = vmatprep.mubr.f32.mxu0 0.0
        %1905 = vmatmul.mubr.f32.gmra.mrb[0].mxu0 %v1799
        %v1906 = vpop.f32.mrb[0].mxu0
        %v1907 = vadd.f32 0.0, %v1906
        %v1908 = vpop.f32.mrb[0].mxu0
        %1909 = vmatprep.mubr.f32.mxu0 0.0
        %1910 = vmatmul.mubr.f32.gmra.mrb[0].mxu0 %v1800
        %v1911 = vpop.f32.mrb[0].mxu0
        %v1912 = vadd.f32 0.0, %v1911
        %v1913 = vpop.f32.mrb[0].mxu0
        %1914 = vmatprep.mubr.f32.mxu0 0.0
        %1915 = vmatmul.mubr.f32.gmra.mrb[0].mxu0 %v1801
        %v1916 = vpop.f32.mrb[0].mxu0
        %v1917 = vadd.f32 0.0, %v1916
        %v1918 = vpop.f32.mrb[0].mxu0
        %1919 = vmatprep.mubr.f32.mxu0 0.0
        %1920 = vmatmul.mubr.f32.gmra.mrb[0].mxu0 %v1802
        %v1921 = vpop.f32.mrb[0].mxu0
        %v1922 = vadd.f32 0.0, %v1921
        %v1923 = vpop.f32.mrb[0].mxu0
        %1924 = vmatprep.mubr.f32.mxu0 0.0
        %1925 = vmatmul.mubr.f32.gmra.mrb[0].mxu0 %v1803
        %v1926 = vpop.f32.mrb[0].mxu0
        %v1927 = vadd.f32 0.0, %v1926
        %v1928 = vpop.f32.mrb[0].mxu0
        %1929 = vmatprep.mubr.f32.mxu0 0.0
        %1930 = vmatmul.mubr.f32.gmra.mrb[0].mxu0 %v1804
        %v1931 = vpop.f32.mrb[0].mxu0
        %v1932 = vadd.f32 0.0, %v1931
        %v1933 = vpop.f32.mrb[0].mxu0
        %1934 = vmatprep.mubr.f32.mxu0 0.0
        %1935 = vmatmul.mubr.f32.gmra.mrb[0].mxu0 %v1805
        %v1936 = vpop.f32.mrb[0].mxu0
        %v1937 = vadd.f32 0.0, %v1936
        %v1938 = vpop.f32.mrb[0].mxu0
        %1939 = vmatprep.mubr.f32.mxu0 0.0
        %1940 = vmatmul.mubr.f32.gmra.mrb[0].mxu0 %v1806
        %v1941 = vpop.f32.mrb[0].mxu0
        %v1942 = vadd.f32 0.0, %v1941
        %v1943 = vpop.f32.mrb[0].mxu0
        %1944 = vmatprep.mubr.f32.mxu0 0.0
        %1945 = vmatmul.mubr.f32.gmra.mrb[0].mxu0 %v1807
        %v1946 = vpop.f32.mrb[0].mxu0
        %v1947 = vadd.f32 0.0, %v1946
        %v1948 = vpop.f32.mrb[0].mxu0
        %1949 = vmatprep.mubr.f32.mxu0 0.0
        %1950 = vmatmul.mubr.f32.gmra.mrb[0].mxu0 %v1808
        %v1951 = vpop.f32.mrb[0].mxu0
        %v1952 = vadd.f32 0.0, %v1951
        %v1953 = vpop.f32.mrb[0].mxu0
        %1954 = vmatprep.mubr.f32.mxu0 0.0
        %1955 = vmatmul.mubr.f32.gmra.mrb[0].mxu0 %v1809
        %v1956 = vpop.f32.mrb[0].mxu0
        %v1957 = vadd.f32 0.0, %v1956
        %v1958 = vpop.f32.mrb[0].mxu0
        %1959 = vmatprep.mubr.f32.mxu0 0.0
        %1960 = vmatmul.mubr.f32.gmra.mrb[0].mxu0 %v1810
        %v1961 = vpop.f32.mrb[0].mxu0
        %v1962 = vadd.f32 0.0, %v1961
        %v1963 = vpop.f32.mrb[0].mxu0
        %1964 = vmatprep.mubr.f32.mxu0 0.0
        %1965 = vmatmul.mubr.f32.gmra.mrb[0].mxu0 %v1811
        %v1966 = vpop.f32.mrb[0].mxu0
        %v1967 = vadd.f32 0.0, %v1966
        %v1968 = vpop.f32.mrb[0].mxu0
        %1969 = vmatprep.mubr.f32.mxu0 0.0
        %1970 = vmatmul.mubr.f32.gmra.mrb[0].mxu0 %v1812
        %v1971 = vpop.f32.mrb[0].mxu0
        %v1972 = vadd.f32 0.0, %v1971
        %v1973 = vpop.f32.mrb[0].mxu0
        %1974 = vdwg.mxu0
        %v1975 = vadd.f32 %v1781, %v1897
        %v1976 = vadd.f32 %v1782, %v1902
        %v1977 = vadd.f32 %v1783, %v1907
        %v1978 = vadd.f32 %v1784, %v1912
        %v1979 = vadd.f32 %v1785, %v1917
        %v1980 = vadd.f32 %v1786, %v1922
        %v1981 = vadd.f32 %v1787, %v1927
        %v1982 = vadd.f32 %v1788, %v1932
        %v1983 = vadd.f32 %v1789, %v1937
        %v1984 = vadd.f32 %v1790, %v1942
        %v1985 = vadd.f32 %v1791, %v1947
        %v1986 = vadd.f32 %v1792, %v1952
        %v1987 = vadd.f32 %v1793, %v1957
        %v1988 = vadd.f32 %v1794, %v1962
        %v1989 = vadd.f32 %v1795, %v1967
        %v1990 = vadd.f32 %v1796, %v1972
        %v1991 = vld [vmem:[%s825 + $0x20] sm:$0xff]
        %v1992 = vld [vmem:[%s825 + $0x28] sm:$0xff]
        %v1993 = vld [vmem:[%s825 + $0x30] sm:$0xff]
        %v1994 = vld [vmem:[%s825 + $0x38] sm:$0xff]
        %v1995 = vld [vmem:[%s825 + $0x40] sm:$0xff]
        %v1996 = vld [vmem:[%s825 + $0x48] sm:$0xff]
        %v1997 = vld [vmem:[%s825 + $0x50] sm:$0xff]
        %v1998 = vld [vmem:[%s825 + $0x58] sm:$0xff]
        %v1999 = vld [vmem:[%s825 + $0x60] sm:$0xff]
        %v2000 = vld [vmem:[%s825 + $0x68] sm:$0xff]
        %v2001 = vld [vmem:[%s825 + $0x70] sm:$0xff]
        %v2002 = vld [vmem:[%s825 + $0x78] sm:$0xff]
        %v2003 = vld [vmem:[%s825 + $0x80] sm:$0xff]
        %v2004 = vld [vmem:[%s825 + $0x88] sm:$0xff]
        %v2005 = vld [vmem:[%s825 + $0x90] sm:$0xff]
        %v2006 = vld [vmem:[%s825 + $0x98] sm:$0xff]
        %s2007 = scalar_lea.vmem %s601, 896
        %v2008 = vld [vmem:[%s2007] sm:$0xff]
        %v2009 = vld [vmem:[%s2007 + $0x8] sm:$0xff]
        %v2010 = vld [vmem:[%s2007 + $0x10] sm:$0xff]
        %v2011 = vld [vmem:[%s2007 + $0x18] sm:$0xff]
        %v2012 = vld [vmem:[%s2007 + $0x20] sm:$0xff]
        %v2013 = vld [vmem:[%s2007 + $0x28] sm:$0xff]
        %v2014 = vld [vmem:[%s2007 + $0x30] sm:$0xff]
        %v2015 = vld [vmem:[%s2007 + $0x38] sm:$0xff]
        %v2016 = vld [vmem:[%s2007 + $0x40] sm:$0xff]
        %v2017 = vld [vmem:[%s2007 + $0x48] sm:$0xff]
        %v2018 = vld [vmem:[%s2007 + $0x50] sm:$0xff]
        %v2019 = vld [vmem:[%s2007 + $0x58] sm:$0xff]
        %v2020 = vld [vmem:[%s2007 + $0x60] sm:$0xff]
        %v2021 = vld [vmem:[%s2007 + $0x68] sm:$0xff]
        %v2022 = vld [vmem:[%s2007 + $0x70] sm:$0xff]
        %v2023 = vld [vmem:[%s2007 + $0x78] sm:$0xff]
        %2024 = vmatprep.subr.mxu0 0.0
        %2025 = vmatpush1.msra.mxu0 %v2008
        %2026 = vmatprep.subr.mxu0 0.0
        %2027 = vmatpush1.msra.mxu0 %v2009
        %2028 = vmatprep.subr.mxu0 0.0
        %2029 = vmatpush1.msra.mxu0 %v2010
        %2030 = vmatprep.subr.mxu0 0.0
        %2031 = vmatpush1.msra.mxu0 %v2011
        %2032 = vmatprep.subr.mxu0 0.0
        %2033 = vmatpush1.msra.mxu0 %v2012
        %2034 = vmatprep.subr.mxu0 0.0
        %2035 = vmatpush1.msra.mxu0 %v2013
        %2036 = vmatprep.subr.mxu0 0.0
        %2037 = vmatpush1.msra.mxu0 %v2014
        %2038 = vmatprep.subr.mxu0 0.0
        %2039 = vmatpush1.msra.mxu0 %v2015
        %2040 = vmatprep.subr.mxu0 0.0
        %2041 = vmatpush1.msra.mxu0 %v2016
        %2042 = vmatprep.subr.mxu0 0.0
        %2043 = vmatpush1.msra.mxu0 %v2017
        %2044 = vmatprep.subr.mxu0 0.0
        %2045 = vmatpush1.msra.mxu0 %v2018
        %2046 = vmatprep.subr.mxu0 0.0
        %2047 = vmatpush1.msra.mxu0 %v2019
        %2048 = vmatprep.subr.mxu0 0.0
        %2049 = vmatpush1.msra.mxu0 %v2020
        %2050 = vmatprep.subr.mxu0 0.0
        %2051 = vmatpush1.msra.mxu0 %v2021
        %2052 = vmatprep.subr.mxu0 0.0
        %2053 = vmatpush1.msra.mxu0 %v2022
        %2054 = vmatprep.subr.mxu0 0.0
        %2055 = vmatpush1.msra.mxu0 %v2023
        %2056 = vmatprep.subr.mxu0 0.0
        %2057 = vmatpush1.msra.mxu0 0.0
        %2058 = vmatprep.subr.mxu0 0.0
        %2059 = vmatpush1.msra.mxu0 0.0
        %2060 = vmatprep.subr.mxu0 0.0
        %2061 = vmatpush1.msra.mxu0 0.0
        %2062 = vmatprep.subr.mxu0 0.0
        %2063 = vmatpush1.msra.mxu0 0.0
        %2064 = vmatprep.subr.mxu0 0.0
        %2065 = vmatpush1.msra.mxu0 0.0
        %2066 = vmatprep.subr.mxu0 0.0
        %2067 = vmatpush1.msra.mxu0 0.0
        %2068 = vmatprep.subr.mxu0 0.0
        %2069 = vmatpush1.msra.mxu0 0.0
        %2070 = vmatprep.subr.mxu0 0.0
        %2071 = vmatpush1.msra.mxu0 0.0
        %2072 = vmatprep.subr.mxu0 0.0
        %2073 = vmatpush1.msra.mxu0 0.0
        %2074 = vmatprep.subr.mxu0 0.0
        %2075 = vmatpush1.msra.mxu0 0.0
        %2076 = vmatprep.subr.mxu0 0.0
        %2077 = vmatpush1.msra.mxu0 0.0
        %2078 = vmatprep.subr.mxu0 0.0
        %2079 = vmatpush1.msra.mxu0 0.0
        %2080 = vmatprep.subr.mxu0 0.0
        %2081 = vmatpush1.msra.mxu0 0.0
        %2082 = vmatprep.subr.mxu0 0.0
        %2083 = vmatpush1.msra.mxu0 0.0
        %2084 = vmatprep.subr.mxu0 0.0
        %2085 = vmatpush1.msra.mxu0 0.0
        %2086 = vmatprep.subr.mxu0 0.0
        %2087 = vmatpush1.msra.mxu0 0.0
        %2088 = vmatprep.mubr.f32.mxu0 0.0
        %2089 = vmatmul.mubr.f32.gmra.mrb[0].mxu0 %v1991
        %v2090 = vpop.f32.mrb[0].mxu0
        %v2091 = vadd.f32 0.0, %v2090
        %v2092 = vpop.f32.mrb[0].mxu0
        %2093 = vmatprep.mubr.f32.mxu0 0.0
        %2094 = vmatmul.mubr.f32.gmra.mrb[0].mxu0 %v1992
        %v2095 = vpop.f32.mrb[0].mxu0
        %v2096 = vadd.f32 0.0, %v2095
        %v2097 = vpop.f32.mrb[0].mxu0
        %2098 = vmatprep.mubr.f32.mxu0 0.0
        %2099 = vmatmul.mubr.f32.gmra.mrb[0].mxu0 %v1993
        %v2100 = vpop.f32.mrb[0].mxu0
        %v2101 = vadd.f32 0.0, %v2100
        %v2102 = vpop.f32.mrb[0].mxu0
        %2103 = vmatprep.mubr.f32.mxu0 0.0
        %2104 = vmatmul.mubr.f32.gmra.mrb[0].mxu0 %v1994
        %v2105 = vpop.f32.mrb[0].mxu0
        %v2106 = vadd.f32 0.0, %v2105
        %v2107 = vpop.f32.mrb[0].mxu0
        %2108 = vmatprep.mubr.f32.mxu0 0.0
        %2109 = vmatmul.mubr.f32.gmra.mrb[0].mxu0 %v1995
        %v2110 = vpop.f32.mrb[0].mxu0
        %v2111 = vadd.f32 0.0, %v2110
        %v2112 = vpop.f32.mrb[0].mxu0
        %2113 = vmatprep.mubr.f32.mxu0 0.0
        %2114 = vmatmul.mubr.f32.gmra.mrb[0].mxu0 %v1996
        %v2115 = vpop.f32.mrb[0].mxu0
        %v2116 = vadd.f32 0.0, %v2115
        %v2117 = vpop.f32.mrb[0].mxu0
        %2118 = vmatprep.mubr.f32.mxu0 0.0
        %2119 = vmatmul.mubr.f32.gmra.mrb[0].mxu0 %v1997
        %v2120 = vpop.f32.mrb[0].mxu0
        %v2121 = vadd.f32 0.0, %v2120
        %v2122 = vpop.f32.mrb[0].mxu0
        %2123 = vmatprep.mubr.f32.mxu0 0.0
        %2124 = vmatmul.mubr.f32.gmra.mrb[0].mxu0 %v1998
        %v2125 = vpop.f32.mrb[0].mxu0
        %v2126 = vadd.f32 0.0, %v2125
        %v2127 = vpop.f32.mrb[0].mxu0
        %2128 = vmatprep.mubr.f32.mxu0 0.0
        %2129 = vmatmul.mubr.f32.gmra.mrb[0].mxu0 %v1999
        %v2130 = vpop.f32.mrb[0].mxu0
        %v2131 = vadd.f32 0.0, %v2130
        %v2132 = vpop.f32.mrb[0].mxu0
        %2133 = vmatprep.mubr.f32.mxu0 0.0
        %2134 = vmatmul.mubr.f32.gmra.mrb[0].mxu0 %v2000
        %v2135 = vpop.f32.mrb[0].mxu0
        %v2136 = vadd.f32 0.0, %v2135
        %v2137 = vpop.f32.mrb[0].mxu0
        %2138 = vmatprep.mubr.f32.mxu0 0.0
        %2139 = vmatmul.mubr.f32.gmra.mrb[0].mxu0 %v2001
        %v2140 = vpop.f32.mrb[0].mxu0
        %v2141 = vadd.f32 0.0, %v2140
        %v2142 = vpop.f32.mrb[0].mxu0
        %2143 = vmatprep.mubr.f32.mxu0 0.0
        %2144 = vmatmul.mubr.f32.gmra.mrb[0].mxu0 %v2002
        %v2145 = vpop.f32.mrb[0].mxu0
        %v2146 = vadd.f32 0.0, %v2145
        %v2147 = vpop.f32.mrb[0].mxu0
        %2148 = vmatprep.mubr.f32.mxu0 0.0
        %2149 = vmatmul.mubr.f32.gmra.mrb[0].mxu0 %v2003
        %v2150 = vpop.f32.mrb[0].mxu0
        %v2151 = vadd.f32 0.0, %v2150
        %v2152 = vpop.f32.mrb[0].mxu0
        %2153 = vmatprep.mubr.f32.mxu0 0.0
        %2154 = vmatmul.mubr.f32.gmra.mrb[0].mxu0 %v2004
        %v2155 = vpop.f32.mrb[0].mxu0
        %v2156 = vadd.f32 0.0, %v2155
        %v2157 = vpop.f32.mrb[0].mxu0
        %2158 = vmatprep.mubr.f32.mxu0 0.0
        %2159 = vmatmul.mubr.f32.gmra.mrb[0].mxu0 %v2005
        %v2160 = vpop.f32.mrb[0].mxu0
        %v2161 = vadd.f32 0.0, %v2160
        %v2162 = vpop.f32.mrb[0].mxu0
        %2163 = vmatprep.mubr.f32.mxu0 0.0
        %2164 = vmatmul.mubr.f32.gmra.mrb[0].mxu0 %v2006
        %v2165 = vpop.f32.mrb[0].mxu0
        %v2166 = vadd.f32 0.0, %v2165
        %v2167 = vpop.f32.mrb[0].mxu0
        %2168 = vdwg.mxu0
        %v2169 = vadd.f32 %v1975, %v2091
        %v2170 = vadd.f32 %v1976, %v2096
        %v2171 = vadd.f32 %v1977, %v2101
        %v2172 = vadd.f32 %v1978, %v2106
        %v2173 = vadd.f32 %v1979, %v2111
        %v2174 = vadd.f32 %v1980, %v2116
        %v2175 = vadd.f32 %v1981, %v2121
        %v2176 = vadd.f32 %v1982, %v2126
        %v2177 = vadd.f32 %v1983, %v2131
        %v2178 = vadd.f32 %v1984, %v2136
        %v2179 = vadd.f32 %v1985, %v2141
        %v2180 = vadd.f32 %v1986, %v2146
        %v2181 = vadd.f32 %v1987, %v2151
        %v2182 = vadd.f32 %v1988, %v2156
        %v2183 = vadd.f32 %v1989, %v2161
        %v2184 = vadd.f32 %v1990, %v2166
        %v2185 = vld [vmem:[%s1020 + $0x20] sm:$0xff]
        %v2186 = vld [vmem:[%s1020 + $0x28] sm:$0xff]
        %v2187 = vld [vmem:[%s1020 + $0x30] sm:$0xff]
        %v2188 = vld [vmem:[%s1020 + $0x38] sm:$0xff]
        %v2189 = vld [vmem:[%s1020 + $0x40] sm:$0xff]
        %v2190 = vld [vmem:[%s1020 + $0x48] sm:$0xff]
        %v2191 = vld [vmem:[%s1020 + $0x50] sm:$0xff]
        %v2192 = vld [vmem:[%s1020 + $0x58] sm:$0xff]
        %v2193 = vld [vmem:[%s1020 + $0x60] sm:$0xff]
        %v2194 = vld [vmem:[%s1020 + $0x68] sm:$0xff]
        %v2195 = vld [vmem:[%s1020 + $0x70] sm:$0xff]
        %v2196 = vld [vmem:[%s1020 + $0x78] sm:$0xff]
        %v2197 = vld [vmem:[%s1020 + $0x80] sm:$0xff]
        %v2198 = vld [vmem:[%s1020 + $0x88] sm:$0xff]
        %v2199 = vld [vmem:[%s1020 + $0x90] sm:$0xff]
        %v2200 = vld [vmem:[%s1020 + $0x98] sm:$0xff]
        %s2201 = scalar_lea.vmem %s601, 1024
        %v2202 = vld [vmem:[%s2201] sm:$0xff]
        %v2203 = vld [vmem:[%s2201 + $0x8] sm:$0xff]
        %v2204 = vld [vmem:[%s2201 + $0x10] sm:$0xff]
        %v2205 = vld [vmem:[%s2201 + $0x18] sm:$0xff]
        %v2206 = vld [vmem:[%s2201 + $0x20] sm:$0xff]
        %v2207 = vld [vmem:[%s2201 + $0x28] sm:$0xff]
        %v2208 = vld [vmem:[%s2201 + $0x30] sm:$0xff]
        %v2209 = vld [vmem:[%s2201 + $0x38] sm:$0xff]
        %v2210 = vld [vmem:[%s2201 + $0x40] sm:$0xff]
        %v2211 = vld [vmem:[%s2201 + $0x48] sm:$0xff]
        %v2212 = vld [vmem:[%s2201 + $0x50] sm:$0xff]
        %v2213 = vld [vmem:[%s2201 + $0x58] sm:$0xff]
        %v2214 = vld [vmem:[%s2201 + $0x60] sm:$0xff]
        %v2215 = vld [vmem:[%s2201 + $0x68] sm:$0xff]
        %v2216 = vld [vmem:[%s2201 + $0x70] sm:$0xff]
        %v2217 = vld [vmem:[%s2201 + $0x78] sm:$0xff]
        %2218 = vmatprep.subr.mxu0 0.0
        %2219 = vmatpush1.msra.mxu0 %v2202
        %2220 = vmatprep.subr.mxu0 0.0
        %2221 = vmatpush1.msra.mxu0 %v2203
        %2222 = vmatprep.subr.mxu0 0.0
        %2223 = vmatpush1.msra.mxu0 %v2204
        %2224 = vmatprep.subr.mxu0 0.0
        %2225 = vmatpush1.msra.mxu0 %v2205
        %2226 = vmatprep.subr.mxu0 0.0
        %2227 = vmatpush1.msra.mxu0 %v2206
        %2228 = vmatprep.subr.mxu0 0.0
        %2229 = vmatpush1.msra.mxu0 %v2207
        %2230 = vmatprep.subr.mxu0 0.0
        %2231 = vmatpush1.msra.mxu0 %v2208
        %2232 = vmatprep.subr.mxu0 0.0
        %2233 = vmatpush1.msra.mxu0 %v2209
        %2234 = vmatprep.subr.mxu0 0.0
        %2235 = vmatpush1.msra.mxu0 %v2210
        %2236 = vmatprep.subr.mxu0 0.0
        %2237 = vmatpush1.msra.mxu0 %v2211
        %2238 = vmatprep.subr.mxu0 0.0
        %2239 = vmatpush1.msra.mxu0 %v2212
        %2240 = vmatprep.subr.mxu0 0.0
        %2241 = vmatpush1.msra.mxu0 %v2213
        %2242 = vmatprep.subr.mxu0 0.0
        %2243 = vmatpush1.msra.mxu0 %v2214
        %2244 = vmatprep.subr.mxu0 0.0
        %2245 = vmatpush1.msra.mxu0 %v2215
        %2246 = vmatprep.subr.mxu0 0.0
        %2247 = vmatpush1.msra.mxu0 %v2216
        %2248 = vmatprep.subr.mxu0 0.0
        %2249 = vmatpush1.msra.mxu0 %v2217
        %2250 = vmatprep.subr.mxu0 0.0
        %2251 = vmatpush1.msra.mxu0 0.0
        %2252 = vmatprep.subr.mxu0 0.0
        %2253 = vmatpush1.msra.mxu0 0.0
        %2254 = vmatprep.subr.mxu0 0.0
        %2255 = vmatpush1.msra.mxu0 0.0
        %2256 = vmatprep.subr.mxu0 0.0
        %2257 = vmatpush1.msra.mxu0 0.0
        %2258 = vmatprep.subr.mxu0 0.0
        %2259 = vmatpush1.msra.mxu0 0.0
        %2260 = vmatprep.subr.mxu0 0.0
        %2261 = vmatpush1.msra.mxu0 0.0
        %2262 = vmatprep.subr.mxu0 0.0
        %2263 = vmatpush1.msra.mxu0 0.0
        %2264 = vmatprep.subr.mxu0 0.0
        %2265 = vmatpush1.msra.mxu0 0.0
        %2266 = vmatprep.subr.mxu0 0.0
        %2267 = vmatpush1.msra.mxu0 0.0
        %2268 = vmatprep.subr.mxu0 0.0
        %2269 = vmatpush1.msra.mxu0 0.0
        %2270 = vmatprep.subr.mxu0 0.0
        %2271 = vmatpush1.msra.mxu0 0.0
        %2272 = vmatprep.subr.mxu0 0.0
        %2273 = vmatpush1.msra.mxu0 0.0
        %2274 = vmatprep.subr.mxu0 0.0
        %2275 = vmatpush1.msra.mxu0 0.0
        %2276 = vmatprep.subr.mxu0 0.0
        %2277 = vmatpush1.msra.mxu0 0.0
        %2278 = vmatprep.subr.mxu0 0.0
        %2279 = vmatpush1.msra.mxu0 0.0
        %2280 = vmatprep.subr.mxu0 0.0
        %2281 = vmatpush1.msra.mxu0 0.0
        %2282 = vmatprep.mubr.f32.mxu0 0.0
        %2283 = vmatmul.mubr.f32.gmra.mrb[0].mxu0 %v2185
        %v2284 = vpop.f32.mrb[0].mxu0
        %v2285 = vadd.f32 0.0, %v2284
        %v2286 = vpop.f32.mrb[0].mxu0
        %2287 = vmatprep.mubr.f32.mxu0 0.0
        %2288 = vmatmul.mubr.f32.gmra.mrb[0].mxu0 %v2186
        %v2289 = vpop.f32.mrb[0].mxu0
        %v2290 = vadd.f32 0.0, %v2289
        %v2291 = vpop.f32.mrb[0].mxu0
        %2292 = vmatprep.mubr.f32.mxu0 0.0
        %2293 = vmatmul.mubr.f32.gmra.mrb[0].mxu0 %v2187
        %v2294 = vpop.f32.mrb[0].mxu0
        %v2295 = vadd.f32 0.0, %v2294
        %v2296 = vpop.f32.mrb[0].mxu0
        %2297 = vmatprep.mubr.f32.mxu0 0.0
        %2298 = vmatmul.mubr.f32.gmra.mrb[0].mxu0 %v2188
        %v2299 = vpop.f32.mrb[0].mxu0
        %v2300 = vadd.f32 0.0, %v2299
        %v2301 = vpop.f32.mrb[0].mxu0
        %2302 = vmatprep.mubr.f32.mxu0 0.0
        %2303 = vmatmul.mubr.f32.gmra.mrb[0].mxu0 %v2189
        %v2304 = vpop.f32.mrb[0].mxu0
        %v2305 = vadd.f32 0.0, %v2304
        %v2306 = vpop.f32.mrb[0].mxu0
        %2307 = vmatprep.mubr.f32.mxu0 0.0
        %2308 = vmatmul.mubr.f32.gmra.mrb[0].mxu0 %v2190
        %v2309 = vpop.f32.mrb[0].mxu0
        %v2310 = vadd.f32 0.0, %v2309
        %v2311 = vpop.f32.mrb[0].mxu0
        %2312 = vmatprep.mubr.f32.mxu0 0.0
        %2313 = vmatmul.mubr.f32.gmra.mrb[0].mxu0 %v2191
        %v2314 = vpop.f32.mrb[0].mxu0
        %v2315 = vadd.f32 0.0, %v2314
        %v2316 = vpop.f32.mrb[0].mxu0
        %2317 = vmatprep.mubr.f32.mxu0 0.0
        %2318 = vmatmul.mubr.f32.gmra.mrb[0].mxu0 %v2192
        %v2319 = vpop.f32.mrb[0].mxu0
        %v2320 = vadd.f32 0.0, %v2319
        %v2321 = vpop.f32.mrb[0].mxu0
        %2322 = vmatprep.mubr.f32.mxu0 0.0
        %2323 = vmatmul.mubr.f32.gmra.mrb[0].mxu0 %v2193
        %v2324 = vpop.f32.mrb[0].mxu0
        %v2325 = vadd.f32 0.0, %v2324
        %v2326 = vpop.f32.mrb[0].mxu0
        %2327 = vmatprep.mubr.f32.mxu0 0.0
        %2328 = vmatmul.mubr.f32.gmra.mrb[0].mxu0 %v2194
        %v2329 = vpop.f32.mrb[0].mxu0
        %v2330 = vadd.f32 0.0, %v2329
        %v2331 = vpop.f32.mrb[0].mxu0
        %2332 = vmatprep.mubr.f32.mxu0 0.0
        %2333 = vmatmul.mubr.f32.gmra.mrb[0].mxu0 %v2195
        %v2334 = vpop.f32.mrb[0].mxu0
        %v2335 = vadd.f32 0.0, %v2334
        %v2336 = vpop.f32.mrb[0].mxu0
        %2337 = vmatprep.mubr.f32.mxu0 0.0
        %2338 = vmatmul.mubr.f32.gmra.mrb[0].mxu0 %v2196
        %v2339 = vpop.f32.mrb[0].mxu0
        %v2340 = vadd.f32 0.0, %v2339
        %v2341 = vpop.f32.mrb[0].mxu0
        %2342 = vmatprep.mubr.f32.mxu0 0.0
        %2343 = vmatmul.mubr.f32.gmra.mrb[0].mxu0 %v2197
        %v2344 = vpop.f32.mrb[0].mxu0
        %v2345 = vadd.f32 0.0, %v2344
        %v2346 = vpop.f32.mrb[0].mxu0
        %2347 = vmatprep.mubr.f32.mxu0 0.0
        %2348 = vmatmul.mubr.f32.gmra.mrb[0].mxu0 %v2198
        %v2349 = vpop.f32.mrb[0].mxu0
        %v2350 = vadd.f32 0.0, %v2349
        %v2351 = vpop.f32.mrb[0].mxu0
        %2352 = vmatprep.mubr.f32.mxu0 0.0
        %2353 = vmatmul.mubr.f32.gmra.mrb[0].mxu0 %v2199
        %v2354 = vpop.f32.mrb[0].mxu0
        %v2355 = vadd.f32 0.0, %v2354
        %v2356 = vpop.f32.mrb[0].mxu0
        %2357 = vmatprep.mubr.f32.mxu0 0.0
        %2358 = vmatmul.mubr.f32.gmra.mrb[0].mxu0 %v2200
        %v2359 = vpop.f32.mrb[0].mxu0
        %v2360 = vadd.f32 0.0, %v2359
        %v2361 = vpop.f32.mrb[0].mxu0
        %2362 = vdwg.mxu0
        %v2363 = vadd.f32 %v2169, %v2285
        %v2364 = vadd.f32 %v2170, %v2290
        %v2365 = vadd.f32 %v2171, %v2295
        %v2366 = vadd.f32 %v2172, %v2300
        %v2367 = vadd.f32 %v2173, %v2305
        %v2368 = vadd.f32 %v2174, %v2310
        %v2369 = vadd.f32 %v2175, %v2315
        %v2370 = vadd.f32 %v2176, %v2320
        %v2371 = vadd.f32 %v2177, %v2325
        %v2372 = vadd.f32 %v2178, %v2330
        %v2373 = vadd.f32 %v2179, %v2335
        %v2374 = vadd.f32 %v2180, %v2340
        %v2375 = vadd.f32 %v2181, %v2345
        %v2376 = vadd.f32 %v2182, %v2350
        %v2377 = vadd.f32 %v2183, %v2355
        %v2378 = vadd.f32 %v2184, %v2360
        %v2379 = vld [vmem:[%s609] sm:$0xff]
        %v2380 = vld [vmem:[%s609 + $0x8] sm:$0xff]
        %v2381 = vld [vmem:[%s609 + $0x10] sm:$0xff]
        %v2382 = vld [vmem:[%s609 + $0x18] sm:$0xff]
        %v2383 = vld [vmem:[%s609 + $0x20] sm:$0xff]
        %v2384 = vld [vmem:[%s609 + $0x28] sm:$0xff]
        %v2385 = vld [vmem:[%s609 + $0x30] sm:$0xff]
        %v2386 = vld [vmem:[%s609 + $0x38] sm:$0xff]
        %v2387 = vld [vmem:[%s609 + $0x40] sm:$0xff]
        %v2388 = vld [vmem:[%s609 + $0x48] sm:$0xff]
        %v2389 = vld [vmem:[%s609 + $0x50] sm:$0xff]
        %v2390 = vld [vmem:[%s609 + $0x58] sm:$0xff]
        %v2391 = vld [vmem:[%s609 + $0x60] sm:$0xff]
        %v2392 = vld [vmem:[%s609 + $0x68] sm:$0xff]
        %v2393 = vld [vmem:[%s609 + $0x70] sm:$0xff]
        %v2394 = vld [vmem:[%s609 + $0x78] sm:$0xff]
        %v2395 = vld [vmem:[%s613] sm:$0xff]
        %v2396 = vld [vmem:[%s613 + $0x8] sm:$0xff]
        %v2397 = vld [vmem:[%s613 + $0x10] sm:$0xff]
        %v2398 = vld [vmem:[%s613 + $0x18] sm:$0xff]
        %v2399 = vld [vmem:[%s613 + $0x20] sm:$0xff]
        %v2400 = vld [vmem:[%s613 + $0x28] sm:$0xff]
        %v2401 = vld [vmem:[%s613 + $0x30] sm:$0xff]
        %v2402 = vld [vmem:[%s613 + $0x38] sm:$0xff]
        %v2403 = vld [vmem:[%s613 + $0x40] sm:$0xff]
        %v2404 = vld [vmem:[%s613 + $0x48] sm:$0xff]
        %v2405 = vld [vmem:[%s613 + $0x50] sm:$0xff]
        %v2406 = vld [vmem:[%s613 + $0x58] sm:$0xff]
        %v2407 = vld [vmem:[%s613 + $0x60] sm:$0xff]
        %v2408 = vld [vmem:[%s613 + $0x68] sm:$0xff]
        %v2409 = vld [vmem:[%s613 + $0x70] sm:$0xff]
        %v2410 = vld [vmem:[%s613 + $0x78] sm:$0xff]
        %v2411 = vld [vmem:[%s616] sm:$0x1]
        %v2413 = vlaneseq
        %v2414 = vshrl.u32 %v2413, 7
        %v2415 = vsub.s32 0, %v2414
        %v2416 = vrot.slane %v2411, %v2415
        %2418 = vmatprep.subr.mxu0 0.0
        %2419 = vmatpush1.msra.mxu0 %v2395
        %2420 = vmatprep.subr.mxu0 0.0
        %2421 = vmatpush1.msra.mxu0 %v2396
        %2422 = vmatprep.subr.mxu0 0.0
        %2423 = vmatpush1.msra.mxu0 %v2397
        %2424 = vmatprep.subr.mxu0 0.0
        %2425 = vmatpush1.msra.mxu0 %v2398
        %2426 = vmatprep.subr.mxu0 0.0
        %2427 = vmatpush1.msra.mxu0 %v2399
        %2428 = vmatprep.subr.mxu0 0.0
        %2429 = vmatpush1.msra.mxu0 %v2400
        %2430 = vmatprep.subr.mxu0 0.0
        %2431 = vmatpush1.msra.mxu0 %v2401
        %2432 = vmatprep.subr.mxu0 0.0
        %2433 = vmatpush1.msra.mxu0 %v2402
        %2434 = vmatprep.subr.mxu0 0.0
        %2435 = vmatpush1.msra.mxu0 %v2403
        %2436 = vmatprep.subr.mxu0 0.0
        %2437 = vmatpush1.msra.mxu0 %v2404
        %2438 = vmatprep.subr.mxu0 0.0
        %2439 = vmatpush1.msra.mxu0 %v2405
        %2440 = vmatprep.subr.mxu0 0.0
        %2441 = vmatpush1.msra.mxu0 %v2406
        %2442 = vmatprep.subr.mxu0 0.0
        %2443 = vmatpush1.msra.mxu0 %v2407
        %2444 = vmatprep.subr.mxu0 0.0
        %2445 = vmatpush1.msra.mxu0 %v2408
        %2446 = vmatprep.subr.mxu0 0.0
        %2447 = vmatpush1.msra.mxu0 %v2409
        %2448 = vmatprep.subr.mxu0 0.0
        %2449 = vmatpush1.msra.mxu0 %v2410
        %2450 = vmatprep.subr.mxu0 0.0
        %2451 = vmatpush1.msra.mxu0 0.0
        %2452 = vmatprep.subr.mxu0 0.0
        %2453 = vmatpush1.msra.mxu0 0.0
        %2454 = vmatprep.subr.mxu0 0.0
        %2455 = vmatpush1.msra.mxu0 0.0
        %2456 = vmatprep.subr.mxu0 0.0
        %2457 = vmatpush1.msra.mxu0 0.0
        %2458 = vmatprep.subr.mxu0 0.0
        %2459 = vmatpush1.msra.mxu0 0.0
        %2460 = vmatprep.subr.mxu0 0.0
        %2461 = vmatpush1.msra.mxu0 0.0
        %2462 = vmatprep.subr.mxu0 0.0
        %2463 = vmatpush1.msra.mxu0 0.0
        %2464 = vmatprep.subr.mxu0 0.0
        %2465 = vmatpush1.msra.mxu0 0.0
        %2466 = vmatprep.subr.mxu0 0.0
        %2467 = vmatpush1.msra.mxu0 0.0
        %2468 = vmatprep.subr.mxu0 0.0
        %2469 = vmatpush1.msra.mxu0 0.0
        %2470 = vmatprep.subr.mxu0 0.0
        %2471 = vmatpush1.msra.mxu0 0.0
        %2472 = vmatprep.subr.mxu0 0.0
        %2473 = vmatpush1.msra.mxu0 0.0
        %2474 = vmatprep.subr.mxu0 0.0
        %2475 = vmatpush1.msra.mxu0 0.0
        %2476 = vmatprep.subr.mxu0 0.0
        %2477 = vmatpush1.msra.mxu0 0.0
        %2478 = vmatprep.subr.mxu0 0.0
        %2479 = vmatpush1.msra.mxu0 0.0
        %2480 = vmatprep.subr.mxu0 0.0
        %2481 = vmatpush1.msra.mxu0 0.0
        %2482 = vmatprep.mubr.f32.mxu0 0.0
        %2483 = vmatmul.mubr.f32.gmra.mrb[0].mxu0 %v2379
        %v2484 = vpop.f32.mrb[0].mxu0
        %v2485 = vadd.f32 %v2416, %v2484
        %v2486 = vpop.f32.mrb[0].mxu0
        %2487 = vmatprep.mubr.f32.mxu0 0.0
        %2488 = vmatmul.mubr.f32.gmra.mrb[0].mxu0 %v2380
        %v2489 = vpop.f32.mrb[0].mxu0
        %v2490 = vadd.f32 %v2416, %v2489
        %v2491 = vpop.f32.mrb[0].mxu0
        %2492 = vmatprep.mubr.f32.mxu0 0.0
        %2493 = vmatmul.mubr.f32.gmra.mrb[0].mxu0 %v2381
        %v2494 = vpop.f32.mrb[0].mxu0
        %v2495 = vadd.f32 %v2416, %v2494
        %v2496 = vpop.f32.mrb[0].mxu0
        %2497 = vmatprep.mubr.f32.mxu0 0.0
        %2498 = vmatmul.mubr.f32.gmra.mrb[0].mxu0 %v2382
        %v2499 = vpop.f32.mrb[0].mxu0
        %v2500 = vadd.f32 %v2416, %v2499
        %v2501 = vpop.f32.mrb[0].mxu0
        %2502 = vmatprep.mubr.f32.mxu0 0.0
        %2503 = vmatmul.mubr.f32.gmra.mrb[0].mxu0 %v2383
        %v2504 = vpop.f32.mrb[0].mxu0
        %v2505 = vadd.f32 %v2416, %v2504
        %v2506 = vpop.f32.mrb[0].mxu0
        %2507 = vmatprep.mubr.f32.mxu0 0.0
        %2508 = vmatmul.mubr.f32.gmra.mrb[0].mxu0 %v2384
        %v2509 = vpop.f32.mrb[0].mxu0
        %v2510 = vadd.f32 %v2416, %v2509
        %v2511 = vpop.f32.mrb[0].mxu0
        %2512 = vmatprep.mubr.f32.mxu0 0.0
        %2513 = vmatmul.mubr.f32.gmra.mrb[0].mxu0 %v2385
        %v2514 = vpop.f32.mrb[0].mxu0
        %v2515 = vadd.f32 %v2416, %v2514
        %v2516 = vpop.f32.mrb[0].mxu0
        %2517 = vmatprep.mubr.f32.mxu0 0.0
        %2518 = vmatmul.mubr.f32.gmra.mrb[0].mxu0 %v2386
        %v2519 = vpop.f32.mrb[0].mxu0
        %v2520 = vadd.f32 %v2416, %v2519
        %v2521 = vpop.f32.mrb[0].mxu0
        %2522 = vmatprep.mubr.f32.mxu0 0.0
        %2523 = vmatmul.mubr.f32.gmra.mrb[0].mxu0 %v2387
        %v2524 = vpop.f32.mrb[0].mxu0
        %v2525 = vadd.f32 %v2416, %v2524
        %v2526 = vpop.f32.mrb[0].mxu0
        %2527 = vmatprep.mubr.f32.mxu0 0.0
        %2528 = vmatmul.mubr.f32.gmra.mrb[0].mxu0 %v2388
        %v2529 = vpop.f32.mrb[0].mxu0
        %v2530 = vadd.f32 %v2416, %v2529
        %v2531 = vpop.f32.mrb[0].mxu0
        %2532 = vmatprep.mubr.f32.mxu0 0.0
        %2533 = vmatmul.mubr.f32.gmra.mrb[0].mxu0 %v2389
        %v2534 = vpop.f32.mrb[0].mxu0
        %v2535 = vadd.f32 %v2416, %v2534
        %v2536 = vpop.f32.mrb[0].mxu0
        %2537 = vmatprep.mubr.f32.mxu0 0.0
        %2538 = vmatmul.mubr.f32.gmra.mrb[0].mxu0 %v2390
        %v2539 = vpop.f32.mrb[0].mxu0
        %v2540 = vadd.f32 %v2416, %v2539
        %v2541 = vpop.f32.mrb[0].mxu0
        %2542 = vmatprep.mubr.f32.mxu0 0.0
        %2543 = vmatmul.mubr.f32.gmra.mrb[0].mxu0 %v2391
        %v2544 = vpop.f32.mrb[0].mxu0
        %v2545 = vadd.f32 %v2416, %v2544
        %v2546 = vpop.f32.mrb[0].mxu0
        %2547 = vmatprep.mubr.f32.mxu0 0.0
        %2548 = vmatmul.mubr.f32.gmra.mrb[0].mxu0 %v2392
        %v2549 = vpop.f32.mrb[0].mxu0
        %v2550 = vadd.f32 %v2416, %v2549
        %v2551 = vpop.f32.mrb[0].mxu0
        %2552 = vmatprep.mubr.f32.mxu0 0.0
        %2553 = vmatmul.mubr.f32.gmra.mrb[0].mxu0 %v2393
        %v2554 = vpop.f32.mrb[0].mxu0
        %v2555 = vadd.f32 %v2416, %v2554
        %v2556 = vpop.f32.mrb[0].mxu0
        %2557 = vmatprep.mubr.f32.mxu0 0.0
        %2558 = vmatmul.mubr.f32.gmra.mrb[0].mxu0 %v2394
        %v2559 = vpop.f32.mrb[0].mxu0
        %v2560 = vadd.f32 %v2416, %v2559
        %v2561 = vpop.f32.mrb[0].mxu0
        %2562 = vdwg.mxu0
        %v2563 = vadd.f32 %v2363, %v2485
        %v2564 = vadd.f32 %v2364, %v2490
        %v2565 = vadd.f32 %v2365, %v2495
        %v2566 = vadd.f32 %v2366, %v2500
        %v2567 = vadd.f32 %v2367, %v2505
        %v2568 = vadd.f32 %v2368, %v2510
        %v2569 = vadd.f32 %v2369, %v2515
        %v2570 = vadd.f32 %v2370, %v2520
        %v2571 = vadd.f32 %v2371, %v2525
        %v2572 = vadd.f32 %v2372, %v2530
        %v2573 = vadd.f32 %v2373, %v2535
        %v2574 = vadd.f32 %v2374, %v2540
        %v2575 = vadd.f32 %v2375, %v2545
        %v2576 = vadd.f32 %v2376, %v2550
        %v2577 = vadd.f32 %v2377, %v2555
        %v2578 = vadd.f32 %v2378, %v2560
        %v2579 = vmax.f32 %v2563, 0.0
        %v2580 = vmax.f32 %v2564, 0.0
        %v2581 = vmax.f32 %v2565, 0.0
        %v2582 = vmax.f32 %v2566, 0.0
        %v2583 = vmax.f32 %v2567, 0.0
        %v2584 = vmax.f32 %v2568, 0.0
        %v2585 = vmax.f32 %v2569, 0.0
        %v2586 = vmax.f32 %v2570, 0.0
        %v2587 = vmax.f32 %v2571, 0.0
        %v2588 = vmax.f32 %v2572, 0.0
        %v2589 = vmax.f32 %v2573, 0.0
        %v2590 = vmax.f32 %v2574, 0.0
        %v2591 = vmax.f32 %v2575, 0.0
        %v2592 = vmax.f32 %v2576, 0.0
        %v2593 = vmax.f32 %v2577, 0.0
        %v2594 = vmax.f32 %v2578, 0.0
        %2595 = vst [vmem:[%s624] sm:$0xff] %v2579
        %2596 = vst [vmem:[%s624 + $0x8] sm:$0xff] %v2580
        %2597 = vst [vmem:[%s624 + $0x10] sm:$0xff] %v2581
        %2598 = vst [vmem:[%s624 + $0x18] sm:$0xff] %v2582
        %2599 = vst [vmem:[%s624 + $0x20] sm:$0xff] %v2583
        %2600 = vst [vmem:[%s624 + $0x28] sm:$0xff] %v2584
        %2601 = vst [vmem:[%s624 + $0x30] sm:$0xff] %v2585
        %2602 = vst [vmem:[%s624 + $0x38] sm:$0xff] %v2586
        %2603 = vst [vmem:[%s624 + $0x40] sm:$0xff] %v2587
        %2604 = vst [vmem:[%s624 + $0x48] sm:$0xff] %v2588
        %2605 = vst [vmem:[%s624 + $0x50] sm:$0xff] %v2589
        %2606 = vst [vmem:[%s624 + $0x58] sm:$0xff] %v2590
        %2607 = vst [vmem:[%s624 + $0x60] sm:$0xff] %v2591
        %2608 = vst [vmem:[%s624 + $0x68] sm:$0xff] %v2592
        %2609 = vst [vmem:[%s624 + $0x70] sm:$0xff] %v2593
        %2610 = vst [vmem:[%s624 + $0x78] sm:$0xff] %v2594
        %p2611 = scmp.lt.s32.totalorder %s22, 1
        %s2612 = scalar_select %p2611, %s22, 1
        %p2613 = scmp.lt.s32.totalorder %s21, 0
        %s2614 = scalar_select %p2613, %s21, 0
        %s2615 = smul.addr %s2612, 16
        %s2616 = sadd.s32 %s2614, %s2615
        %s2617 = smul.addr %s2616, 8
        %s2618 = scalar_lea.vmem %s6, %s2617
        // Predicated region
        $region83: #{basic_block_forward.3} parent=77 // pred_check
          %p2619 = pneg %p205
        $region84: #{basic_block_forward.3} parent=77 // pred_check_branch
          %2621 = sbr.rel (%p2619) target = $region86
        $region85: #{basic_block_forward.3} parent=77 // pred_region
          _
        $region86: #{basic_block_forward.3} parent=77 // pred_fallthru
          _
      $region78: #{basic_block_forward.3} parent=5 // pred_fallthru
        _
      %p2622 = scmp.le.s32.totalorder 2, %s12
      // Predicated region
      $region87: #{basic_block_forward.3} parent=5 // pred_check
        %p2623 = pneg %p2622
      $region88: #{basic_block_forward.3} parent=5 // pred_check_branch
        %2625 = sbr.rel (%p2623) target = $region90
      $region89: #{basic_block_forward.3} parent=5 // pred_region
        %s2626 = ssub.s32 %s12, 2
        // Predicated region
        $region91: #{basic_block_forward.3} parent=89 // pred_check
          %p2627 = pneg %p211
        $region92: #{basic_block_forward.3} parent=89 // pred_check_branch
          %2629 = sbr.rel (%p2627) target = $region94
        $region93: #{basic_block_forward.3} parent=89 // pred_region
          %p2630 = scmp.lt.s32.totalorder %s24, 1
          %s2631 = scalar_select %p2630, %s24, 1
          %p2632 = scmp.lt.s32.totalorder %s23, 0
          %s2633 = scalar_select %p2632, %s23, 0
          %s2634 = smul.addr %s2631, 16
          %s2635 = sadd.s32 %s2633, %s2634
          %s2636 = smul.addr %s2635, 8
          %s2637 = scalar_lea.vmem %s6, %s2636
        $region94: #{basic_block_forward.3} parent=89 // pred_fallthru
          _
      $region90: #{basic_block_forward.3} parent=5 // pred_fallthru
        _
    $region6: #{basic_block_forward.3} parent=1 // loop_footer
      %s16 = sadd.s32 1, %s12
    $region7: #{basic_block_forward.3} parent=1 // loop_footer_branch
      %11 = sbr.rel target = $region3
    $region8: #{basic_block_forward.3} parent=1 // loop_exit
      _

</llo_original>
